<compile_context>
chip_gen: v7x
topology: tpu7x:2x2x1
jax: 0.10.0
libtpu: 0.0.40
codegen_flags: <defaults>
</compile_context>

<pallas_src>
import jax
import jax.numpy as jnp
import numpy as np
from jax.experimental import pallas as pl
from jax.experimental.pallas import tpu as pltpu


def _conv3x3_packed(xpk, offs, w_ref, b_ref, Ho, Wo):
    """Direct 3x3 convolution with the 3 output channels packed along lanes.

    xpk  : (B, Hi, L) activation value; input channel ci occupies lanes
           [offs[ci], offs[ci] + Wo + 2), Hi >= Ho + 2 (already zero-padded
           for 'same' convolutions).
    w_ref: VMEM ref (cin*9, 3*Wo).  Row (ci*3+ky)*3+kx holds the 3 output-
           channel weights for tap (ci,ky,kx), each repeated Wo times.
    b_ref: VMEM ref (1, 3*Wo): bias repeated Wo times per output channel.
    Returns a packed (B, Ho, 3*Wo) float32 accumulator (bias added, NO relu).
    """
    B = xpk.shape[0]
    acc = jnp.broadcast_to(b_ref[...], (B, Ho, 3 * Wo)).astype(jnp.float32)
    for ci, off in enumerate(offs):
        for kx in range(3):
            # Lane shift once per (ci, kx), full height; replicate 3x along lanes.
            s = xpk[:, :, off + kx: off + kx + Wo]            # (B, Hi, Wo)
            t3 = jnp.concatenate([s, s, s], axis=2)            # (B, Hi, 3*Wo)
            for ky in range(3):
                r = (ci * 3 + ky) * 3 + kx
                w_row = w_ref[r:r + 1, :]                      # (1, 3*Wo)
                acc = acc + w_row * t3[:, ky:ky + Ho, :]       # single packed FMA pass
    return acc


def residual_net_kernel(xp_ref, w1, b1, w2, b2, w3, b3, w4, b4,
                        wfc_ref, bfc_ref, out_ref):
    B = xp_ref.shape[0]
    f32 = jnp.float32

    # ---------- conv1 (input host-padded to 30x30, 1 channel) + relu ----------
    y1 = jnp.maximum(_conv3x3_packed(xp_ref[...], (0,), w1, b1, 28, 28), 0.0)
    # y1: packed (B, 28, 84), channel c at lanes [c*28, (c+1)*28)

    # ---------- conv2 (pad=1) + relu + residual ----------
    # Build the zero-padded, channel-packed input (B, 30, 90) in-register
    # (channel c at lanes [c*30, c*30+30) with a 1-wide zero frame).
    z1 = jnp.zeros((B, 28, 1), f32)
    z2 = jnp.zeros((B, 28, 2), f32)
    ch0 = y1[:, :, 0:28]
    ch1 = y1[:, :, 28:56]
    ch2 = y1[:, :, 56:84]
    mid = jnp.concatenate([z1, ch0, z2, ch1, z2, ch2, z1], axis=2)   # (B, 28, 90)
    zr = jnp.zeros((B, 1, 90), f32)
    x2p = jnp.concatenate([zr, mid, zr], axis=1)                      # (B, 30, 90)
    c2 = _conv3x3_packed(x2p, (0, 30, 60), w2, b2, 28, 28)
    y2 = y1 + jnp.maximum(c2, 0.0)                                    # packed residual add

    # ---------- conv3 (valid) + relu ----------
    y3 = jnp.maximum(_conv3x3_packed(y2, (0, 28, 56), w3, b3, 26, 26), 0.0)
    # y3: (B, 26, 78), channel c at lanes [c*26, (c+1)*26)

    # ---------- conv4 (valid), NO relu ----------
    x4 = _conv3x3_packed(y3, (0, 26, 52), w4, b4, 24, 24)
    # x4: (B, 24, 72), lane index = c*24 + w

    # ---------- FC (+ relu) ----------
    # Lane index c*24+w at row h equals torch flatten index c*576+h*24+w, so
    # contracting each row against wfc[h] (72, 10) reproduces nn.Flatten
    # ordering exactly; 24 MXU dots (K=72) instead of 72 (K=24).
    acc = jnp.broadcast_to(bfc_ref[...], (B, 10)).astype(f32)
    for h in range(24):
        acc = acc + jnp.dot(x4[:, h, :], wfc_ref[h],
                            preferred_element_type=jnp.float32)
    out_ref[...] = jnp.maximum(acc, 0.0)


def residual_net_forward(x, params):
    B = x.shape[0]
    # Pre-pad the conv1 input host-side and drop the singleton channel dim.
    xp = jnp.pad(x, ((0, 0), (0, 0), (1, 1), (1, 1)))[:, 0]   # (B, 30, 30)
    vmem = pl.BlockSpec(memory_space=pltpu.MemorySpace.VMEM)
    return pl.pallas_call(
        residual_net_kernel,
        out_shape=jax.ShapeDtypeStruct((B, 10), jnp.float32),
        in_specs=[vmem] * 11,
        out_specs=vmem,
    )(xp,
      params["w1p"], params["b1p"],
      params["w2p"], params["b2p"],
      params["w3p"], params["b3p"],
      params["w4p"], params["b4p"],
      params["wfc_r"], params["fcb2d"])


# --------------------------------------------------------------------------
# Host-side weight packing.
# --------------------------------------------------------------------------
def _pack_conv(w, b, Wo):
    """w: (cout, cin, 3, 3), b: (cout,) -> packed (cin*9, cout*Wo), (1, cout*Wo)."""
    cout, cin = w.shape[0], w.shape[1]
    rows = jnp.transpose(w, (1, 2, 3, 0)).reshape(cin * 9, cout)   # row = (ci,ky,kx)
    wpk = jnp.repeat(rows, Wo, axis=1)                              # col = co*Wo + w
    bpk = jnp.repeat(b, Wo).reshape(1, cout * Wo)
    return wpk, bpk


def make_params(key):
    ks = jax.random.split(key, 10)
    raw = {
        "w1": jax.random.normal(ks[0], (3, 1, 3, 3), jnp.float32) * 0.10,
        "b1": jax.random.normal(ks[1], (3,), jnp.float32) * 0.01,
        "w2": jax.random.normal(ks[2], (3, 3, 3, 3), jnp.float32) * 0.10,
        "b2": jax.random.normal(ks[3], (3,), jnp.float32) * 0.01,
        "w3": jax.random.normal(ks[4], (3, 3, 3, 3), jnp.float32) * 0.10,
        "b3": jax.random.normal(ks[5], (3,), jnp.float32) * 0.01,
        "w4": jax.random.normal(ks[6], (3, 3, 3, 3), jnp.float32) * 0.10,
        "b4": jax.random.normal(ks[7], (3,), jnp.float32) * 0.01,
        "fcw": jax.random.normal(ks[8], (10, 3 * 24 * 24), jnp.float32) * 0.05,
        "fcb": jax.random.normal(ks[9], (10,), jnp.float32) * 0.01,
    }
    w1p, b1p = _pack_conv(raw["w1"], raw["b1"], 28)
    w2p, b2p = _pack_conv(raw["w2"], raw["b2"], 28)
    w3p, b3p = _pack_conv(raw["w3"], raw["b3"], 26)
    w4p, b4p = _pack_conv(raw["w4"], raw["b4"], 24)
    # FC weight: (10, 1728) -> (h, c*24+w, n) so the packed x4 rows dot against it.
    wfc_r = jnp.transpose(raw["fcw"].reshape(10, 3, 24, 24),
                          (2, 1, 3, 0)).reshape(24, 72, 10)
    params = {
        "w1p": w1p, "b1p": b1p, "w2p": w2p, "b2p": b2p,
        "w3p": w3p, "b3p": b3p, "w4p": w4p, "b4p": b4p,
        "wfc_r": wfc_r, "fcb2d": raw["fcb"].reshape(1, 10),
    }
    return raw, params


# --------------------------------------------------------------------------
# Pure-JAX reference for validation.
# --------------------------------------------------------------------------
def ref_forward(x, raw):
    def conv(h, w, b, pad):
        y = jax.lax.conv_general_dilated(
            h, w, (1, 1), [(pad, pad), (pad, pad)],
            dimension_numbers=("NCHW", "OIHW", "NCHW"),
            precision=jax.lax.Precision.HIGHEST)
        return y + b.reshape(1, -1, 1, 1)

    x1 = jax.nn.relu(conv(x, raw["w1"], raw["b1"], 1))
    x2 = jax.nn.relu(conv(x1, raw["w2"], raw["b2"], 1))
    x2 = x1 + x2
    x3 = jax.nn.relu(conv(x2, raw["w3"], raw["b3"], 0))
    x4 = conv(x3, raw["w4"], raw["b4"], 0)
    xf = x4.reshape(x.shape[0], -1)
    y = jnp.dot(xf, raw["fcw"].T, precision=jax.lax.Precision.HIGHEST) + raw["fcb"]
    return jax.nn.relu(y)


if __name__ == "__main__":
    key = jax.random.PRNGKey(0)
    k_x, k_p = jax.random.split(key)

    # Input implied by the module: 1 channel, 28x28 (fc expects 3*24*24).
    B = 2
    x = jax.random.normal(k_x, (B, 1, 28, 28), jnp.float32)

    raw, params = make_params(k_p)

    out = jax.block_until_ready(residual_net_forward(x, params))
    ref = jax.block_until_ready(ref_forward(x, raw))
    np.testing.assert_allclose(np.asarray(out), np.asarray(ref),
                               rtol=1e-3, atol=1e-3)

    assert out.shape == (B, 10) and out.dtype == jnp.float32
    print("KERNEL_OK")
</pallas_src>

<mosaic_0001>
module attributes {stable_mosaic.version = 11 : i64} {
  func.func @residual_net_kernel(%arg0: memref<2x30x30xf32, #tpu.memory_space<vmem>>, %arg1: memref<9x84xf32, #tpu.memory_space<vmem>>, %arg2: memref<1x84xf32, #tpu.memory_space<vmem>>, %arg3: memref<27x84xf32, #tpu.memory_space<vmem>>, %arg4: memref<1x84xf32, #tpu.memory_space<vmem>>, %arg5: memref<27x78xf32, #tpu.memory_space<vmem>>, %arg6: memref<1x78xf32, #tpu.memory_space<vmem>>, %arg7: memref<27x72xf32, #tpu.memory_space<vmem>>, %arg8: memref<1x72xf32, #tpu.memory_space<vmem>>, %arg9: memref<24x72x10xf32, #tpu.memory_space<vmem>>, %arg10: memref<1x10xf32, #tpu.memory_space<vmem>>, %arg11: memref<2x10xf32, #tpu.memory_space<vmem>>) attributes {dimension_semantics = [], scalar_prefetch = 0 : i64, scratch_operands = 0 : i64, tpu.core_type = #tpu.core_type<tc>} {
    %c0 = arith.constant 0 : index
    %c0_0 = arith.constant 0 : index
    %c0_1 = arith.constant 0 : index
    %0 = vector.load %arg0[%c0, %c0_0, %c0_1] : memref<2x30x30xf32, #tpu.memory_space<vmem>>, vector<2x30x30xf32>
    %c0_2 = arith.constant 0 : index
    %c0_3 = arith.constant 0 : index
    %1 = vector.load %arg2[%c0_2, %c0_3] : memref<1x84xf32, #tpu.memory_space<vmem>>, vector<1x84xf32>
    %2 = vector.shape_cast %1 : vector<1x84xf32> to vector<1x1x84xf32>
    %3 = vector.broadcast %2 : vector<1x1x84xf32> to vector<2x28x84xf32>
    %4 = vector.extract_strided_slice %0 {offsets = [0, 0, 0], sizes = [2, 30, 28], strides = [1, 1, 1]} : vector<2x30x30xf32> to vector<2x30x28xf32>
    %5 = tpu.concatenate %4, %4, %4 in 2 : vector<2x30x28xf32>, vector<2x30x28xf32>, vector<2x30x28xf32> -> vector<2x30x84xf32>
    %c0_4 = arith.constant 0 : index
    %c0_5 = arith.constant 0 : index
    %6 = vector.load %arg1[%c0_4, %c0_5] : memref<9x84xf32, #tpu.memory_space<vmem>>, vector<1x84xf32>
    %7 = vector.extract_strided_slice %5 {offsets = [0, 0, 0], sizes = [2, 28, 84], strides = [1, 1, 1]} : vector<2x30x84xf32> to vector<2x28x84xf32>
    %8 = vector.shape_cast %6 : vector<1x84xf32> to vector<1x1x84xf32>
    %9 = vector.broadcast %8 : vector<1x1x84xf32> to vector<2x28x84xf32>
    %10 = arith.mulf %9, %7 : vector<2x28x84xf32>
    %11 = arith.addf %3, %10 : vector<2x28x84xf32>
    %c3 = arith.constant 3 : index
    %c0_6 = arith.constant 0 : index
    %12 = vector.load %arg1[%c3, %c0_6] : memref<9x84xf32, #tpu.memory_space<vmem>>, vector<1x84xf32>
    %13 = vector.extract_strided_slice %5 {offsets = [0, 1, 0], sizes = [2, 28, 84], strides = [1, 1, 1]} : vector<2x30x84xf32> to vector<2x28x84xf32>
    %14 = vector.shape_cast %12 : vector<1x84xf32> to vector<1x1x84xf32>
    %15 = vector.broadcast %14 : vector<1x1x84xf32> to vector<2x28x84xf32>
    %16 = arith.mulf %15, %13 : vector<2x28x84xf32>
    %17 = arith.addf %11, %16 : vector<2x28x84xf32>
    %c6 = arith.constant 6 : index
    %c0_7 = arith.constant 0 : index
    %18 = vector.load %arg1[%c6, %c0_7] : memref<9x84xf32, #tpu.memory_space<vmem>>, vector<1x84xf32>
    %19 = vector.extract_strided_slice %5 {offsets = [0, 2, 0], sizes = [2, 28, 84], strides = [1, 1, 1]} : vector<2x30x84xf32> to vector<2x28x84xf32>
    %20 = vector.shape_cast %18 : vector<1x84xf32> to vector<1x1x84xf32>
    %21 = vector.broadcast %20 : vector<1x1x84xf32> to vector<2x28x84xf32>
    %22 = arith.mulf %21, %19 : vector<2x28x84xf32>
    %23 = arith.addf %17, %22 : vector<2x28x84xf32>
    %24 = vector.extract_strided_slice %0 {offsets = [0, 0, 1], sizes = [2, 30, 28], strides = [1, 1, 1]} : vector<2x30x30xf32> to vector<2x30x28xf32>
    %25 = tpu.concatenate %24, %24, %24 in 2 : vector<2x30x28xf32>, vector<2x30x28xf32>, vector<2x30x28xf32> -> vector<2x30x84xf32>
    %c1 = arith.constant 1 : index
    %c0_8 = arith.constant 0 : index
    %26 = vector.load %arg1[%c1, %c0_8] : memref<9x84xf32, #tpu.memory_space<vmem>>, vector<1x84xf32>
    %27 = vector.extract_strided_slice %25 {offsets = [0, 0, 0], sizes = [2, 28, 84], strides = [1, 1, 1]} : vector<2x30x84xf32> to vector<2x28x84xf32>
    %28 = vector.shape_cast %26 : vector<1x84xf32> to vector<1x1x84xf32>
    %29 = vector.broadcast %28 : vector<1x1x84xf32> to vector<2x28x84xf32>
    %30 = arith.mulf %29, %27 : vector<2x28x84xf32>
    %31 = arith.addf %23, %30 : vector<2x28x84xf32>
    %c4 = arith.constant 4 : index
    %c0_9 = arith.constant 0 : index
    %32 = vector.load %arg1[%c4, %c0_9] : memref<9x84xf32, #tpu.memory_space<vmem>>, vector<1x84xf32>
    %33 = vector.extract_strided_slice %25 {offsets = [0, 1, 0], sizes = [2, 28, 84], strides = [1, 1, 1]} : vector<2x30x84xf32> to vector<2x28x84xf32>
    %34 = vector.shape_cast %32 : vector<1x84xf32> to vector<1x1x84xf32>
    %35 = vector.broadcast %34 : vector<1x1x84xf32> to vector<2x28x84xf32>
    %36 = arith.mulf %35, %33 : vector<2x28x84xf32>
    %37 = arith.addf %31, %36 : vector<2x28x84xf32>
    %c7 = arith.constant 7 : index
    %c0_10 = arith.constant 0 : index
    %38 = vector.load %arg1[%c7, %c0_10] : memref<9x84xf32, #tpu.memory_space<vmem>>, vector<1x84xf32>
    %39 = vector.extract_strided_slice %25 {offsets = [0, 2, 0], sizes = [2, 28, 84], strides = [1, 1, 1]} : vector<2x30x84xf32> to vector<2x28x84xf32>
    %40 = vector.shape_cast %38 : vector<1x84xf32> to vector<1x1x84xf32>
    %41 = vector.broadcast %40 : vector<1x1x84xf32> to vector<2x28x84xf32>
    %42 = arith.mulf %41, %39 : vector<2x28x84xf32>
    %43 = arith.addf %37, %42 : vector<2x28x84xf32>
    %44 = vector.extract_strided_slice %0 {offsets = [0, 0, 2], sizes = [2, 30, 28], strides = [1, 1, 1]} : vector<2x30x30xf32> to vector<2x30x28xf32>
    %45 = tpu.concatenate %44, %44, %44 in 2 : vector<2x30x28xf32>, vector<2x30x28xf32>, vector<2x30x28xf32> -> vector<2x30x84xf32>
    %c2 = arith.constant 2 : index
    %c0_11 = arith.constant 0 : index
    %46 = vector.load %arg1[%c2, %c0_11] : memref<9x84xf32, #tpu.memory_space<vmem>>, vector<1x84xf32>
    %47 = vector.extract_strided_slice %45 {offsets = [0, 0, 0], sizes = [2, 28, 84], strides = [1, 1, 1]} : vector<2x30x84xf32> to vector<2x28x84xf32>
    %48 = vector.shape_cast %46 : vector<1x84xf32> to vector<1x1x84xf32>
    %49 = vector.broadcast %48 : vector<1x1x84xf32> to vector<2x28x84xf32>
    %50 = arith.mulf %49, %47 : vector<2x28x84xf32>
    %51 = arith.addf %43, %50 : vector<2x28x84xf32>
    %c5 = arith.constant 5 : index
    %c0_12 = arith.constant 0 : index
    %52 = vector.load %arg1[%c5, %c0_12] : memref<9x84xf32, #tpu.memory_space<vmem>>, vector<1x84xf32>
    %53 = vector.extract_strided_slice %45 {offsets = [0, 1, 0], sizes = [2, 28, 84], strides = [1, 1, 1]} : vector<2x30x84xf32> to vector<2x28x84xf32>
    %54 = vector.shape_cast %52 : vector<1x84xf32> to vector<1x1x84xf32>
    %55 = vector.broadcast %54 : vector<1x1x84xf32> to vector<2x28x84xf32>
    %56 = arith.mulf %55, %53 : vector<2x28x84xf32>
    %57 = arith.addf %51, %56 : vector<2x28x84xf32>
    %c8 = arith.constant 8 : index
    %c0_13 = arith.constant 0 : index
    %58 = vector.load %arg1[%c8, %c0_13] : memref<9x84xf32, #tpu.memory_space<vmem>>, vector<1x84xf32>
    %59 = vector.extract_strided_slice %45 {offsets = [0, 2, 0], sizes = [2, 28, 84], strides = [1, 1, 1]} : vector<2x30x84xf32> to vector<2x28x84xf32>
    %60 = vector.shape_cast %58 : vector<1x84xf32> to vector<1x1x84xf32>
    %61 = vector.broadcast %60 : vector<1x1x84xf32> to vector<2x28x84xf32>
    %62 = arith.mulf %61, %59 : vector<2x28x84xf32>
    %63 = arith.addf %57, %62 : vector<2x28x84xf32>
    %cst = arith.constant 0.000000e+00 : f32
    %64 = vector.broadcast %cst : f32 to vector<2x28x84xf32>
    %65 = arith.maximumf %63, %64 : vector<2x28x84xf32>
    %cst_14 = arith.constant 0.000000e+00 : f32
    %66 = vector.broadcast %cst_14 : f32 to vector<2x28x1xf32>
    %cst_15 = arith.constant 0.000000e+00 : f32
    %67 = vector.broadcast %cst_15 : f32 to vector<2x28x2xf32>
    %68 = vector.extract_strided_slice %65 {offsets = [0, 0, 0], sizes = [2, 28, 28], strides = [1, 1, 1]} : vector<2x28x84xf32> to vector<2x28x28xf32>
    %69 = vector.extract_strided_slice %65 {offsets = [0, 0, 28], sizes = [2, 28, 28], strides = [1, 1, 1]} : vector<2x28x84xf32> to vector<2x28x28xf32>
    %70 = vector.extract_strided_slice %65 {offsets = [0, 0, 56], sizes = [2, 28, 28], strides = [1, 1, 1]} : vector<2x28x84xf32> to vector<2x28x28xf32>
    %71 = tpu.concatenate %66, %68, %67, %69, %67, %70, %66 in 2 : vector<2x28x1xf32>, vector<2x28x28xf32>, vector<2x28x2xf32>, vector<2x28x28xf32>, vector<2x28x2xf32>, vector<2x28x28xf32>, vector<2x28x1xf32> -> vector<2x28x90xf32>
    %cst_16 = arith.constant 0.000000e+00 : f32
    %72 = vector.broadcast %cst_16 : f32 to vector<2x1x90xf32>
    %73 = tpu.concatenate %72, %71, %72 in 1 : vector<2x1x90xf32>, vector<2x28x90xf32>, vector<2x1x90xf32> -> vector<2x30x90xf32>
    %c0_17 = arith.constant 0 : index
    %c0_18 = arith.constant 0 : index
    %74 = vector.load %arg4[%c0_17, %c0_18] : memref<1x84xf32, #tpu.memory_space<vmem>>, vector<1x84xf32>
    %75 = vector.shape_cast %74 : vector<1x84xf32> to vector<1x1x84xf32>
    %76 = vector.broadcast %75 : vector<1x1x84xf32> to vector<2x28x84xf32>
    %77 = vector.extract_strided_slice %73 {offsets = [0, 0, 0], sizes = [2, 30, 28], strides = [1, 1, 1]} : vector<2x30x90xf32> to vector<2x30x28xf32>
    %78 = tpu.concatenate %77, %77, %77 in 2 : vector<2x30x28xf32>, vector<2x30x28xf32>, vector<2x30x28xf32> -> vector<2x30x84xf32>
    %c0_19 = arith.constant 0 : index
    %c0_20 = arith.constant 0 : index
    %79 = vector.load %arg3[%c0_19, %c0_20] : memref<27x84xf32, #tpu.memory_space<vmem>>, vector<1x84xf32>
    %80 = vector.extract_strided_slice %78 {offsets = [0, 0, 0], sizes = [2, 28, 84], strides = [1, 1, 1]} : vector<2x30x84xf32> to vector<2x28x84xf32>
    %81 = vector.shape_cast %79 : vector<1x84xf32> to vector<1x1x84xf32>
    %82 = vector.broadcast %81 : vector<1x1x84xf32> to vector<2x28x84xf32>
    %83 = arith.mulf %82, %80 : vector<2x28x84xf32>
    %84 = arith.addf %76, %83 : vector<2x28x84xf32>
    %c3_21 = arith.constant 3 : index
    %c0_22 = arith.constant 0 : index
    %85 = vector.load %arg3[%c3_21, %c0_22] : memref<27x84xf32, #tpu.memory_space<vmem>>, vector<1x84xf32>
    %86 = vector.extract_strided_slice %78 {offsets = [0, 1, 0], sizes = [2, 28, 84], strides = [1, 1, 1]} : vector<2x30x84xf32> to vector<2x28x84xf32>
    %87 = vector.shape_cast %85 : vector<1x84xf32> to vector<1x1x84xf32>
    %88 = vector.broadcast %87 : vector<1x1x84xf32> to vector<2x28x84xf32>
    %89 = arith.mulf %88, %86 : vector<2x28x84xf32>
    %90 = arith.addf %84, %89 : vector<2x28x84xf32>
    %c6_23 = arith.constant 6 : index
    %c0_24 = arith.constant 0 : index
    %91 = vector.load %arg3[%c6_23, %c0_24] : memref<27x84xf32, #tpu.memory_space<vmem>>, vector<1x84xf32>
    %92 = vector.extract_strided_slice %78 {offsets = [0, 2, 0], sizes = [2, 28, 84], strides = [1, 1, 1]} : vector<2x30x84xf32> to vector<2x28x84xf32>
    %93 = vector.shape_cast %91 : vector<1x84xf32> to vector<1x1x84xf32>
    %94 = vector.broadcast %93 : vector<1x1x84xf32> to vector<2x28x84xf32>
    %95 = arith.mulf %94, %92 : vector<2x28x84xf32>
    %96 = arith.addf %90, %95 : vector<2x28x84xf32>
    %97 = vector.extract_strided_slice %73 {offsets = [0, 0, 1], sizes = [2, 30, 28], strides = [1, 1, 1]} : vector<2x30x90xf32> to vector<2x30x28xf32>
    %98 = tpu.concatenate %97, %97, %97 in 2 : vector<2x30x28xf32>, vector<2x30x28xf32>, vector<2x30x28xf32> -> vector<2x30x84xf32>
    %c1_25 = arith.constant 1 : index
    %c0_26 = arith.constant 0 : index
    %99 = vector.load %arg3[%c1_25, %c0_26] : memref<27x84xf32, #tpu.memory_space<vmem>>, vector<1x84xf32>
    %100 = vector.extract_strided_slice %98 {offsets = [0, 0, 0], sizes = [2, 28, 84], strides = [1, 1, 1]} : vector<2x30x84xf32> to vector<2x28x84xf32>
    %101 = vector.shape_cast %99 : vector<1x84xf32> to vector<1x1x84xf32>
    %102 = vector.broadcast %101 : vector<1x1x84xf32> to vector<2x28x84xf32>
    %103 = arith.mulf %102, %100 : vector<2x28x84xf32>
    %104 = arith.addf %96, %103 : vector<2x28x84xf32>
    %c4_27 = arith.constant 4 : index
    %c0_28 = arith.constant 0 : index
    %105 = vector.load %arg3[%c4_27, %c0_28] : memref<27x84xf32, #tpu.memory_space<vmem>>, vector<1x84xf32>
    %106 = vector.extract_strided_slice %98 {offsets = [0, 1, 0], sizes = [2, 28, 84], strides = [1, 1, 1]} : vector<2x30x84xf32> to vector<2x28x84xf32>
    %107 = vector.shape_cast %105 : vector<1x84xf32> to vector<1x1x84xf32>
    %108 = vector.broadcast %107 : vector<1x1x84xf32> to vector<2x28x84xf32>
    %109 = arith.mulf %108, %106 : vector<2x28x84xf32>
    %110 = arith.addf %104, %109 : vector<2x28x84xf32>
    %c7_29 = arith.constant 7 : index
    %c0_30 = arith.constant 0 : index
    %111 = vector.load %arg3[%c7_29, %c0_30] : memref<27x84xf32, #tpu.memory_space<vmem>>, vector<1x84xf32>
    %112 = vector.extract_strided_slice %98 {offsets = [0, 2, 0], sizes = [2, 28, 84], strides = [1, 1, 1]} : vector<2x30x84xf32> to vector<2x28x84xf32>
    %113 = vector.shape_cast %111 : vector<1x84xf32> to vector<1x1x84xf32>
    %114 = vector.broadcast %113 : vector<1x1x84xf32> to vector<2x28x84xf32>
    %115 = arith.mulf %114, %112 : vector<2x28x84xf32>
    %116 = arith.addf %110, %115 : vector<2x28x84xf32>
    %117 = vector.extract_strided_slice %73 {offsets = [0, 0, 2], sizes = [2, 30, 28], strides = [1, 1, 1]} : vector<2x30x90xf32> to vector<2x30x28xf32>
    %118 = tpu.concatenate %117, %117, %117 in 2 : vector<2x30x28xf32>, vector<2x30x28xf32>, vector<2x30x28xf32> -> vector<2x30x84xf32>
    %c2_31 = arith.constant 2 : index
    %c0_32 = arith.constant 0 : index
    %119 = vector.load %arg3[%c2_31, %c0_32] : memref<27x84xf32, #tpu.memory_space<vmem>>, vector<1x84xf32>
    %120 = vector.extract_strided_slice %118 {offsets = [0, 0, 0], sizes = [2, 28, 84], strides = [1, 1, 1]} : vector<2x30x84xf32> to vector<2x28x84xf32>
    %121 = vector.shape_cast %119 : vector<1x84xf32> to vector<1x1x84xf32>
    %122 = vector.broadcast %121 : vector<1x1x84xf32> to vector<2x28x84xf32>
    %123 = arith.mulf %122, %120 : vector<2x28x84xf32>
    %124 = arith.addf %116, %123 : vector<2x28x84xf32>
    %c5_33 = arith.constant 5 : index
    %c0_34 = arith.constant 0 : index
    %125 = vector.load %arg3[%c5_33, %c0_34] : memref<27x84xf32, #tpu.memory_space<vmem>>, vector<1x84xf32>
    %126 = vector.extract_strided_slice %118 {offsets = [0, 1, 0], sizes = [2, 28, 84], strides = [1, 1, 1]} : vector<2x30x84xf32> to vector<2x28x84xf32>
    %127 = vector.shape_cast %125 : vector<1x84xf32> to vector<1x1x84xf32>
    %128 = vector.broadcast %127 : vector<1x1x84xf32> to vector<2x28x84xf32>
    %129 = arith.mulf %128, %126 : vector<2x28x84xf32>
    %130 = arith.addf %124, %129 : vector<2x28x84xf32>
    %c8_35 = arith.constant 8 : index
    %c0_36 = arith.constant 0 : index
    %131 = vector.load %arg3[%c8_35, %c0_36] : memref<27x84xf32, #tpu.memory_space<vmem>>, vector<1x84xf32>
    %132 = vector.extract_strided_slice %118 {offsets = [0, 2, 0], sizes = [2, 28, 84], strides = [1, 1, 1]} : vector<2x30x84xf32> to vector<2x28x84xf32>
    %133 = vector.shape_cast %131 : vector<1x84xf32> to vector<1x1x84xf32>
    %134 = vector.broadcast %133 : vector<1x1x84xf32> to vector<2x28x84xf32>
    %135 = arith.mulf %134, %132 : vector<2x28x84xf32>
    %136 = arith.addf %130, %135 : vector<2x28x84xf32>
    %137 = vector.extract_strided_slice %73 {offsets = [0, 0, 30], sizes = [2, 30, 28], strides = [1, 1, 1]} : vector<2x30x90xf32> to vector<2x30x28xf32>
    %138 = tpu.concatenate %137, %137, %137 in 2 : vector<2x30x28xf32>, vector<2x30x28xf32>, vector<2x30x28xf32> -> vector<2x30x84xf32>
    %c9 = arith.constant 9 : index
    %c0_37 = arith.constant 0 : index
    %139 = vector.load %arg3[%c9, %c0_37] : memref<27x84xf32, #tpu.memory_space<vmem>>, vector<1x84xf32>
    %140 = vector.extract_strided_slice %138 {offsets = [0, 0, 0], sizes = [2, 28, 84], strides = [1, 1, 1]} : vector<2x30x84xf32> to vector<2x28x84xf32>
    %141 = vector.shape_cast %139 : vector<1x84xf32> to vector<1x1x84xf32>
    %142 = vector.broadcast %141 : vector<1x1x84xf32> to vector<2x28x84xf32>
    %143 = arith.mulf %142, %140 : vector<2x28x84xf32>
    %144 = arith.addf %136, %143 : vector<2x28x84xf32>
    %c12 = arith.constant 12 : index
    %c0_38 = arith.constant 0 : index
    %145 = vector.load %arg3[%c12, %c0_38] : memref<27x84xf32, #tpu.memory_space<vmem>>, vector<1x84xf32>
    %146 = vector.extract_strided_slice %138 {offsets = [0, 1, 0], sizes = [2, 28, 84], strides = [1, 1, 1]} : vector<2x30x84xf32> to vector<2x28x84xf32>
    %147 = vector.shape_cast %145 : vector<1x84xf32> to vector<1x1x84xf32>
    %148 = vector.broadcast %147 : vector<1x1x84xf32> to vector<2x28x84xf32>
    %149 = arith.mulf %148, %146 : vector<2x28x84xf32>
    %150 = arith.addf %144, %149 : vector<2x28x84xf32>
    %c15 = arith.constant 15 : index
    %c0_39 = arith.constant 0 : index
    %151 = vector.load %arg3[%c15, %c0_39] : memref<27x84xf32, #tpu.memory_space<vmem>>, vector<1x84xf32>
    %152 = vector.extract_strided_slice %138 {offsets = [0, 2, 0], sizes = [2, 28, 84], strides = [1, 1, 1]} : vector<2x30x84xf32> to vector<2x28x84xf32>
    %153 = vector.shape_cast %151 : vector<1x84xf32> to vector<1x1x84xf32>
    %154 = vector.broadcast %153 : vector<1x1x84xf32> to vector<2x28x84xf32>
    %155 = arith.mulf %154, %152 : vector<2x28x84xf32>
    %156 = arith.addf %150, %155 : vector<2x28x84xf32>
    %157 = vector.extract_strided_slice %73 {offsets = [0, 0, 31], sizes = [2, 30, 28], strides = [1, 1, 1]} : vector<2x30x90xf32> to vector<2x30x28xf32>
    %158 = tpu.concatenate %157, %157, %157 in 2 : vector<2x30x28xf32>, vector<2x30x28xf32>, vector<2x30x28xf32> -> vector<2x30x84xf32>
    %c10 = arith.constant 10 : index
    %c0_40 = arith.constant 0 : index
    %159 = vector.load %arg3[%c10, %c0_40] : memref<27x84xf32, #tpu.memory_space<vmem>>, vector<1x84xf32>
    %160 = vector.extract_strided_slice %158 {offsets = [0, 0, 0], sizes = [2, 28, 84], strides = [1, 1, 1]} : vector<2x30x84xf32> to vector<2x28x84xf32>
    %161 = vector.shape_cast %159 : vector<1x84xf32> to vector<1x1x84xf32>
    %162 = vector.broadcast %161 : vector<1x1x84xf32> to vector<2x28x84xf32>
    %163 = arith.mulf %162, %160 : vector<2x28x84xf32>
    %164 = arith.addf %156, %163 : vector<2x28x84xf32>
    %c13 = arith.constant 13 : index
    %c0_41 = arith.constant 0 : index
    %165 = vector.load %arg3[%c13, %c0_41] : memref<27x84xf32, #tpu.memory_space<vmem>>, vector<1x84xf32>
    %166 = vector.extract_strided_slice %158 {offsets = [0, 1, 0], sizes = [2, 28, 84], strides = [1, 1, 1]} : vector<2x30x84xf32> to vector<2x28x84xf32>
    %167 = vector.shape_cast %165 : vector<1x84xf32> to vector<1x1x84xf32>
    %168 = vector.broadcast %167 : vector<1x1x84xf32> to vector<2x28x84xf32>
    %169 = arith.mulf %168, %166 : vector<2x28x84xf32>
    %170 = arith.addf %164, %169 : vector<2x28x84xf32>
    %c16 = arith.constant 16 : index
    %c0_42 = arith.constant 0 : index
    %171 = vector.load %arg3[%c16, %c0_42] : memref<27x84xf32, #tpu.memory_space<vmem>>, vector<1x84xf32>
    %172 = vector.extract_strided_slice %158 {offsets = [0, 2, 0], sizes = [2, 28, 84], strides = [1, 1, 1]} : vector<2x30x84xf32> to vector<2x28x84xf32>
    %173 = vector.shape_cast %171 : vector<1x84xf32> to vector<1x1x84xf32>
    %174 = vector.broadcast %173 : vector<1x1x84xf32> to vector<2x28x84xf32>
    %175 = arith.mulf %174, %172 : vector<2x28x84xf32>
    %176 = arith.addf %170, %175 : vector<2x28x84xf32>
    %177 = vector.extract_strided_slice %73 {offsets = [0, 0, 32], sizes = [2, 30, 28], strides = [1, 1, 1]} : vector<2x30x90xf32> to vector<2x30x28xf32>
    %178 = tpu.concatenate %177, %177, %177 in 2 : vector<2x30x28xf32>, vector<2x30x28xf32>, vector<2x30x28xf32> -> vector<2x30x84xf32>
    %c11 = arith.constant 11 : index
    %c0_43 = arith.constant 0 : index
    %179 = vector.load %arg3[%c11, %c0_43] : memref<27x84xf32, #tpu.memory_space<vmem>>, vector<1x84xf32>
    %180 = vector.extract_strided_slice %178 {offsets = [0, 0, 0], sizes = [2, 28, 84], strides = [1, 1, 1]} : vector<2x30x84xf32> to vector<2x28x84xf32>
    %181 = vector.shape_cast %179 : vector<1x84xf32> to vector<1x1x84xf32>
    %182 = vector.broadcast %181 : vector<1x1x84xf32> to vector<2x28x84xf32>
    %183 = arith.mulf %182, %180 : vector<2x28x84xf32>
    %184 = arith.addf %176, %183 : vector<2x28x84xf32>
    %c14 = arith.constant 14 : index
    %c0_44 = arith.constant 0 : index
    %185 = vector.load %arg3[%c14, %c0_44] : memref<27x84xf32, #tpu.memory_space<vmem>>, vector<1x84xf32>
    %186 = vector.extract_strided_slice %178 {offsets = [0, 1, 0], sizes = [2, 28, 84], strides = [1, 1, 1]} : vector<2x30x84xf32> to vector<2x28x84xf32>
    %187 = vector.shape_cast %185 : vector<1x84xf32> to vector<1x1x84xf32>
    %188 = vector.broadcast %187 : vector<1x1x84xf32> to vector<2x28x84xf32>
    %189 = arith.mulf %188, %186 : vector<2x28x84xf32>
    %190 = arith.addf %184, %189 : vector<2x28x84xf32>
    %c17 = arith.constant 17 : index
    %c0_45 = arith.constant 0 : index
    %191 = vector.load %arg3[%c17, %c0_45] : memref<27x84xf32, #tpu.memory_space<vmem>>, vector<1x84xf32>
    %192 = vector.extract_strided_slice %178 {offsets = [0, 2, 0], sizes = [2, 28, 84], strides = [1, 1, 1]} : vector<2x30x84xf32> to vector<2x28x84xf32>
    %193 = vector.shape_cast %191 : vector<1x84xf32> to vector<1x1x84xf32>
    %194 = vector.broadcast %193 : vector<1x1x84xf32> to vector<2x28x84xf32>
    %195 = arith.mulf %194, %192 : vector<2x28x84xf32>
    %196 = arith.addf %190, %195 : vector<2x28x84xf32>
    %197 = vector.extract_strided_slice %73 {offsets = [0, 0, 60], sizes = [2, 30, 28], strides = [1, 1, 1]} : vector<2x30x90xf32> to vector<2x30x28xf32>
    %198 = tpu.concatenate %197, %197, %197 in 2 : vector<2x30x28xf32>, vector<2x30x28xf32>, vector<2x30x28xf32> -> vector<2x30x84xf32>
    %c18 = arith.constant 18 : index
    %c0_46 = arith.constant 0 : index
    %199 = vector.load %arg3[%c18, %c0_46] : memref<27x84xf32, #tpu.memory_space<vmem>>, vector<1x84xf32>
    %200 = vector.extract_strided_slice %198 {offsets = [0, 0, 0], sizes = [2, 28, 84], strides = [1, 1, 1]} : vector<2x30x84xf32> to vector<2x28x84xf32>
    %201 = vector.shape_cast %199 : vector<1x84xf32> to vector<1x1x84xf32>
    %202 = vector.broadcast %201 : vector<1x1x84xf32> to vector<2x28x84xf32>
    %203 = arith.mulf %202, %200 : vector<2x28x84xf32>
    %204 = arith.addf %196, %203 : vector<2x28x84xf32>
    %c21 = arith.constant 21 : index
    %c0_47 = arith.constant 0 : index
    %205 = vector.load %arg3[%c21, %c0_47] : memref<27x84xf32, #tpu.memory_space<vmem>>, vector<1x84xf32>
    %206 = vector.extract_strided_slice %198 {offsets = [0, 1, 0], sizes = [2, 28, 84], strides = [1, 1, 1]} : vector<2x30x84xf32> to vector<2x28x84xf32>
    %207 = vector.shape_cast %205 : vector<1x84xf32> to vector<1x1x84xf32>
    %208 = vector.broadcast %207 : vector<1x1x84xf32> to vector<2x28x84xf32>
    %209 = arith.mulf %208, %206 : vector<2x28x84xf32>
    %210 = arith.addf %204, %209 : vector<2x28x84xf32>
    %c24 = arith.constant 24 : index
    %c0_48 = arith.constant 0 : index
    %211 = vector.load %arg3[%c24, %c0_48] : memref<27x84xf32, #tpu.memory_space<vmem>>, vector<1x84xf32>
    %212 = vector.extract_strided_slice %198 {offsets = [0, 2, 0], sizes = [2, 28, 84], strides = [1, 1, 1]} : vector<2x30x84xf32> to vector<2x28x84xf32>
    %213 = vector.shape_cast %211 : vector<1x84xf32> to vector<1x1x84xf32>
    %214 = vector.broadcast %213 : vector<1x1x84xf32> to vector<2x28x84xf32>
    %215 = arith.mulf %214, %212 : vector<2x28x84xf32>
    %216 = arith.addf %210, %215 : vector<2x28x84xf32>
    %217 = vector.extract_strided_slice %73 {offsets = [0, 0, 61], sizes = [2, 30, 28], strides = [1, 1, 1]} : vector<2x30x90xf32> to vector<2x30x28xf32>
    %218 = tpu.concatenate %217, %217, %217 in 2 : vector<2x30x28xf32>, vector<2x30x28xf32>, vector<2x30x28xf32> -> vector<2x30x84xf32>
    %c19 = arith.constant 19 : index
    %c0_49 = arith.constant 0 : index
    %219 = vector.load %arg3[%c19, %c0_49] : memref<27x84xf32, #tpu.memory_space<vmem>>, vector<1x84xf32>
    %220 = vector.extract_strided_slice %218 {offsets = [0, 0, 0], sizes = [2, 28, 84], strides = [1, 1, 1]} : vector<2x30x84xf32> to vector<2x28x84xf32>
    %221 = vector.shape_cast %219 : vector<1x84xf32> to vector<1x1x84xf32>
    %222 = vector.broadcast %221 : vector<1x1x84xf32> to vector<2x28x84xf32>
    %223 = arith.mulf %222, %220 : vector<2x28x84xf32>
    %224 = arith.addf %216, %223 : vector<2x28x84xf32>
    %c22 = arith.constant 22 : index
    %c0_50 = arith.constant 0 : index
    %225 = vector.load %arg3[%c22, %c0_50] : memref<27x84xf32, #tpu.memory_space<vmem>>, vector<1x84xf32>
    %226 = vector.extract_strided_slice %218 {offsets = [0, 1, 0], sizes = [2, 28, 84], strides = [1, 1, 1]} : vector<2x30x84xf32> to vector<2x28x84xf32>
    %227 = vector.shape_cast %225 : vector<1x84xf32> to vector<1x1x84xf32>
    %228 = vector.broadcast %227 : vector<1x1x84xf32> to vector<2x28x84xf32>
    %229 = arith.mulf %228, %226 : vector<2x28x84xf32>
    %230 = arith.addf %224, %229 : vector<2x28x84xf32>
    %c25 = arith.constant 25 : index
    %c0_51 = arith.constant 0 : index
    %231 = vector.load %arg3[%c25, %c0_51] : memref<27x84xf32, #tpu.memory_space<vmem>>, vector<1x84xf32>
    %232 = vector.extract_strided_slice %218 {offsets = [0, 2, 0], sizes = [2, 28, 84], strides = [1, 1, 1]} : vector<2x30x84xf32> to vector<2x28x84xf32>
    %233 = vector.shape_cast %231 : vector<1x84xf32> to vector<1x1x84xf32>
    %234 = vector.broadcast %233 : vector<1x1x84xf32> to vector<2x28x84xf32>
    %235 = arith.mulf %234, %232 : vector<2x28x84xf32>
    %236 = arith.addf %230, %235 : vector<2x28x84xf32>
    %237 = vector.extract_strided_slice %73 {offsets = [0, 0, 62], sizes = [2, 30, 28], strides = [1, 1, 1]} : vector<2x30x90xf32> to vector<2x30x28xf32>
    %238 = tpu.concatenate %237, %237, %237 in 2 : vector<2x30x28xf32>, vector<2x30x28xf32>, vector<2x30x28xf32> -> vector<2x30x84xf32>
    %c20 = arith.constant 20 : index
    %c0_52 = arith.constant 0 : index
    %239 = vector.load %arg3[%c20, %c0_52] : memref<27x84xf32, #tpu.memory_space<vmem>>, vector<1x84xf32>
    %240 = vector.extract_strided_slice %238 {offsets = [0, 0, 0], sizes = [2, 28, 84], strides = [1, 1, 1]} : vector<2x30x84xf32> to vector<2x28x84xf32>
    %241 = vector.shape_cast %239 : vector<1x84xf32> to vector<1x1x84xf32>
    %242 = vector.broadcast %241 : vector<1x1x84xf32> to vector<2x28x84xf32>
    %243 = arith.mulf %242, %240 : vector<2x28x84xf32>
    %244 = arith.addf %236, %243 : vector<2x28x84xf32>
    %c23 = arith.constant 23 : index
    %c0_53 = arith.constant 0 : index
    %245 = vector.load %arg3[%c23, %c0_53] : memref<27x84xf32, #tpu.memory_space<vmem>>, vector<1x84xf32>
    %246 = vector.extract_strided_slice %238 {offsets = [0, 1, 0], sizes = [2, 28, 84], strides = [1, 1, 1]} : vector<2x30x84xf32> to vector<2x28x84xf32>
    %247 = vector.shape_cast %245 : vector<1x84xf32> to vector<1x1x84xf32>
    %248 = vector.broadcast %247 : vector<1x1x84xf32> to vector<2x28x84xf32>
    %249 = arith.mulf %248, %246 : vector<2x28x84xf32>
    %250 = arith.addf %244, %249 : vector<2x28x84xf32>
    %c26 = arith.constant 26 : index
    %c0_54 = arith.constant 0 : index
    %251 = vector.load %arg3[%c26, %c0_54] : memref<27x84xf32, #tpu.memory_space<vmem>>, vector<1x84xf32>
    %252 = vector.extract_strided_slice %238 {offsets = [0, 2, 0], sizes = [2, 28, 84], strides = [1, 1, 1]} : vector<2x30x84xf32> to vector<2x28x84xf32>
    %253 = vector.shape_cast %251 : vector<1x84xf32> to vector<1x1x84xf32>
    %254 = vector.broadcast %253 : vector<1x1x84xf32> to vector<2x28x84xf32>
    %255 = arith.mulf %254, %252 : vector<2x28x84xf32>
    %256 = arith.addf %250, %255 : vector<2x28x84xf32>
    %cst_55 = arith.constant 0.000000e+00 : f32
    %257 = vector.broadcast %cst_55 : f32 to vector<2x28x84xf32>
    %258 = arith.maximumf %256, %257 : vector<2x28x84xf32>
    %259 = arith.addf %65, %258 : vector<2x28x84xf32>
    %c0_56 = arith.constant 0 : index
    %c0_57 = arith.constant 0 : index
    %260 = vector.load %arg6[%c0_56, %c0_57] : memref<1x78xf32, #tpu.memory_space<vmem>>, vector<1x78xf32>
    %261 = vector.shape_cast %260 : vector<1x78xf32> to vector<1x1x78xf32>
    %262 = vector.broadcast %261 : vector<1x1x78xf32> to vector<2x26x78xf32>
    %263 = vector.extract_strided_slice %259 {offsets = [0, 0, 0], sizes = [2, 28, 26], strides = [1, 1, 1]} : vector<2x28x84xf32> to vector<2x28x26xf32>
    %264 = tpu.concatenate %263, %263, %263 in 2 : vector<2x28x26xf32>, vector<2x28x26xf32>, vector<2x28x26xf32> -> vector<2x28x78xf32>
    %c0_58 = arith.constant 0 : index
    %c0_59 = arith.constant 0 : index
    %265 = vector.load %arg5[%c0_58, %c0_59] : memref<27x78xf32, #tpu.memory_space<vmem>>, vector<1x78xf32>
    %266 = vector.extract_strided_slice %264 {offsets = [0, 0, 0], sizes = [2, 26, 78], strides = [1, 1, 1]} : vector<2x28x78xf32> to vector<2x26x78xf32>
    %267 = vector.shape_cast %265 : vector<1x78xf32> to vector<1x1x78xf32>
    %268 = vector.broadcast %267 : vector<1x1x78xf32> to vector<2x26x78xf32>
    %269 = arith.mulf %268, %266 : vector<2x26x78xf32>
    %270 = arith.addf %262, %269 : vector<2x26x78xf32>
    %c3_60 = arith.constant 3 : index
    %c0_61 = arith.constant 0 : index
    %271 = vector.load %arg5[%c3_60, %c0_61] : memref<27x78xf32, #tpu.memory_space<vmem>>, vector<1x78xf32>
    %272 = vector.extract_strided_slice %264 {offsets = [0, 1, 0], sizes = [2, 26, 78], strides = [1, 1, 1]} : vector<2x28x78xf32> to vector<2x26x78xf32>
    %273 = vector.shape_cast %271 : vector<1x78xf32> to vector<1x1x78xf32>
    %274 = vector.broadcast %273 : vector<1x1x78xf32> to vector<2x26x78xf32>
    %275 = arith.mulf %274, %272 : vector<2x26x78xf32>
    %276 = arith.addf %270, %275 : vector<2x26x78xf32>
    %c6_62 = arith.constant 6 : index
    %c0_63 = arith.constant 0 : index
    %277 = vector.load %arg5[%c6_62, %c0_63] : memref<27x78xf32, #tpu.memory_space<vmem>>, vector<1x78xf32>
    %278 = vector.extract_strided_slice %264 {offsets = [0, 2, 0], sizes = [2, 26, 78], strides = [1, 1, 1]} : vector<2x28x78xf32> to vector<2x26x78xf32>
    %279 = vector.shape_cast %277 : vector<1x78xf32> to vector<1x1x78xf32>
    %280 = vector.broadcast %279 : vector<1x1x78xf32> to vector<2x26x78xf32>
    %281 = arith.mulf %280, %278 : vector<2x26x78xf32>
    %282 = arith.addf %276, %281 : vector<2x26x78xf32>
    %283 = vector.extract_strided_slice %259 {offsets = [0, 0, 1], sizes = [2, 28, 26], strides = [1, 1, 1]} : vector<2x28x84xf32> to vector<2x28x26xf32>
    %284 = tpu.concatenate %283, %283, %283 in 2 : vector<2x28x26xf32>, vector<2x28x26xf32>, vector<2x28x26xf32> -> vector<2x28x78xf32>
    %c1_64 = arith.constant 1 : index
    %c0_65 = arith.constant 0 : index
    %285 = vector.load %arg5[%c1_64, %c0_65] : memref<27x78xf32, #tpu.memory_space<vmem>>, vector<1x78xf32>
    %286 = vector.extract_strided_slice %284 {offsets = [0, 0, 0], sizes = [2, 26, 78], strides = [1, 1, 1]} : vector<2x28x78xf32> to vector<2x26x78xf32>
    %287 = vector.shape_cast %285 : vector<1x78xf32> to vector<1x1x78xf32>
    %288 = vector.broadcast %287 : vector<1x1x78xf32> to vector<2x26x78xf32>
    %289 = arith.mulf %288, %286 : vector<2x26x78xf32>
    %290 = arith.addf %282, %289 : vector<2x26x78xf32>
    %c4_66 = arith.constant 4 : index
    %c0_67 = arith.constant 0 : index
    %291 = vector.load %arg5[%c4_66, %c0_67] : memref<27x78xf32, #tpu.memory_space<vmem>>, vector<1x78xf32>
    %292 = vector.extract_strided_slice %284 {offsets = [0, 1, 0], sizes = [2, 26, 78], strides = [1, 1, 1]} : vector<2x28x78xf32> to vector<2x26x78xf32>
    %293 = vector.shape_cast %291 : vector<1x78xf32> to vector<1x1x78xf32>
    %294 = vector.broadcast %293 : vector<1x1x78xf32> to vector<2x26x78xf32>
    %295 = arith.mulf %294, %292 : vector<2x26x78xf32>
    %296 = arith.addf %290, %295 : vector<2x26x78xf32>
    %c7_68 = arith.constant 7 : index
    %c0_69 = arith.constant 0 : index
    %297 = vector.load %arg5[%c7_68, %c0_69] : memref<27x78xf32, #tpu.memory_space<vmem>>, vector<1x78xf32>
    %298 = vector.extract_strided_slice %284 {offsets = [0, 2, 0], sizes = [2, 26, 78], strides = [1, 1, 1]} : vector<2x28x78xf32> to vector<2x26x78xf32>
    %299 = vector.shape_cast %297 : vector<1x78xf32> to vector<1x1x78xf32>
    %300 = vector.broadcast %299 : vector<1x1x78xf32> to vector<2x26x78xf32>
    %301 = arith.mulf %300, %298 : vector<2x26x78xf32>
    %302 = arith.addf %296, %301 : vector<2x26x78xf32>
    %303 = vector.extract_strided_slice %259 {offsets = [0, 0, 2], sizes = [2, 28, 26], strides = [1, 1, 1]} : vector<2x28x84xf32> to vector<2x28x26xf32>
    %304 = tpu.concatenate %303, %303, %303 in 2 : vector<2x28x26xf32>, vector<2x28x26xf32>, vector<2x28x26xf32> -> vector<2x28x78xf32>
    %c2_70 = arith.constant 2 : index
    %c0_71 = arith.constant 0 : index
    %305 = vector.load %arg5[%c2_70, %c0_71] : memref<27x78xf32, #tpu.memory_space<vmem>>, vector<1x78xf32>
    %306 = vector.extract_strided_slice %304 {offsets = [0, 0, 0], sizes = [2, 26, 78], strides = [1, 1, 1]} : vector<2x28x78xf32> to vector<2x26x78xf32>
    %307 = vector.shape_cast %305 : vector<1x78xf32> to vector<1x1x78xf32>
    %308 = vector.broadcast %307 : vector<1x1x78xf32> to vector<2x26x78xf32>
    %309 = arith.mulf %308, %306 : vector<2x26x78xf32>
    %310 = arith.addf %302, %309 : vector<2x26x78xf32>
    %c5_72 = arith.constant 5 : index
    %c0_73 = arith.constant 0 : index
    %311 = vector.load %arg5[%c5_72, %c0_73] : memref<27x78xf32, #tpu.memory_space<vmem>>, vector<1x78xf32>
    %312 = vector.extract_strided_slice %304 {offsets = [0, 1, 0], sizes = [2, 26, 78], strides = [1, 1, 1]} : vector<2x28x78xf32> to vector<2x26x78xf32>
    %313 = vector.shape_cast %311 : vector<1x78xf32> to vector<1x1x78xf32>
    %314 = vector.broadcast %313 : vector<1x1x78xf32> to vector<2x26x78xf32>
    %315 = arith.mulf %314, %312 : vector<2x26x78xf32>
    %316 = arith.addf %310, %315 : vector<2x26x78xf32>
    %c8_74 = arith.constant 8 : index
    %c0_75 = arith.constant 0 : index
    %317 = vector.load %arg5[%c8_74, %c0_75] : memref<27x78xf32, #tpu.memory_space<vmem>>, vector<1x78xf32>
    %318 = vector.extract_strided_slice %304 {offsets = [0, 2, 0], sizes = [2, 26, 78], strides = [1, 1, 1]} : vector<2x28x78xf32> to vector<2x26x78xf32>
    %319 = vector.shape_cast %317 : vector<1x78xf32> to vector<1x1x78xf32>
    %320 = vector.broadcast %319 : vector<1x1x78xf32> to vector<2x26x78xf32>
    %321 = arith.mulf %320, %318 : vector<2x26x78xf32>
    %322 = arith.addf %316, %321 : vector<2x26x78xf32>
    %323 = vector.extract_strided_slice %259 {offsets = [0, 0, 28], sizes = [2, 28, 26], strides = [1, 1, 1]} : vector<2x28x84xf32> to vector<2x28x26xf32>
    %324 = tpu.concatenate %323, %323, %323 in 2 : vector<2x28x26xf32>, vector<2x28x26xf32>, vector<2x28x26xf32> -> vector<2x28x78xf32>
    %c9_76 = arith.constant 9 : index
    %c0_77 = arith.constant 0 : index
    %325 = vector.load %arg5[%c9_76, %c0_77] : memref<27x78xf32, #tpu.memory_space<vmem>>, vector<1x78xf32>
    %326 = vector.extract_strided_slice %324 {offsets = [0, 0, 0], sizes = [2, 26, 78], strides = [1, 1, 1]} : vector<2x28x78xf32> to vector<2x26x78xf32>
    %327 = vector.shape_cast %325 : vector<1x78xf32> to vector<1x1x78xf32>
    %328 = vector.broadcast %327 : vector<1x1x78xf32> to vector<2x26x78xf32>
    %329 = arith.mulf %328, %326 : vector<2x26x78xf32>
    %330 = arith.addf %322, %329 : vector<2x26x78xf32>
    %c12_78 = arith.constant 12 : index
    %c0_79 = arith.constant 0 : index
    %331 = vector.load %arg5[%c12_78, %c0_79] : memref<27x78xf32, #tpu.memory_space<vmem>>, vector<1x78xf32>
    %332 = vector.extract_strided_slice %324 {offsets = [0, 1, 0], sizes = [2, 26, 78], strides = [1, 1, 1]} : vector<2x28x78xf32> to vector<2x26x78xf32>
    %333 = vector.shape_cast %331 : vector<1x78xf32> to vector<1x1x78xf32>
    %334 = vector.broadcast %333 : vector<1x1x78xf32> to vector<2x26x78xf32>
    %335 = arith.mulf %334, %332 : vector<2x26x78xf32>
    %336 = arith.addf %330, %335 : vector<2x26x78xf32>
    %c15_80 = arith.constant 15 : index
    %c0_81 = arith.constant 0 : index
    %337 = vector.load %arg5[%c15_80, %c0_81] : memref<27x78xf32, #tpu.memory_space<vmem>>, vector<1x78xf32>
    %338 = vector.extract_strided_slice %324 {offsets = [0, 2, 0], sizes = [2, 26, 78], strides = [1, 1, 1]} : vector<2x28x78xf32> to vector<2x26x78xf32>
    %339 = vector.shape_cast %337 : vector<1x78xf32> to vector<1x1x78xf32>
    %340 = vector.broadcast %339 : vector<1x1x78xf32> to vector<2x26x78xf32>
    %341 = arith.mulf %340, %338 : vector<2x26x78xf32>
    %342 = arith.addf %336, %341 : vector<2x26x78xf32>
    %343 = vector.extract_strided_slice %259 {offsets = [0, 0, 29], sizes = [2, 28, 26], strides = [1, 1, 1]} : vector<2x28x84xf32> to vector<2x28x26xf32>
    %344 = tpu.concatenate %343, %343, %343 in 2 : vector<2x28x26xf32>, vector<2x28x26xf32>, vector<2x28x26xf32> -> vector<2x28x78xf32>
    %c10_82 = arith.constant 10 : index
    %c0_83 = arith.constant 0 : index
    %345 = vector.load %arg5[%c10_82, %c0_83] : memref<27x78xf32, #tpu.memory_space<vmem>>, vector<1x78xf32>
    %346 = vector.extract_strided_slice %344 {offsets = [0, 0, 0], sizes = [2, 26, 78], strides = [1, 1, 1]} : vector<2x28x78xf32> to vector<2x26x78xf32>
    %347 = vector.shape_cast %345 : vector<1x78xf32> to vector<1x1x78xf32>
    %348 = vector.broadcast %347 : vector<1x1x78xf32> to vector<2x26x78xf32>
    %349 = arith.mulf %348, %346 : vector<2x26x78xf32>
    %350 = arith.addf %342, %349 : vector<2x26x78xf32>
    %c13_84 = arith.constant 13 : index
    %c0_85 = arith.constant 0 : index
    %351 = vector.load %arg5[%c13_84, %c0_85] : memref<27x78xf32, #tpu.memory_space<vmem>>, vector<1x78xf32>
    %352 = vector.extract_strided_slice %344 {offsets = [0, 1, 0], sizes = [2, 26, 78], strides = [1, 1, 1]} : vector<2x28x78xf32> to vector<2x26x78xf32>
    %353 = vector.shape_cast %351 : vector<1x78xf32> to vector<1x1x78xf32>
    %354 = vector.broadcast %353 : vector<1x1x78xf32> to vector<2x26x78xf32>
    %355 = arith.mulf %354, %352 : vector<2x26x78xf32>
    %356 = arith.addf %350, %355 : vector<2x26x78xf32>
    %c16_86 = arith.constant 16 : index
    %c0_87 = arith.constant 0 : index
    %357 = vector.load %arg5[%c16_86, %c0_87] : memref<27x78xf32, #tpu.memory_space<vmem>>, vector<1x78xf32>
    %358 = vector.extract_strided_slice %344 {offsets = [0, 2, 0], sizes = [2, 26, 78], strides = [1, 1, 1]} : vector<2x28x78xf32> to vector<2x26x78xf32>
    %359 = vector.shape_cast %357 : vector<1x78xf32> to vector<1x1x78xf32>
    %360 = vector.broadcast %359 : vector<1x1x78xf32> to vector<2x26x78xf32>
    %361 = arith.mulf %360, %358 : vector<2x26x78xf32>
    %362 = arith.addf %356, %361 : vector<2x26x78xf32>
    %363 = vector.extract_strided_slice %259 {offsets = [0, 0, 30], sizes = [2, 28, 26], strides = [1, 1, 1]} : vector<2x28x84xf32> to vector<2x28x26xf32>
    %364 = tpu.concatenate %363, %363, %363 in 2 : vector<2x28x26xf32>, vector<2x28x26xf32>, vector<2x28x26xf32> -> vector<2x28x78xf32>
    %c11_88 = arith.constant 11 : index
    %c0_89 = arith.constant 0 : index
    %365 = vector.load %arg5[%c11_88, %c0_89] : memref<27x78xf32, #tpu.memory_space<vmem>>, vector<1x78xf32>
    %366 = vector.extract_strided_slice %364 {offsets = [0, 0, 0], sizes = [2, 26, 78], strides = [1, 1, 1]} : vector<2x28x78xf32> to vector<2x26x78xf32>
    %367 = vector.shape_cast %365 : vector<1x78xf32> to vector<1x1x78xf32>
    %368 = vector.broadcast %367 : vector<1x1x78xf32> to vector<2x26x78xf32>
    %369 = arith.mulf %368, %366 : vector<2x26x78xf32>
    %370 = arith.addf %362, %369 : vector<2x26x78xf32>
    %c14_90 = arith.constant 14 : index
    %c0_91 = arith.constant 0 : index
    %371 = vector.load %arg5[%c14_90, %c0_91] : memref<27x78xf32, #tpu.memory_space<vmem>>, vector<1x78xf32>
    %372 = vector.extract_strided_slice %364 {offsets = [0, 1, 0], sizes = [2, 26, 78], strides = [1, 1, 1]} : vector<2x28x78xf32> to vector<2x26x78xf32>
    %373 = vector.shape_cast %371 : vector<1x78xf32> to vector<1x1x78xf32>
    %374 = vector.broadcast %373 : vector<1x1x78xf32> to vector<2x26x78xf32>
    %375 = arith.mulf %374, %372 : vector<2x26x78xf32>
    %376 = arith.addf %370, %375 : vector<2x26x78xf32>
    %c17_92 = arith.constant 17 : index
    %c0_93 = arith.constant 0 : index
    %377 = vector.load %arg5[%c17_92, %c0_93] : memref<27x78xf32, #tpu.memory_space<vmem>>, vector<1x78xf32>
    %378 = vector.extract_strided_slice %364 {offsets = [0, 2, 0], sizes = [2, 26, 78], strides = [1, 1, 1]} : vector<2x28x78xf32> to vector<2x26x78xf32>
    %379 = vector.shape_cast %377 : vector<1x78xf32> to vector<1x1x78xf32>
    %380 = vector.broadcast %379 : vector<1x1x78xf32> to vector<2x26x78xf32>
    %381 = arith.mulf %380, %378 : vector<2x26x78xf32>
    %382 = arith.addf %376, %381 : vector<2x26x78xf32>
    %383 = vector.extract_strided_slice %259 {offsets = [0, 0, 56], sizes = [2, 28, 26], strides = [1, 1, 1]} : vector<2x28x84xf32> to vector<2x28x26xf32>
    %384 = tpu.concatenate %383, %383, %383 in 2 : vector<2x28x26xf32>, vector<2x28x26xf32>, vector<2x28x26xf32> -> vector<2x28x78xf32>
    %c18_94 = arith.constant 18 : index
    %c0_95 = arith.constant 0 : index
    %385 = vector.load %arg5[%c18_94, %c0_95] : memref<27x78xf32, #tpu.memory_space<vmem>>, vector<1x78xf32>
    %386 = vector.extract_strided_slice %384 {offsets = [0, 0, 0], sizes = [2, 26, 78], strides = [1, 1, 1]} : vector<2x28x78xf32> to vector<2x26x78xf32>
    %387 = vector.shape_cast %385 : vector<1x78xf32> to vector<1x1x78xf32>
    %388 = vector.broadcast %387 : vector<1x1x78xf32> to vector<2x26x78xf32>
    %389 = arith.mulf %388, %386 : vector<2x26x78xf32>
    %390 = arith.addf %382, %389 : vector<2x26x78xf32>
    %c21_96 = arith.constant 21 : index
    %c0_97 = arith.constant 0 : index
    %391 = vector.load %arg5[%c21_96, %c0_97] : memref<27x78xf32, #tpu.memory_space<vmem>>, vector<1x78xf32>
    %392 = vector.extract_strided_slice %384 {offsets = [0, 1, 0], sizes = [2, 26, 78], strides = [1, 1, 1]} : vector<2x28x78xf32> to vector<2x26x78xf32>
    %393 = vector.shape_cast %391 : vector<1x78xf32> to vector<1x1x78xf32>
    %394 = vector.broadcast %393 : vector<1x1x78xf32> to vector<2x26x78xf32>
    %395 = arith.mulf %394, %392 : vector<2x26x78xf32>
    %396 = arith.addf %390, %395 : vector<2x26x78xf32>
    %c24_98 = arith.constant 24 : index
    %c0_99 = arith.constant 0 : index
    %397 = vector.load %arg5[%c24_98, %c0_99] : memref<27x78xf32, #tpu.memory_space<vmem>>, vector<1x78xf32>
    %398 = vector.extract_strided_slice %384 {offsets = [0, 2, 0], sizes = [2, 26, 78], strides = [1, 1, 1]} : vector<2x28x78xf32> to vector<2x26x78xf32>
    %399 = vector.shape_cast %397 : vector<1x78xf32> to vector<1x1x78xf32>
    %400 = vector.broadcast %399 : vector<1x1x78xf32> to vector<2x26x78xf32>
    %401 = arith.mulf %400, %398 : vector<2x26x78xf32>
    %402 = arith.addf %396, %401 : vector<2x26x78xf32>
    %403 = vector.extract_strided_slice %259 {offsets = [0, 0, 57], sizes = [2, 28, 26], strides = [1, 1, 1]} : vector<2x28x84xf32> to vector<2x28x26xf32>
    %404 = tpu.concatenate %403, %403, %403 in 2 : vector<2x28x26xf32>, vector<2x28x26xf32>, vector<2x28x26xf32> -> vector<2x28x78xf32>
    %c19_100 = arith.constant 19 : index
    %c0_101 = arith.constant 0 : index
    %405 = vector.load %arg5[%c19_100, %c0_101] : memref<27x78xf32, #tpu.memory_space<vmem>>, vector<1x78xf32>
    %406 = vector.extract_strided_slice %404 {offsets = [0, 0, 0], sizes = [2, 26, 78], strides = [1, 1, 1]} : vector<2x28x78xf32> to vector<2x26x78xf32>
    %407 = vector.shape_cast %405 : vector<1x78xf32> to vector<1x1x78xf32>
    %408 = vector.broadcast %407 : vector<1x1x78xf32> to vector<2x26x78xf32>
    %409 = arith.mulf %408, %406 : vector<2x26x78xf32>
    %410 = arith.addf %402, %409 : vector<2x26x78xf32>
    %c22_102 = arith.constant 22 : index
    %c0_103 = arith.constant 0 : index
    %411 = vector.load %arg5[%c22_102, %c0_103] : memref<27x78xf32, #tpu.memory_space<vmem>>, vector<1x78xf32>
    %412 = vector.extract_strided_slice %404 {offsets = [0, 1, 0], sizes = [2, 26, 78], strides = [1, 1, 1]} : vector<2x28x78xf32> to vector<2x26x78xf32>
    %413 = vector.shape_cast %411 : vector<1x78xf32> to vector<1x1x78xf32>
    %414 = vector.broadcast %413 : vector<1x1x78xf32> to vector<2x26x78xf32>
    %415 = arith.mulf %414, %412 : vector<2x26x78xf32>
    %416 = arith.addf %410, %415 : vector<2x26x78xf32>
    %c25_104 = arith.constant 25 : index
    %c0_105 = arith.constant 0 : index
    %417 = vector.load %arg5[%c25_104, %c0_105] : memref<27x78xf32, #tpu.memory_space<vmem>>, vector<1x78xf32>
    %418 = vector.extract_strided_slice %404 {offsets = [0, 2, 0], sizes = [2, 26, 78], strides = [1, 1, 1]} : vector<2x28x78xf32> to vector<2x26x78xf32>
    %419 = vector.shape_cast %417 : vector<1x78xf32> to vector<1x1x78xf32>
    %420 = vector.broadcast %419 : vector<1x1x78xf32> to vector<2x26x78xf32>
    %421 = arith.mulf %420, %418 : vector<2x26x78xf32>
    %422 = arith.addf %416, %421 : vector<2x26x78xf32>
    %423 = vector.extract_strided_slice %259 {offsets = [0, 0, 58], sizes = [2, 28, 26], strides = [1, 1, 1]} : vector<2x28x84xf32> to vector<2x28x26xf32>
    %424 = tpu.concatenate %423, %423, %423 in 2 : vector<2x28x26xf32>, vector<2x28x26xf32>, vector<2x28x26xf32> -> vector<2x28x78xf32>
    %c20_106 = arith.constant 20 : index
    %c0_107 = arith.constant 0 : index
    %425 = vector.load %arg5[%c20_106, %c0_107] : memref<27x78xf32, #tpu.memory_space<vmem>>, vector<1x78xf32>
    %426 = vector.extract_strided_slice %424 {offsets = [0, 0, 0], sizes = [2, 26, 78], strides = [1, 1, 1]} : vector<2x28x78xf32> to vector<2x26x78xf32>
    %427 = vector.shape_cast %425 : vector<1x78xf32> to vector<1x1x78xf32>
    %428 = vector.broadcast %427 : vector<1x1x78xf32> to vector<2x26x78xf32>
    %429 = arith.mulf %428, %426 : vector<2x26x78xf32>
    %430 = arith.addf %422, %429 : vector<2x26x78xf32>
    %c23_108 = arith.constant 23 : index
    %c0_109 = arith.constant 0 : index
    %431 = vector.load %arg5[%c23_108, %c0_109] : memref<27x78xf32, #tpu.memory_space<vmem>>, vector<1x78xf32>
    %432 = vector.extract_strided_slice %424 {offsets = [0, 1, 0], sizes = [2, 26, 78], strides = [1, 1, 1]} : vector<2x28x78xf32> to vector<2x26x78xf32>
    %433 = vector.shape_cast %431 : vector<1x78xf32> to vector<1x1x78xf32>
    %434 = vector.broadcast %433 : vector<1x1x78xf32> to vector<2x26x78xf32>
    %435 = arith.mulf %434, %432 : vector<2x26x78xf32>
    %436 = arith.addf %430, %435 : vector<2x26x78xf32>
    %c26_110 = arith.constant 26 : index
    %c0_111 = arith.constant 0 : index
    %437 = vector.load %arg5[%c26_110, %c0_111] : memref<27x78xf32, #tpu.memory_space<vmem>>, vector<1x78xf32>
    %438 = vector.extract_strided_slice %424 {offsets = [0, 2, 0], sizes = [2, 26, 78], strides = [1, 1, 1]} : vector<2x28x78xf32> to vector<2x26x78xf32>
    %439 = vector.shape_cast %437 : vector<1x78xf32> to vector<1x1x78xf32>
    %440 = vector.broadcast %439 : vector<1x1x78xf32> to vector<2x26x78xf32>
    %441 = arith.mulf %440, %438 : vector<2x26x78xf32>
    %442 = arith.addf %436, %441 : vector<2x26x78xf32>
    %cst_112 = arith.constant 0.000000e+00 : f32
    %443 = vector.broadcast %cst_112 : f32 to vector<2x26x78xf32>
    %444 = arith.maximumf %442, %443 : vector<2x26x78xf32>
    %c0_113 = arith.constant 0 : index
    %c0_114 = arith.constant 0 : index
    %445 = vector.load %arg8[%c0_113, %c0_114] : memref<1x72xf32, #tpu.memory_space<vmem>>, vector<1x72xf32>
    %446 = vector.shape_cast %445 : vector<1x72xf32> to vector<1x1x72xf32>
    %447 = vector.broadcast %446 : vector<1x1x72xf32> to vector<2x24x72xf32>
    %448 = vector.extract_strided_slice %444 {offsets = [0, 0, 0], sizes = [2, 26, 24], strides = [1, 1, 1]} : vector<2x26x78xf32> to vector<2x26x24xf32>
    %449 = tpu.concatenate %448, %448, %448 in 2 : vector<2x26x24xf32>, vector<2x26x24xf32>, vector<2x26x24xf32> -> vector<2x26x72xf32>
    %c0_115 = arith.constant 0 : index
    %c0_116 = arith.constant 0 : index
    %450 = vector.load %arg7[%c0_115, %c0_116] : memref<27x72xf32, #tpu.memory_space<vmem>>, vector<1x72xf32>
    %451 = vector.extract_strided_slice %449 {offsets = [0, 0, 0], sizes = [2, 24, 72], strides = [1, 1, 1]} : vector<2x26x72xf32> to vector<2x24x72xf32>
    %452 = vector.shape_cast %450 : vector<1x72xf32> to vector<1x1x72xf32>
    %453 = vector.broadcast %452 : vector<1x1x72xf32> to vector<2x24x72xf32>
    %454 = arith.mulf %453, %451 : vector<2x24x72xf32>
    %455 = arith.addf %447, %454 : vector<2x24x72xf32>
    %c3_117 = arith.constant 3 : index
    %c0_118 = arith.constant 0 : index
    %456 = vector.load %arg7[%c3_117, %c0_118] : memref<27x72xf32, #tpu.memory_space<vmem>>, vector<1x72xf32>
    %457 = vector.extract_strided_slice %449 {offsets = [0, 1, 0], sizes = [2, 24, 72], strides = [1, 1, 1]} : vector<2x26x72xf32> to vector<2x24x72xf32>
    %458 = vector.shape_cast %456 : vector<1x72xf32> to vector<1x1x72xf32>
    %459 = vector.broadcast %458 : vector<1x1x72xf32> to vector<2x24x72xf32>
    %460 = arith.mulf %459, %457 : vector<2x24x72xf32>
    %461 = arith.addf %455, %460 : vector<2x24x72xf32>
    %c6_119 = arith.constant 6 : index
    %c0_120 = arith.constant 0 : index
    %462 = vector.load %arg7[%c6_119, %c0_120] : memref<27x72xf32, #tpu.memory_space<vmem>>, vector<1x72xf32>
    %463 = vector.extract_strided_slice %449 {offsets = [0, 2, 0], sizes = [2, 24, 72], strides = [1, 1, 1]} : vector<2x26x72xf32> to vector<2x24x72xf32>
    %464 = vector.shape_cast %462 : vector<1x72xf32> to vector<1x1x72xf32>
    %465 = vector.broadcast %464 : vector<1x1x72xf32> to vector<2x24x72xf32>
    %466 = arith.mulf %465, %463 : vector<2x24x72xf32>
    %467 = arith.addf %461, %466 : vector<2x24x72xf32>
    %468 = vector.extract_strided_slice %444 {offsets = [0, 0, 1], sizes = [2, 26, 24], strides = [1, 1, 1]} : vector<2x26x78xf32> to vector<2x26x24xf32>
    %469 = tpu.concatenate %468, %468, %468 in 2 : vector<2x26x24xf32>, vector<2x26x24xf32>, vector<2x26x24xf32> -> vector<2x26x72xf32>
    %c1_121 = arith.constant 1 : index
    %c0_122 = arith.constant 0 : index
    %470 = vector.load %arg7[%c1_121, %c0_122] : memref<27x72xf32, #tpu.memory_space<vmem>>, vector<1x72xf32>
    %471 = vector.extract_strided_slice %469 {offsets = [0, 0, 0], sizes = [2, 24, 72], strides = [1, 1, 1]} : vector<2x26x72xf32> to vector<2x24x72xf32>
    %472 = vector.shape_cast %470 : vector<1x72xf32> to vector<1x1x72xf32>
    %473 = vector.broadcast %472 : vector<1x1x72xf32> to vector<2x24x72xf32>
    %474 = arith.mulf %473, %471 : vector<2x24x72xf32>
    %475 = arith.addf %467, %474 : vector<2x24x72xf32>
    %c4_123 = arith.constant 4 : index
    %c0_124 = arith.constant 0 : index
    %476 = vector.load %arg7[%c4_123, %c0_124] : memref<27x72xf32, #tpu.memory_space<vmem>>, vector<1x72xf32>
    %477 = vector.extract_strided_slice %469 {offsets = [0, 1, 0], sizes = [2, 24, 72], strides = [1, 1, 1]} : vector<2x26x72xf32> to vector<2x24x72xf32>
    %478 = vector.shape_cast %476 : vector<1x72xf32> to vector<1x1x72xf32>
    %479 = vector.broadcast %478 : vector<1x1x72xf32> to vector<2x24x72xf32>
    %480 = arith.mulf %479, %477 : vector<2x24x72xf32>
    %481 = arith.addf %475, %480 : vector<2x24x72xf32>
    %c7_125 = arith.constant 7 : index
    %c0_126 = arith.constant 0 : index
    %482 = vector.load %arg7[%c7_125, %c0_126] : memref<27x72xf32, #tpu.memory_space<vmem>>, vector<1x72xf32>
    %483 = vector.extract_strided_slice %469 {offsets = [0, 2, 0], sizes = [2, 24, 72], strides = [1, 1, 1]} : vector<2x26x72xf32> to vector<2x24x72xf32>
    %484 = vector.shape_cast %482 : vector<1x72xf32> to vector<1x1x72xf32>
    %485 = vector.broadcast %484 : vector<1x1x72xf32> to vector<2x24x72xf32>
    %486 = arith.mulf %485, %483 : vector<2x24x72xf32>
    %487 = arith.addf %481, %486 : vector<2x24x72xf32>
    %488 = vector.extract_strided_slice %444 {offsets = [0, 0, 2], sizes = [2, 26, 24], strides = [1, 1, 1]} : vector<2x26x78xf32> to vector<2x26x24xf32>
    %489 = tpu.concatenate %488, %488, %488 in 2 : vector<2x26x24xf32>, vector<2x26x24xf32>, vector<2x26x24xf32> -> vector<2x26x72xf32>
    %c2_127 = arith.constant 2 : index
    %c0_128 = arith.constant 0 : index
    %490 = vector.load %arg7[%c2_127, %c0_128] : memref<27x72xf32, #tpu.memory_space<vmem>>, vector<1x72xf32>
    %491 = vector.extract_strided_slice %489 {offsets = [0, 0, 0], sizes = [2, 24, 72], strides = [1, 1, 1]} : vector<2x26x72xf32> to vector<2x24x72xf32>
    %492 = vector.shape_cast %490 : vector<1x72xf32> to vector<1x1x72xf32>
    %493 = vector.broadcast %492 : vector<1x1x72xf32> to vector<2x24x72xf32>
    %494 = arith.mulf %493, %491 : vector<2x24x72xf32>
    %495 = arith.addf %487, %494 : vector<2x24x72xf32>
    %c5_129 = arith.constant 5 : index
    %c0_130 = arith.constant 0 : index
    %496 = vector.load %arg7[%c5_129, %c0_130] : memref<27x72xf32, #tpu.memory_space<vmem>>, vector<1x72xf32>
    %497 = vector.extract_strided_slice %489 {offsets = [0, 1, 0], sizes = [2, 24, 72], strides = [1, 1, 1]} : vector<2x26x72xf32> to vector<2x24x72xf32>
    %498 = vector.shape_cast %496 : vector<1x72xf32> to vector<1x1x72xf32>
    %499 = vector.broadcast %498 : vector<1x1x72xf32> to vector<2x24x72xf32>
    %500 = arith.mulf %499, %497 : vector<2x24x72xf32>
    %501 = arith.addf %495, %500 : vector<2x24x72xf32>
    %c8_131 = arith.constant 8 : index
    %c0_132 = arith.constant 0 : index
    %502 = vector.load %arg7[%c8_131, %c0_132] : memref<27x72xf32, #tpu.memory_space<vmem>>, vector<1x72xf32>
    %503 = vector.extract_strided_slice %489 {offsets = [0, 2, 0], sizes = [2, 24, 72], strides = [1, 1, 1]} : vector<2x26x72xf32> to vector<2x24x72xf32>
    %504 = vector.shape_cast %502 : vector<1x72xf32> to vector<1x1x72xf32>
    %505 = vector.broadcast %504 : vector<1x1x72xf32> to vector<2x24x72xf32>
    %506 = arith.mulf %505, %503 : vector<2x24x72xf32>
    %507 = arith.addf %501, %506 : vector<2x24x72xf32>
    %508 = vector.extract_strided_slice %444 {offsets = [0, 0, 26], sizes = [2, 26, 24], strides = [1, 1, 1]} : vector<2x26x78xf32> to vector<2x26x24xf32>
    %509 = tpu.concatenate %508, %508, %508 in 2 : vector<2x26x24xf32>, vector<2x26x24xf32>, vector<2x26x24xf32> -> vector<2x26x72xf32>
    %c9_133 = arith.constant 9 : index
    %c0_134 = arith.constant 0 : index
    %510 = vector.load %arg7[%c9_133, %c0_134] : memref<27x72xf32, #tpu.memory_space<vmem>>, vector<1x72xf32>
    %511 = vector.extract_strided_slice %509 {offsets = [0, 0, 0], sizes = [2, 24, 72], strides = [1, 1, 1]} : vector<2x26x72xf32> to vector<2x24x72xf32>
    %512 = vector.shape_cast %510 : vector<1x72xf32> to vector<1x1x72xf32>
    %513 = vector.broadcast %512 : vector<1x1x72xf32> to vector<2x24x72xf32>
    %514 = arith.mulf %513, %511 : vector<2x24x72xf32>
    %515 = arith.addf %507, %514 : vector<2x24x72xf32>
    %c12_135 = arith.constant 12 : index
    %c0_136 = arith.constant 0 : index
    %516 = vector.load %arg7[%c12_135, %c0_136] : memref<27x72xf32, #tpu.memory_space<vmem>>, vector<1x72xf32>
    %517 = vector.extract_strided_slice %509 {offsets = [0, 1, 0], sizes = [2, 24, 72], strides = [1, 1, 1]} : vector<2x26x72xf32> to vector<2x24x72xf32>
    %518 = vector.shape_cast %516 : vector<1x72xf32> to vector<1x1x72xf32>
    %519 = vector.broadcast %518 : vector<1x1x72xf32> to vector<2x24x72xf32>
    %520 = arith.mulf %519, %517 : vector<2x24x72xf32>
    %521 = arith.addf %515, %520 : vector<2x24x72xf32>
    %c15_137 = arith.constant 15 : index
    %c0_138 = arith.constant 0 : index
    %522 = vector.load %arg7[%c15_137, %c0_138] : memref<27x72xf32, #tpu.memory_space<vmem>>, vector<1x72xf32>
    %523 = vector.extract_strided_slice %509 {offsets = [0, 2, 0], sizes = [2, 24, 72], strides = [1, 1, 1]} : vector<2x26x72xf32> to vector<2x24x72xf32>
    %524 = vector.shape_cast %522 : vector<1x72xf32> to vector<1x1x72xf32>
    %525 = vector.broadcast %524 : vector<1x1x72xf32> to vector<2x24x72xf32>
    %526 = arith.mulf %525, %523 : vector<2x24x72xf32>
    %527 = arith.addf %521, %526 : vector<2x24x72xf32>
    %528 = vector.extract_strided_slice %444 {offsets = [0, 0, 27], sizes = [2, 26, 24], strides = [1, 1, 1]} : vector<2x26x78xf32> to vector<2x26x24xf32>
    %529 = tpu.concatenate %528, %528, %528 in 2 : vector<2x26x24xf32>, vector<2x26x24xf32>, vector<2x26x24xf32> -> vector<2x26x72xf32>
    %c10_139 = arith.constant 10 : index
    %c0_140 = arith.constant 0 : index
    %530 = vector.load %arg7[%c10_139, %c0_140] : memref<27x72xf32, #tpu.memory_space<vmem>>, vector<1x72xf32>
    %531 = vector.extract_strided_slice %529 {offsets = [0, 0, 0], sizes = [2, 24, 72], strides = [1, 1, 1]} : vector<2x26x72xf32> to vector<2x24x72xf32>
    %532 = vector.shape_cast %530 : vector<1x72xf32> to vector<1x1x72xf32>
    %533 = vector.broadcast %532 : vector<1x1x72xf32> to vector<2x24x72xf32>
    %534 = arith.mulf %533, %531 : vector<2x24x72xf32>
    %535 = arith.addf %527, %534 : vector<2x24x72xf32>
    %c13_141 = arith.constant 13 : index
    %c0_142 = arith.constant 0 : index
    %536 = vector.load %arg7[%c13_141, %c0_142] : memref<27x72xf32, #tpu.memory_space<vmem>>, vector<1x72xf32>
    %537 = vector.extract_strided_slice %529 {offsets = [0, 1, 0], sizes = [2, 24, 72], strides = [1, 1, 1]} : vector<2x26x72xf32> to vector<2x24x72xf32>
    %538 = vector.shape_cast %536 : vector<1x72xf32> to vector<1x1x72xf32>
    %539 = vector.broadcast %538 : vector<1x1x72xf32> to vector<2x24x72xf32>
    %540 = arith.mulf %539, %537 : vector<2x24x72xf32>
    %541 = arith.addf %535, %540 : vector<2x24x72xf32>
    %c16_143 = arith.constant 16 : index
    %c0_144 = arith.constant 0 : index
    %542 = vector.load %arg7[%c16_143, %c0_144] : memref<27x72xf32, #tpu.memory_space<vmem>>, vector<1x72xf32>
    %543 = vector.extract_strided_slice %529 {offsets = [0, 2, 0], sizes = [2, 24, 72], strides = [1, 1, 1]} : vector<2x26x72xf32> to vector<2x24x72xf32>
    %544 = vector.shape_cast %542 : vector<1x72xf32> to vector<1x1x72xf32>
    %545 = vector.broadcast %544 : vector<1x1x72xf32> to vector<2x24x72xf32>
    %546 = arith.mulf %545, %543 : vector<2x24x72xf32>
    %547 = arith.addf %541, %546 : vector<2x24x72xf32>
    %548 = vector.extract_strided_slice %444 {offsets = [0, 0, 28], sizes = [2, 26, 24], strides = [1, 1, 1]} : vector<2x26x78xf32> to vector<2x26x24xf32>
    %549 = tpu.concatenate %548, %548, %548 in 2 : vector<2x26x24xf32>, vector<2x26x24xf32>, vector<2x26x24xf32> -> vector<2x26x72xf32>
    %c11_145 = arith.constant 11 : index
    %c0_146 = arith.constant 0 : index
    %550 = vector.load %arg7[%c11_145, %c0_146] : memref<27x72xf32, #tpu.memory_space<vmem>>, vector<1x72xf32>
    %551 = vector.extract_strided_slice %549 {offsets = [0, 0, 0], sizes = [2, 24, 72], strides = [1, 1, 1]} : vector<2x26x72xf32> to vector<2x24x72xf32>
    %552 = vector.shape_cast %550 : vector<1x72xf32> to vector<1x1x72xf32>
    %553 = vector.broadcast %552 : vector<1x1x72xf32> to vector<2x24x72xf32>
    %554 = arith.mulf %553, %551 : vector<2x24x72xf32>
    %555 = arith.addf %547, %554 : vector<2x24x72xf32>
    %c14_147 = arith.constant 14 : index
    %c0_148 = arith.constant 0 : index
    %556 = vector.load %arg7[%c14_147, %c0_148] : memref<27x72xf32, #tpu.memory_space<vmem>>, vector<1x72xf32>
    %557 = vector.extract_strided_slice %549 {offsets = [0, 1, 0], sizes = [2, 24, 72], strides = [1, 1, 1]} : vector<2x26x72xf32> to vector<2x24x72xf32>
    %558 = vector.shape_cast %556 : vector<1x72xf32> to vector<1x1x72xf32>
    %559 = vector.broadcast %558 : vector<1x1x72xf32> to vector<2x24x72xf32>
    %560 = arith.mulf %559, %557 : vector<2x24x72xf32>
    %561 = arith.addf %555, %560 : vector<2x24x72xf32>
    %c17_149 = arith.constant 17 : index
    %c0_150 = arith.constant 0 : index
    %562 = vector.load %arg7[%c17_149, %c0_150] : memref<27x72xf32, #tpu.memory_space<vmem>>, vector<1x72xf32>
    %563 = vector.extract_strided_slice %549 {offsets = [0, 2, 0], sizes = [2, 24, 72], strides = [1, 1, 1]} : vector<2x26x72xf32> to vector<2x24x72xf32>
    %564 = vector.shape_cast %562 : vector<1x72xf32> to vector<1x1x72xf32>
    %565 = vector.broadcast %564 : vector<1x1x72xf32> to vector<2x24x72xf32>
    %566 = arith.mulf %565, %563 : vector<2x24x72xf32>
    %567 = arith.addf %561, %566 : vector<2x24x72xf32>
    %568 = vector.extract_strided_slice %444 {offsets = [0, 0, 52], sizes = [2, 26, 24], strides = [1, 1, 1]} : vector<2x26x78xf32> to vector<2x26x24xf32>
    %569 = tpu.concatenate %568, %568, %568 in 2 : vector<2x26x24xf32>, vector<2x26x24xf32>, vector<2x26x24xf32> -> vector<2x26x72xf32>
    %c18_151 = arith.constant 18 : index
    %c0_152 = arith.constant 0 : index
    %570 = vector.load %arg7[%c18_151, %c0_152] : memref<27x72xf32, #tpu.memory_space<vmem>>, vector<1x72xf32>
    %571 = vector.extract_strided_slice %569 {offsets = [0, 0, 0], sizes = [2, 24, 72], strides = [1, 1, 1]} : vector<2x26x72xf32> to vector<2x24x72xf32>
    %572 = vector.shape_cast %570 : vector<1x72xf32> to vector<1x1x72xf32>
    %573 = vector.broadcast %572 : vector<1x1x72xf32> to vector<2x24x72xf32>
    %574 = arith.mulf %573, %571 : vector<2x24x72xf32>
    %575 = arith.addf %567, %574 : vector<2x24x72xf32>
    %c21_153 = arith.constant 21 : index
    %c0_154 = arith.constant 0 : index
    %576 = vector.load %arg7[%c21_153, %c0_154] : memref<27x72xf32, #tpu.memory_space<vmem>>, vector<1x72xf32>
    %577 = vector.extract_strided_slice %569 {offsets = [0, 1, 0], sizes = [2, 24, 72], strides = [1, 1, 1]} : vector<2x26x72xf32> to vector<2x24x72xf32>
    %578 = vector.shape_cast %576 : vector<1x72xf32> to vector<1x1x72xf32>
    %579 = vector.broadcast %578 : vector<1x1x72xf32> to vector<2x24x72xf32>
    %580 = arith.mulf %579, %577 : vector<2x24x72xf32>
    %581 = arith.addf %575, %580 : vector<2x24x72xf32>
    %c24_155 = arith.constant 24 : index
    %c0_156 = arith.constant 0 : index
    %582 = vector.load %arg7[%c24_155, %c0_156] : memref<27x72xf32, #tpu.memory_space<vmem>>, vector<1x72xf32>
    %583 = vector.extract_strided_slice %569 {offsets = [0, 2, 0], sizes = [2, 24, 72], strides = [1, 1, 1]} : vector<2x26x72xf32> to vector<2x24x72xf32>
    %584 = vector.shape_cast %582 : vector<1x72xf32> to vector<1x1x72xf32>
    %585 = vector.broadcast %584 : vector<1x1x72xf32> to vector<2x24x72xf32>
    %586 = arith.mulf %585, %583 : vector<2x24x72xf32>
    %587 = arith.addf %581, %586 : vector<2x24x72xf32>
    %588 = vector.extract_strided_slice %444 {offsets = [0, 0, 53], sizes = [2, 26, 24], strides = [1, 1, 1]} : vector<2x26x78xf32> to vector<2x26x24xf32>
    %589 = tpu.concatenate %588, %588, %588 in 2 : vector<2x26x24xf32>, vector<2x26x24xf32>, vector<2x26x24xf32> -> vector<2x26x72xf32>
    %c19_157 = arith.constant 19 : index
    %c0_158 = arith.constant 0 : index
    %590 = vector.load %arg7[%c19_157, %c0_158] : memref<27x72xf32, #tpu.memory_space<vmem>>, vector<1x72xf32>
    %591 = vector.extract_strided_slice %589 {offsets = [0, 0, 0], sizes = [2, 24, 72], strides = [1, 1, 1]} : vector<2x26x72xf32> to vector<2x24x72xf32>
    %592 = vector.shape_cast %590 : vector<1x72xf32> to vector<1x1x72xf32>
    %593 = vector.broadcast %592 : vector<1x1x72xf32> to vector<2x24x72xf32>
    %594 = arith.mulf %593, %591 : vector<2x24x72xf32>
    %595 = arith.addf %587, %594 : vector<2x24x72xf32>
    %c22_159 = arith.constant 22 : index
    %c0_160 = arith.constant 0 : index
    %596 = vector.load %arg7[%c22_159, %c0_160] : memref<27x72xf32, #tpu.memory_space<vmem>>, vector<1x72xf32>
    %597 = vector.extract_strided_slice %589 {offsets = [0, 1, 0], sizes = [2, 24, 72], strides = [1, 1, 1]} : vector<2x26x72xf32> to vector<2x24x72xf32>
    %598 = vector.shape_cast %596 : vector<1x72xf32> to vector<1x1x72xf32>
    %599 = vector.broadcast %598 : vector<1x1x72xf32> to vector<2x24x72xf32>
    %600 = arith.mulf %599, %597 : vector<2x24x72xf32>
    %601 = arith.addf %595, %600 : vector<2x24x72xf32>
    %c25_161 = arith.constant 25 : index
    %c0_162 = arith.constant 0 : index
    %602 = vector.load %arg7[%c25_161, %c0_162] : memref<27x72xf32, #tpu.memory_space<vmem>>, vector<1x72xf32>
    %603 = vector.extract_strided_slice %589 {offsets = [0, 2, 0], sizes = [2, 24, 72], strides = [1, 1, 1]} : vector<2x26x72xf32> to vector<2x24x72xf32>
    %604 = vector.shape_cast %602 : vector<1x72xf32> to vector<1x1x72xf32>
    %605 = vector.broadcast %604 : vector<1x1x72xf32> to vector<2x24x72xf32>
    %606 = arith.mulf %605, %603 : vector<2x24x72xf32>
    %607 = arith.addf %601, %606 : vector<2x24x72xf32>
    %608 = vector.extract_strided_slice %444 {offsets = [0, 0, 54], sizes = [2, 26, 24], strides = [1, 1, 1]} : vector<2x26x78xf32> to vector<2x26x24xf32>
    %609 = tpu.concatenate %608, %608, %608 in 2 : vector<2x26x24xf32>, vector<2x26x24xf32>, vector<2x26x24xf32> -> vector<2x26x72xf32>
    %c20_163 = arith.constant 20 : index
    %c0_164 = arith.constant 0 : index
    %610 = vector.load %arg7[%c20_163, %c0_164] : memref<27x72xf32, #tpu.memory_space<vmem>>, vector<1x72xf32>
    %611 = vector.extract_strided_slice %609 {offsets = [0, 0, 0], sizes = [2, 24, 72], strides = [1, 1, 1]} : vector<2x26x72xf32> to vector<2x24x72xf32>
    %612 = vector.shape_cast %610 : vector<1x72xf32> to vector<1x1x72xf32>
    %613 = vector.broadcast %612 : vector<1x1x72xf32> to vector<2x24x72xf32>
    %614 = arith.mulf %613, %611 : vector<2x24x72xf32>
    %615 = arith.addf %607, %614 : vector<2x24x72xf32>
    %c23_165 = arith.constant 23 : index
    %c0_166 = arith.constant 0 : index
    %616 = vector.load %arg7[%c23_165, %c0_166] : memref<27x72xf32, #tpu.memory_space<vmem>>, vector<1x72xf32>
    %617 = vector.extract_strided_slice %609 {offsets = [0, 1, 0], sizes = [2, 24, 72], strides = [1, 1, 1]} : vector<2x26x72xf32> to vector<2x24x72xf32>
    %618 = vector.shape_cast %616 : vector<1x72xf32> to vector<1x1x72xf32>
    %619 = vector.broadcast %618 : vector<1x1x72xf32> to vector<2x24x72xf32>
    %620 = arith.mulf %619, %617 : vector<2x24x72xf32>
    %621 = arith.addf %615, %620 : vector<2x24x72xf32>
    %c26_167 = arith.constant 26 : index
    %c0_168 = arith.constant 0 : index
    %622 = vector.load %arg7[%c26_167, %c0_168] : memref<27x72xf32, #tpu.memory_space<vmem>>, vector<1x72xf32>
    %623 = vector.extract_strided_slice %609 {offsets = [0, 2, 0], sizes = [2, 24, 72], strides = [1, 1, 1]} : vector<2x26x72xf32> to vector<2x24x72xf32>
    %624 = vector.shape_cast %622 : vector<1x72xf32> to vector<1x1x72xf32>
    %625 = vector.broadcast %624 : vector<1x1x72xf32> to vector<2x24x72xf32>
    %626 = arith.mulf %625, %623 : vector<2x24x72xf32>
    %627 = arith.addf %621, %626 : vector<2x24x72xf32>
    %c0_169 = arith.constant 0 : index
    %c0_170 = arith.constant 0 : index
    %628 = vector.load %arg10[%c0_169, %c0_170] : memref<1x10xf32, #tpu.memory_space<vmem>>, vector<1x10xf32>
    %629 = vector.shape_cast %628 : vector<1x10xf32> to vector<1x10xf32>
    %630 = vector.broadcast %629 : vector<1x10xf32> to vector<2x10xf32>
    %631 = vector.extract_strided_slice %627 {offsets = [0, 0, 0], sizes = [2, 1, 72], strides = [1, 1, 1]} : vector<2x24x72xf32> to vector<2x1x72xf32>
    %632 = vector.shape_cast %631 : vector<2x1x72xf32> to vector<2x72xf32>
    %c0_171 = arith.constant 0 : index
    %c0_172 = arith.constant 0 : index
    %c0_173 = arith.constant 0 : index
    %633 = vector.load %arg9[%c0_171, %c0_172, %c0_173] : memref<24x72x10xf32, #tpu.memory_space<vmem>>, vector<1x72x10xf32>
    %634 = vector.shape_cast %633 : vector<1x72x10xf32> to vector<72x10xf32>
    %cst_174 = arith.constant dense<0.000000e+00> : vector<2x10xf32>
    %635 = tpu.matmul %632, %634, %cst_174 {dimension_numbers = #tpu.dot_dimension_numbers<[1], [0], [0], [1], [0, 0, 1, 1], [], []>} : vector<2x72xf32>, vector<72x10xf32>, vector<2x10xf32> -> vector<2x10xf32>
    %636 = arith.addf %630, %635 : vector<2x10xf32>
    %637 = vector.extract_strided_slice %627 {offsets = [0, 1, 0], sizes = [2, 1, 72], strides = [1, 1, 1]} : vector<2x24x72xf32> to vector<2x1x72xf32>
    %638 = vector.shape_cast %637 : vector<2x1x72xf32> to vector<2x72xf32>
    %c1_175 = arith.constant 1 : index
    %c0_176 = arith.constant 0 : index
    %c0_177 = arith.constant 0 : index
    %639 = vector.load %arg9[%c1_175, %c0_176, %c0_177] : memref<24x72x10xf32, #tpu.memory_space<vmem>>, vector<1x72x10xf32>
    %640 = vector.shape_cast %639 : vector<1x72x10xf32> to vector<72x10xf32>
    %cst_178 = arith.constant dense<0.000000e+00> : vector<2x10xf32>
    %641 = tpu.matmul %638, %640, %cst_178 {dimension_numbers = #tpu.dot_dimension_numbers<[1], [0], [0], [1], [0, 0, 1, 1], [], []>} : vector<2x72xf32>, vector<72x10xf32>, vector<2x10xf32> -> vector<2x10xf32>
    %642 = arith.addf %636, %641 : vector<2x10xf32>
    %643 = vector.extract_strided_slice %627 {offsets = [0, 2, 0], sizes = [2, 1, 72], strides = [1, 1, 1]} : vector<2x24x72xf32> to vector<2x1x72xf32>
    %644 = vector.shape_cast %643 : vector<2x1x72xf32> to vector<2x72xf32>
    %c2_179 = arith.constant 2 : index
    %c0_180 = arith.constant 0 : index
    %c0_181 = arith.constant 0 : index
    %645 = vector.load %arg9[%c2_179, %c0_180, %c0_181] : memref<24x72x10xf32, #tpu.memory_space<vmem>>, vector<1x72x10xf32>
    %646 = vector.shape_cast %645 : vector<1x72x10xf32> to vector<72x10xf32>
    %cst_182 = arith.constant dense<0.000000e+00> : vector<2x10xf32>
    %647 = tpu.matmul %644, %646, %cst_182 {dimension_numbers = #tpu.dot_dimension_numbers<[1], [0], [0], [1], [0, 0, 1, 1], [], []>} : vector<2x72xf32>, vector<72x10xf32>, vector<2x10xf32> -> vector<2x10xf32>
    %648 = arith.addf %642, %647 : vector<2x10xf32>
    %649 = vector.extract_strided_slice %627 {offsets = [0, 3, 0], sizes = [2, 1, 72], strides = [1, 1, 1]} : vector<2x24x72xf32> to vector<2x1x72xf32>
    %650 = vector.shape_cast %649 : vector<2x1x72xf32> to vector<2x72xf32>
    %c3_183 = arith.constant 3 : index
    %c0_184 = arith.constant 0 : index
    %c0_185 = arith.constant 0 : index
    %651 = vector.load %arg9[%c3_183, %c0_184, %c0_185] : memref<24x72x10xf32, #tpu.memory_space<vmem>>, vector<1x72x10xf32>
    %652 = vector.shape_cast %651 : vector<1x72x10xf32> to vector<72x10xf32>
    %cst_186 = arith.constant dense<0.000000e+00> : vector<2x10xf32>
    %653 = tpu.matmul %650, %652, %cst_186 {dimension_numbers = #tpu.dot_dimension_numbers<[1], [0], [0], [1], [0, 0, 1, 1], [], []>} : vector<2x72xf32>, vector<72x10xf32>, vector<2x10xf32> -> vector<2x10xf32>
    %654 = arith.addf %648, %653 : vector<2x10xf32>
    %655 = vector.extract_strided_slice %627 {offsets = [0, 4, 0], sizes = [2, 1, 72], strides = [1, 1, 1]} : vector<2x24x72xf32> to vector<2x1x72xf32>
    %656 = vector.shape_cast %655 : vector<2x1x72xf32> to vector<2x72xf32>
    %c4_187 = arith.constant 4 : index
    %c0_188 = arith.constant 0 : index
    %c0_189 = arith.constant 0 : index
    %657 = vector.load %arg9[%c4_187, %c0_188, %c0_189] : memref<24x72x10xf32, #tpu.memory_space<vmem>>, vector<1x72x10xf32>
    %658 = vector.shape_cast %657 : vector<1x72x10xf32> to vector<72x10xf32>
    %cst_190 = arith.constant dense<0.000000e+00> : vector<2x10xf32>
    %659 = tpu.matmul %656, %658, %cst_190 {dimension_numbers = #tpu.dot_dimension_numbers<[1], [0], [0], [1], [0, 0, 1, 1], [], []>} : vector<2x72xf32>, vector<72x10xf32>, vector<2x10xf32> -> vector<2x10xf32>
    %660 = arith.addf %654, %659 : vector<2x10xf32>
    %661 = vector.extract_strided_slice %627 {offsets = [0, 5, 0], sizes = [2, 1, 72], strides = [1, 1, 1]} : vector<2x24x72xf32> to vector<2x1x72xf32>
    %662 = vector.shape_cast %661 : vector<2x1x72xf32> to vector<2x72xf32>
    %c5_191 = arith.constant 5 : index
    %c0_192 = arith.constant 0 : index
    %c0_193 = arith.constant 0 : index
    %663 = vector.load %arg9[%c5_191, %c0_192, %c0_193] : memref<24x72x10xf32, #tpu.memory_space<vmem>>, vector<1x72x10xf32>
    %664 = vector.shape_cast %663 : vector<1x72x10xf32> to vector<72x10xf32>
    %cst_194 = arith.constant dense<0.000000e+00> : vector<2x10xf32>
    %665 = tpu.matmul %662, %664, %cst_194 {dimension_numbers = #tpu.dot_dimension_numbers<[1], [0], [0], [1], [0, 0, 1, 1], [], []>} : vector<2x72xf32>, vector<72x10xf32>, vector<2x10xf32> -> vector<2x10xf32>
    %666 = arith.addf %660, %665 : vector<2x10xf32>
    %667 = vector.extract_strided_slice %627 {offsets = [0, 6, 0], sizes = [2, 1, 72], strides = [1, 1, 1]} : vector<2x24x72xf32> to vector<2x1x72xf32>
    %668 = vector.shape_cast %667 : vector<2x1x72xf32> to vector<2x72xf32>
    %c6_195 = arith.constant 6 : index
    %c0_196 = arith.constant 0 : index
    %c0_197 = arith.constant 0 : index
    %669 = vector.load %arg9[%c6_195, %c0_196, %c0_197] : memref<24x72x10xf32, #tpu.memory_space<vmem>>, vector<1x72x10xf32>
    %670 = vector.shape_cast %669 : vector<1x72x10xf32> to vector<72x10xf32>
    %cst_198 = arith.constant dense<0.000000e+00> : vector<2x10xf32>
    %671 = tpu.matmul %668, %670, %cst_198 {dimension_numbers = #tpu.dot_dimension_numbers<[1], [0], [0], [1], [0, 0, 1, 1], [], []>} : vector<2x72xf32>, vector<72x10xf32>, vector<2x10xf32> -> vector<2x10xf32>
    %672 = arith.addf %666, %671 : vector<2x10xf32>
    %673 = vector.extract_strided_slice %627 {offsets = [0, 7, 0], sizes = [2, 1, 72], strides = [1, 1, 1]} : vector<2x24x72xf32> to vector<2x1x72xf32>
    %674 = vector.shape_cast %673 : vector<2x1x72xf32> to vector<2x72xf32>
    %c7_199 = arith.constant 7 : index
    %c0_200 = arith.constant 0 : index
    %c0_201 = arith.constant 0 : index
    %675 = vector.load %arg9[%c7_199, %c0_200, %c0_201] : memref<24x72x10xf32, #tpu.memory_space<vmem>>, vector<1x72x10xf32>
    %676 = vector.shape_cast %675 : vector<1x72x10xf32> to vector<72x10xf32>
    %cst_202 = arith.constant dense<0.000000e+00> : vector<2x10xf32>
    %677 = tpu.matmul %674, %676, %cst_202 {dimension_numbers = #tpu.dot_dimension_numbers<[1], [0], [0], [1], [0, 0, 1, 1], [], []>} : vector<2x72xf32>, vector<72x10xf32>, vector<2x10xf32> -> vector<2x10xf32>
    %678 = arith.addf %672, %677 : vector<2x10xf32>
    %679 = vector.extract_strided_slice %627 {offsets = [0, 8, 0], sizes = [2, 1, 72], strides = [1, 1, 1]} : vector<2x24x72xf32> to vector<2x1x72xf32>
    %680 = vector.shape_cast %679 : vector<2x1x72xf32> to vector<2x72xf32>
    %c8_203 = arith.constant 8 : index
    %c0_204 = arith.constant 0 : index
    %c0_205 = arith.constant 0 : index
    %681 = vector.load %arg9[%c8_203, %c0_204, %c0_205] : memref<24x72x10xf32, #tpu.memory_space<vmem>>, vector<1x72x10xf32>
    %682 = vector.shape_cast %681 : vector<1x72x10xf32> to vector<72x10xf32>
    %cst_206 = arith.constant dense<0.000000e+00> : vector<2x10xf32>
    %683 = tpu.matmul %680, %682, %cst_206 {dimension_numbers = #tpu.dot_dimension_numbers<[1], [0], [0], [1], [0, 0, 1, 1], [], []>} : vector<2x72xf32>, vector<72x10xf32>, vector<2x10xf32> -> vector<2x10xf32>
    %684 = arith.addf %678, %683 : vector<2x10xf32>
    %685 = vector.extract_strided_slice %627 {offsets = [0, 9, 0], sizes = [2, 1, 72], strides = [1, 1, 1]} : vector<2x24x72xf32> to vector<2x1x72xf32>
    %686 = vector.shape_cast %685 : vector<2x1x72xf32> to vector<2x72xf32>
    %c9_207 = arith.constant 9 : index
    %c0_208 = arith.constant 0 : index
    %c0_209 = arith.constant 0 : index
    %687 = vector.load %arg9[%c9_207, %c0_208, %c0_209] : memref<24x72x10xf32, #tpu.memory_space<vmem>>, vector<1x72x10xf32>
    %688 = vector.shape_cast %687 : vector<1x72x10xf32> to vector<72x10xf32>
    %cst_210 = arith.constant dense<0.000000e+00> : vector<2x10xf32>
    %689 = tpu.matmul %686, %688, %cst_210 {dimension_numbers = #tpu.dot_dimension_numbers<[1], [0], [0], [1], [0, 0, 1, 1], [], []>} : vector<2x72xf32>, vector<72x10xf32>, vector<2x10xf32> -> vector<2x10xf32>
    %690 = arith.addf %684, %689 : vector<2x10xf32>
    %691 = vector.extract_strided_slice %627 {offsets = [0, 10, 0], sizes = [2, 1, 72], strides = [1, 1, 1]} : vector<2x24x72xf32> to vector<2x1x72xf32>
    %692 = vector.shape_cast %691 : vector<2x1x72xf32> to vector<2x72xf32>
    %c10_211 = arith.constant 10 : index
    %c0_212 = arith.constant 0 : index
    %c0_213 = arith.constant 0 : index
    %693 = vector.load %arg9[%c10_211, %c0_212, %c0_213] : memref<24x72x10xf32, #tpu.memory_space<vmem>>, vector<1x72x10xf32>
    %694 = vector.shape_cast %693 : vector<1x72x10xf32> to vector<72x10xf32>
    %cst_214 = arith.constant dense<0.000000e+00> : vector<2x10xf32>
    %695 = tpu.matmul %692, %694, %cst_214 {dimension_numbers = #tpu.dot_dimension_numbers<[1], [0], [0], [1], [0, 0, 1, 1], [], []>} : vector<2x72xf32>, vector<72x10xf32>, vector<2x10xf32> -> vector<2x10xf32>
    %696 = arith.addf %690, %695 : vector<2x10xf32>
    %697 = vector.extract_strided_slice %627 {offsets = [0, 11, 0], sizes = [2, 1, 72], strides = [1, 1, 1]} : vector<2x24x72xf32> to vector<2x1x72xf32>
    %698 = vector.shape_cast %697 : vector<2x1x72xf32> to vector<2x72xf32>
    %c11_215 = arith.constant 11 : index
    %c0_216 = arith.constant 0 : index
    %c0_217 = arith.constant 0 : index
    %699 = vector.load %arg9[%c11_215, %c0_216, %c0_217] : memref<24x72x10xf32, #tpu.memory_space<vmem>>, vector<1x72x10xf32>
    %700 = vector.shape_cast %699 : vector<1x72x10xf32> to vector<72x10xf32>
    %cst_218 = arith.constant dense<0.000000e+00> : vector<2x10xf32>
    %701 = tpu.matmul %698, %700, %cst_218 {dimension_numbers = #tpu.dot_dimension_numbers<[1], [0], [0], [1], [0, 0, 1, 1], [], []>} : vector<2x72xf32>, vector<72x10xf32>, vector<2x10xf32> -> vector<2x10xf32>
    %702 = arith.addf %696, %701 : vector<2x10xf32>
    %703 = vector.extract_strided_slice %627 {offsets = [0, 12, 0], sizes = [2, 1, 72], strides = [1, 1, 1]} : vector<2x24x72xf32> to vector<2x1x72xf32>
    %704 = vector.shape_cast %703 : vector<2x1x72xf32> to vector<2x72xf32>
    %c12_219 = arith.constant 12 : index
    %c0_220 = arith.constant 0 : index
    %c0_221 = arith.constant 0 : index
    %705 = vector.load %arg9[%c12_219, %c0_220, %c0_221] : memref<24x72x10xf32, #tpu.memory_space<vmem>>, vector<1x72x10xf32>
    %706 = vector.shape_cast %705 : vector<1x72x10xf32> to vector<72x10xf32>
    %cst_222 = arith.constant dense<0.000000e+00> : vector<2x10xf32>
    %707 = tpu.matmul %704, %706, %cst_222 {dimension_numbers = #tpu.dot_dimension_numbers<[1], [0], [0], [1], [0, 0, 1, 1], [], []>} : vector<2x72xf32>, vector<72x10xf32>, vector<2x10xf32> -> vector<2x10xf32>
    %708 = arith.addf %702, %707 : vector<2x10xf32>
    %709 = vector.extract_strided_slice %627 {offsets = [0, 13, 0], sizes = [2, 1, 72], strides = [1, 1, 1]} : vector<2x24x72xf32> to vector<2x1x72xf32>
    %710 = vector.shape_cast %709 : vector<2x1x72xf32> to vector<2x72xf32>
    %c13_223 = arith.constant 13 : index
    %c0_224 = arith.constant 0 : index
    %c0_225 = arith.constant 0 : index
    %711 = vector.load %arg9[%c13_223, %c0_224, %c0_225] : memref<24x72x10xf32, #tpu.memory_space<vmem>>, vector<1x72x10xf32>
    %712 = vector.shape_cast %711 : vector<1x72x10xf32> to vector<72x10xf32>
    %cst_226 = arith.constant dense<0.000000e+00> : vector<2x10xf32>
    %713 = tpu.matmul %710, %712, %cst_226 {dimension_numbers = #tpu.dot_dimension_numbers<[1], [0], [0], [1], [0, 0, 1, 1], [], []>} : vector<2x72xf32>, vector<72x10xf32>, vector<2x10xf32> -> vector<2x10xf32>
    %714 = arith.addf %708, %713 : vector<2x10xf32>
    %715 = vector.extract_strided_slice %627 {offsets = [0, 14, 0], sizes = [2, 1, 72], strides = [1, 1, 1]} : vector<2x24x72xf32> to vector<2x1x72xf32>
    %716 = vector.shape_cast %715 : vector<2x1x72xf32> to vector<2x72xf32>
    %c14_227 = arith.constant 14 : index
    %c0_228 = arith.constant 0 : index
    %c0_229 = arith.constant 0 : index
    %717 = vector.load %arg9[%c14_227, %c0_228, %c0_229] : memref<24x72x10xf32, #tpu.memory_space<vmem>>, vector<1x72x10xf32>
    %718 = vector.shape_cast %717 : vector<1x72x10xf32> to vector<72x10xf32>
    %cst_230 = arith.constant dense<0.000000e+00> : vector<2x10xf32>
    %719 = tpu.matmul %716, %718, %cst_230 {dimension_numbers = #tpu.dot_dimension_numbers<[1], [0], [0], [1], [0, 0, 1, 1], [], []>} : vector<2x72xf32>, vector<72x10xf32>, vector<2x10xf32> -> vector<2x10xf32>
    %720 = arith.addf %714, %719 : vector<2x10xf32>
    %721 = vector.extract_strided_slice %627 {offsets = [0, 15, 0], sizes = [2, 1, 72], strides = [1, 1, 1]} : vector<2x24x72xf32> to vector<2x1x72xf32>
    %722 = vector.shape_cast %721 : vector<2x1x72xf32> to vector<2x72xf32>
    %c15_231 = arith.constant 15 : index
    %c0_232 = arith.constant 0 : index
    %c0_233 = arith.constant 0 : index
    %723 = vector.load %arg9[%c15_231, %c0_232, %c0_233] : memref<24x72x10xf32, #tpu.memory_space<vmem>>, vector<1x72x10xf32>
    %724 = vector.shape_cast %723 : vector<1x72x10xf32> to vector<72x10xf32>
    %cst_234 = arith.constant dense<0.000000e+00> : vector<2x10xf32>
    %725 = tpu.matmul %722, %724, %cst_234 {dimension_numbers = #tpu.dot_dimension_numbers<[1], [0], [0], [1], [0, 0, 1, 1], [], []>} : vector<2x72xf32>, vector<72x10xf32>, vector<2x10xf32> -> vector<2x10xf32>
    %726 = arith.addf %720, %725 : vector<2x10xf32>
    %727 = vector.extract_strided_slice %627 {offsets = [0, 16, 0], sizes = [2, 1, 72], strides = [1, 1, 1]} : vector<2x24x72xf32> to vector<2x1x72xf32>
    %728 = vector.shape_cast %727 : vector<2x1x72xf32> to vector<2x72xf32>
    %c16_235 = arith.constant 16 : index
    %c0_236 = arith.constant 0 : index
    %c0_237 = arith.constant 0 : index
    %729 = vector.load %arg9[%c16_235, %c0_236, %c0_237] : memref<24x72x10xf32, #tpu.memory_space<vmem>>, vector<1x72x10xf32>
    %730 = vector.shape_cast %729 : vector<1x72x10xf32> to vector<72x10xf32>
    %cst_238 = arith.constant dense<0.000000e+00> : vector<2x10xf32>
    %731 = tpu.matmul %728, %730, %cst_238 {dimension_numbers = #tpu.dot_dimension_numbers<[1], [0], [0], [1], [0, 0, 1, 1], [], []>} : vector<2x72xf32>, vector<72x10xf32>, vector<2x10xf32> -> vector<2x10xf32>
    %732 = arith.addf %726, %731 : vector<2x10xf32>
    %733 = vector.extract_strided_slice %627 {offsets = [0, 17, 0], sizes = [2, 1, 72], strides = [1, 1, 1]} : vector<2x24x72xf32> to vector<2x1x72xf32>
    %734 = vector.shape_cast %733 : vector<2x1x72xf32> to vector<2x72xf32>
    %c17_239 = arith.constant 17 : index
    %c0_240 = arith.constant 0 : index
    %c0_241 = arith.constant 0 : index
    %735 = vector.load %arg9[%c17_239, %c0_240, %c0_241] : memref<24x72x10xf32, #tpu.memory_space<vmem>>, vector<1x72x10xf32>
    %736 = vector.shape_cast %735 : vector<1x72x10xf32> to vector<72x10xf32>
    %cst_242 = arith.constant dense<0.000000e+00> : vector<2x10xf32>
    %737 = tpu.matmul %734, %736, %cst_242 {dimension_numbers = #tpu.dot_dimension_numbers<[1], [0], [0], [1], [0, 0, 1, 1], [], []>} : vector<2x72xf32>, vector<72x10xf32>, vector<2x10xf32> -> vector<2x10xf32>
    %738 = arith.addf %732, %737 : vector<2x10xf32>
    %739 = vector.extract_strided_slice %627 {offsets = [0, 18, 0], sizes = [2, 1, 72], strides = [1, 1, 1]} : vector<2x24x72xf32> to vector<2x1x72xf32>
    %740 = vector.shape_cast %739 : vector<2x1x72xf32> to vector<2x72xf32>
    %c18_243 = arith.constant 18 : index
    %c0_244 = arith.constant 0 : index
    %c0_245 = arith.constant 0 : index
    %741 = vector.load %arg9[%c18_243, %c0_244, %c0_245] : memref<24x72x10xf32, #tpu.memory_space<vmem>>, vector<1x72x10xf32>
    %742 = vector.shape_cast %741 : vector<1x72x10xf32> to vector<72x10xf32>
    %cst_246 = arith.constant dense<0.000000e+00> : vector<2x10xf32>
    %743 = tpu.matmul %740, %742, %cst_246 {dimension_numbers = #tpu.dot_dimension_numbers<[1], [0], [0], [1], [0, 0, 1, 1], [], []>} : vector<2x72xf32>, vector<72x10xf32>, vector<2x10xf32> -> vector<2x10xf32>
    %744 = arith.addf %738, %743 : vector<2x10xf32>
    %745 = vector.extract_strided_slice %627 {offsets = [0, 19, 0], sizes = [2, 1, 72], strides = [1, 1, 1]} : vector<2x24x72xf32> to vector<2x1x72xf32>
    %746 = vector.shape_cast %745 : vector<2x1x72xf32> to vector<2x72xf32>
    %c19_247 = arith.constant 19 : index
    %c0_248 = arith.constant 0 : index
    %c0_249 = arith.constant 0 : index
    %747 = vector.load %arg9[%c19_247, %c0_248, %c0_249] : memref<24x72x10xf32, #tpu.memory_space<vmem>>, vector<1x72x10xf32>
    %748 = vector.shape_cast %747 : vector<1x72x10xf32> to vector<72x10xf32>
    %cst_250 = arith.constant dense<0.000000e+00> : vector<2x10xf32>
    %749 = tpu.matmul %746, %748, %cst_250 {dimension_numbers = #tpu.dot_dimension_numbers<[1], [0], [0], [1], [0, 0, 1, 1], [], []>} : vector<2x72xf32>, vector<72x10xf32>, vector<2x10xf32> -> vector<2x10xf32>
    %750 = arith.addf %744, %749 : vector<2x10xf32>
    %751 = vector.extract_strided_slice %627 {offsets = [0, 20, 0], sizes = [2, 1, 72], strides = [1, 1, 1]} : vector<2x24x72xf32> to vector<2x1x72xf32>
    %752 = vector.shape_cast %751 : vector<2x1x72xf32> to vector<2x72xf32>
    %c20_251 = arith.constant 20 : index
    %c0_252 = arith.constant 0 : index
    %c0_253 = arith.constant 0 : index
    %753 = vector.load %arg9[%c20_251, %c0_252, %c0_253] : memref<24x72x10xf32, #tpu.memory_space<vmem>>, vector<1x72x10xf32>
    %754 = vector.shape_cast %753 : vector<1x72x10xf32> to vector<72x10xf32>
    %cst_254 = arith.constant dense<0.000000e+00> : vector<2x10xf32>
    %755 = tpu.matmul %752, %754, %cst_254 {dimension_numbers = #tpu.dot_dimension_numbers<[1], [0], [0], [1], [0, 0, 1, 1], [], []>} : vector<2x72xf32>, vector<72x10xf32>, vector<2x10xf32> -> vector<2x10xf32>
    %756 = arith.addf %750, %755 : vector<2x10xf32>
    %757 = vector.extract_strided_slice %627 {offsets = [0, 21, 0], sizes = [2, 1, 72], strides = [1, 1, 1]} : vector<2x24x72xf32> to vector<2x1x72xf32>
    %758 = vector.shape_cast %757 : vector<2x1x72xf32> to vector<2x72xf32>
    %c21_255 = arith.constant 21 : index
    %c0_256 = arith.constant 0 : index
    %c0_257 = arith.constant 0 : index
    %759 = vector.load %arg9[%c21_255, %c0_256, %c0_257] : memref<24x72x10xf32, #tpu.memory_space<vmem>>, vector<1x72x10xf32>
    %760 = vector.shape_cast %759 : vector<1x72x10xf32> to vector<72x10xf32>
    %cst_258 = arith.constant dense<0.000000e+00> : vector<2x10xf32>
    %761 = tpu.matmul %758, %760, %cst_258 {dimension_numbers = #tpu.dot_dimension_numbers<[1], [0], [0], [1], [0, 0, 1, 1], [], []>} : vector<2x72xf32>, vector<72x10xf32>, vector<2x10xf32> -> vector<2x10xf32>
    %762 = arith.addf %756, %761 : vector<2x10xf32>
    %763 = vector.extract_strided_slice %627 {offsets = [0, 22, 0], sizes = [2, 1, 72], strides = [1, 1, 1]} : vector<2x24x72xf32> to vector<2x1x72xf32>
    %764 = vector.shape_cast %763 : vector<2x1x72xf32> to vector<2x72xf32>
    %c22_259 = arith.constant 22 : index
    %c0_260 = arith.constant 0 : index
    %c0_261 = arith.constant 0 : index
    %765 = vector.load %arg9[%c22_259, %c0_260, %c0_261] : memref<24x72x10xf32, #tpu.memory_space<vmem>>, vector<1x72x10xf32>
    %766 = vector.shape_cast %765 : vector<1x72x10xf32> to vector<72x10xf32>
    %cst_262 = arith.constant dense<0.000000e+00> : vector<2x10xf32>
    %767 = tpu.matmul %764, %766, %cst_262 {dimension_numbers = #tpu.dot_dimension_numbers<[1], [0], [0], [1], [0, 0, 1, 1], [], []>} : vector<2x72xf32>, vector<72x10xf32>, vector<2x10xf32> -> vector<2x10xf32>
    %768 = arith.addf %762, %767 : vector<2x10xf32>
    %769 = vector.extract_strided_slice %627 {offsets = [0, 23, 0], sizes = [2, 1, 72], strides = [1, 1, 1]} : vector<2x24x72xf32> to vector<2x1x72xf32>
    %770 = vector.shape_cast %769 : vector<2x1x72xf32> to vector<2x72xf32>
    %c23_263 = arith.constant 23 : index
    %c0_264 = arith.constant 0 : index
    %c0_265 = arith.constant 0 : index
    %771 = vector.load %arg9[%c23_263, %c0_264, %c0_265] : memref<24x72x10xf32, #tpu.memory_space<vmem>>, vector<1x72x10xf32>
    %772 = vector.shape_cast %771 : vector<1x72x10xf32> to vector<72x10xf32>
    %cst_266 = arith.constant dense<0.000000e+00> : vector<2x10xf32>
    %773 = tpu.matmul %770, %772, %cst_266 {dimension_numbers = #tpu.dot_dimension_numbers<[1], [0], [0], [1], [0, 0, 1, 1], [], []>} : vector<2x72xf32>, vector<72x10xf32>, vector<2x10xf32> -> vector<2x10xf32>
    %774 = arith.addf %768, %773 : vector<2x10xf32>
    %cst_267 = arith.constant 0.000000e+00 : f32
    %775 = vector.broadcast %cst_267 : f32 to vector<2x10xf32>
    %776 = arith.maximumf %774, %775 : vector<2x10xf32>
    %c0_268 = arith.constant 0 : index
    %c0_269 = arith.constant 0 : index
    %777 = vector.load %arg11[%c0_268, %c0_269] : memref<2x10xf32, #tpu.memory_space<vmem>>, vector<2x10xf32>
    tpu.vector_store %arg11[%c0_268, %c0_269], %776 {strides = array<i32>} : memref<2x10xf32, #tpu.memory_space<vmem>>, vector<2x10xf32>,
    return
  }
}

</mosaic_0001>

<llo_original>
// kernel: tpu_custom_call.1
$region0: #{tpu_custom_call.1}
  #allocation0 [shape = 'u32[]', space=smem, size = 0x4, offset = 0x4, fixed_abs, tag = 'smem constant byte address 0x4 - core index']
  #allocation1 [shape = 'u32[144,128]{1,0:T(1,128)}', space=vmem, size = 0x12000, scoped, tag = 'internal scratch']
  %s0 = inlined_call_operand.vmem [shape: f32[2,30,30], index: 0, kind: input, shape index: {}]
  %s1 = inlined_call_operand.vmem [shape: f32[9,84], index: 1, kind: input, shape index: {}]
  %s2 = inlined_call_operand.vmem [shape: f32[1,84], index: 2, kind: input, shape index: {}]
  %s3 = inlined_call_operand.vmem [shape: f32[27,84], index: 3, kind: input, shape index: {}]
  %s4 = inlined_call_operand.vmem [shape: f32[1,84], index: 4, kind: input, shape index: {}]
  %s5 = inlined_call_operand.vmem [shape: f32[27,78], index: 5, kind: input, shape index: {}]
  %s6 = inlined_call_operand.vmem [shape: f32[1,78], index: 6, kind: input, shape index: {}]
  %s7 = inlined_call_operand.vmem [shape: f32[27,72], index: 7, kind: input, shape index: {}]
  %s8 = inlined_call_operand.vmem [shape: f32[1,72], index: 8, kind: input, shape index: {}]
  %s9 = inlined_call_operand.vmem [shape: f32[24,72,10], index: 9, kind: input, shape index: {}]
  %s10 = inlined_call_operand.vmem [shape: f32[1,10], index: 10, kind: input, shape index: {}]
  %s11 = inlined_call_operand.hbm [shape: f32[2,10], index: 11, kind: output, shape index: {}]
  %s12 = sld [smem:[#allocation0]]
  $region54: #{tpu_custom_call.1} parent=0
    _
  %s14 = ssub.s32 1, %s12
  %s15 = scalar_select 0, %s14, %s12
  $region1: #{tpu_custom_call.1} parent=0
    #allocation2 [shape = 'u8[1024]{0}', space=vmem, size = 0x400, scoped, tag = 'output window, operand 0, single buffered']
    #allocation3 [shape = 's32[1]{0}', space=sflag, size = 0x4, scoped, tag = 'scoped memory for tpu_custom_call.1']
    %16 = vsyncpa [#allocation3], 0
    // Predicated region
    $region2: #{tpu_custom_call.1} parent=1 // pred_check
      _
    $region3: #{tpu_custom_call.1} parent=1 // pred_check_branch
      %18 = sbr.rel (0) target = $region5
    $region4: #{tpu_custom_call.1} parent=1 // pred_region
      _
    $region5: #{tpu_custom_call.1} parent=1 // pred_fallthru
      _
    // Predicated region
    $region6: #{tpu_custom_call.1} parent=1 // pred_check
      _
    $region7: #{tpu_custom_call.1} parent=1 // pred_check_branch
      %20 = sbr.rel (0) target = $region9
    $region8: #{tpu_custom_call.1} parent=1 // pred_region
      _
    $region9: #{tpu_custom_call.1} parent=1 // pred_fallthru
      _
    // Predicated region
    $region10: #{tpu_custom_call.1} parent=1 // pred_check
      _
    $region11: #{tpu_custom_call.1} parent=1 // pred_check_branch
      %22 = sbr.rel (0) target = $region13
    $region12: #{tpu_custom_call.1} parent=1 // pred_region
      _
    $region13: #{tpu_custom_call.1} parent=1 // pred_fallthru
      _
    // Predicated region
    $region14: #{tpu_custom_call.1} parent=1 // pred_check
      _
    $region15: #{tpu_custom_call.1} parent=1 // pred_check_branch
      %24 = sbr.rel (0) target = $region17
    $region16: #{tpu_custom_call.1} parent=1 // pred_region
      _
    $region17: #{tpu_custom_call.1} parent=1 // pred_fallthru
      _
    // Predicated region
    $region18: #{tpu_custom_call.1} parent=1 // pred_check
      _
    $region19: #{tpu_custom_call.1} parent=1 // pred_check_branch
      %26 = sbr.rel (0) target = $region21
    $region20: #{tpu_custom_call.1} parent=1 // pred_region
      _
    $region21: #{tpu_custom_call.1} parent=1 // pred_fallthru
      _
    // Predicated region
    $region22: #{tpu_custom_call.1} parent=1 // pred_check
      _
    $region23: #{tpu_custom_call.1} parent=1 // pred_check_branch
      %28 = sbr.rel (0) target = $region25
    $region24: #{tpu_custom_call.1} parent=1 // pred_region
      _
    $region25: #{tpu_custom_call.1} parent=1 // pred_fallthru
      _
    // Predicated region
    $region26: #{tpu_custom_call.1} parent=1 // pred_check
      _
    $region27: #{tpu_custom_call.1} parent=1 // pred_check_branch
      %30 = sbr.rel (0) target = $region29
    $region28: #{tpu_custom_call.1} parent=1 // pred_region
      _
    $region29: #{tpu_custom_call.1} parent=1 // pred_fallthru
      _
    // Predicated region
    $region30: #{tpu_custom_call.1} parent=1 // pred_check
      _
    $region31: #{tpu_custom_call.1} parent=1 // pred_check_branch
      %32 = sbr.rel (0) target = $region33
    $region32: #{tpu_custom_call.1} parent=1 // pred_region
      _
    $region33: #{tpu_custom_call.1} parent=1 // pred_fallthru
      _
    // Predicated region
    $region34: #{tpu_custom_call.1} parent=1 // pred_check
      _
    $region35: #{tpu_custom_call.1} parent=1 // pred_check_branch
      %34 = sbr.rel (0) target = $region37
    $region36: #{tpu_custom_call.1} parent=1 // pred_region
      _
    $region37: #{tpu_custom_call.1} parent=1 // pred_fallthru
      _
    // Predicated region
    $region38: #{tpu_custom_call.1} parent=1 // pred_check
      _
    $region39: #{tpu_custom_call.1} parent=1 // pred_check_branch
      %36 = sbr.rel (0) target = $region41
    $region40: #{tpu_custom_call.1} parent=1 // pred_region
      _
    $region41: #{tpu_custom_call.1} parent=1 // pred_fallthru
      _
    // Predicated region
    $region42: #{tpu_custom_call.1} parent=1 // pred_check
      _
    $region43: #{tpu_custom_call.1} parent=1 // pred_check_branch
      %38 = sbr.rel (0) target = $region45
    $region44: #{tpu_custom_call.1} parent=1 // pred_region
      _
    $region45: #{tpu_custom_call.1} parent=1 // pred_fallthru
      _
    %v39 = vld [vmem:[%s0] sm:$0xff]
    %v40 = vld [vmem:[%s0 + $0x8] sm:$0xff]
    %v41 = vld [vmem:[%s0 + $0x10] sm:$0xff]
    %v42 = vld [vmem:[%s0 + $0x18] sm:$0x3f]
    %v43 = vld [vmem:[%s0 + $0x20] sm:$0xff]
    %v44 = vld [vmem:[%s0 + $0x28] sm:$0xff]
    %v45 = vld [vmem:[%s0 + $0x30] sm:$0xff]
    %v46 = vld [vmem:[%s0 + $0x38] sm:$0x3f]
    %v47 = vld [vmem:[%s2] sm:$0x1]
    %v49 = vlaneseq
    %v50 = vshrl.u32 %v49, 7
    %v51 = vsub.s32 0, %v50
    %v52 = vrot.slane %v47, %v51
    %62 = vrot.lane.b32.xlu0 %v39, 28
    %v63 = vpop.permute.xlu0 %62
    %64 = vrot.lane.b32.xlu0 %v40, 28
    %v65 = vpop.permute.xlu0 %64
    %66 = vrot.lane.b32.xlu0 %v41, 28
    %v67 = vpop.permute.xlu0 %66
    %68 = vrot.lane.b32.xlu0 %v42, 28
    %v69 = vpop.permute.xlu0 %68
    %70 = vrot.lane.b32.xlu0 %v43, 28
    %v71 = vpop.permute.xlu0 %70
    %72 = vrot.lane.b32.xlu0 %v44, 28
    %v73 = vpop.permute.xlu0 %72
    %74 = vrot.lane.b32.xlu0 %v45, 28
    %v75 = vpop.permute.xlu0 %74
    %76 = vrot.lane.b32.xlu0 %v46, 28
    %v77 = vpop.permute.xlu0 %76
    %86 = vrot.lane.b32.xlu0 %v39, 56
    %v87 = vpop.permute.xlu0 %86
    %88 = vrot.lane.b32.xlu0 %v40, 56
    %v89 = vpop.permute.xlu0 %88
    %90 = vrot.lane.b32.xlu0 %v41, 56
    %v91 = vpop.permute.xlu0 %90
    %92 = vrot.lane.b32.xlu0 %v42, 56
    %v93 = vpop.permute.xlu0 %92
    %94 = vrot.lane.b32.xlu0 %v43, 56
    %v95 = vpop.permute.xlu0 %94
    %96 = vrot.lane.b32.xlu0 %v44, 56
    %v97 = vpop.permute.xlu0 %96
    %98 = vrot.lane.b32.xlu0 %v45, 56
    %v99 = vpop.permute.xlu0 %98
    %100 = vrot.lane.b32.xlu0 %v46, 56
    %v101 = vpop.permute.xlu0 %100
    %vm110 = vcmask 228352
    %v111 = vsel %vm110, %v39, %v63
    %v112 = vsel %vm110, %v40, %v65
    %v113 = vsel %vm110, %v41, %v67
    %v114 = vsel %vm110, %v42, %v69
    %v115 = vsel %vm110, %v43, %v71
    %v116 = vsel %vm110, %v44, %v73
    %v117 = vsel %vm110, %v45, %v75
    %v118 = vsel %vm110, %v46, %v77
    %vm119 = vcmask 457728
    %v120 = vsel %vm119, %v111, %v87
    %v121 = vsel %vm119, %v112, %v89
    %v122 = vsel %vm119, %v113, %v91
    %v123 = vsel %vm119, %v114, %v93
    %v124 = vsel %vm119, %v115, %v95
    %v125 = vsel %vm119, %v116, %v97
    %v126 = vsel %vm119, %v117, %v99
    %v127 = vsel %vm119, %v118, %v101
    %v128 = vld [vmem:[%s1] sm:$0x1]
    %v129 = vlaneseq
    %v130 = vshrl.u32 %v129, 7
    %v131 = vsub.s32 0, %v130
    %v132 = vrot.slane %v128, %v131
    %v133 = vmul.f32 %v132, %v120
    %v134 = vmul.f32 %v132, %v121
    %v135 = vmul.f32 %v132, %v122
    %v136 = vmul.f32 %v132, %v123
    %v137 = vmul.f32 %v132, %v124
    %v138 = vmul.f32 %v132, %v125
    %v139 = vmul.f32 %v132, %v126
    %v140 = vmul.f32 %v132, %v127
    %v141 = vadd.f32 %v52, %v133
    %v142 = vadd.f32 %v52, %v134
    %v143 = vadd.f32 %v52, %v135
    %v144 = vadd.f32 %v52, %v136
    %v145 = vadd.f32 %v52, %v137
    %v146 = vadd.f32 %v52, %v138
    %v147 = vadd.f32 %v52, %v139
    %v148 = vadd.f32 %v52, %v140
    %v149 = vld [vmem:[%s1 + $0x3] sm:$0x1]
    %v150 = vlaneseq
    %v151 = vshrl.u32 %v150, 7
    %v152 = vsub.s32 0, %v151
    %v153 = vrot.slane %v149, %v152
    %v154 = vmul.f32 %v153, %v120
    %v155 = vmul.f32 %v153, %v121
    %v156 = vmul.f32 %v153, %v122
    %v157 = vmul.f32 %v153, %v123
    %v158 = vmul.f32 %v153, %v124
    %v159 = vmul.f32 %v153, %v125
    %v160 = vmul.f32 %v153, %v126
    %v161 = vmul.f32 %v153, %v127
    %vm170 = vcmask 1046528
    %v171 = vrot.slane %v154, 1
    %v172 = vrot.slane %v155, 1
    %v173 = vsel %vm170, %v171, %v172
    %v174 = vrot.slane %v156, 1
    %v175 = vsel %vm170, %v172, %v174
    %v176 = vrot.slane %v157, 1
    %v177 = vsel %vm170, %v174, %v176
    %v178 = vrot.slane %v158, 1
    %v179 = vrot.slane %v159, 1
    %v180 = vsel %vm170, %v178, %v179
    %v181 = vrot.slane %v160, 1
    %v182 = vsel %vm170, %v179, %v181
    %v183 = vrot.slane %v161, 1
    %v184 = vsel %vm170, %v181, %v183
    %v193 = vadd.f32 %v141, %v173
    %v194 = vadd.f32 %v142, %v175
    %v195 = vadd.f32 %v143, %v177
    %v196 = vadd.f32 %v144, %v176
    %v197 = vadd.f32 %v145, %v180
    %v198 = vadd.f32 %v146, %v182
    %v199 = vadd.f32 %v147, %v184
    %v200 = vadd.f32 %v148, %v183
    %v201 = vld [vmem:[%s1 + $0x6] sm:$0x1]
    %v202 = vlaneseq
    %v203 = vshrl.u32 %v202, 7
    %v204 = vsub.s32 0, %v203
    %v205 = vrot.slane %v201, %v204
    %v206 = vmul.f32 %v205, %v120
    %v207 = vmul.f32 %v205, %v121
    %v208 = vmul.f32 %v205, %v122
    %v209 = vmul.f32 %v205, %v123
    %v210 = vmul.f32 %v205, %v124
    %v211 = vmul.f32 %v205, %v125
    %v212 = vmul.f32 %v205, %v126
    %v213 = vmul.f32 %v205, %v127
    %vm222 = vcmask 1045504
    %v223 = vrot.slane %v206, 2
    %v224 = vrot.slane %v207, 2
    %v225 = vsel %vm222, %v223, %v224
    %v226 = vrot.slane %v208, 2
    %v227 = vsel %vm222, %v224, %v226
    %v228 = vrot.slane %v209, 2
    %v229 = vsel %vm222, %v226, %v228
    %v230 = vrot.slane %v210, 2
    %v231 = vrot.slane %v211, 2
    %v232 = vsel %vm222, %v230, %v231
    %v233 = vrot.slane %v212, 2
    %v234 = vsel %vm222, %v231, %v233
    %v235 = vrot.slane %v213, 2
    %v236 = vsel %vm222, %v233, %v235
    %v245 = vadd.f32 %v193, %v225
    %v246 = vadd.f32 %v194, %v227
    %v247 = vadd.f32 %v195, %v229
    %v248 = vadd.f32 %v196, %v228
    %v249 = vadd.f32 %v197, %v232
    %v250 = vadd.f32 %v198, %v234
    %v251 = vadd.f32 %v199, %v236
    %v252 = vadd.f32 %v200, %v235
    %253 = vrot.lane.b32.xlu0 %v39, 127
    %v254 = vpop.permute.xlu0 %253
    %255 = vrot.lane.b32.xlu0 %v40, 127
    %v256 = vpop.permute.xlu0 %255
    %257 = vrot.lane.b32.xlu0 %v41, 127
    %v258 = vpop.permute.xlu0 %257
    %259 = vrot.lane.b32.xlu0 %v42, 127
    %v260 = vpop.permute.xlu0 %259
    %261 = vrot.lane.b32.xlu0 %v43, 127
    %v262 = vpop.permute.xlu0 %261
    %263 = vrot.lane.b32.xlu0 %v44, 127
    %v264 = vpop.permute.xlu0 %263
    %265 = vrot.lane.b32.xlu0 %v45, 127
    %v266 = vpop.permute.xlu0 %265
    %267 = vrot.lane.b32.xlu0 %v46, 127
    %v268 = vpop.permute.xlu0 %267
    %277 = vrot.lane.b32.xlu0 %v39, 27
    %v278 = vpop.permute.xlu0 %277
    %279 = vrot.lane.b32.xlu0 %v40, 27
    %v280 = vpop.permute.xlu0 %279
    %281 = vrot.lane.b32.xlu0 %v41, 27
    %v282 = vpop.permute.xlu0 %281
    %283 = vrot.lane.b32.xlu0 %v42, 27
    %v284 = vpop.permute.xlu0 %283
    %285 = vrot.lane.b32.xlu0 %v43, 27
    %v286 = vpop.permute.xlu0 %285
    %287 = vrot.lane.b32.xlu0 %v44, 27
    %v288 = vpop.permute.xlu0 %287
    %289 = vrot.lane.b32.xlu0 %v45, 27
    %v290 = vpop.permute.xlu0 %289
    %291 = vrot.lane.b32.xlu0 %v46, 27
    %v292 = vpop.permute.xlu0 %291
    %301 = vrot.lane.b32.xlu0 %v39, 55
    %v302 = vpop.permute.xlu0 %301
    %303 = vrot.lane.b32.xlu0 %v40, 55
    %v304 = vpop.permute.xlu0 %303
    %305 = vrot.lane.b32.xlu0 %v41, 55
    %v306 = vpop.permute.xlu0 %305
    %307 = vrot.lane.b32.xlu0 %v42, 55
    %v308 = vpop.permute.xlu0 %307
    %309 = vrot.lane.b32.xlu0 %v43, 55
    %v310 = vpop.permute.xlu0 %309
    %311 = vrot.lane.b32.xlu0 %v44, 55
    %v312 = vpop.permute.xlu0 %311
    %313 = vrot.lane.b32.xlu0 %v45, 55
    %v314 = vpop.permute.xlu0 %313
    %315 = vrot.lane.b32.xlu0 %v46, 55
    %v316 = vpop.permute.xlu0 %315
    %v325 = vsel %vm110, %v254, %v278
    %v326 = vsel %vm110, %v256, %v280
    %v327 = vsel %vm110, %v258, %v282
    %v328 = vsel %vm110, %v260, %v284
    %v329 = vsel %vm110, %v262, %v286
    %v330 = vsel %vm110, %v264, %v288
    %v331 = vsel %vm110, %v266, %v290
    %v332 = vsel %vm110, %v268, %v292
    %v333 = vsel %vm119, %v325, %v302
    %v334 = vsel %vm119, %v326, %v304
    %v335 = vsel %vm119, %v327, %v306
    %v336 = vsel %vm119, %v328, %v308
    %v337 = vsel %vm119, %v329, %v310
    %v338 = vsel %vm119, %v330, %v312
    %v339 = vsel %vm119, %v331, %v314
    %v340 = vsel %vm119, %v332, %v316
    %v341 = vld [vmem:[%s1 + $0x1] sm:$0x1]
    %v342 = vlaneseq
    %v343 = vshrl.u32 %v342, 7
    %v344 = vsub.s32 0, %v343
    %v345 = vrot.slane %v341, %v344
    %v346 = vmul.f32 %v345, %v333
    %v347 = vmul.f32 %v345, %v334
    %v348 = vmul.f32 %v345, %v335
    %v349 = vmul.f32 %v345, %v336
    %v350 = vmul.f32 %v345, %v337
    %v351 = vmul.f32 %v345, %v338
    %v352 = vmul.f32 %v345, %v339
    %v353 = vmul.f32 %v345, %v340
    %v354 = vadd.f32 %v245, %v346
    %v355 = vadd.f32 %v246, %v347
    %v356 = vadd.f32 %v247, %v348
    %v357 = vadd.f32 %v248, %v349
    %v358 = vadd.f32 %v249, %v350
    %v359 = vadd.f32 %v250, %v351
    %v360 = vadd.f32 %v251, %v352
    %v361 = vadd.f32 %v252, %v353
    %v362 = vld [vmem:[%s1 + $0x4] sm:$0x1]
    %v363 = vlaneseq
    %v364 = vshrl.u32 %v363, 7
    %v365 = vsub.s32 0, %v364
    %v366 = vrot.slane %v362, %v365
    %v367 = vmul.f32 %v366, %v333
    %v368 = vmul.f32 %v366, %v334
    %v369 = vmul.f32 %v366, %v335
    %v370 = vmul.f32 %v366, %v336
    %v371 = vmul.f32 %v366, %v337
    %v372 = vmul.f32 %v366, %v338
    %v373 = vmul.f32 %v366, %v339
    %v374 = vmul.f32 %v366, %v340
    %v383 = vrot.slane %v367, 1
    %v384 = vrot.slane %v368, 1
    %v385 = vsel %vm170, %v383, %v384
    %v386 = vrot.slane %v369, 1
    %v387 = vsel %vm170, %v384, %v386
    %v388 = vrot.slane %v370, 1
    %v389 = vsel %vm170, %v386, %v388
    %v390 = vrot.slane %v371, 1
    %v391 = vrot.slane %v372, 1
    %v392 = vsel %vm170, %v390, %v391
    %v393 = vrot.slane %v373, 1
    %v394 = vsel %vm170, %v391, %v393
    %v395 = vrot.slane %v374, 1
    %v396 = vsel %vm170, %v393, %v395
    %v405 = vadd.f32 %v354, %v385
    %v406 = vadd.f32 %v355, %v387
    %v407 = vadd.f32 %v356, %v389
    %v408 = vadd.f32 %v357, %v388
    %v409 = vadd.f32 %v358, %v392
    %v410 = vadd.f32 %v359, %v394
    %v411 = vadd.f32 %v360, %v396
    %v412 = vadd.f32 %v361, %v395
    %v413 = vld [vmem:[%s1 + $0x7] sm:$0x1]
    %v414 = vlaneseq
    %v415 = vshrl.u32 %v414, 7
    %v416 = vsub.s32 0, %v415
    %v417 = vrot.slane %v413, %v416
    %v418 = vmul.f32 %v417, %v333
    %v419 = vmul.f32 %v417, %v334
    %v420 = vmul.f32 %v417, %v335
    %v421 = vmul.f32 %v417, %v336
    %v422 = vmul.f32 %v417, %v337
    %v423 = vmul.f32 %v417, %v338
    %v424 = vmul.f32 %v417, %v339
    %v425 = vmul.f32 %v417, %v340
    %v434 = vrot.slane %v418, 2
    %v435 = vrot.slane %v419, 2
    %v436 = vsel %vm222, %v434, %v435
    %v437 = vrot.slane %v420, 2
    %v438 = vsel %vm222, %v435, %v437
    %v439 = vrot.slane %v421, 2
    %v440 = vsel %vm222, %v437, %v439
    %v441 = vrot.slane %v422, 2
    %v442 = vrot.slane %v423, 2
    %v443 = vsel %vm222, %v441, %v442
    %v444 = vrot.slane %v424, 2
    %v445 = vsel %vm222, %v442, %v444
    %v446 = vrot.slane %v425, 2
    %v447 = vsel %vm222, %v444, %v446
    %v456 = vadd.f32 %v405, %v436
    %v457 = vadd.f32 %v406, %v438
    %v458 = vadd.f32 %v407, %v440
    %v459 = vadd.f32 %v408, %v439
    %v460 = vadd.f32 %v409, %v443
    %v461 = vadd.f32 %v410, %v445
    %v462 = vadd.f32 %v411, %v447
    %v463 = vadd.f32 %v412, %v446
    %464 = vrot.lane.b32.xlu0 %v39, 126
    %v465 = vpop.permute.xlu0 %464
    %466 = vrot.lane.b32.xlu0 %v40, 126
    %v467 = vpop.permute.xlu0 %466
    %468 = vrot.lane.b32.xlu0 %v41, 126
    %v469 = vpop.permute.xlu0 %468
    %470 = vrot.lane.b32.xlu0 %v42, 126
    %v471 = vpop.permute.xlu0 %470
    %472 = vrot.lane.b32.xlu0 %v43, 126
    %v473 = vpop.permute.xlu0 %472
    %474 = vrot.lane.b32.xlu0 %v44, 126
    %v475 = vpop.permute.xlu0 %474
    %476 = vrot.lane.b32.xlu0 %v45, 126
    %v477 = vpop.permute.xlu0 %476
    %478 = vrot.lane.b32.xlu0 %v46, 126
    %v479 = vpop.permute.xlu0 %478
    %488 = vrot.lane.b32.xlu0 %v39, 26
    %v489 = vpop.permute.xlu0 %488
    %490 = vrot.lane.b32.xlu0 %v40, 26
    %v491 = vpop.permute.xlu0 %490
    %492 = vrot.lane.b32.xlu0 %v41, 26
    %v493 = vpop.permute.xlu0 %492
    %494 = vrot.lane.b32.xlu0 %v42, 26
    %v495 = vpop.permute.xlu0 %494
    %496 = vrot.lane.b32.xlu0 %v43, 26
    %v497 = vpop.permute.xlu0 %496
    %498 = vrot.lane.b32.xlu0 %v44, 26
    %v499 = vpop.permute.xlu0 %498
    %500 = vrot.lane.b32.xlu0 %v45, 26
    %v501 = vpop.permute.xlu0 %500
    %502 = vrot.lane.b32.xlu0 %v46, 26
    %v503 = vpop.permute.xlu0 %502
    %512 = vrot.lane.b32.xlu0 %v39, 54
    %v513 = vpop.permute.xlu0 %512
    %514 = vrot.lane.b32.xlu0 %v40, 54
    %v515 = vpop.permute.xlu0 %514
    %516 = vrot.lane.b32.xlu0 %v41, 54
    %v517 = vpop.permute.xlu0 %516
    %518 = vrot.lane.b32.xlu0 %v42, 54
    %v519 = vpop.permute.xlu0 %518
    %520 = vrot.lane.b32.xlu0 %v43, 54
    %v521 = vpop.permute.xlu0 %520
    %522 = vrot.lane.b32.xlu0 %v44, 54
    %v523 = vpop.permute.xlu0 %522
    %524 = vrot.lane.b32.xlu0 %v45, 54
    %v525 = vpop.permute.xlu0 %524
    %526 = vrot.lane.b32.xlu0 %v46, 54
    %v527 = vpop.permute.xlu0 %526
    %v536 = vsel %vm110, %v465, %v489
    %v537 = vsel %vm110, %v467, %v491
    %v538 = vsel %vm110, %v469, %v493
    %v539 = vsel %vm110, %v471, %v495
    %v540 = vsel %vm110, %v473, %v497
    %v541 = vsel %vm110, %v475, %v499
    %v542 = vsel %vm110, %v477, %v501
    %v543 = vsel %vm110, %v479, %v503
    %v544 = vsel %vm119, %v536, %v513
    %v545 = vsel %vm119, %v537, %v515
    %v546 = vsel %vm119, %v538, %v517
    %v547 = vsel %vm119, %v539, %v519
    %v548 = vsel %vm119, %v540, %v521
    %v549 = vsel %vm119, %v541, %v523
    %v550 = vsel %vm119, %v542, %v525
    %v551 = vsel %vm119, %v543, %v527
    %v552 = vld [vmem:[%s1 + $0x2] sm:$0x1]
    %v553 = vlaneseq
    %v554 = vshrl.u32 %v553, 7
    %v555 = vsub.s32 0, %v554
    %v556 = vrot.slane %v552, %v555
    %v557 = vmul.f32 %v556, %v544
    %v558 = vmul.f32 %v556, %v545
    %v559 = vmul.f32 %v556, %v546
    %v560 = vmul.f32 %v556, %v547
    %v561 = vmul.f32 %v556, %v548
    %v562 = vmul.f32 %v556, %v549
    %v563 = vmul.f32 %v556, %v550
    %v564 = vmul.f32 %v556, %v551
    %v565 = vadd.f32 %v456, %v557
    %v566 = vadd.f32 %v457, %v558
    %v567 = vadd.f32 %v458, %v559
    %v568 = vadd.f32 %v459, %v560
    %v569 = vadd.f32 %v460, %v561
    %v570 = vadd.f32 %v461, %v562
    %v571 = vadd.f32 %v462, %v563
    %v572 = vadd.f32 %v463, %v564
    %v573 = vld [vmem:[%s1 + $0x5] sm:$0x1]
    %v574 = vlaneseq
    %v575 = vshrl.u32 %v574, 7
    %v576 = vsub.s32 0, %v575
    %v577 = vrot.slane %v573, %v576
    %v578 = vmul.f32 %v577, %v544
    %v579 = vmul.f32 %v577, %v545
    %v580 = vmul.f32 %v577, %v546
    %v581 = vmul.f32 %v577, %v547
    %v582 = vmul.f32 %v577, %v548
    %v583 = vmul.f32 %v577, %v549
    %v584 = vmul.f32 %v577, %v550
    %v585 = vmul.f32 %v577, %v551
    %v594 = vrot.slane %v578, 1
    %v595 = vrot.slane %v579, 1
    %v596 = vsel %vm170, %v594, %v595
    %v597 = vrot.slane %v580, 1
    %v598 = vsel %vm170, %v595, %v597
    %v599 = vrot.slane %v581, 1
    %v600 = vsel %vm170, %v597, %v599
    %v601 = vrot.slane %v582, 1
    %v602 = vrot.slane %v583, 1
    %v603 = vsel %vm170, %v601, %v602
    %v604 = vrot.slane %v584, 1
    %v605 = vsel %vm170, %v602, %v604
    %v606 = vrot.slane %v585, 1
    %v607 = vsel %vm170, %v604, %v606
    %v616 = vadd.f32 %v565, %v596
    %v617 = vadd.f32 %v566, %v598
    %v618 = vadd.f32 %v567, %v600
    %v619 = vadd.f32 %v568, %v599
    %v620 = vadd.f32 %v569, %v603
    %v621 = vadd.f32 %v570, %v605
    %v622 = vadd.f32 %v571, %v607
    %v623 = vadd.f32 %v572, %v606
    %v624 = vld [vmem:[%s1 + $0x8] sm:$0x1]
    %v625 = vlaneseq
    %v626 = vshrl.u32 %v625, 7
    %v627 = vsub.s32 0, %v626
    %v628 = vrot.slane %v624, %v627
    %v629 = vmul.f32 %v628, %v544
    %v630 = vmul.f32 %v628, %v545
    %v631 = vmul.f32 %v628, %v546
    %v632 = vmul.f32 %v628, %v547
    %v633 = vmul.f32 %v628, %v548
    %v634 = vmul.f32 %v628, %v549
    %v635 = vmul.f32 %v628, %v550
    %v636 = vmul.f32 %v628, %v551
    %v645 = vrot.slane %v629, 2
    %v646 = vrot.slane %v630, 2
    %v647 = vsel %vm222, %v645, %v646
    %v648 = vrot.slane %v631, 2
    %v649 = vsel %vm222, %v646, %v648
    %v650 = vrot.slane %v632, 2
    %v651 = vsel %vm222, %v648, %v650
    %v652 = vrot.slane %v633, 2
    %v653 = vrot.slane %v634, 2
    %v654 = vsel %vm222, %v652, %v653
    %v655 = vrot.slane %v635, 2
    %v656 = vsel %vm222, %v653, %v655
    %v657 = vrot.slane %v636, 2
    %v658 = vsel %vm222, %v655, %v657
    %v667 = vadd.f32 %v616, %v647
    %v668 = vadd.f32 %v617, %v649
    %v669 = vadd.f32 %v618, %v651
    %v670 = vadd.f32 %v619, %v650
    %v671 = vadd.f32 %v620, %v654
    %v672 = vadd.f32 %v621, %v656
    %v673 = vadd.f32 %v622, %v658
    %v674 = vadd.f32 %v623, %v657
    %v675 = vmax.f32 %v667, 0.0
    %v676 = vmax.f32 %v668, 0.0
    %v677 = vmax.f32 %v669, 0.0
    %v678 = vmax.f32 %v670, 0.0
    %v679 = vmax.f32 %v671, 0.0
    %v680 = vmax.f32 %v672, 0.0
    %v681 = vmax.f32 %v673, 0.0
    %v682 = vmax.f32 %v674, 0.0
    %691 = vrot.lane.b32.xlu0 %v675, 1
    %v692 = vpop.permute.xlu0 %691
    %693 = vrot.lane.b32.xlu0 %v676, 1
    %v694 = vpop.permute.xlu0 %693
    %695 = vrot.lane.b32.xlu0 %v677, 1
    %v696 = vpop.permute.xlu0 %695
    %697 = vrot.lane.b32.xlu0 %v678, 1
    %v698 = vpop.permute.xlu0 %697
    %699 = vrot.lane.b32.xlu0 %v679, 1
    %v700 = vpop.permute.xlu0 %699
    %701 = vrot.lane.b32.xlu0 %v680, 1
    %v702 = vpop.permute.xlu0 %701
    %703 = vrot.lane.b32.xlu0 %v681, 1
    %v704 = vpop.permute.xlu0 %703
    %705 = vrot.lane.b32.xlu0 %v682, 1
    %v706 = vpop.permute.xlu0 %705
    %715 = vrot.lane.b32.xlu0 %v675, 3
    %v716 = vpop.permute.xlu0 %715
    %717 = vrot.lane.b32.xlu0 %v676, 3
    %v718 = vpop.permute.xlu0 %717
    %719 = vrot.lane.b32.xlu0 %v677, 3
    %v720 = vpop.permute.xlu0 %719
    %721 = vrot.lane.b32.xlu0 %v678, 3
    %v722 = vpop.permute.xlu0 %721
    %723 = vrot.lane.b32.xlu0 %v679, 3
    %v724 = vpop.permute.xlu0 %723
    %725 = vrot.lane.b32.xlu0 %v680, 3
    %v726 = vpop.permute.xlu0 %725
    %727 = vrot.lane.b32.xlu0 %v681, 3
    %v728 = vpop.permute.xlu0 %727
    %729 = vrot.lane.b32.xlu0 %v682, 3
    %v730 = vpop.permute.xlu0 %729
    %739 = vrot.lane.b32.xlu0 %v675, 5
    %v740 = vpop.permute.xlu0 %739
    %741 = vrot.lane.b32.xlu0 %v676, 5
    %v742 = vpop.permute.xlu0 %741
    %743 = vrot.lane.b32.xlu0 %v677, 5
    %v744 = vpop.permute.xlu0 %743
    %745 = vrot.lane.b32.xlu0 %v678, 5
    %v746 = vpop.permute.xlu0 %745
    %747 = vrot.lane.b32.xlu0 %v679, 5
    %v748 = vpop.permute.xlu0 %747
    %749 = vrot.lane.b32.xlu0 %v680, 5
    %v750 = vpop.permute.xlu0 %749
    %751 = vrot.lane.b32.xlu0 %v681, 5
    %v752 = vpop.permute.xlu0 %751
    %753 = vrot.lane.b32.xlu0 %v682, 5
    %v754 = vpop.permute.xlu0 %753
    %vm763 = vcmask 7168
    %v764 = vsel %vm763, 0.0, %v692
    %v765 = vsel %vm763, 0.0, %v694
    %v766 = vsel %vm763, 0.0, %v696
    %v767 = vsel %vm763, 0.0, %v698
    %v768 = vsel %vm763, 0.0, %v700
    %v769 = vsel %vm763, 0.0, %v702
    %v770 = vsel %vm763, 0.0, %v704
    %v771 = vsel %vm763, 0.0, %v706
    %vm772 = vcmask 236544
    %v773 = vsel %vm772, %v764, 0.0
    %v774 = vsel %vm772, %v765, 0.0
    %v775 = vsel %vm772, %v766, 0.0
    %v776 = vsel %vm772, %v767, 0.0
    %v777 = vsel %vm772, %v768, 0.0
    %v778 = vsel %vm772, %v769, 0.0
    %v779 = vsel %vm772, %v770, 0.0
    %v780 = vsel %vm772, %v771, 0.0
    %vm781 = vcmask 252928
    %v782 = vsel %vm781, %v773, %v716
    %v783 = vsel %vm781, %v774, %v718
    %v784 = vsel %vm781, %v775, %v720
    %v785 = vsel %vm781, %v776, %v722
    %v786 = vsel %vm781, %v777, %v724
    %v787 = vsel %vm781, %v778, %v726
    %v788 = vsel %vm781, %v779, %v728
    %v789 = vsel %vm781, %v780, %v730
    %vm790 = vcmask 482304
    %v791 = vsel %vm790, %v782, 0.0
    %v792 = vsel %vm790, %v783, 0.0
    %v793 = vsel %vm790, %v784, 0.0
    %v794 = vsel %vm790, %v785, 0.0
    %v795 = vsel %vm790, %v786, 0.0
    %v796 = vsel %vm790, %v787, 0.0
    %v797 = vsel %vm790, %v788, 0.0
    %v798 = vsel %vm790, %v789, 0.0
    %vm799 = vcmask 498688
    %v800 = vsel %vm799, %v791, %v740
    %v801 = vsel %vm799, %v792, %v742
    %v802 = vsel %vm799, %v793, %v744
    %v803 = vsel %vm799, %v794, %v746
    %v804 = vsel %vm799, %v795, %v748
    %v805 = vsel %vm799, %v796, %v750
    %v806 = vsel %vm799, %v797, %v752
    %v807 = vsel %vm799, %v798, %v754
    %vm808 = vcmask 728064
    %v809 = vsel %vm808, %v800, 0.0
    %v810 = vsel %vm808, %v801, 0.0
    %v811 = vsel %vm808, %v802, 0.0
    %v812 = vsel %vm808, %v803, 0.0
    %v813 = vsel %vm808, %v804, 0.0
    %v814 = vsel %vm808, %v805, 0.0
    %v815 = vsel %vm808, %v806, 0.0
    %v816 = vsel %vm808, %v807, 0.0
    %vm825 = vcmask 1040384
    %v826 = vrot.slane %v809, 7
    %v827 = vrot.slane %v810, 7
    %v828 = vsel %vm825, %v826, %v827
    %v829 = vrot.slane %v811, 7
    %v830 = vsel %vm825, %v827, %v829
    %v831 = vrot.slane %v812, 7
    %v832 = vsel %vm825, %v829, %v831
    %v833 = vrot.slane %v813, 7
    %v834 = vrot.slane %v814, 7
    %v835 = vsel %vm825, %v833, %v834
    %v836 = vrot.slane %v815, 7
    %v837 = vsel %vm825, %v834, %v836
    %v838 = vrot.slane %v816, 7
    %v839 = vsel %vm825, %v836, %v838
    %v848 = vsel %vm825, 0.0, %v826
    %v849 = vsel %vm825, 0.0, %v833
    %vm850 = vcmask 1044480
    %v851 = vsel %vm850, %v832, 0.0
    %v852 = vsel %vm850, %v839, 0.0
    %v853 = vld [vmem:[%s4] sm:$0x1]
    %v855 = vlaneseq
    %v856 = vshrl.u32 %v855, 7
    %v857 = vsub.s32 0, %v856
    %v858 = vrot.slane %v853, %v857
    %864 = vrot.lane.b32.xlu0 %v848, 28
    %v865 = vpop.permute.xlu0 %864
    %866 = vrot.lane.b32.xlu0 %v828, 28
    %v867 = vpop.permute.xlu0 %866
    %868 = vrot.lane.b32.xlu0 %v830, 28
    %v869 = vpop.permute.xlu0 %868
    %870 = vrot.lane.b32.xlu0 %v851, 28
    %v871 = vpop.permute.xlu0 %870
    %872 = vrot.lane.b32.xlu0 %v849, 28
    %v873 = vpop.permute.xlu0 %872
    %874 = vrot.lane.b32.xlu0 %v835, 28
    %v875 = vpop.permute.xlu0 %874
    %876 = vrot.lane.b32.xlu0 %v837, 28
    %v877 = vpop.permute.xlu0 %876
    %878 = vrot.lane.b32.xlu0 %v852, 28
    %v879 = vpop.permute.xlu0 %878
    %888 = vrot.lane.b32.xlu0 %v848, 56
    %v889 = vpop.permute.xlu0 %888
    %890 = vrot.lane.b32.xlu0 %v828, 56
    %v891 = vpop.permute.xlu0 %890
    %892 = vrot.lane.b32.xlu0 %v830, 56
    %v893 = vpop.permute.xlu0 %892
    %894 = vrot.lane.b32.xlu0 %v851, 56
    %v895 = vpop.permute.xlu0 %894
    %896 = vrot.lane.b32.xlu0 %v849, 56
    %v897 = vpop.permute.xlu0 %896
    %898 = vrot.lane.b32.xlu0 %v835, 56
    %v899 = vpop.permute.xlu0 %898
    %900 = vrot.lane.b32.xlu0 %v837, 56
    %v901 = vpop.permute.xlu0 %900
    %902 = vrot.lane.b32.xlu0 %v852, 56
    %v903 = vpop.permute.xlu0 %902
    %v912 = vsel %vm110, %v848, %v865
    %v913 = vsel %vm110, %v828, %v867
    %v914 = vsel %vm110, %v830, %v869
    %v915 = vsel %vm110, %v851, %v871
    %v916 = vsel %vm110, %v849, %v873
    %v917 = vsel %vm110, %v835, %v875
    %v918 = vsel %vm110, %v837, %v877
    %v919 = vsel %vm110, %v852, %v879
    %v920 = vsel %vm119, %v912, %v889
    %v921 = vsel %vm119, %v913, %v891
    %v922 = vsel %vm119, %v914, %v893
    %v923 = vsel %vm119, %v915, %v895
    %v924 = vsel %vm119, %v916, %v897
    %v925 = vsel %vm119, %v917, %v899
    %v926 = vsel %vm119, %v918, %v901
    %v927 = vsel %vm119, %v919, %v903
    %v928 = vld [vmem:[%s3] sm:$0x1]
    %v929 = vlaneseq
    %v930 = vshrl.u32 %v929, 7
    %v931 = vsub.s32 0, %v930
    %v932 = vrot.slane %v928, %v931
    %v933 = vmul.f32 %v932, %v920
    %v934 = vmul.f32 %v932, %v921
    %v935 = vmul.f32 %v932, %v922
    %v936 = vmul.f32 %v932, %v923
    %v937 = vmul.f32 %v932, %v924
    %v938 = vmul.f32 %v932, %v925
    %v939 = vmul.f32 %v932, %v926
    %v940 = vmul.f32 %v932, %v927
    %v941 = vadd.f32 %v858, %v933
    %v942 = vadd.f32 %v858, %v934
    %v943 = vadd.f32 %v858, %v935
    %v944 = vadd.f32 %v858, %v936
    %v945 = vadd.f32 %v858, %v937
    %v946 = vadd.f32 %v858, %v938
    %v947 = vadd.f32 %v858, %v939
    %v948 = vadd.f32 %v858, %v940
    %v949 = vld [vmem:[%s3 + $0x3] sm:$0x1]
    %v950 = vlaneseq
    %v951 = vshrl.u32 %v950, 7
    %v952 = vsub.s32 0, %v951
    %v953 = vrot.slane %v949, %v952
    %v954 = vmul.f32 %v953, %v920
    %v955 = vmul.f32 %v953, %v921
    %v956 = vmul.f32 %v953, %v922
    %v957 = vmul.f32 %v953, %v923
    %v958 = vmul.f32 %v953, %v924
    %v959 = vmul.f32 %v953, %v925
    %v960 = vmul.f32 %v953, %v926
    %v961 = vmul.f32 %v953, %v927
    %v970 = vrot.slane %v954, 1
    %v971 = vrot.slane %v955, 1
    %v972 = vsel %vm170, %v970, %v971
    %v973 = vrot.slane %v956, 1
    %v974 = vsel %vm170, %v971, %v973
    %v975 = vrot.slane %v957, 1
    %v976 = vsel %vm170, %v973, %v975
    %v977 = vrot.slane %v958, 1
    %v978 = vrot.slane %v959, 1
    %v979 = vsel %vm170, %v977, %v978
    %v980 = vrot.slane %v960, 1
    %v981 = vsel %vm170, %v978, %v980
    %v982 = vrot.slane %v961, 1
    %v983 = vsel %vm170, %v980, %v982
    %v992 = vadd.f32 %v941, %v972
    %v993 = vadd.f32 %v942, %v974
    %v994 = vadd.f32 %v943, %v976
    %v995 = vadd.f32 %v944, %v975
    %v996 = vadd.f32 %v945, %v979
    %v997 = vadd.f32 %v946, %v981
    %v998 = vadd.f32 %v947, %v983
    %v999 = vadd.f32 %v948, %v982
    %v1000 = vld [vmem:[%s3 + $0x6] sm:$0x1]
    %v1001 = vlaneseq
    %v1002 = vshrl.u32 %v1001, 7
    %v1003 = vsub.s32 0, %v1002
    %v1004 = vrot.slane %v1000, %v1003
    %v1005 = vmul.f32 %v1004, %v920
    %v1006 = vmul.f32 %v1004, %v921
    %v1007 = vmul.f32 %v1004, %v922
    %v1008 = vmul.f32 %v1004, %v923
    %v1009 = vmul.f32 %v1004, %v924
    %v1010 = vmul.f32 %v1004, %v925
    %v1011 = vmul.f32 %v1004, %v926
    %v1012 = vmul.f32 %v1004, %v927
    %v1021 = vrot.slane %v1005, 2
    %v1022 = vrot.slane %v1006, 2
    %v1023 = vsel %vm222, %v1021, %v1022
    %v1024 = vrot.slane %v1007, 2
    %v1025 = vsel %vm222, %v1022, %v1024
    %v1026 = vrot.slane %v1008, 2
    %v1027 = vsel %vm222, %v1024, %v1026
    %v1028 = vrot.slane %v1009, 2
    %v1029 = vrot.slane %v1010, 2
    %v1030 = vsel %vm222, %v1028, %v1029
    %v1031 = vrot.slane %v1011, 2
    %v1032 = vsel %vm222, %v1029, %v1031
    %v1033 = vrot.slane %v1012, 2
    %v1034 = vsel %vm222, %v1031, %v1033
    %v1043 = vadd.f32 %v992, %v1023
    %v1044 = vadd.f32 %v993, %v1025
    %v1045 = vadd.f32 %v994, %v1027
    %v1046 = vadd.f32 %v995, %v1026
    %v1047 = vadd.f32 %v996, %v1030
    %v1048 = vadd.f32 %v997, %v1032
    %v1049 = vadd.f32 %v998, %v1034
    %v1050 = vadd.f32 %v999, %v1033
    %1051 = vrot.lane.b32.xlu0 %v848, 127
    %v1052 = vpop.permute.xlu0 %1051
    %1053 = vrot.lane.b32.xlu0 %v828, 127
    %v1054 = vpop.permute.xlu0 %1053
    %1055 = vrot.lane.b32.xlu0 %v830, 127
    %v1056 = vpop.permute.xlu0 %1055
    %1057 = vrot.lane.b32.xlu0 %v851, 127
    %v1058 = vpop.permute.xlu0 %1057
    %1059 = vrot.lane.b32.xlu0 %v849, 127
    %v1060 = vpop.permute.xlu0 %1059
    %1061 = vrot.lane.b32.xlu0 %v835, 127
    %v1062 = vpop.permute.xlu0 %1061
    %1063 = vrot.lane.b32.xlu0 %v837, 127
    %v1064 = vpop.permute.xlu0 %1063
    %1065 = vrot.lane.b32.xlu0 %v852, 127
    %v1066 = vpop.permute.xlu0 %1065
    %1075 = vrot.lane.b32.xlu0 %v848, 27
    %v1076 = vpop.permute.xlu0 %1075
    %1077 = vrot.lane.b32.xlu0 %v828, 27
    %v1078 = vpop.permute.xlu0 %1077
    %1079 = vrot.lane.b32.xlu0 %v830, 27
    %v1080 = vpop.permute.xlu0 %1079
    %1081 = vrot.lane.b32.xlu0 %v851, 27
    %v1082 = vpop.permute.xlu0 %1081
    %1083 = vrot.lane.b32.xlu0 %v849, 27
    %v1084 = vpop.permute.xlu0 %1083
    %1085 = vrot.lane.b32.xlu0 %v835, 27
    %v1086 = vpop.permute.xlu0 %1085
    %1087 = vrot.lane.b32.xlu0 %v837, 27
    %v1088 = vpop.permute.xlu0 %1087
    %1089 = vrot.lane.b32.xlu0 %v852, 27
    %v1090 = vpop.permute.xlu0 %1089
    %1099 = vrot.lane.b32.xlu0 %v848, 55
    %v1100 = vpop.permute.xlu0 %1099
    %1101 = vrot.lane.b32.xlu0 %v828, 55
    %v1102 = vpop.permute.xlu0 %1101
    %1103 = vrot.lane.b32.xlu0 %v830, 55
    %v1104 = vpop.permute.xlu0 %1103
    %1105 = vrot.lane.b32.xlu0 %v851, 55
    %v1106 = vpop.permute.xlu0 %1105
    %1107 = vrot.lane.b32.xlu0 %v849, 55
    %v1108 = vpop.permute.xlu0 %1107
    %1109 = vrot.lane.b32.xlu0 %v835, 55
    %v1110 = vpop.permute.xlu0 %1109
    %1111 = vrot.lane.b32.xlu0 %v837, 55
    %v1112 = vpop.permute.xlu0 %1111
    %1113 = vrot.lane.b32.xlu0 %v852, 55
    %v1114 = vpop.permute.xlu0 %1113
    %v1123 = vsel %vm110, %v1052, %v1076
    %v1124 = vsel %vm110, %v1054, %v1078
    %v1125 = vsel %vm110, %v1056, %v1080
    %v1126 = vsel %vm110, %v1058, %v1082
    %v1127 = vsel %vm110, %v1060, %v1084
    %v1128 = vsel %vm110, %v1062, %v1086
    %v1129 = vsel %vm110, %v1064, %v1088
    %v1130 = vsel %vm110, %v1066, %v1090
    %v1131 = vsel %vm119, %v1123, %v1100
    %v1132 = vsel %vm119, %v1124, %v1102
    %v1133 = vsel %vm119, %v1125, %v1104
    %v1134 = vsel %vm119, %v1126, %v1106
    %v1135 = vsel %vm119, %v1127, %v1108
    %v1136 = vsel %vm119, %v1128, %v1110
    %v1137 = vsel %vm119, %v1129, %v1112
    %v1138 = vsel %vm119, %v1130, %v1114
    %v1139 = vld [vmem:[%s3 + $0x1] sm:$0x1]
    %v1140 = vlaneseq
    %v1141 = vshrl.u32 %v1140, 7
    %v1142 = vsub.s32 0, %v1141
    %v1143 = vrot.slane %v1139, %v1142
    %v1144 = vmul.f32 %v1143, %v1131
    %v1145 = vmul.f32 %v1143, %v1132
    %v1146 = vmul.f32 %v1143, %v1133
    %v1147 = vmul.f32 %v1143, %v1134
    %v1148 = vmul.f32 %v1143, %v1135
    %v1149 = vmul.f32 %v1143, %v1136
    %v1150 = vmul.f32 %v1143, %v1137
    %v1151 = vmul.f32 %v1143, %v1138
    %v1152 = vadd.f32 %v1043, %v1144
    %v1153 = vadd.f32 %v1044, %v1145
    %v1154 = vadd.f32 %v1045, %v1146
    %v1155 = vadd.f32 %v1046, %v1147
    %v1156 = vadd.f32 %v1047, %v1148
    %v1157 = vadd.f32 %v1048, %v1149
    %v1158 = vadd.f32 %v1049, %v1150
    %v1159 = vadd.f32 %v1050, %v1151
    %v1160 = vld [vmem:[%s3 + $0x4] sm:$0x1]
    %v1161 = vlaneseq
    %v1162 = vshrl.u32 %v1161, 7
    %v1163 = vsub.s32 0, %v1162
    %v1164 = vrot.slane %v1160, %v1163
    %v1165 = vmul.f32 %v1164, %v1131
    %v1166 = vmul.f32 %v1164, %v1132
    %v1167 = vmul.f32 %v1164, %v1133
    %v1168 = vmul.f32 %v1164, %v1134
    %v1169 = vmul.f32 %v1164, %v1135
    %v1170 = vmul.f32 %v1164, %v1136
    %v1171 = vmul.f32 %v1164, %v1137
    %v1172 = vmul.f32 %v1164, %v1138
    %v1181 = vrot.slane %v1165, 1
    %v1182 = vrot.slane %v1166, 1
    %v1183 = vsel %vm170, %v1181, %v1182
    %v1184 = vrot.slane %v1167, 1
    %v1185 = vsel %vm170, %v1182, %v1184
    %v1186 = vrot.slane %v1168, 1
    %v1187 = vsel %vm170, %v1184, %v1186
    %v1188 = vrot.slane %v1169, 1
    %v1189 = vrot.slane %v1170, 1
    %v1190 = vsel %vm170, %v1188, %v1189
    %v1191 = vrot.slane %v1171, 1
    %v1192 = vsel %vm170, %v1189, %v1191
    %v1193 = vrot.slane %v1172, 1
    %v1194 = vsel %vm170, %v1191, %v1193
    %v1203 = vadd.f32 %v1152, %v1183
    %v1204 = vadd.f32 %v1153, %v1185
    %v1205 = vadd.f32 %v1154, %v1187
    %v1206 = vadd.f32 %v1155, %v1186
    %v1207 = vadd.f32 %v1156, %v1190
    %v1208 = vadd.f32 %v1157, %v1192
    %v1209 = vadd.f32 %v1158, %v1194
    %v1210 = vadd.f32 %v1159, %v1193
    %v1211 = vld [vmem:[%s3 + $0x7] sm:$0x1]
    %v1212 = vlaneseq
    %v1213 = vshrl.u32 %v1212, 7
    %v1214 = vsub.s32 0, %v1213
    %v1215 = vrot.slane %v1211, %v1214
    %v1216 = vmul.f32 %v1215, %v1131
    %v1217 = vmul.f32 %v1215, %v1132
    %v1218 = vmul.f32 %v1215, %v1133
    %v1219 = vmul.f32 %v1215, %v1134
    %v1220 = vmul.f32 %v1215, %v1135
    %v1221 = vmul.f32 %v1215, %v1136
    %v1222 = vmul.f32 %v1215, %v1137
    %v1223 = vmul.f32 %v1215, %v1138
    %v1232 = vrot.slane %v1216, 2
    %v1233 = vrot.slane %v1217, 2
    %v1234 = vsel %vm222, %v1232, %v1233
    %v1235 = vrot.slane %v1218, 2
    %v1236 = vsel %vm222, %v1233, %v1235
    %v1237 = vrot.slane %v1219, 2
    %v1238 = vsel %vm222, %v1235, %v1237
    %v1239 = vrot.slane %v1220, 2
    %v1240 = vrot.slane %v1221, 2
    %v1241 = vsel %vm222, %v1239, %v1240
    %v1242 = vrot.slane %v1222, 2
    %v1243 = vsel %vm222, %v1240, %v1242
    %v1244 = vrot.slane %v1223, 2
    %v1245 = vsel %vm222, %v1242, %v1244
    %v1254 = vadd.f32 %v1203, %v1234
    %v1255 = vadd.f32 %v1204, %v1236
    %v1256 = vadd.f32 %v1205, %v1238
    %v1257 = vadd.f32 %v1206, %v1237
    %v1258 = vadd.f32 %v1207, %v1241
    %v1259 = vadd.f32 %v1208, %v1243
    %v1260 = vadd.f32 %v1209, %v1245
    %v1261 = vadd.f32 %v1210, %v1244
    %1262 = vrot.lane.b32.xlu0 %v848, 126
    %v1263 = vpop.permute.xlu0 %1262
    %1264 = vrot.lane.b32.xlu0 %v828, 126
    %v1265 = vpop.permute.xlu0 %1264
    %1266 = vrot.lane.b32.xlu0 %v830, 126
    %v1267 = vpop.permute.xlu0 %1266
    %1268 = vrot.lane.b32.xlu0 %v851, 126
    %v1269 = vpop.permute.xlu0 %1268
    %1270 = vrot.lane.b32.xlu0 %v849, 126
    %v1271 = vpop.permute.xlu0 %1270
    %1272 = vrot.lane.b32.xlu0 %v835, 126
    %v1273 = vpop.permute.xlu0 %1272
    %1274 = vrot.lane.b32.xlu0 %v837, 126
    %v1275 = vpop.permute.xlu0 %1274
    %1276 = vrot.lane.b32.xlu0 %v852, 126
    %v1277 = vpop.permute.xlu0 %1276
    %1286 = vrot.lane.b32.xlu0 %v848, 26
    %v1287 = vpop.permute.xlu0 %1286
    %1288 = vrot.lane.b32.xlu0 %v828, 26
    %v1289 = vpop.permute.xlu0 %1288
    %1290 = vrot.lane.b32.xlu0 %v830, 26
    %v1291 = vpop.permute.xlu0 %1290
    %1292 = vrot.lane.b32.xlu0 %v851, 26
    %v1293 = vpop.permute.xlu0 %1292
    %1294 = vrot.lane.b32.xlu0 %v849, 26
    %v1295 = vpop.permute.xlu0 %1294
    %1296 = vrot.lane.b32.xlu0 %v835, 26
    %v1297 = vpop.permute.xlu0 %1296
    %1298 = vrot.lane.b32.xlu0 %v837, 26
    %v1299 = vpop.permute.xlu0 %1298
    %1300 = vrot.lane.b32.xlu0 %v852, 26
    %v1301 = vpop.permute.xlu0 %1300
    %1310 = vrot.lane.b32.xlu0 %v848, 54
    %v1311 = vpop.permute.xlu0 %1310
    %1312 = vrot.lane.b32.xlu0 %v828, 54
    %v1313 = vpop.permute.xlu0 %1312
    %1314 = vrot.lane.b32.xlu0 %v830, 54
    %v1315 = vpop.permute.xlu0 %1314
    %1316 = vrot.lane.b32.xlu0 %v851, 54
    %v1317 = vpop.permute.xlu0 %1316
    %1318 = vrot.lane.b32.xlu0 %v849, 54
    %v1319 = vpop.permute.xlu0 %1318
    %1320 = vrot.lane.b32.xlu0 %v835, 54
    %v1321 = vpop.permute.xlu0 %1320
    %1322 = vrot.lane.b32.xlu0 %v837, 54
    %v1323 = vpop.permute.xlu0 %1322
    %1324 = vrot.lane.b32.xlu0 %v852, 54
    %v1325 = vpop.permute.xlu0 %1324
    %v1334 = vsel %vm110, %v1263, %v1287
    %v1335 = vsel %vm110, %v1265, %v1289
    %v1336 = vsel %vm110, %v1267, %v1291
    %v1337 = vsel %vm110, %v1269, %v1293
    %v1338 = vsel %vm110, %v1271, %v1295
    %v1339 = vsel %vm110, %v1273, %v1297
    %v1340 = vsel %vm110, %v1275, %v1299
    %v1341 = vsel %vm110, %v1277, %v1301
    %v1342 = vsel %vm119, %v1334, %v1311
    %v1343 = vsel %vm119, %v1335, %v1313
    %v1344 = vsel %vm119, %v1336, %v1315
    %v1345 = vsel %vm119, %v1337, %v1317
    %v1346 = vsel %vm119, %v1338, %v1319
    %v1347 = vsel %vm119, %v1339, %v1321
    %v1348 = vsel %vm119, %v1340, %v1323
    %v1349 = vsel %vm119, %v1341, %v1325
    %v1350 = vld [vmem:[%s3 + $0x2] sm:$0x1]
    %v1351 = vlaneseq
    %v1352 = vshrl.u32 %v1351, 7
    %v1353 = vsub.s32 0, %v1352
    %v1354 = vrot.slane %v1350, %v1353
    %v1355 = vmul.f32 %v1354, %v1342
    %v1356 = vmul.f32 %v1354, %v1343
    %v1357 = vmul.f32 %v1354, %v1344
    %v1358 = vmul.f32 %v1354, %v1345
    %v1359 = vmul.f32 %v1354, %v1346
    %v1360 = vmul.f32 %v1354, %v1347
    %v1361 = vmul.f32 %v1354, %v1348
    %v1362 = vmul.f32 %v1354, %v1349
    %v1363 = vadd.f32 %v1254, %v1355
    %v1364 = vadd.f32 %v1255, %v1356
    %v1365 = vadd.f32 %v1256, %v1357
    %v1366 = vadd.f32 %v1257, %v1358
    %v1367 = vadd.f32 %v1258, %v1359
    %v1368 = vadd.f32 %v1259, %v1360
    %v1369 = vadd.f32 %v1260, %v1361
    %v1370 = vadd.f32 %v1261, %v1362
    %v1371 = vld [vmem:[%s3 + $0x5] sm:$0x1]
    %v1372 = vlaneseq
    %v1373 = vshrl.u32 %v1372, 7
    %v1374 = vsub.s32 0, %v1373
    %v1375 = vrot.slane %v1371, %v1374
    %v1376 = vmul.f32 %v1375, %v1342
    %v1377 = vmul.f32 %v1375, %v1343
    %v1378 = vmul.f32 %v1375, %v1344
    %v1379 = vmul.f32 %v1375, %v1345
    %v1380 = vmul.f32 %v1375, %v1346
    %v1381 = vmul.f32 %v1375, %v1347
    %v1382 = vmul.f32 %v1375, %v1348
    %v1383 = vmul.f32 %v1375, %v1349
    %v1392 = vrot.slane %v1376, 1
    %v1393 = vrot.slane %v1377, 1
    %v1394 = vsel %vm170, %v1392, %v1393
    %v1395 = vrot.slane %v1378, 1
    %v1396 = vsel %vm170, %v1393, %v1395
    %v1397 = vrot.slane %v1379, 1
    %v1398 = vsel %vm170, %v1395, %v1397
    %v1399 = vrot.slane %v1380, 1
    %v1400 = vrot.slane %v1381, 1
    %v1401 = vsel %vm170, %v1399, %v1400
    %v1402 = vrot.slane %v1382, 1
    %v1403 = vsel %vm170, %v1400, %v1402
    %v1404 = vrot.slane %v1383, 1
    %v1405 = vsel %vm170, %v1402, %v1404
    %v1414 = vadd.f32 %v1363, %v1394
    %v1415 = vadd.f32 %v1364, %v1396
    %v1416 = vadd.f32 %v1365, %v1398
    %v1417 = vadd.f32 %v1366, %v1397
    %v1418 = vadd.f32 %v1367, %v1401
    %v1419 = vadd.f32 %v1368, %v1403
    %v1420 = vadd.f32 %v1369, %v1405
    %v1421 = vadd.f32 %v1370, %v1404
    %v1422 = vld [vmem:[%s3 + $0x8] sm:$0x1]
    %v1423 = vlaneseq
    %v1424 = vshrl.u32 %v1423, 7
    %v1425 = vsub.s32 0, %v1424
    %v1426 = vrot.slane %v1422, %v1425
    %v1427 = vmul.f32 %v1426, %v1342
    %v1428 = vmul.f32 %v1426, %v1343
    %v1429 = vmul.f32 %v1426, %v1344
    %v1430 = vmul.f32 %v1426, %v1345
    %v1431 = vmul.f32 %v1426, %v1346
    %v1432 = vmul.f32 %v1426, %v1347
    %v1433 = vmul.f32 %v1426, %v1348
    %v1434 = vmul.f32 %v1426, %v1349
    %v1443 = vrot.slane %v1427, 2
    %v1444 = vrot.slane %v1428, 2
    %v1445 = vsel %vm222, %v1443, %v1444
    %v1446 = vrot.slane %v1429, 2
    %v1447 = vsel %vm222, %v1444, %v1446
    %v1448 = vrot.slane %v1430, 2
    %v1449 = vsel %vm222, %v1446, %v1448
    %v1450 = vrot.slane %v1431, 2
    %v1451 = vrot.slane %v1432, 2
    %v1452 = vsel %vm222, %v1450, %v1451
    %v1453 = vrot.slane %v1433, 2
    %v1454 = vsel %vm222, %v1451, %v1453
    %v1455 = vrot.slane %v1434, 2
    %v1456 = vsel %vm222, %v1453, %v1455
    %v1465 = vadd.f32 %v1414, %v1445
    %v1466 = vadd.f32 %v1415, %v1447
    %v1467 = vadd.f32 %v1416, %v1449
    %v1468 = vadd.f32 %v1417, %v1448
    %v1469 = vadd.f32 %v1418, %v1452
    %v1470 = vadd.f32 %v1419, %v1454
    %v1471 = vadd.f32 %v1420, %v1456
    %v1472 = vadd.f32 %v1421, %v1455
    %1473 = vrot.lane.b32.xlu0 %v848, 98
    %v1474 = vpop.permute.xlu0 %1473
    %1475 = vrot.lane.b32.xlu0 %v828, 98
    %v1476 = vpop.permute.xlu0 %1475
    %1477 = vrot.lane.b32.xlu0 %v830, 98
    %v1478 = vpop.permute.xlu0 %1477
    %1479 = vrot.lane.b32.xlu0 %v851, 98
    %v1480 = vpop.permute.xlu0 %1479
    %1481 = vrot.lane.b32.xlu0 %v849, 98
    %v1482 = vpop.permute.xlu0 %1481
    %1483 = vrot.lane.b32.xlu0 %v835, 98
    %v1484 = vpop.permute.xlu0 %1483
    %1485 = vrot.lane.b32.xlu0 %v837, 98
    %v1486 = vpop.permute.xlu0 %1485
    %1487 = vrot.lane.b32.xlu0 %v852, 98
    %v1488 = vpop.permute.xlu0 %1487
    %v1497 = vsel %vm110, %v1474, %v1263
    %v1498 = vsel %vm110, %v1476, %v1265
    %v1499 = vsel %vm110, %v1478, %v1267
    %v1500 = vsel %vm110, %v1480, %v1269
    %v1501 = vsel %vm110, %v1482, %v1271
    %v1502 = vsel %vm110, %v1484, %v1273
    %v1503 = vsel %vm110, %v1486, %v1275
    %v1504 = vsel %vm110, %v1488, %v1277
    %v1505 = vsel %vm119, %v1497, %v1287
    %v1506 = vsel %vm119, %v1498, %v1289
    %v1507 = vsel %vm119, %v1499, %v1291
    %v1508 = vsel %vm119, %v1500, %v1293
    %v1509 = vsel %vm119, %v1501, %v1295
    %v1510 = vsel %vm119, %v1502, %v1297
    %v1511 = vsel %vm119, %v1503, %v1299
    %v1512 = vsel %vm119, %v1504, %v1301
    %v1513 = vld [vmem:[%s3 + $0x9] sm:$0x1]
    %v1514 = vlaneseq
    %v1515 = vshrl.u32 %v1514, 7
    %v1516 = vsub.s32 0, %v1515
    %v1517 = vrot.slane %v1513, %v1516
    %v1518 = vmul.f32 %v1517, %v1505
    %v1519 = vmul.f32 %v1517, %v1506
    %v1520 = vmul.f32 %v1517, %v1507
    %v1521 = vmul.f32 %v1517, %v1508
    %v1522 = vmul.f32 %v1517, %v1509
    %v1523 = vmul.f32 %v1517, %v1510
    %v1524 = vmul.f32 %v1517, %v1511
    %v1525 = vmul.f32 %v1517, %v1512
    %v1526 = vadd.f32 %v1465, %v1518
    %v1527 = vadd.f32 %v1466, %v1519
    %v1528 = vadd.f32 %v1467, %v1520
    %v1529 = vadd.f32 %v1468, %v1521
    %v1530 = vadd.f32 %v1469, %v1522
    %v1531 = vadd.f32 %v1470, %v1523
    %v1532 = vadd.f32 %v1471, %v1524
    %v1533 = vadd.f32 %v1472, %v1525
    %v1534 = vld [vmem:[%s3 + $0xc] sm:$0x1]
    %v1535 = vlaneseq
    %v1536 = vshrl.u32 %v1535, 7
    %v1537 = vsub.s32 0, %v1536
    %v1538 = vrot.slane %v1534, %v1537
    %v1539 = vmul.f32 %v1538, %v1505
    %v1540 = vmul.f32 %v1538, %v1506
    %v1541 = vmul.f32 %v1538, %v1507
    %v1542 = vmul.f32 %v1538, %v1508
    %v1543 = vmul.f32 %v1538, %v1509
    %v1544 = vmul.f32 %v1538, %v1510
    %v1545 = vmul.f32 %v1538, %v1511
    %v1546 = vmul.f32 %v1538, %v1512
    %v1555 = vrot.slane %v1539, 1
    %v1556 = vrot.slane %v1540, 1
    %v1557 = vsel %vm170, %v1555, %v1556
    %v1558 = vrot.slane %v1541, 1
    %v1559 = vsel %vm170, %v1556, %v1558
    %v1560 = vrot.slane %v1542, 1
    %v1561 = vsel %vm170, %v1558, %v1560
    %v1562 = vrot.slane %v1543, 1
    %v1563 = vrot.slane %v1544, 1
    %v1564 = vsel %vm170, %v1562, %v1563
    %v1565 = vrot.slane %v1545, 1
    %v1566 = vsel %vm170, %v1563, %v1565
    %v1567 = vrot.slane %v1546, 1
    %v1568 = vsel %vm170, %v1565, %v1567
    %v1577 = vadd.f32 %v1526, %v1557
    %v1578 = vadd.f32 %v1527, %v1559
    %v1579 = vadd.f32 %v1528, %v1561
    %v1580 = vadd.f32 %v1529, %v1560
    %v1581 = vadd.f32 %v1530, %v1564
    %v1582 = vadd.f32 %v1531, %v1566
    %v1583 = vadd.f32 %v1532, %v1568
    %v1584 = vadd.f32 %v1533, %v1567
    %v1585 = vld [vmem:[%s3 + $0xf] sm:$0x1]
    %v1586 = vlaneseq
    %v1587 = vshrl.u32 %v1586, 7
    %v1588 = vsub.s32 0, %v1587
    %v1589 = vrot.slane %v1585, %v1588
    %v1590 = vmul.f32 %v1589, %v1505
    %v1591 = vmul.f32 %v1589, %v1506
    %v1592 = vmul.f32 %v1589, %v1507
    %v1593 = vmul.f32 %v1589, %v1508
    %v1594 = vmul.f32 %v1589, %v1509
    %v1595 = vmul.f32 %v1589, %v1510
    %v1596 = vmul.f32 %v1589, %v1511
    %v1597 = vmul.f32 %v1589, %v1512
    %v1606 = vrot.slane %v1590, 2
    %v1607 = vrot.slane %v1591, 2
    %v1608 = vsel %vm222, %v1606, %v1607
    %v1609 = vrot.slane %v1592, 2
    %v1610 = vsel %vm222, %v1607, %v1609
    %v1611 = vrot.slane %v1593, 2
    %v1612 = vsel %vm222, %v1609, %v1611
    %v1613 = vrot.slane %v1594, 2
    %v1614 = vrot.slane %v1595, 2
    %v1615 = vsel %vm222, %v1613, %v1614
    %v1616 = vrot.slane %v1596, 2
    %v1617 = vsel %vm222, %v1614, %v1616
    %v1618 = vrot.slane %v1597, 2
    %v1619 = vsel %vm222, %v1616, %v1618
    %v1628 = vadd.f32 %v1577, %v1608
    %v1629 = vadd.f32 %v1578, %v1610
    %v1630 = vadd.f32 %v1579, %v1612
    %v1631 = vadd.f32 %v1580, %v1611
    %v1632 = vadd.f32 %v1581, %v1615
    %v1633 = vadd.f32 %v1582, %v1617
    %v1634 = vadd.f32 %v1583, %v1619
    %v1635 = vadd.f32 %v1584, %v1618
    %1636 = vrot.lane.b32.xlu0 %v848, 97
    %v1637 = vpop.permute.xlu0 %1636
    %1638 = vrot.lane.b32.xlu0 %v828, 97
    %v1639 = vpop.permute.xlu0 %1638
    %1640 = vrot.lane.b32.xlu0 %v830, 97
    %v1641 = vpop.permute.xlu0 %1640
    %1642 = vrot.lane.b32.xlu0 %v851, 97
    %v1643 = vpop.permute.xlu0 %1642
    %1644 = vrot.lane.b32.xlu0 %v849, 97
    %v1645 = vpop.permute.xlu0 %1644
    %1646 = vrot.lane.b32.xlu0 %v835, 97
    %v1647 = vpop.permute.xlu0 %1646
    %1648 = vrot.lane.b32.xlu0 %v837, 97
    %v1649 = vpop.permute.xlu0 %1648
    %1650 = vrot.lane.b32.xlu0 %v852, 97
    %v1651 = vpop.permute.xlu0 %1650
    %1660 = vrot.lane.b32.xlu0 %v848, 125
    %v1661 = vpop.permute.xlu0 %1660
    %1662 = vrot.lane.b32.xlu0 %v828, 125
    %v1663 = vpop.permute.xlu0 %1662
    %1664 = vrot.lane.b32.xlu0 %v830, 125
    %v1665 = vpop.permute.xlu0 %1664
    %1666 = vrot.lane.b32.xlu0 %v851, 125
    %v1667 = vpop.permute.xlu0 %1666
    %1668 = vrot.lane.b32.xlu0 %v849, 125
    %v1669 = vpop.permute.xlu0 %1668
    %1670 = vrot.lane.b32.xlu0 %v835, 125
    %v1671 = vpop.permute.xlu0 %1670
    %1672 = vrot.lane.b32.xlu0 %v837, 125
    %v1673 = vpop.permute.xlu0 %1672
    %1674 = vrot.lane.b32.xlu0 %v852, 125
    %v1675 = vpop.permute.xlu0 %1674
    %1684 = vrot.lane.b32.xlu0 %v848, 25
    %v1685 = vpop.permute.xlu0 %1684
    %1686 = vrot.lane.b32.xlu0 %v828, 25
    %v1687 = vpop.permute.xlu0 %1686
    %1688 = vrot.lane.b32.xlu0 %v830, 25
    %v1689 = vpop.permute.xlu0 %1688
    %1690 = vrot.lane.b32.xlu0 %v851, 25
    %v1691 = vpop.permute.xlu0 %1690
    %1692 = vrot.lane.b32.xlu0 %v849, 25
    %v1693 = vpop.permute.xlu0 %1692
    %1694 = vrot.lane.b32.xlu0 %v835, 25
    %v1695 = vpop.permute.xlu0 %1694
    %1696 = vrot.lane.b32.xlu0 %v837, 25
    %v1697 = vpop.permute.xlu0 %1696
    %1698 = vrot.lane.b32.xlu0 %v852, 25
    %v1699 = vpop.permute.xlu0 %1698
    %v1708 = vsel %vm110, %v1637, %v1661
    %v1709 = vsel %vm110, %v1639, %v1663
    %v1710 = vsel %vm110, %v1641, %v1665
    %v1711 = vsel %vm110, %v1643, %v1667
    %v1712 = vsel %vm110, %v1645, %v1669
    %v1713 = vsel %vm110, %v1647, %v1671
    %v1714 = vsel %vm110, %v1649, %v1673
    %v1715 = vsel %vm110, %v1651, %v1675
    %v1716 = vsel %vm119, %v1708, %v1685
    %v1717 = vsel %vm119, %v1709, %v1687
    %v1718 = vsel %vm119, %v1710, %v1689
    %v1719 = vsel %vm119, %v1711, %v1691
    %v1720 = vsel %vm119, %v1712, %v1693
    %v1721 = vsel %vm119, %v1713, %v1695
    %v1722 = vsel %vm119, %v1714, %v1697
    %v1723 = vsel %vm119, %v1715, %v1699
    %v1724 = vld [vmem:[%s3 + $0xa] sm:$0x1]
    %v1725 = vlaneseq
    %v1726 = vshrl.u32 %v1725, 7
    %v1727 = vsub.s32 0, %v1726
    %v1728 = vrot.slane %v1724, %v1727
    %v1729 = vmul.f32 %v1728, %v1716
    %v1730 = vmul.f32 %v1728, %v1717
    %v1731 = vmul.f32 %v1728, %v1718
    %v1732 = vmul.f32 %v1728, %v1719
    %v1733 = vmul.f32 %v1728, %v1720
    %v1734 = vmul.f32 %v1728, %v1721
    %v1735 = vmul.f32 %v1728, %v1722
    %v1736 = vmul.f32 %v1728, %v1723
    %v1737 = vadd.f32 %v1628, %v1729
    %v1738 = vadd.f32 %v1629, %v1730
    %v1739 = vadd.f32 %v1630, %v1731
    %v1740 = vadd.f32 %v1631, %v1732
    %v1741 = vadd.f32 %v1632, %v1733
    %v1742 = vadd.f32 %v1633, %v1734
    %v1743 = vadd.f32 %v1634, %v1735
    %v1744 = vadd.f32 %v1635, %v1736
    %v1745 = vld [vmem:[%s3 + $0xd] sm:$0x1]
    %v1746 = vlaneseq
    %v1747 = vshrl.u32 %v1746, 7
    %v1748 = vsub.s32 0, %v1747
    %v1749 = vrot.slane %v1745, %v1748
    %v1750 = vmul.f32 %v1749, %v1716
    %v1751 = vmul.f32 %v1749, %v1717
    %v1752 = vmul.f32 %v1749, %v1718
    %v1753 = vmul.f32 %v1749, %v1719
    %v1754 = vmul.f32 %v1749, %v1720
    %v1755 = vmul.f32 %v1749, %v1721
    %v1756 = vmul.f32 %v1749, %v1722
    %v1757 = vmul.f32 %v1749, %v1723
    %v1766 = vrot.slane %v1750, 1
    %v1767 = vrot.slane %v1751, 1
    %v1768 = vsel %vm170, %v1766, %v1767
    %v1769 = vrot.slane %v1752, 1
    %v1770 = vsel %vm170, %v1767, %v1769
    %v1771 = vrot.slane %v1753, 1
    %v1772 = vsel %vm170, %v1769, %v1771
    %v1773 = vrot.slane %v1754, 1
    %v1774 = vrot.slane %v1755, 1
    %v1775 = vsel %vm170, %v1773, %v1774
    %v1776 = vrot.slane %v1756, 1
    %v1777 = vsel %vm170, %v1774, %v1776
    %v1778 = vrot.slane %v1757, 1
    %v1779 = vsel %vm170, %v1776, %v1778
    %v1788 = vadd.f32 %v1737, %v1768
    %v1789 = vadd.f32 %v1738, %v1770
    %v1790 = vadd.f32 %v1739, %v1772
    %v1791 = vadd.f32 %v1740, %v1771
    %v1792 = vadd.f32 %v1741, %v1775
    %v1793 = vadd.f32 %v1742, %v1777
    %v1794 = vadd.f32 %v1743, %v1779
    %v1795 = vadd.f32 %v1744, %v1778
    %v1796 = vld [vmem:[%s3 + $0x10] sm:$0x1]
    %v1797 = vlaneseq
    %v1798 = vshrl.u32 %v1797, 7
    %v1799 = vsub.s32 0, %v1798
    %v1800 = vrot.slane %v1796, %v1799
    %v1801 = vmul.f32 %v1800, %v1716
    %v1802 = vmul.f32 %v1800, %v1717
    %v1803 = vmul.f32 %v1800, %v1718
    %v1804 = vmul.f32 %v1800, %v1719
    %v1805 = vmul.f32 %v1800, %v1720
    %v1806 = vmul.f32 %v1800, %v1721
    %v1807 = vmul.f32 %v1800, %v1722
    %v1808 = vmul.f32 %v1800, %v1723
    %v1817 = vrot.slane %v1801, 2
    %v1818 = vrot.slane %v1802, 2
    %v1819 = vsel %vm222, %v1817, %v1818
    %v1820 = vrot.slane %v1803, 2
    %v1821 = vsel %vm222, %v1818, %v1820
    %v1822 = vrot.slane %v1804, 2
    %v1823 = vsel %vm222, %v1820, %v1822
    %v1824 = vrot.slane %v1805, 2
    %v1825 = vrot.slane %v1806, 2
    %v1826 = vsel %vm222, %v1824, %v1825
    %v1827 = vrot.slane %v1807, 2
    %v1828 = vsel %vm222, %v1825, %v1827
    %v1829 = vrot.slane %v1808, 2
    %v1830 = vsel %vm222, %v1827, %v1829
    %v1839 = vadd.f32 %v1788, %v1819
    %v1840 = vadd.f32 %v1789, %v1821
    %v1841 = vadd.f32 %v1790, %v1823
    %v1842 = vadd.f32 %v1791, %v1822
    %v1843 = vadd.f32 %v1792, %v1826
    %v1844 = vadd.f32 %v1793, %v1828
    %v1845 = vadd.f32 %v1794, %v1830
    %v1846 = vadd.f32 %v1795, %v1829
    %1847 = vrot.lane.b32.xlu0 %v848, 96
    %v1848 = vpop.permute.xlu0 %1847
    %1849 = vrot.lane.b32.xlu0 %v828, 96
    %v1850 = vpop.permute.xlu0 %1849
    %1851 = vrot.lane.b32.xlu0 %v830, 96
    %v1852 = vpop.permute.xlu0 %1851
    %1853 = vrot.lane.b32.xlu0 %v851, 96
    %v1854 = vpop.permute.xlu0 %1853
    %1855 = vrot.lane.b32.xlu0 %v849, 96
    %v1856 = vpop.permute.xlu0 %1855
    %1857 = vrot.lane.b32.xlu0 %v835, 96
    %v1858 = vpop.permute.xlu0 %1857
    %1859 = vrot.lane.b32.xlu0 %v837, 96
    %v1860 = vpop.permute.xlu0 %1859
    %1861 = vrot.lane.b32.xlu0 %v852, 96
    %v1862 = vpop.permute.xlu0 %1861
    %1871 = vrot.lane.b32.xlu0 %v848, 124
    %v1872 = vpop.permute.xlu0 %1871
    %1873 = vrot.lane.b32.xlu0 %v828, 124
    %v1874 = vpop.permute.xlu0 %1873
    %1875 = vrot.lane.b32.xlu0 %v830, 124
    %v1876 = vpop.permute.xlu0 %1875
    %1877 = vrot.lane.b32.xlu0 %v851, 124
    %v1878 = vpop.permute.xlu0 %1877
    %1879 = vrot.lane.b32.xlu0 %v849, 124
    %v1880 = vpop.permute.xlu0 %1879
    %1881 = vrot.lane.b32.xlu0 %v835, 124
    %v1882 = vpop.permute.xlu0 %1881
    %1883 = vrot.lane.b32.xlu0 %v837, 124
    %v1884 = vpop.permute.xlu0 %1883
    %1885 = vrot.lane.b32.xlu0 %v852, 124
    %v1886 = vpop.permute.xlu0 %1885
    %1895 = vrot.lane.b32.xlu0 %v848, 24
    %v1896 = vpop.permute.xlu0 %1895
    %1897 = vrot.lane.b32.xlu0 %v828, 24
    %v1898 = vpop.permute.xlu0 %1897
    %1899 = vrot.lane.b32.xlu0 %v830, 24
    %v1900 = vpop.permute.xlu0 %1899
    %1901 = vrot.lane.b32.xlu0 %v851, 24
    %v1902 = vpop.permute.xlu0 %1901
    %1903 = vrot.lane.b32.xlu0 %v849, 24
    %v1904 = vpop.permute.xlu0 %1903
    %1905 = vrot.lane.b32.xlu0 %v835, 24
    %v1906 = vpop.permute.xlu0 %1905
    %1907 = vrot.lane.b32.xlu0 %v837, 24
    %v1908 = vpop.permute.xlu0 %1907
    %1909 = vrot.lane.b32.xlu0 %v852, 24
    %v1910 = vpop.permute.xlu0 %1909
    %v1919 = vsel %vm110, %v1848, %v1872
    %v1920 = vsel %vm110, %v1850, %v1874
    %v1921 = vsel %vm110, %v1852, %v1876
    %v1922 = vsel %vm110, %v1854, %v1878
    %v1923 = vsel %vm110, %v1856, %v1880
    %v1924 = vsel %vm110, %v1858, %v1882
    %v1925 = vsel %vm110, %v1860, %v1884
    %v1926 = vsel %vm110, %v1862, %v1886
    %v1927 = vsel %vm119, %v1919, %v1896
    %v1928 = vsel %vm119, %v1920, %v1898
    %v1929 = vsel %vm119, %v1921, %v1900
    %v1930 = vsel %vm119, %v1922, %v1902
    %v1931 = vsel %vm119, %v1923, %v1904
    %v1932 = vsel %vm119, %v1924, %v1906
    %v1933 = vsel %vm119, %v1925, %v1908
    %v1934 = vsel %vm119, %v1926, %v1910
    %v1935 = vld [vmem:[%s3 + $0xb] sm:$0x1]
    %v1936 = vlaneseq
    %v1937 = vshrl.u32 %v1936, 7
    %v1938 = vsub.s32 0, %v1937
    %v1939 = vrot.slane %v1935, %v1938
    %v1940 = vmul.f32 %v1939, %v1927
    %v1941 = vmul.f32 %v1939, %v1928
    %v1942 = vmul.f32 %v1939, %v1929
    %v1943 = vmul.f32 %v1939, %v1930
    %v1944 = vmul.f32 %v1939, %v1931
    %v1945 = vmul.f32 %v1939, %v1932
    %v1946 = vmul.f32 %v1939, %v1933
    %v1947 = vmul.f32 %v1939, %v1934
    %v1948 = vadd.f32 %v1839, %v1940
    %v1949 = vadd.f32 %v1840, %v1941
    %v1950 = vadd.f32 %v1841, %v1942
    %v1951 = vadd.f32 %v1842, %v1943
    %v1952 = vadd.f32 %v1843, %v1944
    %v1953 = vadd.f32 %v1844, %v1945
    %v1954 = vadd.f32 %v1845, %v1946
    %v1955 = vadd.f32 %v1846, %v1947
    %v1956 = vld [vmem:[%s3 + $0xe] sm:$0x1]
    %v1957 = vlaneseq
    %v1958 = vshrl.u32 %v1957, 7
    %v1959 = vsub.s32 0, %v1958
    %v1960 = vrot.slane %v1956, %v1959
    %v1961 = vmul.f32 %v1960, %v1927
    %v1962 = vmul.f32 %v1960, %v1928
    %v1963 = vmul.f32 %v1960, %v1929
    %v1964 = vmul.f32 %v1960, %v1930
    %v1965 = vmul.f32 %v1960, %v1931
    %v1966 = vmul.f32 %v1960, %v1932
    %v1967 = vmul.f32 %v1960, %v1933
    %v1968 = vmul.f32 %v1960, %v1934
    %v1977 = vrot.slane %v1961, 1
    %v1978 = vrot.slane %v1962, 1
    %v1979 = vsel %vm170, %v1977, %v1978
    %v1980 = vrot.slane %v1963, 1
    %v1981 = vsel %vm170, %v1978, %v1980
    %v1982 = vrot.slane %v1964, 1
    %v1983 = vsel %vm170, %v1980, %v1982
    %v1984 = vrot.slane %v1965, 1
    %v1985 = vrot.slane %v1966, 1
    %v1986 = vsel %vm170, %v1984, %v1985
    %v1987 = vrot.slane %v1967, 1
    %v1988 = vsel %vm170, %v1985, %v1987
    %v1989 = vrot.slane %v1968, 1
    %v1990 = vsel %vm170, %v1987, %v1989
    %v1999 = vadd.f32 %v1948, %v1979
    %v2000 = vadd.f32 %v1949, %v1981
    %v2001 = vadd.f32 %v1950, %v1983
    %v2002 = vadd.f32 %v1951, %v1982
    %v2003 = vadd.f32 %v1952, %v1986
    %v2004 = vadd.f32 %v1953, %v1988
    %v2005 = vadd.f32 %v1954, %v1990
    %v2006 = vadd.f32 %v1955, %v1989
    %v2007 = vld [vmem:[%s3 + $0x11] sm:$0x1]
    %v2008 = vlaneseq
    %v2009 = vshrl.u32 %v2008, 7
    %v2010 = vsub.s32 0, %v2009
    %v2011 = vrot.slane %v2007, %v2010
    %v2012 = vmul.f32 %v2011, %v1927
    %v2013 = vmul.f32 %v2011, %v1928
    %v2014 = vmul.f32 %v2011, %v1929
    %v2015 = vmul.f32 %v2011, %v1930
    %v2016 = vmul.f32 %v2011, %v1931
    %v2017 = vmul.f32 %v2011, %v1932
    %v2018 = vmul.f32 %v2011, %v1933
    %v2019 = vmul.f32 %v2011, %v1934
    %v2028 = vrot.slane %v2012, 2
    %v2029 = vrot.slane %v2013, 2
    %v2030 = vsel %vm222, %v2028, %v2029
    %v2031 = vrot.slane %v2014, 2
    %v2032 = vsel %vm222, %v2029, %v2031
    %v2033 = vrot.slane %v2015, 2
    %v2034 = vsel %vm222, %v2031, %v2033
    %v2035 = vrot.slane %v2016, 2
    %v2036 = vrot.slane %v2017, 2
    %v2037 = vsel %vm222, %v2035, %v2036
    %v2038 = vrot.slane %v2018, 2
    %v2039 = vsel %vm222, %v2036, %v2038
    %v2040 = vrot.slane %v2019, 2
    %v2041 = vsel %vm222, %v2038, %v2040
    %v2050 = vadd.f32 %v1999, %v2030
    %v2051 = vadd.f32 %v2000, %v2032
    %v2052 = vadd.f32 %v2001, %v2034
    %v2053 = vadd.f32 %v2002, %v2033
    %v2054 = vadd.f32 %v2003, %v2037
    %v2055 = vadd.f32 %v2004, %v2039
    %v2056 = vadd.f32 %v2005, %v2041
    %v2057 = vadd.f32 %v2006, %v2040
    %2058 = vrot.lane.b32.xlu0 %v848, 68
    %v2059 = vpop.permute.xlu0 %2058
    %2060 = vrot.lane.b32.xlu0 %v828, 68
    %v2061 = vpop.permute.xlu0 %2060
    %2062 = vrot.lane.b32.xlu0 %v830, 68
    %v2063 = vpop.permute.xlu0 %2062
    %2064 = vrot.lane.b32.xlu0 %v851, 68
    %v2065 = vpop.permute.xlu0 %2064
    %2066 = vrot.lane.b32.xlu0 %v849, 68
    %v2067 = vpop.permute.xlu0 %2066
    %2068 = vrot.lane.b32.xlu0 %v835, 68
    %v2069 = vpop.permute.xlu0 %2068
    %2070 = vrot.lane.b32.xlu0 %v837, 68
    %v2071 = vpop.permute.xlu0 %2070
    %2072 = vrot.lane.b32.xlu0 %v852, 68
    %v2073 = vpop.permute.xlu0 %2072
    %v2082 = vsel %vm110, %v2059, %v1848
    %v2083 = vsel %vm110, %v2061, %v1850
    %v2084 = vsel %vm110, %v2063, %v1852
    %v2085 = vsel %vm110, %v2065, %v1854
    %v2086 = vsel %vm110, %v2067, %v1856
    %v2087 = vsel %vm110, %v2069, %v1858
    %v2088 = vsel %vm110, %v2071, %v1860
    %v2089 = vsel %vm110, %v2073, %v1862
    %v2090 = vsel %vm119, %v2082, %v1872
    %v2091 = vsel %vm119, %v2083, %v1874
    %v2092 = vsel %vm119, %v2084, %v1876
    %v2093 = vsel %vm119, %v2085, %v1878
    %v2094 = vsel %vm119, %v2086, %v1880
    %v2095 = vsel %vm119, %v2087, %v1882
    %v2096 = vsel %vm119, %v2088, %v1884
    %v2097 = vsel %vm119, %v2089, %v1886
    %v2098 = vld [vmem:[%s3 + $0x12] sm:$0x1]
    %v2099 = vlaneseq
    %v2100 = vshrl.u32 %v2099, 7
    %v2101 = vsub.s32 0, %v2100
    %v2102 = vrot.slane %v2098, %v2101
    %v2103 = vmul.f32 %v2102, %v2090
    %v2104 = vmul.f32 %v2102, %v2091
    %v2105 = vmul.f32 %v2102, %v2092
    %v2106 = vmul.f32 %v2102, %v2093
    %v2107 = vmul.f32 %v2102, %v2094
    %v2108 = vmul.f32 %v2102, %v2095
    %v2109 = vmul.f32 %v2102, %v2096
    %v2110 = vmul.f32 %v2102, %v2097
    %v2111 = vadd.f32 %v2050, %v2103
    %v2112 = vadd.f32 %v2051, %v2104
    %v2113 = vadd.f32 %v2052, %v2105
    %v2114 = vadd.f32 %v2053, %v2106
    %v2115 = vadd.f32 %v2054, %v2107
    %v2116 = vadd.f32 %v2055, %v2108
    %v2117 = vadd.f32 %v2056, %v2109
    %v2118 = vadd.f32 %v2057, %v2110
    %v2119 = vld [vmem:[%s3 + $0x15] sm:$0x1]
    %v2120 = vlaneseq
    %v2121 = vshrl.u32 %v2120, 7
    %v2122 = vsub.s32 0, %v2121
    %v2123 = vrot.slane %v2119, %v2122
    %v2124 = vmul.f32 %v2123, %v2090
    %v2125 = vmul.f32 %v2123, %v2091
    %v2126 = vmul.f32 %v2123, %v2092
    %v2127 = vmul.f32 %v2123, %v2093
    %v2128 = vmul.f32 %v2123, %v2094
    %v2129 = vmul.f32 %v2123, %v2095
    %v2130 = vmul.f32 %v2123, %v2096
    %v2131 = vmul.f32 %v2123, %v2097
    %v2140 = vrot.slane %v2124, 1
    %v2141 = vrot.slane %v2125, 1
    %v2142 = vsel %vm170, %v2140, %v2141
    %v2143 = vrot.slane %v2126, 1
    %v2144 = vsel %vm170, %v2141, %v2143
    %v2145 = vrot.slane %v2127, 1
    %v2146 = vsel %vm170, %v2143, %v2145
    %v2147 = vrot.slane %v2128, 1
    %v2148 = vrot.slane %v2129, 1
    %v2149 = vsel %vm170, %v2147, %v2148
    %v2150 = vrot.slane %v2130, 1
    %v2151 = vsel %vm170, %v2148, %v2150
    %v2152 = vrot.slane %v2131, 1
    %v2153 = vsel %vm170, %v2150, %v2152
    %v2162 = vadd.f32 %v2111, %v2142
    %v2163 = vadd.f32 %v2112, %v2144
    %v2164 = vadd.f32 %v2113, %v2146
    %v2165 = vadd.f32 %v2114, %v2145
    %v2166 = vadd.f32 %v2115, %v2149
    %v2167 = vadd.f32 %v2116, %v2151
    %v2168 = vadd.f32 %v2117, %v2153
    %v2169 = vadd.f32 %v2118, %v2152
    %v2170 = vld [vmem:[%s3 + $0x18] sm:$0x1]
    %v2171 = vlaneseq
    %v2172 = vshrl.u32 %v2171, 7
    %v2173 = vsub.s32 0, %v2172
    %v2174 = vrot.slane %v2170, %v2173
    %v2175 = vmul.f32 %v2174, %v2090
    %v2176 = vmul.f32 %v2174, %v2091
    %v2177 = vmul.f32 %v2174, %v2092
    %v2178 = vmul.f32 %v2174, %v2093
    %v2179 = vmul.f32 %v2174, %v2094
    %v2180 = vmul.f32 %v2174, %v2095
    %v2181 = vmul.f32 %v2174, %v2096
    %v2182 = vmul.f32 %v2174, %v2097
    %v2191 = vrot.slane %v2175, 2
    %v2192 = vrot.slane %v2176, 2
    %v2193 = vsel %vm222, %v2191, %v2192
    %v2194 = vrot.slane %v2177, 2
    %v2195 = vsel %vm222, %v2192, %v2194
    %v2196 = vrot.slane %v2178, 2
    %v2197 = vsel %vm222, %v2194, %v2196
    %v2198 = vrot.slane %v2179, 2
    %v2199 = vrot.slane %v2180, 2
    %v2200 = vsel %vm222, %v2198, %v2199
    %v2201 = vrot.slane %v2181, 2
    %v2202 = vsel %vm222, %v2199, %v2201
    %v2203 = vrot.slane %v2182, 2
    %v2204 = vsel %vm222, %v2201, %v2203
    %v2213 = vadd.f32 %v2162, %v2193
    %v2214 = vadd.f32 %v2163, %v2195
    %v2215 = vadd.f32 %v2164, %v2197
    %v2216 = vadd.f32 %v2165, %v2196
    %v2217 = vadd.f32 %v2166, %v2200
    %v2218 = vadd.f32 %v2167, %v2202
    %v2219 = vadd.f32 %v2168, %v2204
    %v2220 = vadd.f32 %v2169, %v2203
    %2221 = vrot.lane.b32.xlu0 %v848, 67
    %v2222 = vpop.permute.xlu0 %2221
    %2223 = vrot.lane.b32.xlu0 %v828, 67
    %v2224 = vpop.permute.xlu0 %2223
    %2225 = vrot.lane.b32.xlu0 %v830, 67
    %v2226 = vpop.permute.xlu0 %2225
    %2227 = vrot.lane.b32.xlu0 %v851, 67
    %v2228 = vpop.permute.xlu0 %2227
    %2229 = vrot.lane.b32.xlu0 %v849, 67
    %v2230 = vpop.permute.xlu0 %2229
    %2231 = vrot.lane.b32.xlu0 %v835, 67
    %v2232 = vpop.permute.xlu0 %2231
    %2233 = vrot.lane.b32.xlu0 %v837, 67
    %v2234 = vpop.permute.xlu0 %2233
    %2235 = vrot.lane.b32.xlu0 %v852, 67
    %v2236 = vpop.permute.xlu0 %2235
    %2245 = vrot.lane.b32.xlu0 %v848, 95
    %v2246 = vpop.permute.xlu0 %2245
    %2247 = vrot.lane.b32.xlu0 %v828, 95
    %v2248 = vpop.permute.xlu0 %2247
    %2249 = vrot.lane.b32.xlu0 %v830, 95
    %v2250 = vpop.permute.xlu0 %2249
    %2251 = vrot.lane.b32.xlu0 %v851, 95
    %v2252 = vpop.permute.xlu0 %2251
    %2253 = vrot.lane.b32.xlu0 %v849, 95
    %v2254 = vpop.permute.xlu0 %2253
    %2255 = vrot.lane.b32.xlu0 %v835, 95
    %v2256 = vpop.permute.xlu0 %2255
    %2257 = vrot.lane.b32.xlu0 %v837, 95
    %v2258 = vpop.permute.xlu0 %2257
    %2259 = vrot.lane.b32.xlu0 %v852, 95
    %v2260 = vpop.permute.xlu0 %2259
    %2269 = vrot.lane.b32.xlu0 %v848, 123
    %v2270 = vpop.permute.xlu0 %2269
    %2271 = vrot.lane.b32.xlu0 %v828, 123
    %v2272 = vpop.permute.xlu0 %2271
    %2273 = vrot.lane.b32.xlu0 %v830, 123
    %v2274 = vpop.permute.xlu0 %2273
    %2275 = vrot.lane.b32.xlu0 %v851, 123
    %v2276 = vpop.permute.xlu0 %2275
    %2277 = vrot.lane.b32.xlu0 %v849, 123
    %v2278 = vpop.permute.xlu0 %2277
    %2279 = vrot.lane.b32.xlu0 %v835, 123
    %v2280 = vpop.permute.xlu0 %2279
    %2281 = vrot.lane.b32.xlu0 %v837, 123
    %v2282 = vpop.permute.xlu0 %2281
    %2283 = vrot.lane.b32.xlu0 %v852, 123
    %v2284 = vpop.permute.xlu0 %2283
    %v2293 = vsel %vm110, %v2222, %v2246
    %v2294 = vsel %vm110, %v2224, %v2248
    %v2295 = vsel %vm110, %v2226, %v2250
    %v2296 = vsel %vm110, %v2228, %v2252
    %v2297 = vsel %vm110, %v2230, %v2254
    %v2298 = vsel %vm110, %v2232, %v2256
    %v2299 = vsel %vm110, %v2234, %v2258
    %v2300 = vsel %vm110, %v2236, %v2260
    %v2301 = vsel %vm119, %v2293, %v2270
    %v2302 = vsel %vm119, %v2294, %v2272
    %v2303 = vsel %vm119, %v2295, %v2274
    %v2304 = vsel %vm119, %v2296, %v2276
    %v2305 = vsel %vm119, %v2297, %v2278
    %v2306 = vsel %vm119, %v2298, %v2280
    %v2307 = vsel %vm119, %v2299, %v2282
    %v2308 = vsel %vm119, %v2300, %v2284
    %v2309 = vld [vmem:[%s3 + $0x13] sm:$0x1]
    %v2310 = vlaneseq
    %v2311 = vshrl.u32 %v2310, 7
    %v2312 = vsub.s32 0, %v2311
    %v2313 = vrot.slane %v2309, %v2312
    %v2314 = vmul.f32 %v2313, %v2301
    %v2315 = vmul.f32 %v2313, %v2302
    %v2316 = vmul.f32 %v2313, %v2303
    %v2317 = vmul.f32 %v2313, %v2304
    %v2318 = vmul.f32 %v2313, %v2305
    %v2319 = vmul.f32 %v2313, %v2306
    %v2320 = vmul.f32 %v2313, %v2307
    %v2321 = vmul.f32 %v2313, %v2308
    %v2322 = vadd.f32 %v2213, %v2314
    %v2323 = vadd.f32 %v2214, %v2315
    %v2324 = vadd.f32 %v2215, %v2316
    %v2325 = vadd.f32 %v2216, %v2317
    %v2326 = vadd.f32 %v2217, %v2318
    %v2327 = vadd.f32 %v2218, %v2319
    %v2328 = vadd.f32 %v2219, %v2320
    %v2329 = vadd.f32 %v2220, %v2321
    %v2330 = vld [vmem:[%s3 + $0x16] sm:$0x1]
    %v2331 = vlaneseq
    %v2332 = vshrl.u32 %v2331, 7
    %v2333 = vsub.s32 0, %v2332
    %v2334 = vrot.slane %v2330, %v2333
    %v2335 = vmul.f32 %v2334, %v2301
    %v2336 = vmul.f32 %v2334, %v2302
    %v2337 = vmul.f32 %v2334, %v2303
    %v2338 = vmul.f32 %v2334, %v2304
    %v2339 = vmul.f32 %v2334, %v2305
    %v2340 = vmul.f32 %v2334, %v2306
    %v2341 = vmul.f32 %v2334, %v2307
    %v2342 = vmul.f32 %v2334, %v2308
    %v2351 = vrot.slane %v2335, 1
    %v2352 = vrot.slane %v2336, 1
    %v2353 = vsel %vm170, %v2351, %v2352
    %v2354 = vrot.slane %v2337, 1
    %v2355 = vsel %vm170, %v2352, %v2354
    %v2356 = vrot.slane %v2338, 1
    %v2357 = vsel %vm170, %v2354, %v2356
    %v2358 = vrot.slane %v2339, 1
    %v2359 = vrot.slane %v2340, 1
    %v2360 = vsel %vm170, %v2358, %v2359
    %v2361 = vrot.slane %v2341, 1
    %v2362 = vsel %vm170, %v2359, %v2361
    %v2363 = vrot.slane %v2342, 1
    %v2364 = vsel %vm170, %v2361, %v2363
    %v2373 = vadd.f32 %v2322, %v2353
    %v2374 = vadd.f32 %v2323, %v2355
    %v2375 = vadd.f32 %v2324, %v2357
    %v2376 = vadd.f32 %v2325, %v2356
    %v2377 = vadd.f32 %v2326, %v2360
    %v2378 = vadd.f32 %v2327, %v2362
    %v2379 = vadd.f32 %v2328, %v2364
    %v2380 = vadd.f32 %v2329, %v2363
    %v2381 = vld [vmem:[%s3 + $0x19] sm:$0x1]
    %v2382 = vlaneseq
    %v2383 = vshrl.u32 %v2382, 7
    %v2384 = vsub.s32 0, %v2383
    %v2385 = vrot.slane %v2381, %v2384
    %v2386 = vmul.f32 %v2385, %v2301
    %v2387 = vmul.f32 %v2385, %v2302
    %v2388 = vmul.f32 %v2385, %v2303
    %v2389 = vmul.f32 %v2385, %v2304
    %v2390 = vmul.f32 %v2385, %v2305
    %v2391 = vmul.f32 %v2385, %v2306
    %v2392 = vmul.f32 %v2385, %v2307
    %v2393 = vmul.f32 %v2385, %v2308
    %v2402 = vrot.slane %v2386, 2
    %v2403 = vrot.slane %v2387, 2
    %v2404 = vsel %vm222, %v2402, %v2403
    %v2405 = vrot.slane %v2388, 2
    %v2406 = vsel %vm222, %v2403, %v2405
    %v2407 = vrot.slane %v2389, 2
    %v2408 = vsel %vm222, %v2405, %v2407
    %v2409 = vrot.slane %v2390, 2
    %v2410 = vrot.slane %v2391, 2
    %v2411 = vsel %vm222, %v2409, %v2410
    %v2412 = vrot.slane %v2392, 2
    %v2413 = vsel %vm222, %v2410, %v2412
    %v2414 = vrot.slane %v2393, 2
    %v2415 = vsel %vm222, %v2412, %v2414
    %v2424 = vadd.f32 %v2373, %v2404
    %v2425 = vadd.f32 %v2374, %v2406
    %v2426 = vadd.f32 %v2375, %v2408
    %v2427 = vadd.f32 %v2376, %v2407
    %v2428 = vadd.f32 %v2377, %v2411
    %v2429 = vadd.f32 %v2378, %v2413
    %v2430 = vadd.f32 %v2379, %v2415
    %v2431 = vadd.f32 %v2380, %v2414
    %2432 = vrot.lane.b32.xlu0 %v848, 66
    %v2433 = vpop.permute.xlu0 %2432
    %2434 = vrot.lane.b32.xlu0 %v828, 66
    %v2435 = vpop.permute.xlu0 %2434
    %2436 = vrot.lane.b32.xlu0 %v830, 66
    %v2437 = vpop.permute.xlu0 %2436
    %2438 = vrot.lane.b32.xlu0 %v851, 66
    %v2439 = vpop.permute.xlu0 %2438
    %2440 = vrot.lane.b32.xlu0 %v849, 66
    %v2441 = vpop.permute.xlu0 %2440
    %2442 = vrot.lane.b32.xlu0 %v835, 66
    %v2443 = vpop.permute.xlu0 %2442
    %2444 = vrot.lane.b32.xlu0 %v837, 66
    %v2445 = vpop.permute.xlu0 %2444
    %2446 = vrot.lane.b32.xlu0 %v852, 66
    %v2447 = vpop.permute.xlu0 %2446
    %2456 = vrot.lane.b32.xlu0 %v848, 94
    %v2457 = vpop.permute.xlu0 %2456
    %2458 = vrot.lane.b32.xlu0 %v828, 94
    %v2459 = vpop.permute.xlu0 %2458
    %2460 = vrot.lane.b32.xlu0 %v830, 94
    %v2461 = vpop.permute.xlu0 %2460
    %2462 = vrot.lane.b32.xlu0 %v851, 94
    %v2463 = vpop.permute.xlu0 %2462
    %2464 = vrot.lane.b32.xlu0 %v849, 94
    %v2465 = vpop.permute.xlu0 %2464
    %2466 = vrot.lane.b32.xlu0 %v835, 94
    %v2467 = vpop.permute.xlu0 %2466
    %2468 = vrot.lane.b32.xlu0 %v837, 94
    %v2469 = vpop.permute.xlu0 %2468
    %2470 = vrot.lane.b32.xlu0 %v852, 94
    %v2471 = vpop.permute.xlu0 %2470
    %2480 = vrot.lane.b32.xlu0 %v848, 122
    %v2481 = vpop.permute.xlu0 %2480
    %2482 = vrot.lane.b32.xlu0 %v828, 122
    %v2483 = vpop.permute.xlu0 %2482
    %2484 = vrot.lane.b32.xlu0 %v830, 122
    %v2485 = vpop.permute.xlu0 %2484
    %2486 = vrot.lane.b32.xlu0 %v851, 122
    %v2487 = vpop.permute.xlu0 %2486
    %2488 = vrot.lane.b32.xlu0 %v849, 122
    %v2489 = vpop.permute.xlu0 %2488
    %2490 = vrot.lane.b32.xlu0 %v835, 122
    %v2491 = vpop.permute.xlu0 %2490
    %2492 = vrot.lane.b32.xlu0 %v837, 122
    %v2493 = vpop.permute.xlu0 %2492
    %2494 = vrot.lane.b32.xlu0 %v852, 122
    %v2495 = vpop.permute.xlu0 %2494
    %v2504 = vsel %vm110, %v2433, %v2457
    %v2505 = vsel %vm110, %v2435, %v2459
    %v2506 = vsel %vm110, %v2437, %v2461
    %v2507 = vsel %vm110, %v2439, %v2463
    %v2508 = vsel %vm110, %v2441, %v2465
    %v2509 = vsel %vm110, %v2443, %v2467
    %v2510 = vsel %vm110, %v2445, %v2469
    %v2511 = vsel %vm110, %v2447, %v2471
    %v2512 = vsel %vm119, %v2504, %v2481
    %v2513 = vsel %vm119, %v2505, %v2483
    %v2514 = vsel %vm119, %v2506, %v2485
    %v2515 = vsel %vm119, %v2507, %v2487
    %v2516 = vsel %vm119, %v2508, %v2489
    %v2517 = vsel %vm119, %v2509, %v2491
    %v2518 = vsel %vm119, %v2510, %v2493
    %v2519 = vsel %vm119, %v2511, %v2495
    %v2520 = vld [vmem:[%s3 + $0x14] sm:$0x1]
    %v2521 = vlaneseq
    %v2522 = vshrl.u32 %v2521, 7
    %v2523 = vsub.s32 0, %v2522
    %v2524 = vrot.slane %v2520, %v2523
    %v2525 = vmul.f32 %v2524, %v2512
    %v2526 = vmul.f32 %v2524, %v2513
    %v2527 = vmul.f32 %v2524, %v2514
    %v2528 = vmul.f32 %v2524, %v2515
    %v2529 = vmul.f32 %v2524, %v2516
    %v2530 = vmul.f32 %v2524, %v2517
    %v2531 = vmul.f32 %v2524, %v2518
    %v2532 = vmul.f32 %v2524, %v2519
    %v2533 = vadd.f32 %v2424, %v2525
    %v2534 = vadd.f32 %v2425, %v2526
    %v2535 = vadd.f32 %v2426, %v2527
    %v2536 = vadd.f32 %v2427, %v2528
    %v2537 = vadd.f32 %v2428, %v2529
    %v2538 = vadd.f32 %v2429, %v2530
    %v2539 = vadd.f32 %v2430, %v2531
    %v2540 = vadd.f32 %v2431, %v2532
    %v2541 = vld [vmem:[%s3 + $0x17] sm:$0x1]
    %v2542 = vlaneseq
    %v2543 = vshrl.u32 %v2542, 7
    %v2544 = vsub.s32 0, %v2543
    %v2545 = vrot.slane %v2541, %v2544
    %v2546 = vmul.f32 %v2545, %v2512
    %v2547 = vmul.f32 %v2545, %v2513
    %v2548 = vmul.f32 %v2545, %v2514
    %v2549 = vmul.f32 %v2545, %v2515
    %v2550 = vmul.f32 %v2545, %v2516
    %v2551 = vmul.f32 %v2545, %v2517
    %v2552 = vmul.f32 %v2545, %v2518
    %v2553 = vmul.f32 %v2545, %v2519
    %v2562 = vrot.slane %v2546, 1
    %v2563 = vrot.slane %v2547, 1
    %v2564 = vsel %vm170, %v2562, %v2563
    %v2565 = vrot.slane %v2548, 1
    %v2566 = vsel %vm170, %v2563, %v2565
    %v2567 = vrot.slane %v2549, 1
    %v2568 = vsel %vm170, %v2565, %v2567
    %v2569 = vrot.slane %v2550, 1
    %v2570 = vrot.slane %v2551, 1
    %v2571 = vsel %vm170, %v2569, %v2570
    %v2572 = vrot.slane %v2552, 1
    %v2573 = vsel %vm170, %v2570, %v2572
    %v2574 = vrot.slane %v2553, 1
    %v2575 = vsel %vm170, %v2572, %v2574
    %v2584 = vadd.f32 %v2533, %v2564
    %v2585 = vadd.f32 %v2534, %v2566
    %v2586 = vadd.f32 %v2535, %v2568
    %v2587 = vadd.f32 %v2536, %v2567
    %v2588 = vadd.f32 %v2537, %v2571
    %v2589 = vadd.f32 %v2538, %v2573
    %v2590 = vadd.f32 %v2539, %v2575
    %v2591 = vadd.f32 %v2540, %v2574
    %v2592 = vld [vmem:[%s3 + $0x1a] sm:$0x1]
    %v2593 = vlaneseq
    %v2594 = vshrl.u32 %v2593, 7
    %v2595 = vsub.s32 0, %v2594
    %v2596 = vrot.slane %v2592, %v2595
    %v2597 = vmul.f32 %v2596, %v2512
    %v2598 = vmul.f32 %v2596, %v2513
    %v2599 = vmul.f32 %v2596, %v2514
    %v2600 = vmul.f32 %v2596, %v2515
    %v2601 = vmul.f32 %v2596, %v2516
    %v2602 = vmul.f32 %v2596, %v2517
    %v2603 = vmul.f32 %v2596, %v2518
    %v2604 = vmul.f32 %v2596, %v2519
    %v2613 = vrot.slane %v2597, 2
    %v2614 = vrot.slane %v2598, 2
    %v2615 = vsel %vm222, %v2613, %v2614
    %v2616 = vrot.slane %v2599, 2
    %v2617 = vsel %vm222, %v2614, %v2616
    %v2618 = vrot.slane %v2600, 2
    %v2619 = vsel %vm222, %v2616, %v2618
    %v2620 = vrot.slane %v2601, 2
    %v2621 = vrot.slane %v2602, 2
    %v2622 = vsel %vm222, %v2620, %v2621
    %v2623 = vrot.slane %v2603, 2
    %v2624 = vsel %vm222, %v2621, %v2623
    %v2625 = vrot.slane %v2604, 2
    %v2626 = vsel %vm222, %v2623, %v2625
    %v2635 = vadd.f32 %v2584, %v2615
    %v2636 = vadd.f32 %v2585, %v2617
    %v2637 = vadd.f32 %v2586, %v2619
    %v2638 = vadd.f32 %v2587, %v2618
    %v2639 = vadd.f32 %v2588, %v2622
    %v2640 = vadd.f32 %v2589, %v2624
    %v2641 = vadd.f32 %v2590, %v2626
    %v2642 = vadd.f32 %v2591, %v2625
    %v2643 = vmax.f32 %v2635, 0.0
    %v2644 = vmax.f32 %v2636, 0.0
    %v2645 = vmax.f32 %v2637, 0.0
    %v2646 = vmax.f32 %v2638, 0.0
    %v2647 = vmax.f32 %v2639, 0.0
    %v2648 = vmax.f32 %v2640, 0.0
    %v2649 = vmax.f32 %v2641, 0.0
    %v2650 = vmax.f32 %v2642, 0.0
    %v2651 = vadd.f32 %v675, %v2643
    %v2652 = vadd.f32 %v676, %v2644
    %v2653 = vadd.f32 %v677, %v2645
    %v2654 = vadd.f32 %v678, %v2646
    %v2655 = vadd.f32 %v679, %v2647
    %v2656 = vadd.f32 %v680, %v2648
    %v2657 = vadd.f32 %v681, %v2649
    %v2658 = vadd.f32 %v682, %v2650
    %v2659 = vld [vmem:[%s6] sm:$0x1]
    %v2661 = vlaneseq
    %v2662 = vshrl.u32 %v2661, 7
    %v2663 = vsub.s32 0, %v2662
    %v2664 = vrot.slane %v2659, %v2663
    %2674 = vrot.lane.b32.xlu0 %v2651, 26
    %v2675 = vpop.permute.xlu0 %2674
    %2676 = vrot.lane.b32.xlu0 %v2652, 26
    %v2677 = vpop.permute.xlu0 %2676
    %2678 = vrot.lane.b32.xlu0 %v2653, 26
    %v2679 = vpop.permute.xlu0 %2678
    %2680 = vrot.lane.b32.xlu0 %v2654, 26
    %v2681 = vpop.permute.xlu0 %2680
    %2682 = vrot.lane.b32.xlu0 %v2655, 26
    %v2683 = vpop.permute.xlu0 %2682
    %2684 = vrot.lane.b32.xlu0 %v2656, 26
    %v2685 = vpop.permute.xlu0 %2684
    %2686 = vrot.lane.b32.xlu0 %v2657, 26
    %v2687 = vpop.permute.xlu0 %2686
    %2688 = vrot.lane.b32.xlu0 %v2658, 26
    %v2689 = vpop.permute.xlu0 %2688
    %2698 = vrot.lane.b32.xlu0 %v2651, 52
    %v2699 = vpop.permute.xlu0 %2698
    %2700 = vrot.lane.b32.xlu0 %v2652, 52
    %v2701 = vpop.permute.xlu0 %2700
    %2702 = vrot.lane.b32.xlu0 %v2653, 52
    %v2703 = vpop.permute.xlu0 %2702
    %2704 = vrot.lane.b32.xlu0 %v2654, 52
    %v2705 = vpop.permute.xlu0 %2704
    %2706 = vrot.lane.b32.xlu0 %v2655, 52
    %v2707 = vpop.permute.xlu0 %2706
    %2708 = vrot.lane.b32.xlu0 %v2656, 52
    %v2709 = vpop.permute.xlu0 %2708
    %2710 = vrot.lane.b32.xlu0 %v2657, 52
    %v2711 = vpop.permute.xlu0 %2710
    %2712 = vrot.lane.b32.xlu0 %v2658, 52
    %v2713 = vpop.permute.xlu0 %2712
    %vm2722 = vcmask 211968
    %v2723 = vsel %vm2722, %v2651, %v2675
    %v2724 = vsel %vm2722, %v2652, %v2677
    %v2725 = vsel %vm2722, %v2653, %v2679
    %v2726 = vsel %vm2722, %v2654, %v2681
    %v2727 = vsel %vm2722, %v2655, %v2683
    %v2728 = vsel %vm2722, %v2656, %v2685
    %v2729 = vsel %vm2722, %v2657, %v2687
    %v2730 = vsel %vm2722, %v2658, %v2689
    %vm2731 = vcmask 424960
    %v2732 = vsel %vm2731, %v2723, %v2699
    %v2733 = vsel %vm2731, %v2724, %v2701
    %v2734 = vsel %vm2731, %v2725, %v2703
    %v2735 = vsel %vm2731, %v2726, %v2705
    %v2736 = vsel %vm2731, %v2727, %v2707
    %v2737 = vsel %vm2731, %v2728, %v2709
    %v2738 = vsel %vm2731, %v2729, %v2711
    %v2739 = vsel %vm2731, %v2730, %v2713
    %v2740 = vld [vmem:[%s5] sm:$0x1]
    %v2741 = vlaneseq
    %v2742 = vshrl.u32 %v2741, 7
    %v2743 = vsub.s32 0, %v2742
    %v2744 = vrot.slane %v2740, %v2743
    %v2745 = vmul.f32 %v2744, %v2732
    %v2746 = vmul.f32 %v2744, %v2733
    %v2747 = vmul.f32 %v2744, %v2734
    %v2748 = vmul.f32 %v2744, %v2735
    %v2749 = vmul.f32 %v2744, %v2736
    %v2750 = vmul.f32 %v2744, %v2737
    %v2751 = vmul.f32 %v2744, %v2738
    %v2752 = vmul.f32 %v2744, %v2739
    %v2753 = vadd.f32 %v2664, %v2745
    %v2754 = vadd.f32 %v2664, %v2746
    %v2755 = vadd.f32 %v2664, %v2747
    %v2756 = vadd.f32 %v2664, %v2748
    %v2757 = vadd.f32 %v2664, %v2749
    %v2758 = vadd.f32 %v2664, %v2750
    %v2759 = vadd.f32 %v2664, %v2751
    %v2760 = vadd.f32 %v2664, %v2752
    %v2761 = vld [vmem:[%s5 + $0x3] sm:$0x1]
    %v2762 = vlaneseq
    %v2763 = vshrl.u32 %v2762, 7
    %v2764 = vsub.s32 0, %v2763
    %v2765 = vrot.slane %v2761, %v2764
    %v2766 = vmul.f32 %v2765, %v2732
    %v2767 = vmul.f32 %v2765, %v2733
    %v2768 = vmul.f32 %v2765, %v2734
    %v2769 = vmul.f32 %v2765, %v2735
    %v2770 = vmul.f32 %v2765, %v2736
    %v2771 = vmul.f32 %v2765, %v2737
    %v2772 = vmul.f32 %v2765, %v2738
    %v2773 = vmul.f32 %v2765, %v2739
    %v2782 = vrot.slane %v2766, 1
    %v2783 = vrot.slane %v2767, 1
    %v2784 = vsel %vm170, %v2782, %v2783
    %v2785 = vrot.slane %v2768, 1
    %v2786 = vsel %vm170, %v2783, %v2785
    %v2787 = vrot.slane %v2769, 1
    %v2788 = vsel %vm170, %v2785, %v2787
    %v2789 = vrot.slane %v2770, 1
    %v2790 = vrot.slane %v2771, 1
    %v2791 = vsel %vm170, %v2789, %v2790
    %v2792 = vrot.slane %v2772, 1
    %v2793 = vsel %vm170, %v2790, %v2792
    %v2794 = vrot.slane %v2773, 1
    %v2795 = vsel %vm170, %v2792, %v2794
    %v2804 = vadd.f32 %v2753, %v2784
    %v2805 = vadd.f32 %v2754, %v2786
    %v2806 = vadd.f32 %v2755, %v2788
    %v2807 = vadd.f32 %v2756, %v2787
    %v2808 = vadd.f32 %v2757, %v2791
    %v2809 = vadd.f32 %v2758, %v2793
    %v2810 = vadd.f32 %v2759, %v2795
    %v2811 = vadd.f32 %v2760, %v2794
    %v2812 = vld [vmem:[%s5 + $0x6] sm:$0x1]
    %v2813 = vlaneseq
    %v2814 = vshrl.u32 %v2813, 7
    %v2815 = vsub.s32 0, %v2814
    %v2816 = vrot.slane %v2812, %v2815
    %v2817 = vmul.f32 %v2816, %v2732
    %v2818 = vmul.f32 %v2816, %v2733
    %v2819 = vmul.f32 %v2816, %v2734
    %v2820 = vmul.f32 %v2816, %v2735
    %v2821 = vmul.f32 %v2816, %v2736
    %v2822 = vmul.f32 %v2816, %v2737
    %v2823 = vmul.f32 %v2816, %v2738
    %v2824 = vmul.f32 %v2816, %v2739
    %v2833 = vrot.slane %v2817, 2
    %v2834 = vrot.slane %v2818, 2
    %v2835 = vsel %vm222, %v2833, %v2834
    %v2836 = vrot.slane %v2819, 2
    %v2837 = vsel %vm222, %v2834, %v2836
    %v2838 = vrot.slane %v2820, 2
    %v2839 = vsel %vm222, %v2836, %v2838
    %v2840 = vrot.slane %v2821, 2
    %v2841 = vrot.slane %v2822, 2
    %v2842 = vsel %vm222, %v2840, %v2841
    %v2843 = vrot.slane %v2823, 2
    %v2844 = vsel %vm222, %v2841, %v2843
    %v2845 = vrot.slane %v2824, 2
    %v2846 = vsel %vm222, %v2843, %v2845
    %v2855 = vadd.f32 %v2804, %v2835
    %v2856 = vadd.f32 %v2805, %v2837
    %v2857 = vadd.f32 %v2806, %v2839
    %v2858 = vadd.f32 %v2807, %v2838
    %v2859 = vadd.f32 %v2808, %v2842
    %v2860 = vadd.f32 %v2809, %v2844
    %v2861 = vadd.f32 %v2810, %v2846
    %v2862 = vadd.f32 %v2811, %v2845
    %2863 = vrot.lane.b32.xlu0 %v2651, 127
    %v2864 = vpop.permute.xlu0 %2863
    %2865 = vrot.lane.b32.xlu0 %v2652, 127
    %v2866 = vpop.permute.xlu0 %2865
    %2867 = vrot.lane.b32.xlu0 %v2653, 127
    %v2868 = vpop.permute.xlu0 %2867
    %2869 = vrot.lane.b32.xlu0 %v2654, 127
    %v2870 = vpop.permute.xlu0 %2869
    %2871 = vrot.lane.b32.xlu0 %v2655, 127
    %v2872 = vpop.permute.xlu0 %2871
    %2873 = vrot.lane.b32.xlu0 %v2656, 127
    %v2874 = vpop.permute.xlu0 %2873
    %2875 = vrot.lane.b32.xlu0 %v2657, 127
    %v2876 = vpop.permute.xlu0 %2875
    %2877 = vrot.lane.b32.xlu0 %v2658, 127
    %v2878 = vpop.permute.xlu0 %2877
    %2887 = vrot.lane.b32.xlu0 %v2651, 25
    %v2888 = vpop.permute.xlu0 %2887
    %2889 = vrot.lane.b32.xlu0 %v2652, 25
    %v2890 = vpop.permute.xlu0 %2889
    %2891 = vrot.lane.b32.xlu0 %v2653, 25
    %v2892 = vpop.permute.xlu0 %2891
    %2893 = vrot.lane.b32.xlu0 %v2654, 25
    %v2894 = vpop.permute.xlu0 %2893
    %2895 = vrot.lane.b32.xlu0 %v2655, 25
    %v2896 = vpop.permute.xlu0 %2895
    %2897 = vrot.lane.b32.xlu0 %v2656, 25
    %v2898 = vpop.permute.xlu0 %2897
    %2899 = vrot.lane.b32.xlu0 %v2657, 25
    %v2900 = vpop.permute.xlu0 %2899
    %2901 = vrot.lane.b32.xlu0 %v2658, 25
    %v2902 = vpop.permute.xlu0 %2901
    %2911 = vrot.lane.b32.xlu0 %v2651, 51
    %v2912 = vpop.permute.xlu0 %2911
    %2913 = vrot.lane.b32.xlu0 %v2652, 51
    %v2914 = vpop.permute.xlu0 %2913
    %2915 = vrot.lane.b32.xlu0 %v2653, 51
    %v2916 = vpop.permute.xlu0 %2915
    %2917 = vrot.lane.b32.xlu0 %v2654, 51
    %v2918 = vpop.permute.xlu0 %2917
    %2919 = vrot.lane.b32.xlu0 %v2655, 51
    %v2920 = vpop.permute.xlu0 %2919
    %2921 = vrot.lane.b32.xlu0 %v2656, 51
    %v2922 = vpop.permute.xlu0 %2921
    %2923 = vrot.lane.b32.xlu0 %v2657, 51
    %v2924 = vpop.permute.xlu0 %2923
    %2925 = vrot.lane.b32.xlu0 %v2658, 51
    %v2926 = vpop.permute.xlu0 %2925
    %v2935 = vsel %vm2722, %v2864, %v2888
    %v2936 = vsel %vm2722, %v2866, %v2890
    %v2937 = vsel %vm2722, %v2868, %v2892
    %v2938 = vsel %vm2722, %v2870, %v2894
    %v2939 = vsel %vm2722, %v2872, %v2896
    %v2940 = vsel %vm2722, %v2874, %v2898
    %v2941 = vsel %vm2722, %v2876, %v2900
    %v2942 = vsel %vm2722, %v2878, %v2902
    %v2943 = vsel %vm2731, %v2935, %v2912
    %v2944 = vsel %vm2731, %v2936, %v2914
    %v2945 = vsel %vm2731, %v2937, %v2916
    %v2946 = vsel %vm2731, %v2938, %v2918
    %v2947 = vsel %vm2731, %v2939, %v2920
    %v2948 = vsel %vm2731, %v2940, %v2922
    %v2949 = vsel %vm2731, %v2941, %v2924
    %v2950 = vsel %vm2731, %v2942, %v2926
    %v2951 = vld [vmem:[%s5 + $0x1] sm:$0x1]
    %v2952 = vlaneseq
    %v2953 = vshrl.u32 %v2952, 7
    %v2954 = vsub.s32 0, %v2953
    %v2955 = vrot.slane %v2951, %v2954
    %v2956 = vmul.f32 %v2955, %v2943
    %v2957 = vmul.f32 %v2955, %v2944
    %v2958 = vmul.f32 %v2955, %v2945
    %v2959 = vmul.f32 %v2955, %v2946
    %v2960 = vmul.f32 %v2955, %v2947
    %v2961 = vmul.f32 %v2955, %v2948
    %v2962 = vmul.f32 %v2955, %v2949
    %v2963 = vmul.f32 %v2955, %v2950
    %v2964 = vadd.f32 %v2855, %v2956
    %v2965 = vadd.f32 %v2856, %v2957
    %v2966 = vadd.f32 %v2857, %v2958
    %v2967 = vadd.f32 %v2858, %v2959
    %v2968 = vadd.f32 %v2859, %v2960
    %v2969 = vadd.f32 %v2860, %v2961
    %v2970 = vadd.f32 %v2861, %v2962
    %v2971 = vadd.f32 %v2862, %v2963
    %v2972 = vld [vmem:[%s5 + $0x4] sm:$0x1]
    %v2973 = vlaneseq
    %v2974 = vshrl.u32 %v2973, 7
    %v2975 = vsub.s32 0, %v2974
    %v2976 = vrot.slane %v2972, %v2975
    %v2977 = vmul.f32 %v2976, %v2943
    %v2978 = vmul.f32 %v2976, %v2944
    %v2979 = vmul.f32 %v2976, %v2945
    %v2980 = vmul.f32 %v2976, %v2946
    %v2981 = vmul.f32 %v2976, %v2947
    %v2982 = vmul.f32 %v2976, %v2948
    %v2983 = vmul.f32 %v2976, %v2949
    %v2984 = vmul.f32 %v2976, %v2950
    %v2993 = vrot.slane %v2977, 1
    %v2994 = vrot.slane %v2978, 1
    %v2995 = vsel %vm170, %v2993, %v2994
    %v2996 = vrot.slane %v2979, 1
    %v2997 = vsel %vm170, %v2994, %v2996
    %v2998 = vrot.slane %v2980, 1
    %v2999 = vsel %vm170, %v2996, %v2998
    %v3000 = vrot.slane %v2981, 1
    %v3001 = vrot.slane %v2982, 1
    %v3002 = vsel %vm170, %v3000, %v3001
    %v3003 = vrot.slane %v2983, 1
    %v3004 = vsel %vm170, %v3001, %v3003
    %v3005 = vrot.slane %v2984, 1
    %v3006 = vsel %vm170, %v3003, %v3005
    %v3015 = vadd.f32 %v2964, %v2995
    %v3016 = vadd.f32 %v2965, %v2997
    %v3017 = vadd.f32 %v2966, %v2999
    %v3018 = vadd.f32 %v2967, %v2998
    %v3019 = vadd.f32 %v2968, %v3002
    %v3020 = vadd.f32 %v2969, %v3004
    %v3021 = vadd.f32 %v2970, %v3006
    %v3022 = vadd.f32 %v2971, %v3005
    %v3023 = vld [vmem:[%s5 + $0x7] sm:$0x1]
    %v3024 = vlaneseq
    %v3025 = vshrl.u32 %v3024, 7
    %v3026 = vsub.s32 0, %v3025
    %v3027 = vrot.slane %v3023, %v3026
    %v3028 = vmul.f32 %v3027, %v2943
    %v3029 = vmul.f32 %v3027, %v2944
    %v3030 = vmul.f32 %v3027, %v2945
    %v3031 = vmul.f32 %v3027, %v2946
    %v3032 = vmul.f32 %v3027, %v2947
    %v3033 = vmul.f32 %v3027, %v2948
    %v3034 = vmul.f32 %v3027, %v2949
    %v3035 = vmul.f32 %v3027, %v2950
    %v3044 = vrot.slane %v3028, 2
    %v3045 = vrot.slane %v3029, 2
    %v3046 = vsel %vm222, %v3044, %v3045
    %v3047 = vrot.slane %v3030, 2
    %v3048 = vsel %vm222, %v3045, %v3047
    %v3049 = vrot.slane %v3031, 2
    %v3050 = vsel %vm222, %v3047, %v3049
    %v3051 = vrot.slane %v3032, 2
    %v3052 = vrot.slane %v3033, 2
    %v3053 = vsel %vm222, %v3051, %v3052
    %v3054 = vrot.slane %v3034, 2
    %v3055 = vsel %vm222, %v3052, %v3054
    %v3056 = vrot.slane %v3035, 2
    %v3057 = vsel %vm222, %v3054, %v3056
    %v3066 = vadd.f32 %v3015, %v3046
    %v3067 = vadd.f32 %v3016, %v3048
    %v3068 = vadd.f32 %v3017, %v3050
    %v3069 = vadd.f32 %v3018, %v3049
    %v3070 = vadd.f32 %v3019, %v3053
    %v3071 = vadd.f32 %v3020, %v3055
    %v3072 = vadd.f32 %v3021, %v3057
    %v3073 = vadd.f32 %v3022, %v3056
    %3074 = vrot.lane.b32.xlu0 %v2651, 126
    %v3075 = vpop.permute.xlu0 %3074
    %3076 = vrot.lane.b32.xlu0 %v2652, 126
    %v3077 = vpop.permute.xlu0 %3076
    %3078 = vrot.lane.b32.xlu0 %v2653, 126
    %v3079 = vpop.permute.xlu0 %3078
    %3080 = vrot.lane.b32.xlu0 %v2654, 126
    %v3081 = vpop.permute.xlu0 %3080
    %3082 = vrot.lane.b32.xlu0 %v2655, 126
    %v3083 = vpop.permute.xlu0 %3082
    %3084 = vrot.lane.b32.xlu0 %v2656, 126
    %v3085 = vpop.permute.xlu0 %3084
    %3086 = vrot.lane.b32.xlu0 %v2657, 126
    %v3087 = vpop.permute.xlu0 %3086
    %3088 = vrot.lane.b32.xlu0 %v2658, 126
    %v3089 = vpop.permute.xlu0 %3088
    %3098 = vrot.lane.b32.xlu0 %v2651, 24
    %v3099 = vpop.permute.xlu0 %3098
    %3100 = vrot.lane.b32.xlu0 %v2652, 24
    %v3101 = vpop.permute.xlu0 %3100
    %3102 = vrot.lane.b32.xlu0 %v2653, 24
    %v3103 = vpop.permute.xlu0 %3102
    %3104 = vrot.lane.b32.xlu0 %v2654, 24
    %v3105 = vpop.permute.xlu0 %3104
    %3106 = vrot.lane.b32.xlu0 %v2655, 24
    %v3107 = vpop.permute.xlu0 %3106
    %3108 = vrot.lane.b32.xlu0 %v2656, 24
    %v3109 = vpop.permute.xlu0 %3108
    %3110 = vrot.lane.b32.xlu0 %v2657, 24
    %v3111 = vpop.permute.xlu0 %3110
    %3112 = vrot.lane.b32.xlu0 %v2658, 24
    %v3113 = vpop.permute.xlu0 %3112
    %3122 = vrot.lane.b32.xlu0 %v2651, 50
    %v3123 = vpop.permute.xlu0 %3122
    %3124 = vrot.lane.b32.xlu0 %v2652, 50
    %v3125 = vpop.permute.xlu0 %3124
    %3126 = vrot.lane.b32.xlu0 %v2653, 50
    %v3127 = vpop.permute.xlu0 %3126
    %3128 = vrot.lane.b32.xlu0 %v2654, 50
    %v3129 = vpop.permute.xlu0 %3128
    %3130 = vrot.lane.b32.xlu0 %v2655, 50
    %v3131 = vpop.permute.xlu0 %3130
    %3132 = vrot.lane.b32.xlu0 %v2656, 50
    %v3133 = vpop.permute.xlu0 %3132
    %3134 = vrot.lane.b32.xlu0 %v2657, 50
    %v3135 = vpop.permute.xlu0 %3134
    %3136 = vrot.lane.b32.xlu0 %v2658, 50
    %v3137 = vpop.permute.xlu0 %3136
    %v3146 = vsel %vm2722, %v3075, %v3099
    %v3147 = vsel %vm2722, %v3077, %v3101
    %v3148 = vsel %vm2722, %v3079, %v3103
    %v3149 = vsel %vm2722, %v3081, %v3105
    %v3150 = vsel %vm2722, %v3083, %v3107
    %v3151 = vsel %vm2722, %v3085, %v3109
    %v3152 = vsel %vm2722, %v3087, %v3111
    %v3153 = vsel %vm2722, %v3089, %v3113
    %v3154 = vsel %vm2731, %v3146, %v3123
    %v3155 = vsel %vm2731, %v3147, %v3125
    %v3156 = vsel %vm2731, %v3148, %v3127
    %v3157 = vsel %vm2731, %v3149, %v3129
    %v3158 = vsel %vm2731, %v3150, %v3131
    %v3159 = vsel %vm2731, %v3151, %v3133
    %v3160 = vsel %vm2731, %v3152, %v3135
    %v3161 = vsel %vm2731, %v3153, %v3137
    %v3162 = vld [vmem:[%s5 + $0x2] sm:$0x1]
    %v3163 = vlaneseq
    %v3164 = vshrl.u32 %v3163, 7
    %v3165 = vsub.s32 0, %v3164
    %v3166 = vrot.slane %v3162, %v3165
    %v3167 = vmul.f32 %v3166, %v3154
    %v3168 = vmul.f32 %v3166, %v3155
    %v3169 = vmul.f32 %v3166, %v3156
    %v3170 = vmul.f32 %v3166, %v3157
    %v3171 = vmul.f32 %v3166, %v3158
    %v3172 = vmul.f32 %v3166, %v3159
    %v3173 = vmul.f32 %v3166, %v3160
    %v3174 = vmul.f32 %v3166, %v3161
    %v3175 = vadd.f32 %v3066, %v3167
    %v3176 = vadd.f32 %v3067, %v3168
    %v3177 = vadd.f32 %v3068, %v3169
    %v3178 = vadd.f32 %v3069, %v3170
    %v3179 = vadd.f32 %v3070, %v3171
    %v3180 = vadd.f32 %v3071, %v3172
    %v3181 = vadd.f32 %v3072, %v3173
    %v3182 = vadd.f32 %v3073, %v3174
    %v3183 = vld [vmem:[%s5 + $0x5] sm:$0x1]
    %v3184 = vlaneseq
    %v3185 = vshrl.u32 %v3184, 7
    %v3186 = vsub.s32 0, %v3185
    %v3187 = vrot.slane %v3183, %v3186
    %v3188 = vmul.f32 %v3187, %v3154
    %v3189 = vmul.f32 %v3187, %v3155
    %v3190 = vmul.f32 %v3187, %v3156
    %v3191 = vmul.f32 %v3187, %v3157
    %v3192 = vmul.f32 %v3187, %v3158
    %v3193 = vmul.f32 %v3187, %v3159
    %v3194 = vmul.f32 %v3187, %v3160
    %v3195 = vmul.f32 %v3187, %v3161
    %v3204 = vrot.slane %v3188, 1
    %v3205 = vrot.slane %v3189, 1
    %v3206 = vsel %vm170, %v3204, %v3205
    %v3207 = vrot.slane %v3190, 1
    %v3208 = vsel %vm170, %v3205, %v3207
    %v3209 = vrot.slane %v3191, 1
    %v3210 = vsel %vm170, %v3207, %v3209
    %v3211 = vrot.slane %v3192, 1
    %v3212 = vrot.slane %v3193, 1
    %v3213 = vsel %vm170, %v3211, %v3212
    %v3214 = vrot.slane %v3194, 1
    %v3215 = vsel %vm170, %v3212, %v3214
    %v3216 = vrot.slane %v3195, 1
    %v3217 = vsel %vm170, %v3214, %v3216
    %v3226 = vadd.f32 %v3175, %v3206
    %v3227 = vadd.f32 %v3176, %v3208
    %v3228 = vadd.f32 %v3177, %v3210
    %v3229 = vadd.f32 %v3178, %v3209
    %v3230 = vadd.f32 %v3179, %v3213
    %v3231 = vadd.f32 %v3180, %v3215
    %v3232 = vadd.f32 %v3181, %v3217
    %v3233 = vadd.f32 %v3182, %v3216
    %v3234 = vld [vmem:[%s5 + $0x8] sm:$0x1]
    %v3235 = vlaneseq
    %v3236 = vshrl.u32 %v3235, 7
    %v3237 = vsub.s32 0, %v3236
    %v3238 = vrot.slane %v3234, %v3237
    %v3239 = vmul.f32 %v3238, %v3154
    %v3240 = vmul.f32 %v3238, %v3155
    %v3241 = vmul.f32 %v3238, %v3156
    %v3242 = vmul.f32 %v3238, %v3157
    %v3243 = vmul.f32 %v3238, %v3158
    %v3244 = vmul.f32 %v3238, %v3159
    %v3245 = vmul.f32 %v3238, %v3160
    %v3246 = vmul.f32 %v3238, %v3161
    %v3255 = vrot.slane %v3239, 2
    %v3256 = vrot.slane %v3240, 2
    %v3257 = vsel %vm222, %v3255, %v3256
    %v3258 = vrot.slane %v3241, 2
    %v3259 = vsel %vm222, %v3256, %v3258
    %v3260 = vrot.slane %v3242, 2
    %v3261 = vsel %vm222, %v3258, %v3260
    %v3262 = vrot.slane %v3243, 2
    %v3263 = vrot.slane %v3244, 2
    %v3264 = vsel %vm222, %v3262, %v3263
    %v3265 = vrot.slane %v3245, 2
    %v3266 = vsel %vm222, %v3263, %v3265
    %v3267 = vrot.slane %v3246, 2
    %v3268 = vsel %vm222, %v3265, %v3267
    %v3277 = vadd.f32 %v3226, %v3257
    %v3278 = vadd.f32 %v3227, %v3259
    %v3279 = vadd.f32 %v3228, %v3261
    %v3280 = vadd.f32 %v3229, %v3260
    %v3281 = vadd.f32 %v3230, %v3264
    %v3282 = vadd.f32 %v3231, %v3266
    %v3283 = vadd.f32 %v3232, %v3268
    %v3284 = vadd.f32 %v3233, %v3267
    %3285 = vrot.lane.b32.xlu0 %v2651, 100
    %v3286 = vpop.permute.xlu0 %3285
    %3287 = vrot.lane.b32.xlu0 %v2652, 100
    %v3288 = vpop.permute.xlu0 %3287
    %3289 = vrot.lane.b32.xlu0 %v2653, 100
    %v3290 = vpop.permute.xlu0 %3289
    %3291 = vrot.lane.b32.xlu0 %v2654, 100
    %v3292 = vpop.permute.xlu0 %3291
    %3293 = vrot.lane.b32.xlu0 %v2655, 100
    %v3294 = vpop.permute.xlu0 %3293
    %3295 = vrot.lane.b32.xlu0 %v2656, 100
    %v3296 = vpop.permute.xlu0 %3295
    %3297 = vrot.lane.b32.xlu0 %v2657, 100
    %v3298 = vpop.permute.xlu0 %3297
    %3299 = vrot.lane.b32.xlu0 %v2658, 100
    %v3300 = vpop.permute.xlu0 %3299
    %v3309 = vsel %vm2722, %v3286, %v3075
    %v3310 = vsel %vm2722, %v3288, %v3077
    %v3311 = vsel %vm2722, %v3290, %v3079
    %v3312 = vsel %vm2722, %v3292, %v3081
    %v3313 = vsel %vm2722, %v3294, %v3083
    %v3314 = vsel %vm2722, %v3296, %v3085
    %v3315 = vsel %vm2722, %v3298, %v3087
    %v3316 = vsel %vm2722, %v3300, %v3089
    %v3317 = vsel %vm2731, %v3309, %v3099
    %v3318 = vsel %vm2731, %v3310, %v3101
    %v3319 = vsel %vm2731, %v3311, %v3103
    %v3320 = vsel %vm2731, %v3312, %v3105
    %v3321 = vsel %vm2731, %v3313, %v3107
    %v3322 = vsel %vm2731, %v3314, %v3109
    %v3323 = vsel %vm2731, %v3315, %v3111
    %v3324 = vsel %vm2731, %v3316, %v3113
    %v3325 = vld [vmem:[%s5 + $0x9] sm:$0x1]
    %v3326 = vlaneseq
    %v3327 = vshrl.u32 %v3326, 7
    %v3328 = vsub.s32 0, %v3327
    %v3329 = vrot.slane %v3325, %v3328
    %v3330 = vmul.f32 %v3329, %v3317
    %v3331 = vmul.f32 %v3329, %v3318
    %v3332 = vmul.f32 %v3329, %v3319
    %v3333 = vmul.f32 %v3329, %v3320
    %v3334 = vmul.f32 %v3329, %v3321
    %v3335 = vmul.f32 %v3329, %v3322
    %v3336 = vmul.f32 %v3329, %v3323
    %v3337 = vmul.f32 %v3329, %v3324
    %v3338 = vadd.f32 %v3277, %v3330
    %v3339 = vadd.f32 %v3278, %v3331
    %v3340 = vadd.f32 %v3279, %v3332
    %v3341 = vadd.f32 %v3280, %v3333
    %v3342 = vadd.f32 %v3281, %v3334
    %v3343 = vadd.f32 %v3282, %v3335
    %v3344 = vadd.f32 %v3283, %v3336
    %v3345 = vadd.f32 %v3284, %v3337
    %v3346 = vld [vmem:[%s5 + $0xc] sm:$0x1]
    %v3347 = vlaneseq
    %v3348 = vshrl.u32 %v3347, 7
    %v3349 = vsub.s32 0, %v3348
    %v3350 = vrot.slane %v3346, %v3349
    %v3351 = vmul.f32 %v3350, %v3317
    %v3352 = vmul.f32 %v3350, %v3318
    %v3353 = vmul.f32 %v3350, %v3319
    %v3354 = vmul.f32 %v3350, %v3320
    %v3355 = vmul.f32 %v3350, %v3321
    %v3356 = vmul.f32 %v3350, %v3322
    %v3357 = vmul.f32 %v3350, %v3323
    %v3358 = vmul.f32 %v3350, %v3324
    %v3367 = vrot.slane %v3351, 1
    %v3368 = vrot.slane %v3352, 1
    %v3369 = vsel %vm170, %v3367, %v3368
    %v3370 = vrot.slane %v3353, 1
    %v3371 = vsel %vm170, %v3368, %v3370
    %v3372 = vrot.slane %v3354, 1
    %v3373 = vsel %vm170, %v3370, %v3372
    %v3374 = vrot.slane %v3355, 1
    %v3375 = vrot.slane %v3356, 1
    %v3376 = vsel %vm170, %v3374, %v3375
    %v3377 = vrot.slane %v3357, 1
    %v3378 = vsel %vm170, %v3375, %v3377
    %v3379 = vrot.slane %v3358, 1
    %v3380 = vsel %vm170, %v3377, %v3379
    %v3389 = vadd.f32 %v3338, %v3369
    %v3390 = vadd.f32 %v3339, %v3371
    %v3391 = vadd.f32 %v3340, %v3373
    %v3392 = vadd.f32 %v3341, %v3372
    %v3393 = vadd.f32 %v3342, %v3376
    %v3394 = vadd.f32 %v3343, %v3378
    %v3395 = vadd.f32 %v3344, %v3380
    %v3396 = vadd.f32 %v3345, %v3379
    %v3397 = vld [vmem:[%s5 + $0xf] sm:$0x1]
    %v3398 = vlaneseq
    %v3399 = vshrl.u32 %v3398, 7
    %v3400 = vsub.s32 0, %v3399
    %v3401 = vrot.slane %v3397, %v3400
    %v3402 = vmul.f32 %v3401, %v3317
    %v3403 = vmul.f32 %v3401, %v3318
    %v3404 = vmul.f32 %v3401, %v3319
    %v3405 = vmul.f32 %v3401, %v3320
    %v3406 = vmul.f32 %v3401, %v3321
    %v3407 = vmul.f32 %v3401, %v3322
    %v3408 = vmul.f32 %v3401, %v3323
    %v3409 = vmul.f32 %v3401, %v3324
    %v3418 = vrot.slane %v3402, 2
    %v3419 = vrot.slane %v3403, 2
    %v3420 = vsel %vm222, %v3418, %v3419
    %v3421 = vrot.slane %v3404, 2
    %v3422 = vsel %vm222, %v3419, %v3421
    %v3423 = vrot.slane %v3405, 2
    %v3424 = vsel %vm222, %v3421, %v3423
    %v3425 = vrot.slane %v3406, 2
    %v3426 = vrot.slane %v3407, 2
    %v3427 = vsel %vm222, %v3425, %v3426
    %v3428 = vrot.slane %v3408, 2
    %v3429 = vsel %vm222, %v3426, %v3428
    %v3430 = vrot.slane %v3409, 2
    %v3431 = vsel %vm222, %v3428, %v3430
    %v3440 = vadd.f32 %v3389, %v3420
    %v3441 = vadd.f32 %v3390, %v3422
    %v3442 = vadd.f32 %v3391, %v3424
    %v3443 = vadd.f32 %v3392, %v3423
    %v3444 = vadd.f32 %v3393, %v3427
    %v3445 = vadd.f32 %v3394, %v3429
    %v3446 = vadd.f32 %v3395, %v3431
    %v3447 = vadd.f32 %v3396, %v3430
    %3448 = vrot.lane.b32.xlu0 %v2651, 99
    %v3449 = vpop.permute.xlu0 %3448
    %3450 = vrot.lane.b32.xlu0 %v2652, 99
    %v3451 = vpop.permute.xlu0 %3450
    %3452 = vrot.lane.b32.xlu0 %v2653, 99
    %v3453 = vpop.permute.xlu0 %3452
    %3454 = vrot.lane.b32.xlu0 %v2654, 99
    %v3455 = vpop.permute.xlu0 %3454
    %3456 = vrot.lane.b32.xlu0 %v2655, 99
    %v3457 = vpop.permute.xlu0 %3456
    %3458 = vrot.lane.b32.xlu0 %v2656, 99
    %v3459 = vpop.permute.xlu0 %3458
    %3460 = vrot.lane.b32.xlu0 %v2657, 99
    %v3461 = vpop.permute.xlu0 %3460
    %3462 = vrot.lane.b32.xlu0 %v2658, 99
    %v3463 = vpop.permute.xlu0 %3462
    %3472 = vrot.lane.b32.xlu0 %v2651, 125
    %v3473 = vpop.permute.xlu0 %3472
    %3474 = vrot.lane.b32.xlu0 %v2652, 125
    %v3475 = vpop.permute.xlu0 %3474
    %3476 = vrot.lane.b32.xlu0 %v2653, 125
    %v3477 = vpop.permute.xlu0 %3476
    %3478 = vrot.lane.b32.xlu0 %v2654, 125
    %v3479 = vpop.permute.xlu0 %3478
    %3480 = vrot.lane.b32.xlu0 %v2655, 125
    %v3481 = vpop.permute.xlu0 %3480
    %3482 = vrot.lane.b32.xlu0 %v2656, 125
    %v3483 = vpop.permute.xlu0 %3482
    %3484 = vrot.lane.b32.xlu0 %v2657, 125
    %v3485 = vpop.permute.xlu0 %3484
    %3486 = vrot.lane.b32.xlu0 %v2658, 125
    %v3487 = vpop.permute.xlu0 %3486
    %3496 = vrot.lane.b32.xlu0 %v2651, 23
    %v3497 = vpop.permute.xlu0 %3496
    %3498 = vrot.lane.b32.xlu0 %v2652, 23
    %v3499 = vpop.permute.xlu0 %3498
    %3500 = vrot.lane.b32.xlu0 %v2653, 23
    %v3501 = vpop.permute.xlu0 %3500
    %3502 = vrot.lane.b32.xlu0 %v2654, 23
    %v3503 = vpop.permute.xlu0 %3502
    %3504 = vrot.lane.b32.xlu0 %v2655, 23
    %v3505 = vpop.permute.xlu0 %3504
    %3506 = vrot.lane.b32.xlu0 %v2656, 23
    %v3507 = vpop.permute.xlu0 %3506
    %3508 = vrot.lane.b32.xlu0 %v2657, 23
    %v3509 = vpop.permute.xlu0 %3508
    %3510 = vrot.lane.b32.xlu0 %v2658, 23
    %v3511 = vpop.permute.xlu0 %3510
    %v3520 = vsel %vm2722, %v3449, %v3473
    %v3521 = vsel %vm2722, %v3451, %v3475
    %v3522 = vsel %vm2722, %v3453, %v3477
    %v3523 = vsel %vm2722, %v3455, %v3479
    %v3524 = vsel %vm2722, %v3457, %v3481
    %v3525 = vsel %vm2722, %v3459, %v3483
    %v3526 = vsel %vm2722, %v3461, %v3485
    %v3527 = vsel %vm2722, %v3463, %v3487
    %v3528 = vsel %vm2731, %v3520, %v3497
    %v3529 = vsel %vm2731, %v3521, %v3499
    %v3530 = vsel %vm2731, %v3522, %v3501
    %v3531 = vsel %vm2731, %v3523, %v3503
    %v3532 = vsel %vm2731, %v3524, %v3505
    %v3533 = vsel %vm2731, %v3525, %v3507
    %v3534 = vsel %vm2731, %v3526, %v3509
    %v3535 = vsel %vm2731, %v3527, %v3511
    %v3536 = vld [vmem:[%s5 + $0xa] sm:$0x1]
    %v3537 = vlaneseq
    %v3538 = vshrl.u32 %v3537, 7
    %v3539 = vsub.s32 0, %v3538
    %v3540 = vrot.slane %v3536, %v3539
    %v3541 = vmul.f32 %v3540, %v3528
    %v3542 = vmul.f32 %v3540, %v3529
    %v3543 = vmul.f32 %v3540, %v3530
    %v3544 = vmul.f32 %v3540, %v3531
    %v3545 = vmul.f32 %v3540, %v3532
    %v3546 = vmul.f32 %v3540, %v3533
    %v3547 = vmul.f32 %v3540, %v3534
    %v3548 = vmul.f32 %v3540, %v3535
    %v3549 = vadd.f32 %v3440, %v3541
    %v3550 = vadd.f32 %v3441, %v3542
    %v3551 = vadd.f32 %v3442, %v3543
    %v3552 = vadd.f32 %v3443, %v3544
    %v3553 = vadd.f32 %v3444, %v3545
    %v3554 = vadd.f32 %v3445, %v3546
    %v3555 = vadd.f32 %v3446, %v3547
    %v3556 = vadd.f32 %v3447, %v3548
    %v3557 = vld [vmem:[%s5 + $0xd] sm:$0x1]
    %v3558 = vlaneseq
    %v3559 = vshrl.u32 %v3558, 7
    %v3560 = vsub.s32 0, %v3559
    %v3561 = vrot.slane %v3557, %v3560
    %v3562 = vmul.f32 %v3561, %v3528
    %v3563 = vmul.f32 %v3561, %v3529
    %v3564 = vmul.f32 %v3561, %v3530
    %v3565 = vmul.f32 %v3561, %v3531
    %v3566 = vmul.f32 %v3561, %v3532
    %v3567 = vmul.f32 %v3561, %v3533
    %v3568 = vmul.f32 %v3561, %v3534
    %v3569 = vmul.f32 %v3561, %v3535
    %v3578 = vrot.slane %v3562, 1
    %v3579 = vrot.slane %v3563, 1
    %v3580 = vsel %vm170, %v3578, %v3579
    %v3581 = vrot.slane %v3564, 1
    %v3582 = vsel %vm170, %v3579, %v3581
    %v3583 = vrot.slane %v3565, 1
    %v3584 = vsel %vm170, %v3581, %v3583
    %v3585 = vrot.slane %v3566, 1
    %v3586 = vrot.slane %v3567, 1
    %v3587 = vsel %vm170, %v3585, %v3586
    %v3588 = vrot.slane %v3568, 1
    %v3589 = vsel %vm170, %v3586, %v3588
    %v3590 = vrot.slane %v3569, 1
    %v3591 = vsel %vm170, %v3588, %v3590
    %v3600 = vadd.f32 %v3549, %v3580
    %v3601 = vadd.f32 %v3550, %v3582
    %v3602 = vadd.f32 %v3551, %v3584
    %v3603 = vadd.f32 %v3552, %v3583
    %v3604 = vadd.f32 %v3553, %v3587
    %v3605 = vadd.f32 %v3554, %v3589
    %v3606 = vadd.f32 %v3555, %v3591
    %v3607 = vadd.f32 %v3556, %v3590
    %v3608 = vld [vmem:[%s5 + $0x10] sm:$0x1]
    %v3609 = vlaneseq
    %v3610 = vshrl.u32 %v3609, 7
    %v3611 = vsub.s32 0, %v3610
    %v3612 = vrot.slane %v3608, %v3611
    %v3613 = vmul.f32 %v3612, %v3528
    %v3614 = vmul.f32 %v3612, %v3529
    %v3615 = vmul.f32 %v3612, %v3530
    %v3616 = vmul.f32 %v3612, %v3531
    %v3617 = vmul.f32 %v3612, %v3532
    %v3618 = vmul.f32 %v3612, %v3533
    %v3619 = vmul.f32 %v3612, %v3534
    %v3620 = vmul.f32 %v3612, %v3535
    %v3629 = vrot.slane %v3613, 2
    %v3630 = vrot.slane %v3614, 2
    %v3631 = vsel %vm222, %v3629, %v3630
    %v3632 = vrot.slane %v3615, 2
    %v3633 = vsel %vm222, %v3630, %v3632
    %v3634 = vrot.slane %v3616, 2
    %v3635 = vsel %vm222, %v3632, %v3634
    %v3636 = vrot.slane %v3617, 2
    %v3637 = vrot.slane %v3618, 2
    %v3638 = vsel %vm222, %v3636, %v3637
    %v3639 = vrot.slane %v3619, 2
    %v3640 = vsel %vm222, %v3637, %v3639
    %v3641 = vrot.slane %v3620, 2
    %v3642 = vsel %vm222, %v3639, %v3641
    %v3651 = vadd.f32 %v3600, %v3631
    %v3652 = vadd.f32 %v3601, %v3633
    %v3653 = vadd.f32 %v3602, %v3635
    %v3654 = vadd.f32 %v3603, %v3634
    %v3655 = vadd.f32 %v3604, %v3638
    %v3656 = vadd.f32 %v3605, %v3640
    %v3657 = vadd.f32 %v3606, %v3642
    %v3658 = vadd.f32 %v3607, %v3641
    %3659 = vrot.lane.b32.xlu0 %v2651, 98
    %v3660 = vpop.permute.xlu0 %3659
    %3661 = vrot.lane.b32.xlu0 %v2652, 98
    %v3662 = vpop.permute.xlu0 %3661
    %3663 = vrot.lane.b32.xlu0 %v2653, 98
    %v3664 = vpop.permute.xlu0 %3663
    %3665 = vrot.lane.b32.xlu0 %v2654, 98
    %v3666 = vpop.permute.xlu0 %3665
    %3667 = vrot.lane.b32.xlu0 %v2655, 98
    %v3668 = vpop.permute.xlu0 %3667
    %3669 = vrot.lane.b32.xlu0 %v2656, 98
    %v3670 = vpop.permute.xlu0 %3669
    %3671 = vrot.lane.b32.xlu0 %v2657, 98
    %v3672 = vpop.permute.xlu0 %3671
    %3673 = vrot.lane.b32.xlu0 %v2658, 98
    %v3674 = vpop.permute.xlu0 %3673
    %3683 = vrot.lane.b32.xlu0 %v2651, 124
    %v3684 = vpop.permute.xlu0 %3683
    %3685 = vrot.lane.b32.xlu0 %v2652, 124
    %v3686 = vpop.permute.xlu0 %3685
    %3687 = vrot.lane.b32.xlu0 %v2653, 124
    %v3688 = vpop.permute.xlu0 %3687
    %3689 = vrot.lane.b32.xlu0 %v2654, 124
    %v3690 = vpop.permute.xlu0 %3689
    %3691 = vrot.lane.b32.xlu0 %v2655, 124
    %v3692 = vpop.permute.xlu0 %3691
    %3693 = vrot.lane.b32.xlu0 %v2656, 124
    %v3694 = vpop.permute.xlu0 %3693
    %3695 = vrot.lane.b32.xlu0 %v2657, 124
    %v3696 = vpop.permute.xlu0 %3695
    %3697 = vrot.lane.b32.xlu0 %v2658, 124
    %v3698 = vpop.permute.xlu0 %3697
    %3707 = vrot.lane.b32.xlu0 %v2651, 22
    %v3708 = vpop.permute.xlu0 %3707
    %3709 = vrot.lane.b32.xlu0 %v2652, 22
    %v3710 = vpop.permute.xlu0 %3709
    %3711 = vrot.lane.b32.xlu0 %v2653, 22
    %v3712 = vpop.permute.xlu0 %3711
    %3713 = vrot.lane.b32.xlu0 %v2654, 22
    %v3714 = vpop.permute.xlu0 %3713
    %3715 = vrot.lane.b32.xlu0 %v2655, 22
    %v3716 = vpop.permute.xlu0 %3715
    %3717 = vrot.lane.b32.xlu0 %v2656, 22
    %v3718 = vpop.permute.xlu0 %3717
    %3719 = vrot.lane.b32.xlu0 %v2657, 22
    %v3720 = vpop.permute.xlu0 %3719
    %3721 = vrot.lane.b32.xlu0 %v2658, 22
    %v3722 = vpop.permute.xlu0 %3721
    %v3731 = vsel %vm2722, %v3660, %v3684
    %v3732 = vsel %vm2722, %v3662, %v3686
    %v3733 = vsel %vm2722, %v3664, %v3688
    %v3734 = vsel %vm2722, %v3666, %v3690
    %v3735 = vsel %vm2722, %v3668, %v3692
    %v3736 = vsel %vm2722, %v3670, %v3694
    %v3737 = vsel %vm2722, %v3672, %v3696
    %v3738 = vsel %vm2722, %v3674, %v3698
    %v3739 = vsel %vm2731, %v3731, %v3708
    %v3740 = vsel %vm2731, %v3732, %v3710
    %v3741 = vsel %vm2731, %v3733, %v3712
    %v3742 = vsel %vm2731, %v3734, %v3714
    %v3743 = vsel %vm2731, %v3735, %v3716
    %v3744 = vsel %vm2731, %v3736, %v3718
    %v3745 = vsel %vm2731, %v3737, %v3720
    %v3746 = vsel %vm2731, %v3738, %v3722
    %v3747 = vld [vmem:[%s5 + $0xb] sm:$0x1]
    %v3748 = vlaneseq
    %v3749 = vshrl.u32 %v3748, 7
    %v3750 = vsub.s32 0, %v3749
    %v3751 = vrot.slane %v3747, %v3750
    %v3752 = vmul.f32 %v3751, %v3739
    %v3753 = vmul.f32 %v3751, %v3740
    %v3754 = vmul.f32 %v3751, %v3741
    %v3755 = vmul.f32 %v3751, %v3742
    %v3756 = vmul.f32 %v3751, %v3743
    %v3757 = vmul.f32 %v3751, %v3744
    %v3758 = vmul.f32 %v3751, %v3745
    %v3759 = vmul.f32 %v3751, %v3746
    %v3760 = vadd.f32 %v3651, %v3752
    %v3761 = vadd.f32 %v3652, %v3753
    %v3762 = vadd.f32 %v3653, %v3754
    %v3763 = vadd.f32 %v3654, %v3755
    %v3764 = vadd.f32 %v3655, %v3756
    %v3765 = vadd.f32 %v3656, %v3757
    %v3766 = vadd.f32 %v3657, %v3758
    %v3767 = vadd.f32 %v3658, %v3759
    %v3768 = vld [vmem:[%s5 + $0xe] sm:$0x1]
    %v3769 = vlaneseq
    %v3770 = vshrl.u32 %v3769, 7
    %v3771 = vsub.s32 0, %v3770
    %v3772 = vrot.slane %v3768, %v3771
    %v3773 = vmul.f32 %v3772, %v3739
    %v3774 = vmul.f32 %v3772, %v3740
    %v3775 = vmul.f32 %v3772, %v3741
    %v3776 = vmul.f32 %v3772, %v3742
    %v3777 = vmul.f32 %v3772, %v3743
    %v3778 = vmul.f32 %v3772, %v3744
    %v3779 = vmul.f32 %v3772, %v3745
    %v3780 = vmul.f32 %v3772, %v3746
    %v3789 = vrot.slane %v3773, 1
    %v3790 = vrot.slane %v3774, 1
    %v3791 = vsel %vm170, %v3789, %v3790
    %v3792 = vrot.slane %v3775, 1
    %v3793 = vsel %vm170, %v3790, %v3792
    %v3794 = vrot.slane %v3776, 1
    %v3795 = vsel %vm170, %v3792, %v3794
    %v3796 = vrot.slane %v3777, 1
    %v3797 = vrot.slane %v3778, 1
    %v3798 = vsel %vm170, %v3796, %v3797
    %v3799 = vrot.slane %v3779, 1
    %v3800 = vsel %vm170, %v3797, %v3799
    %v3801 = vrot.slane %v3780, 1
    %v3802 = vsel %vm170, %v3799, %v3801
    %v3811 = vadd.f32 %v3760, %v3791
    %v3812 = vadd.f32 %v3761, %v3793
    %v3813 = vadd.f32 %v3762, %v3795
    %v3814 = vadd.f32 %v3763, %v3794
    %v3815 = vadd.f32 %v3764, %v3798
    %v3816 = vadd.f32 %v3765, %v3800
    %v3817 = vadd.f32 %v3766, %v3802
    %v3818 = vadd.f32 %v3767, %v3801
    %v3819 = vld [vmem:[%s5 + $0x11] sm:$0x1]
    %v3820 = vlaneseq
    %v3821 = vshrl.u32 %v3820, 7
    %v3822 = vsub.s32 0, %v3821
    %v3823 = vrot.slane %v3819, %v3822
    %v3824 = vmul.f32 %v3823, %v3739
    %v3825 = vmul.f32 %v3823, %v3740
    %v3826 = vmul.f32 %v3823, %v3741
    %v3827 = vmul.f32 %v3823, %v3742
    %v3828 = vmul.f32 %v3823, %v3743
    %v3829 = vmul.f32 %v3823, %v3744
    %v3830 = vmul.f32 %v3823, %v3745
    %v3831 = vmul.f32 %v3823, %v3746
    %v3840 = vrot.slane %v3824, 2
    %v3841 = vrot.slane %v3825, 2
    %v3842 = vsel %vm222, %v3840, %v3841
    %v3843 = vrot.slane %v3826, 2
    %v3844 = vsel %vm222, %v3841, %v3843
    %v3845 = vrot.slane %v3827, 2
    %v3846 = vsel %vm222, %v3843, %v3845
    %v3847 = vrot.slane %v3828, 2
    %v3848 = vrot.slane %v3829, 2
    %v3849 = vsel %vm222, %v3847, %v3848
    %v3850 = vrot.slane %v3830, 2
    %v3851 = vsel %vm222, %v3848, %v3850
    %v3852 = vrot.slane %v3831, 2
    %v3853 = vsel %vm222, %v3850, %v3852
    %v3862 = vadd.f32 %v3811, %v3842
    %v3863 = vadd.f32 %v3812, %v3844
    %v3864 = vadd.f32 %v3813, %v3846
    %v3865 = vadd.f32 %v3814, %v3845
    %v3866 = vadd.f32 %v3815, %v3849
    %v3867 = vadd.f32 %v3816, %v3851
    %v3868 = vadd.f32 %v3817, %v3853
    %v3869 = vadd.f32 %v3818, %v3852
    %3870 = vrot.lane.b32.xlu0 %v2651, 72
    %v3871 = vpop.permute.xlu0 %3870
    %3872 = vrot.lane.b32.xlu0 %v2652, 72
    %v3873 = vpop.permute.xlu0 %3872
    %3874 = vrot.lane.b32.xlu0 %v2653, 72
    %v3875 = vpop.permute.xlu0 %3874
    %3876 = vrot.lane.b32.xlu0 %v2654, 72
    %v3877 = vpop.permute.xlu0 %3876
    %3878 = vrot.lane.b32.xlu0 %v2655, 72
    %v3879 = vpop.permute.xlu0 %3878
    %3880 = vrot.lane.b32.xlu0 %v2656, 72
    %v3881 = vpop.permute.xlu0 %3880
    %3882 = vrot.lane.b32.xlu0 %v2657, 72
    %v3883 = vpop.permute.xlu0 %3882
    %3884 = vrot.lane.b32.xlu0 %v2658, 72
    %v3885 = vpop.permute.xlu0 %3884
    %v3894 = vsel %vm2722, %v3871, %v3660
    %v3895 = vsel %vm2722, %v3873, %v3662
    %v3896 = vsel %vm2722, %v3875, %v3664
    %v3897 = vsel %vm2722, %v3877, %v3666
    %v3898 = vsel %vm2722, %v3879, %v3668
    %v3899 = vsel %vm2722, %v3881, %v3670
    %v3900 = vsel %vm2722, %v3883, %v3672
    %v3901 = vsel %vm2722, %v3885, %v3674
    %v3902 = vsel %vm2731, %v3894, %v3684
    %v3903 = vsel %vm2731, %v3895, %v3686
    %v3904 = vsel %vm2731, %v3896, %v3688
    %v3905 = vsel %vm2731, %v3897, %v3690
    %v3906 = vsel %vm2731, %v3898, %v3692
    %v3907 = vsel %vm2731, %v3899, %v3694
    %v3908 = vsel %vm2731, %v3900, %v3696
    %v3909 = vsel %vm2731, %v3901, %v3698
    %v3910 = vld [vmem:[%s5 + $0x12] sm:$0x1]
    %v3911 = vlaneseq
    %v3912 = vshrl.u32 %v3911, 7
    %v3913 = vsub.s32 0, %v3912
    %v3914 = vrot.slane %v3910, %v3913
    %v3915 = vmul.f32 %v3914, %v3902
    %v3916 = vmul.f32 %v3914, %v3903
    %v3917 = vmul.f32 %v3914, %v3904
    %v3918 = vmul.f32 %v3914, %v3905
    %v3919 = vmul.f32 %v3914, %v3906
    %v3920 = vmul.f32 %v3914, %v3907
    %v3921 = vmul.f32 %v3914, %v3908
    %v3922 = vmul.f32 %v3914, %v3909
    %v3923 = vadd.f32 %v3862, %v3915
    %v3924 = vadd.f32 %v3863, %v3916
    %v3925 = vadd.f32 %v3864, %v3917
    %v3926 = vadd.f32 %v3865, %v3918
    %v3927 = vadd.f32 %v3866, %v3919
    %v3928 = vadd.f32 %v3867, %v3920
    %v3929 = vadd.f32 %v3868, %v3921
    %v3930 = vadd.f32 %v3869, %v3922
    %v3931 = vld [vmem:[%s5 + $0x15] sm:$0x1]
    %v3932 = vlaneseq
    %v3933 = vshrl.u32 %v3932, 7
    %v3934 = vsub.s32 0, %v3933
    %v3935 = vrot.slane %v3931, %v3934
    %v3936 = vmul.f32 %v3935, %v3902
    %v3937 = vmul.f32 %v3935, %v3903
    %v3938 = vmul.f32 %v3935, %v3904
    %v3939 = vmul.f32 %v3935, %v3905
    %v3940 = vmul.f32 %v3935, %v3906
    %v3941 = vmul.f32 %v3935, %v3907
    %v3942 = vmul.f32 %v3935, %v3908
    %v3943 = vmul.f32 %v3935, %v3909
    %v3952 = vrot.slane %v3936, 1
    %v3953 = vrot.slane %v3937, 1
    %v3954 = vsel %vm170, %v3952, %v3953
    %v3955 = vrot.slane %v3938, 1
    %v3956 = vsel %vm170, %v3953, %v3955
    %v3957 = vrot.slane %v3939, 1
    %v3958 = vsel %vm170, %v3955, %v3957
    %v3959 = vrot.slane %v3940, 1
    %v3960 = vrot.slane %v3941, 1
    %v3961 = vsel %vm170, %v3959, %v3960
    %v3962 = vrot.slane %v3942, 1
    %v3963 = vsel %vm170, %v3960, %v3962
    %v3964 = vrot.slane %v3943, 1
    %v3965 = vsel %vm170, %v3962, %v3964
    %v3974 = vadd.f32 %v3923, %v3954
    %v3975 = vadd.f32 %v3924, %v3956
    %v3976 = vadd.f32 %v3925, %v3958
    %v3977 = vadd.f32 %v3926, %v3957
    %v3978 = vadd.f32 %v3927, %v3961
    %v3979 = vadd.f32 %v3928, %v3963
    %v3980 = vadd.f32 %v3929, %v3965
    %v3981 = vadd.f32 %v3930, %v3964
    %v3982 = vld [vmem:[%s5 + $0x18] sm:$0x1]
    %v3983 = vlaneseq
    %v3984 = vshrl.u32 %v3983, 7
    %v3985 = vsub.s32 0, %v3984
    %v3986 = vrot.slane %v3982, %v3985
    %v3987 = vmul.f32 %v3986, %v3902
    %v3988 = vmul.f32 %v3986, %v3903
    %v3989 = vmul.f32 %v3986, %v3904
    %v3990 = vmul.f32 %v3986, %v3905
    %v3991 = vmul.f32 %v3986, %v3906
    %v3992 = vmul.f32 %v3986, %v3907
    %v3993 = vmul.f32 %v3986, %v3908
    %v3994 = vmul.f32 %v3986, %v3909
    %v4003 = vrot.slane %v3987, 2
    %v4004 = vrot.slane %v3988, 2
    %v4005 = vsel %vm222, %v4003, %v4004
    %v4006 = vrot.slane %v3989, 2
    %v4007 = vsel %vm222, %v4004, %v4006
    %v4008 = vrot.slane %v3990, 2
    %v4009 = vsel %vm222, %v4006, %v4008
    %v4010 = vrot.slane %v3991, 2
    %v4011 = vrot.slane %v3992, 2
    %v4012 = vsel %vm222, %v4010, %v4011
    %v4013 = vrot.slane %v3993, 2
    %v4014 = vsel %vm222, %v4011, %v4013
    %v4015 = vrot.slane %v3994, 2
    %v4016 = vsel %vm222, %v4013, %v4015
    %v4025 = vadd.f32 %v3974, %v4005
    %v4026 = vadd.f32 %v3975, %v4007
    %v4027 = vadd.f32 %v3976, %v4009
    %v4028 = vadd.f32 %v3977, %v4008
    %v4029 = vadd.f32 %v3978, %v4012
    %v4030 = vadd.f32 %v3979, %v4014
    %v4031 = vadd.f32 %v3980, %v4016
    %v4032 = vadd.f32 %v3981, %v4015
    %4033 = vrot.lane.b32.xlu0 %v2651, 71
    %v4034 = vpop.permute.xlu0 %4033
    %4035 = vrot.lane.b32.xlu0 %v2652, 71
    %v4036 = vpop.permute.xlu0 %4035
    %4037 = vrot.lane.b32.xlu0 %v2653, 71
    %v4038 = vpop.permute.xlu0 %4037
    %4039 = vrot.lane.b32.xlu0 %v2654, 71
    %v4040 = vpop.permute.xlu0 %4039
    %4041 = vrot.lane.b32.xlu0 %v2655, 71
    %v4042 = vpop.permute.xlu0 %4041
    %4043 = vrot.lane.b32.xlu0 %v2656, 71
    %v4044 = vpop.permute.xlu0 %4043
    %4045 = vrot.lane.b32.xlu0 %v2657, 71
    %v4046 = vpop.permute.xlu0 %4045
    %4047 = vrot.lane.b32.xlu0 %v2658, 71
    %v4048 = vpop.permute.xlu0 %4047
    %4057 = vrot.lane.b32.xlu0 %v2651, 97
    %v4058 = vpop.permute.xlu0 %4057
    %4059 = vrot.lane.b32.xlu0 %v2652, 97
    %v4060 = vpop.permute.xlu0 %4059
    %4061 = vrot.lane.b32.xlu0 %v2653, 97
    %v4062 = vpop.permute.xlu0 %4061
    %4063 = vrot.lane.b32.xlu0 %v2654, 97
    %v4064 = vpop.permute.xlu0 %4063
    %4065 = vrot.lane.b32.xlu0 %v2655, 97
    %v4066 = vpop.permute.xlu0 %4065
    %4067 = vrot.lane.b32.xlu0 %v2656, 97
    %v4068 = vpop.permute.xlu0 %4067
    %4069 = vrot.lane.b32.xlu0 %v2657, 97
    %v4070 = vpop.permute.xlu0 %4069
    %4071 = vrot.lane.b32.xlu0 %v2658, 97
    %v4072 = vpop.permute.xlu0 %4071
    %4081 = vrot.lane.b32.xlu0 %v2651, 123
    %v4082 = vpop.permute.xlu0 %4081
    %4083 = vrot.lane.b32.xlu0 %v2652, 123
    %v4084 = vpop.permute.xlu0 %4083
    %4085 = vrot.lane.b32.xlu0 %v2653, 123
    %v4086 = vpop.permute.xlu0 %4085
    %4087 = vrot.lane.b32.xlu0 %v2654, 123
    %v4088 = vpop.permute.xlu0 %4087
    %4089 = vrot.lane.b32.xlu0 %v2655, 123
    %v4090 = vpop.permute.xlu0 %4089
    %4091 = vrot.lane.b32.xlu0 %v2656, 123
    %v4092 = vpop.permute.xlu0 %4091
    %4093 = vrot.lane.b32.xlu0 %v2657, 123
    %v4094 = vpop.permute.xlu0 %4093
    %4095 = vrot.lane.b32.xlu0 %v2658, 123
    %v4096 = vpop.permute.xlu0 %4095
    %v4105 = vsel %vm2722, %v4034, %v4058
    %v4106 = vsel %vm2722, %v4036, %v4060
    %v4107 = vsel %vm2722, %v4038, %v4062
    %v4108 = vsel %vm2722, %v4040, %v4064
    %v4109 = vsel %vm2722, %v4042, %v4066
    %v4110 = vsel %vm2722, %v4044, %v4068
    %v4111 = vsel %vm2722, %v4046, %v4070
    %v4112 = vsel %vm2722, %v4048, %v4072
    %v4113 = vsel %vm2731, %v4105, %v4082
    %v4114 = vsel %vm2731, %v4106, %v4084
    %v4115 = vsel %vm2731, %v4107, %v4086
    %v4116 = vsel %vm2731, %v4108, %v4088
    %v4117 = vsel %vm2731, %v4109, %v4090
    %v4118 = vsel %vm2731, %v4110, %v4092
    %v4119 = vsel %vm2731, %v4111, %v4094
    %v4120 = vsel %vm2731, %v4112, %v4096
    %v4121 = vld [vmem:[%s5 + $0x13] sm:$0x1]
    %v4122 = vlaneseq
    %v4123 = vshrl.u32 %v4122, 7
    %v4124 = vsub.s32 0, %v4123
    %v4125 = vrot.slane %v4121, %v4124
    %v4126 = vmul.f32 %v4125, %v4113
    %v4127 = vmul.f32 %v4125, %v4114
    %v4128 = vmul.f32 %v4125, %v4115
    %v4129 = vmul.f32 %v4125, %v4116
    %v4130 = vmul.f32 %v4125, %v4117
    %v4131 = vmul.f32 %v4125, %v4118
    %v4132 = vmul.f32 %v4125, %v4119
    %v4133 = vmul.f32 %v4125, %v4120
    %v4134 = vadd.f32 %v4025, %v4126
    %v4135 = vadd.f32 %v4026, %v4127
    %v4136 = vadd.f32 %v4027, %v4128
    %v4137 = vadd.f32 %v4028, %v4129
    %v4138 = vadd.f32 %v4029, %v4130
    %v4139 = vadd.f32 %v4030, %v4131
    %v4140 = vadd.f32 %v4031, %v4132
    %v4141 = vadd.f32 %v4032, %v4133
    %v4142 = vld [vmem:[%s5 + $0x16] sm:$0x1]
    %v4143 = vlaneseq
    %v4144 = vshrl.u32 %v4143, 7
    %v4145 = vsub.s32 0, %v4144
    %v4146 = vrot.slane %v4142, %v4145
    %v4147 = vmul.f32 %v4146, %v4113
    %v4148 = vmul.f32 %v4146, %v4114
    %v4149 = vmul.f32 %v4146, %v4115
    %v4150 = vmul.f32 %v4146, %v4116
    %v4151 = vmul.f32 %v4146, %v4117
    %v4152 = vmul.f32 %v4146, %v4118
    %v4153 = vmul.f32 %v4146, %v4119
    %v4154 = vmul.f32 %v4146, %v4120
    %v4163 = vrot.slane %v4147, 1
    %v4164 = vrot.slane %v4148, 1
    %v4165 = vsel %vm170, %v4163, %v4164
    %v4166 = vrot.slane %v4149, 1
    %v4167 = vsel %vm170, %v4164, %v4166
    %v4168 = vrot.slane %v4150, 1
    %v4169 = vsel %vm170, %v4166, %v4168
    %v4170 = vrot.slane %v4151, 1
    %v4171 = vrot.slane %v4152, 1
    %v4172 = vsel %vm170, %v4170, %v4171
    %v4173 = vrot.slane %v4153, 1
    %v4174 = vsel %vm170, %v4171, %v4173
    %v4175 = vrot.slane %v4154, 1
    %v4176 = vsel %vm170, %v4173, %v4175
    %v4185 = vadd.f32 %v4134, %v4165
    %v4186 = vadd.f32 %v4135, %v4167
    %v4187 = vadd.f32 %v4136, %v4169
    %v4188 = vadd.f32 %v4137, %v4168
    %v4189 = vadd.f32 %v4138, %v4172
    %v4190 = vadd.f32 %v4139, %v4174
    %v4191 = vadd.f32 %v4140, %v4176
    %v4192 = vadd.f32 %v4141, %v4175
    %v4193 = vld [vmem:[%s5 + $0x19] sm:$0x1]
    %v4194 = vlaneseq
    %v4195 = vshrl.u32 %v4194, 7
    %v4196 = vsub.s32 0, %v4195
    %v4197 = vrot.slane %v4193, %v4196
    %v4198 = vmul.f32 %v4197, %v4113
    %v4199 = vmul.f32 %v4197, %v4114
    %v4200 = vmul.f32 %v4197, %v4115
    %v4201 = vmul.f32 %v4197, %v4116
    %v4202 = vmul.f32 %v4197, %v4117
    %v4203 = vmul.f32 %v4197, %v4118
    %v4204 = vmul.f32 %v4197, %v4119
    %v4205 = vmul.f32 %v4197, %v4120
    %v4214 = vrot.slane %v4198, 2
    %v4215 = vrot.slane %v4199, 2
    %v4216 = vsel %vm222, %v4214, %v4215
    %v4217 = vrot.slane %v4200, 2
    %v4218 = vsel %vm222, %v4215, %v4217
    %v4219 = vrot.slane %v4201, 2
    %v4220 = vsel %vm222, %v4217, %v4219
    %v4221 = vrot.slane %v4202, 2
    %v4222 = vrot.slane %v4203, 2
    %v4223 = vsel %vm222, %v4221, %v4222
    %v4224 = vrot.slane %v4204, 2
    %v4225 = vsel %vm222, %v4222, %v4224
    %v4226 = vrot.slane %v4205, 2
    %v4227 = vsel %vm222, %v4224, %v4226
    %v4236 = vadd.f32 %v4185, %v4216
    %v4237 = vadd.f32 %v4186, %v4218
    %v4238 = vadd.f32 %v4187, %v4220
    %v4239 = vadd.f32 %v4188, %v4219
    %v4240 = vadd.f32 %v4189, %v4223
    %v4241 = vadd.f32 %v4190, %v4225
    %v4242 = vadd.f32 %v4191, %v4227
    %v4243 = vadd.f32 %v4192, %v4226
    %4244 = vrot.lane.b32.xlu0 %v2651, 70
    %v4245 = vpop.permute.xlu0 %4244
    %4246 = vrot.lane.b32.xlu0 %v2652, 70
    %v4247 = vpop.permute.xlu0 %4246
    %4248 = vrot.lane.b32.xlu0 %v2653, 70
    %v4249 = vpop.permute.xlu0 %4248
    %4250 = vrot.lane.b32.xlu0 %v2654, 70
    %v4251 = vpop.permute.xlu0 %4250
    %4252 = vrot.lane.b32.xlu0 %v2655, 70
    %v4253 = vpop.permute.xlu0 %4252
    %4254 = vrot.lane.b32.xlu0 %v2656, 70
    %v4255 = vpop.permute.xlu0 %4254
    %4256 = vrot.lane.b32.xlu0 %v2657, 70
    %v4257 = vpop.permute.xlu0 %4256
    %4258 = vrot.lane.b32.xlu0 %v2658, 70
    %v4259 = vpop.permute.xlu0 %4258
    %4268 = vrot.lane.b32.xlu0 %v2651, 96
    %v4269 = vpop.permute.xlu0 %4268
    %4270 = vrot.lane.b32.xlu0 %v2652, 96
    %v4271 = vpop.permute.xlu0 %4270
    %4272 = vrot.lane.b32.xlu0 %v2653, 96
    %v4273 = vpop.permute.xlu0 %4272
    %4274 = vrot.lane.b32.xlu0 %v2654, 96
    %v4275 = vpop.permute.xlu0 %4274
    %4276 = vrot.lane.b32.xlu0 %v2655, 96
    %v4277 = vpop.permute.xlu0 %4276
    %4278 = vrot.lane.b32.xlu0 %v2656, 96
    %v4279 = vpop.permute.xlu0 %4278
    %4280 = vrot.lane.b32.xlu0 %v2657, 96
    %v4281 = vpop.permute.xlu0 %4280
    %4282 = vrot.lane.b32.xlu0 %v2658, 96
    %v4283 = vpop.permute.xlu0 %4282
    %4292 = vrot.lane.b32.xlu0 %v2651, 122
    %v4293 = vpop.permute.xlu0 %4292
    %4294 = vrot.lane.b32.xlu0 %v2652, 122
    %v4295 = vpop.permute.xlu0 %4294
    %4296 = vrot.lane.b32.xlu0 %v2653, 122
    %v4297 = vpop.permute.xlu0 %4296
    %4298 = vrot.lane.b32.xlu0 %v2654, 122
    %v4299 = vpop.permute.xlu0 %4298
    %4300 = vrot.lane.b32.xlu0 %v2655, 122
    %v4301 = vpop.permute.xlu0 %4300
    %4302 = vrot.lane.b32.xlu0 %v2656, 122
    %v4303 = vpop.permute.xlu0 %4302
    %4304 = vrot.lane.b32.xlu0 %v2657, 122
    %v4305 = vpop.permute.xlu0 %4304
    %4306 = vrot.lane.b32.xlu0 %v2658, 122
    %v4307 = vpop.permute.xlu0 %4306
    %v4316 = vsel %vm2722, %v4245, %v4269
    %v4317 = vsel %vm2722, %v4247, %v4271
    %v4318 = vsel %vm2722, %v4249, %v4273
    %v4319 = vsel %vm2722, %v4251, %v4275
    %v4320 = vsel %vm2722, %v4253, %v4277
    %v4321 = vsel %vm2722, %v4255, %v4279
    %v4322 = vsel %vm2722, %v4257, %v4281
    %v4323 = vsel %vm2722, %v4259, %v4283
    %v4324 = vsel %vm2731, %v4316, %v4293
    %v4325 = vsel %vm2731, %v4317, %v4295
    %v4326 = vsel %vm2731, %v4318, %v4297
    %v4327 = vsel %vm2731, %v4319, %v4299
    %v4328 = vsel %vm2731, %v4320, %v4301
    %v4329 = vsel %vm2731, %v4321, %v4303
    %v4330 = vsel %vm2731, %v4322, %v4305
    %v4331 = vsel %vm2731, %v4323, %v4307
    %v4332 = vld [vmem:[%s5 + $0x14] sm:$0x1]
    %v4333 = vlaneseq
    %v4334 = vshrl.u32 %v4333, 7
    %v4335 = vsub.s32 0, %v4334
    %v4336 = vrot.slane %v4332, %v4335
    %v4337 = vmul.f32 %v4336, %v4324
    %v4338 = vmul.f32 %v4336, %v4325
    %v4339 = vmul.f32 %v4336, %v4326
    %v4340 = vmul.f32 %v4336, %v4327
    %v4341 = vmul.f32 %v4336, %v4328
    %v4342 = vmul.f32 %v4336, %v4329
    %v4343 = vmul.f32 %v4336, %v4330
    %v4344 = vmul.f32 %v4336, %v4331
    %v4345 = vadd.f32 %v4236, %v4337
    %v4346 = vadd.f32 %v4237, %v4338
    %v4347 = vadd.f32 %v4238, %v4339
    %v4348 = vadd.f32 %v4239, %v4340
    %v4349 = vadd.f32 %v4240, %v4341
    %v4350 = vadd.f32 %v4241, %v4342
    %v4351 = vadd.f32 %v4242, %v4343
    %v4352 = vadd.f32 %v4243, %v4344
    %v4353 = vld [vmem:[%s5 + $0x17] sm:$0x1]
    %v4354 = vlaneseq
    %v4355 = vshrl.u32 %v4354, 7
    %v4356 = vsub.s32 0, %v4355
    %v4357 = vrot.slane %v4353, %v4356
    %v4358 = vmul.f32 %v4357, %v4324
    %v4359 = vmul.f32 %v4357, %v4325
    %v4360 = vmul.f32 %v4357, %v4326
    %v4361 = vmul.f32 %v4357, %v4327
    %v4362 = vmul.f32 %v4357, %v4328
    %v4363 = vmul.f32 %v4357, %v4329
    %v4364 = vmul.f32 %v4357, %v4330
    %v4365 = vmul.f32 %v4357, %v4331
    %v4374 = vrot.slane %v4358, 1
    %v4375 = vrot.slane %v4359, 1
    %v4376 = vsel %vm170, %v4374, %v4375
    %v4377 = vrot.slane %v4360, 1
    %v4378 = vsel %vm170, %v4375, %v4377
    %v4379 = vrot.slane %v4361, 1
    %v4380 = vsel %vm170, %v4377, %v4379
    %v4381 = vrot.slane %v4362, 1
    %v4382 = vrot.slane %v4363, 1
    %v4383 = vsel %vm170, %v4381, %v4382
    %v4384 = vrot.slane %v4364, 1
    %v4385 = vsel %vm170, %v4382, %v4384
    %v4386 = vrot.slane %v4365, 1
    %v4387 = vsel %vm170, %v4384, %v4386
    %v4396 = vadd.f32 %v4345, %v4376
    %v4397 = vadd.f32 %v4346, %v4378
    %v4398 = vadd.f32 %v4347, %v4380
    %v4399 = vadd.f32 %v4348, %v4379
    %v4400 = vadd.f32 %v4349, %v4383
    %v4401 = vadd.f32 %v4350, %v4385
    %v4402 = vadd.f32 %v4351, %v4387
    %v4403 = vadd.f32 %v4352, %v4386
    %v4404 = vld [vmem:[%s5 + $0x1a] sm:$0x1]
    %v4405 = vlaneseq
    %v4406 = vshrl.u32 %v4405, 7
    %v4407 = vsub.s32 0, %v4406
    %v4408 = vrot.slane %v4404, %v4407
    %v4409 = vmul.f32 %v4408, %v4324
    %v4410 = vmul.f32 %v4408, %v4325
    %v4411 = vmul.f32 %v4408, %v4326
    %v4412 = vmul.f32 %v4408, %v4327
    %v4413 = vmul.f32 %v4408, %v4328
    %v4414 = vmul.f32 %v4408, %v4329
    %v4415 = vmul.f32 %v4408, %v4330
    %v4416 = vmul.f32 %v4408, %v4331
    %v4425 = vrot.slane %v4409, 2
    %v4426 = vrot.slane %v4410, 2
    %v4427 = vsel %vm222, %v4425, %v4426
    %v4428 = vrot.slane %v4411, 2
    %v4429 = vsel %vm222, %v4426, %v4428
    %v4430 = vrot.slane %v4412, 2
    %v4431 = vsel %vm222, %v4428, %v4430
    %v4432 = vrot.slane %v4413, 2
    %v4433 = vrot.slane %v4414, 2
    %v4434 = vsel %vm222, %v4432, %v4433
    %v4435 = vrot.slane %v4415, 2
    %v4436 = vsel %vm222, %v4433, %v4435
    %v4437 = vrot.slane %v4416, 2
    %v4438 = vsel %vm222, %v4435, %v4437
    %v4447 = vadd.f32 %v4396, %v4427
    %v4448 = vadd.f32 %v4397, %v4429
    %v4449 = vadd.f32 %v4398, %v4431
    %v4450 = vadd.f32 %v4399, %v4430
    %v4451 = vadd.f32 %v4400, %v4434
    %v4452 = vadd.f32 %v4401, %v4436
    %v4453 = vadd.f32 %v4402, %v4438
    %v4454 = vadd.f32 %v4403, %v4437
    %v4455 = vmax.f32 %v4447, 0.0
    %v4456 = vmax.f32 %v4448, 0.0
    %v4457 = vmax.f32 %v4449, 0.0
    %v4458 = vmax.f32 %v4450, 0.0
    %v4459 = vmax.f32 %v4451, 0.0
    %v4460 = vmax.f32 %v4452, 0.0
    %v4461 = vmax.f32 %v4453, 0.0
    %v4462 = vmax.f32 %v4454, 0.0
    %v4463 = vld [vmem:[%s8] sm:$0x1]
    %v4465 = vlaneseq
    %v4466 = vshrl.u32 %v4465, 7
    %v4467 = vsub.s32 0, %v4466
    %v4468 = vrot.slane %v4463, %v4467
    %4478 = vrot.lane.b32.xlu0 %v4455, 24
    %v4479 = vpop.permute.xlu0 %4478
    %4480 = vrot.lane.b32.xlu0 %v4456, 24
    %v4481 = vpop.permute.xlu0 %4480
    %4482 = vrot.lane.b32.xlu0 %v4457, 24
    %v4483 = vpop.permute.xlu0 %4482
    %4484 = vrot.lane.b32.xlu0 %v4458, 24
    %v4485 = vpop.permute.xlu0 %4484
    %4486 = vrot.lane.b32.xlu0 %v4459, 24
    %v4487 = vpop.permute.xlu0 %4486
    %4488 = vrot.lane.b32.xlu0 %v4460, 24
    %v4489 = vpop.permute.xlu0 %4488
    %4490 = vrot.lane.b32.xlu0 %v4461, 24
    %v4491 = vpop.permute.xlu0 %4490
    %4492 = vrot.lane.b32.xlu0 %v4462, 24
    %v4493 = vpop.permute.xlu0 %4492
    %4502 = vrot.lane.b32.xlu0 %v4455, 48
    %v4503 = vpop.permute.xlu0 %4502
    %4504 = vrot.lane.b32.xlu0 %v4456, 48
    %v4505 = vpop.permute.xlu0 %4504
    %4506 = vrot.lane.b32.xlu0 %v4457, 48
    %v4507 = vpop.permute.xlu0 %4506
    %4508 = vrot.lane.b32.xlu0 %v4458, 48
    %v4509 = vpop.permute.xlu0 %4508
    %4510 = vrot.lane.b32.xlu0 %v4459, 48
    %v4511 = vpop.permute.xlu0 %4510
    %4512 = vrot.lane.b32.xlu0 %v4460, 48
    %v4513 = vpop.permute.xlu0 %4512
    %4514 = vrot.lane.b32.xlu0 %v4461, 48
    %v4515 = vpop.permute.xlu0 %4514
    %4516 = vrot.lane.b32.xlu0 %v4462, 48
    %v4517 = vpop.permute.xlu0 %4516
    %vm4526 = vcmask 195584
    %v4527 = vsel %vm4526, %v4455, %v4479
    %v4528 = vsel %vm4526, %v4456, %v4481
    %v4529 = vsel %vm4526, %v4457, %v4483
    %v4530 = vsel %vm4526, %v4458, %v4485
    %v4531 = vsel %vm4526, %v4459, %v4487
    %v4532 = vsel %vm4526, %v4460, %v4489
    %v4533 = vsel %vm4526, %v4461, %v4491
    %v4534 = vsel %vm4526, %v4462, %v4493
    %vm4535 = vcmask 392192
    %v4536 = vsel %vm4535, %v4527, %v4503
    %v4537 = vsel %vm4535, %v4528, %v4505
    %v4538 = vsel %vm4535, %v4529, %v4507
    %v4539 = vsel %vm4535, %v4530, %v4509
    %v4540 = vsel %vm4535, %v4531, %v4511
    %v4541 = vsel %vm4535, %v4532, %v4513
    %v4542 = vsel %vm4535, %v4533, %v4515
    %v4543 = vsel %vm4535, %v4534, %v4517
    %v4544 = vld [vmem:[%s7] sm:$0x1]
    %v4545 = vlaneseq
    %v4546 = vshrl.u32 %v4545, 7
    %v4547 = vsub.s32 0, %v4546
    %v4548 = vrot.slane %v4544, %v4547
    %v4549 = vmul.f32 %v4548, %v4536
    %v4550 = vmul.f32 %v4548, %v4537
    %v4551 = vmul.f32 %v4548, %v4538
    %v4552 = vmul.f32 %v4548, %v4540
    %v4553 = vmul.f32 %v4548, %v4541
    %v4554 = vmul.f32 %v4548, %v4542
    %v4555 = vadd.f32 %v4468, %v4549
    %v4556 = vadd.f32 %v4468, %v4550
    %v4557 = vadd.f32 %v4468, %v4551
    %v4558 = vadd.f32 %v4468, %v4552
    %v4559 = vadd.f32 %v4468, %v4553
    %v4560 = vadd.f32 %v4468, %v4554
    %v4561 = vld [vmem:[%s7 + $0x3] sm:$0x1]
    %v4562 = vlaneseq
    %v4563 = vshrl.u32 %v4562, 7
    %v4564 = vsub.s32 0, %v4563
    %v4565 = vrot.slane %v4561, %v4564
    %v4566 = vmul.f32 %v4565, %v4536
    %v4567 = vmul.f32 %v4565, %v4537
    %v4568 = vmul.f32 %v4565, %v4538
    %v4569 = vmul.f32 %v4565, %v4539
    %v4570 = vmul.f32 %v4565, %v4540
    %v4571 = vmul.f32 %v4565, %v4541
    %v4572 = vmul.f32 %v4565, %v4542
    %v4573 = vmul.f32 %v4565, %v4543
    %v4582 = vrot.slane %v4566, 1
    %v4583 = vrot.slane %v4567, 1
    %v4584 = vsel %vm170, %v4582, %v4583
    %v4585 = vrot.slane %v4568, 1
    %v4586 = vsel %vm170, %v4583, %v4585
    %v4587 = vrot.slane %v4569, 1
    %v4588 = vsel %vm170, %v4585, %v4587
    %v4589 = vrot.slane %v4570, 1
    %v4590 = vrot.slane %v4571, 1
    %v4591 = vsel %vm170, %v4589, %v4590
    %v4592 = vrot.slane %v4572, 1
    %v4593 = vsel %vm170, %v4590, %v4592
    %v4594 = vrot.slane %v4573, 1
    %v4595 = vsel %vm170, %v4592, %v4594
    %v4602 = vadd.f32 %v4555, %v4584
    %v4603 = vadd.f32 %v4556, %v4586
    %v4604 = vadd.f32 %v4557, %v4588
    %v4605 = vadd.f32 %v4558, %v4591
    %v4606 = vadd.f32 %v4559, %v4593
    %v4607 = vadd.f32 %v4560, %v4595
    %v4608 = vld [vmem:[%s7 + $0x6] sm:$0x1]
    %v4609 = vlaneseq
    %v4610 = vshrl.u32 %v4609, 7
    %v4611 = vsub.s32 0, %v4610
    %v4612 = vrot.slane %v4608, %v4611
    %v4613 = vmul.f32 %v4612, %v4536
    %v4614 = vmul.f32 %v4612, %v4537
    %v4615 = vmul.f32 %v4612, %v4538
    %v4616 = vmul.f32 %v4612, %v4539
    %v4617 = vmul.f32 %v4612, %v4540
    %v4618 = vmul.f32 %v4612, %v4541
    %v4619 = vmul.f32 %v4612, %v4542
    %v4620 = vmul.f32 %v4612, %v4543
    %v4629 = vrot.slane %v4613, 2
    %v4630 = vrot.slane %v4614, 2
    %v4631 = vsel %vm222, %v4629, %v4630
    %v4632 = vrot.slane %v4615, 2
    %v4633 = vsel %vm222, %v4630, %v4632
    %v4634 = vrot.slane %v4616, 2
    %v4635 = vsel %vm222, %v4632, %v4634
    %v4636 = vrot.slane %v4617, 2
    %v4637 = vrot.slane %v4618, 2
    %v4638 = vsel %vm222, %v4636, %v4637
    %v4639 = vrot.slane %v4619, 2
    %v4640 = vsel %vm222, %v4637, %v4639
    %v4641 = vrot.slane %v4620, 2
    %v4642 = vsel %vm222, %v4639, %v4641
    %v4649 = vadd.f32 %v4602, %v4631
    %v4650 = vadd.f32 %v4603, %v4633
    %v4651 = vadd.f32 %v4604, %v4635
    %v4652 = vadd.f32 %v4605, %v4638
    %v4653 = vadd.f32 %v4606, %v4640
    %v4654 = vadd.f32 %v4607, %v4642
    %4655 = vrot.lane.b32.xlu0 %v4455, 127
    %v4656 = vpop.permute.xlu0 %4655
    %4657 = vrot.lane.b32.xlu0 %v4456, 127
    %v4658 = vpop.permute.xlu0 %4657
    %4659 = vrot.lane.b32.xlu0 %v4457, 127
    %v4660 = vpop.permute.xlu0 %4659
    %4661 = vrot.lane.b32.xlu0 %v4458, 127
    %v4662 = vpop.permute.xlu0 %4661
    %4663 = vrot.lane.b32.xlu0 %v4459, 127
    %v4664 = vpop.permute.xlu0 %4663
    %4665 = vrot.lane.b32.xlu0 %v4460, 127
    %v4666 = vpop.permute.xlu0 %4665
    %4667 = vrot.lane.b32.xlu0 %v4461, 127
    %v4668 = vpop.permute.xlu0 %4667
    %4669 = vrot.lane.b32.xlu0 %v4462, 127
    %v4670 = vpop.permute.xlu0 %4669
    %4679 = vrot.lane.b32.xlu0 %v4455, 23
    %v4680 = vpop.permute.xlu0 %4679
    %4681 = vrot.lane.b32.xlu0 %v4456, 23
    %v4682 = vpop.permute.xlu0 %4681
    %4683 = vrot.lane.b32.xlu0 %v4457, 23
    %v4684 = vpop.permute.xlu0 %4683
    %4685 = vrot.lane.b32.xlu0 %v4458, 23
    %v4686 = vpop.permute.xlu0 %4685
    %4687 = vrot.lane.b32.xlu0 %v4459, 23
    %v4688 = vpop.permute.xlu0 %4687
    %4689 = vrot.lane.b32.xlu0 %v4460, 23
    %v4690 = vpop.permute.xlu0 %4689
    %4691 = vrot.lane.b32.xlu0 %v4461, 23
    %v4692 = vpop.permute.xlu0 %4691
    %4693 = vrot.lane.b32.xlu0 %v4462, 23
    %v4694 = vpop.permute.xlu0 %4693
    %4703 = vrot.lane.b32.xlu0 %v4455, 47
    %v4704 = vpop.permute.xlu0 %4703
    %4705 = vrot.lane.b32.xlu0 %v4456, 47
    %v4706 = vpop.permute.xlu0 %4705
    %4707 = vrot.lane.b32.xlu0 %v4457, 47
    %v4708 = vpop.permute.xlu0 %4707
    %4709 = vrot.lane.b32.xlu0 %v4458, 47
    %v4710 = vpop.permute.xlu0 %4709
    %4711 = vrot.lane.b32.xlu0 %v4459, 47
    %v4712 = vpop.permute.xlu0 %4711
    %4713 = vrot.lane.b32.xlu0 %v4460, 47
    %v4714 = vpop.permute.xlu0 %4713
    %4715 = vrot.lane.b32.xlu0 %v4461, 47
    %v4716 = vpop.permute.xlu0 %4715
    %4717 = vrot.lane.b32.xlu0 %v4462, 47
    %v4718 = vpop.permute.xlu0 %4717
    %v4727 = vsel %vm4526, %v4656, %v4680
    %v4728 = vsel %vm4526, %v4658, %v4682
    %v4729 = vsel %vm4526, %v4660, %v4684
    %v4730 = vsel %vm4526, %v4662, %v4686
    %v4731 = vsel %vm4526, %v4664, %v4688
    %v4732 = vsel %vm4526, %v4666, %v4690
    %v4733 = vsel %vm4526, %v4668, %v4692
    %v4734 = vsel %vm4526, %v4670, %v4694
    %v4735 = vsel %vm4535, %v4727, %v4704
    %v4736 = vsel %vm4535, %v4728, %v4706
    %v4737 = vsel %vm4535, %v4729, %v4708
    %v4738 = vsel %vm4535, %v4730, %v4710
    %v4739 = vsel %vm4535, %v4731, %v4712
    %v4740 = vsel %vm4535, %v4732, %v4714
    %v4741 = vsel %vm4535, %v4733, %v4716
    %v4742 = vsel %vm4535, %v4734, %v4718
    %v4743 = vld [vmem:[%s7 + $0x1] sm:$0x1]
    %v4744 = vlaneseq
    %v4745 = vshrl.u32 %v4744, 7
    %v4746 = vsub.s32 0, %v4745
    %v4747 = vrot.slane %v4743, %v4746
    %v4748 = vmul.f32 %v4747, %v4735
    %v4749 = vmul.f32 %v4747, %v4736
    %v4750 = vmul.f32 %v4747, %v4737
    %v4751 = vmul.f32 %v4747, %v4739
    %v4752 = vmul.f32 %v4747, %v4740
    %v4753 = vmul.f32 %v4747, %v4741
    %v4754 = vadd.f32 %v4649, %v4748
    %v4755 = vadd.f32 %v4650, %v4749
    %v4756 = vadd.f32 %v4651, %v4750
    %v4757 = vadd.f32 %v4652, %v4751
    %v4758 = vadd.f32 %v4653, %v4752
    %v4759 = vadd.f32 %v4654, %v4753
    %v4760 = vld [vmem:[%s7 + $0x4] sm:$0x1]
    %v4761 = vlaneseq
    %v4762 = vshrl.u32 %v4761, 7
    %v4763 = vsub.s32 0, %v4762
    %v4764 = vrot.slane %v4760, %v4763
    %v4765 = vmul.f32 %v4764, %v4735
    %v4766 = vmul.f32 %v4764, %v4736
    %v4767 = vmul.f32 %v4764, %v4737
    %v4768 = vmul.f32 %v4764, %v4738
    %v4769 = vmul.f32 %v4764, %v4739
    %v4770 = vmul.f32 %v4764, %v4740
    %v4771 = vmul.f32 %v4764, %v4741
    %v4772 = vmul.f32 %v4764, %v4742
    %v4781 = vrot.slane %v4765, 1
    %v4782 = vrot.slane %v4766, 1
    %v4783 = vsel %vm170, %v4781, %v4782
    %v4784 = vrot.slane %v4767, 1
    %v4785 = vsel %vm170, %v4782, %v4784
    %v4786 = vrot.slane %v4768, 1
    %v4787 = vsel %vm170, %v4784, %v4786
    %v4788 = vrot.slane %v4769, 1
    %v4789 = vrot.slane %v4770, 1
    %v4790 = vsel %vm170, %v4788, %v4789
    %v4791 = vrot.slane %v4771, 1
    %v4792 = vsel %vm170, %v4789, %v4791
    %v4793 = vrot.slane %v4772, 1
    %v4794 = vsel %vm170, %v4791, %v4793
    %v4801 = vadd.f32 %v4754, %v4783
    %v4802 = vadd.f32 %v4755, %v4785
    %v4803 = vadd.f32 %v4756, %v4787
    %v4804 = vadd.f32 %v4757, %v4790
    %v4805 = vadd.f32 %v4758, %v4792
    %v4806 = vadd.f32 %v4759, %v4794
    %v4807 = vld [vmem:[%s7 + $0x7] sm:$0x1]
    %v4808 = vlaneseq
    %v4809 = vshrl.u32 %v4808, 7
    %v4810 = vsub.s32 0, %v4809
    %v4811 = vrot.slane %v4807, %v4810
    %v4812 = vmul.f32 %v4811, %v4735
    %v4813 = vmul.f32 %v4811, %v4736
    %v4814 = vmul.f32 %v4811, %v4737
    %v4815 = vmul.f32 %v4811, %v4738
    %v4816 = vmul.f32 %v4811, %v4739
    %v4817 = vmul.f32 %v4811, %v4740
    %v4818 = vmul.f32 %v4811, %v4741
    %v4819 = vmul.f32 %v4811, %v4742
    %v4828 = vrot.slane %v4812, 2
    %v4829 = vrot.slane %v4813, 2
    %v4830 = vsel %vm222, %v4828, %v4829
    %v4831 = vrot.slane %v4814, 2
    %v4832 = vsel %vm222, %v4829, %v4831
    %v4833 = vrot.slane %v4815, 2
    %v4834 = vsel %vm222, %v4831, %v4833
    %v4835 = vrot.slane %v4816, 2
    %v4836 = vrot.slane %v4817, 2
    %v4837 = vsel %vm222, %v4835, %v4836
    %v4838 = vrot.slane %v4818, 2
    %v4839 = vsel %vm222, %v4836, %v4838
    %v4840 = vrot.slane %v4819, 2
    %v4841 = vsel %vm222, %v4838, %v4840
    %v4848 = vadd.f32 %v4801, %v4830
    %v4849 = vadd.f32 %v4802, %v4832
    %v4850 = vadd.f32 %v4803, %v4834
    %v4851 = vadd.f32 %v4804, %v4837
    %v4852 = vadd.f32 %v4805, %v4839
    %v4853 = vadd.f32 %v4806, %v4841
    %4854 = vrot.lane.b32.xlu0 %v4455, 126
    %v4855 = vpop.permute.xlu0 %4854
    %4856 = vrot.lane.b32.xlu0 %v4456, 126
    %v4857 = vpop.permute.xlu0 %4856
    %4858 = vrot.lane.b32.xlu0 %v4457, 126
    %v4859 = vpop.permute.xlu0 %4858
    %4860 = vrot.lane.b32.xlu0 %v4458, 126
    %v4861 = vpop.permute.xlu0 %4860
    %4862 = vrot.lane.b32.xlu0 %v4459, 126
    %v4863 = vpop.permute.xlu0 %4862
    %4864 = vrot.lane.b32.xlu0 %v4460, 126
    %v4865 = vpop.permute.xlu0 %4864
    %4866 = vrot.lane.b32.xlu0 %v4461, 126
    %v4867 = vpop.permute.xlu0 %4866
    %4868 = vrot.lane.b32.xlu0 %v4462, 126
    %v4869 = vpop.permute.xlu0 %4868
    %4878 = vrot.lane.b32.xlu0 %v4455, 22
    %v4879 = vpop.permute.xlu0 %4878
    %4880 = vrot.lane.b32.xlu0 %v4456, 22
    %v4881 = vpop.permute.xlu0 %4880
    %4882 = vrot.lane.b32.xlu0 %v4457, 22
    %v4883 = vpop.permute.xlu0 %4882
    %4884 = vrot.lane.b32.xlu0 %v4458, 22
    %v4885 = vpop.permute.xlu0 %4884
    %4886 = vrot.lane.b32.xlu0 %v4459, 22
    %v4887 = vpop.permute.xlu0 %4886
    %4888 = vrot.lane.b32.xlu0 %v4460, 22
    %v4889 = vpop.permute.xlu0 %4888
    %4890 = vrot.lane.b32.xlu0 %v4461, 22
    %v4891 = vpop.permute.xlu0 %4890
    %4892 = vrot.lane.b32.xlu0 %v4462, 22
    %v4893 = vpop.permute.xlu0 %4892
    %4902 = vrot.lane.b32.xlu0 %v4455, 46
    %v4903 = vpop.permute.xlu0 %4902
    %4904 = vrot.lane.b32.xlu0 %v4456, 46
    %v4905 = vpop.permute.xlu0 %4904
    %4906 = vrot.lane.b32.xlu0 %v4457, 46
    %v4907 = vpop.permute.xlu0 %4906
    %4908 = vrot.lane.b32.xlu0 %v4458, 46
    %v4909 = vpop.permute.xlu0 %4908
    %4910 = vrot.lane.b32.xlu0 %v4459, 46
    %v4911 = vpop.permute.xlu0 %4910
    %4912 = vrot.lane.b32.xlu0 %v4460, 46
    %v4913 = vpop.permute.xlu0 %4912
    %4914 = vrot.lane.b32.xlu0 %v4461, 46
    %v4915 = vpop.permute.xlu0 %4914
    %4916 = vrot.lane.b32.xlu0 %v4462, 46
    %v4917 = vpop.permute.xlu0 %4916
    %v4926 = vsel %vm4526, %v4855, %v4879
    %v4927 = vsel %vm4526, %v4857, %v4881
    %v4928 = vsel %vm4526, %v4859, %v4883
    %v4929 = vsel %vm4526, %v4861, %v4885
    %v4930 = vsel %vm4526, %v4863, %v4887
    %v4931 = vsel %vm4526, %v4865, %v4889
    %v4932 = vsel %vm4526, %v4867, %v4891
    %v4933 = vsel %vm4526, %v4869, %v4893
    %v4934 = vsel %vm4535, %v4926, %v4903
    %v4935 = vsel %vm4535, %v4927, %v4905
    %v4936 = vsel %vm4535, %v4928, %v4907
    %v4937 = vsel %vm4535, %v4929, %v4909
    %v4938 = vsel %vm4535, %v4930, %v4911
    %v4939 = vsel %vm4535, %v4931, %v4913
    %v4940 = vsel %vm4535, %v4932, %v4915
    %v4941 = vsel %vm4535, %v4933, %v4917
    %v4942 = vld [vmem:[%s7 + $0x2] sm:$0x1]
    %v4943 = vlaneseq
    %v4944 = vshrl.u32 %v4943, 7
    %v4945 = vsub.s32 0, %v4944
    %v4946 = vrot.slane %v4942, %v4945
    %v4947 = vmul.f32 %v4946, %v4934
    %v4948 = vmul.f32 %v4946, %v4935
    %v4949 = vmul.f32 %v4946, %v4936
    %v4950 = vmul.f32 %v4946, %v4938
    %v4951 = vmul.f32 %v4946, %v4939
    %v4952 = vmul.f32 %v4946, %v4940
    %v4953 = vadd.f32 %v4848, %v4947
    %v4954 = vadd.f32 %v4849, %v4948
    %v4955 = vadd.f32 %v4850, %v4949
    %v4956 = vadd.f32 %v4851, %v4950
    %v4957 = vadd.f32 %v4852, %v4951
    %v4958 = vadd.f32 %v4853, %v4952
    %v4959 = vld [vmem:[%s7 + $0x5] sm:$0x1]
    %v4960 = vlaneseq
    %v4961 = vshrl.u32 %v4960, 7
    %v4962 = vsub.s32 0, %v4961
    %v4963 = vrot.slane %v4959, %v4962
    %v4964 = vmul.f32 %v4963, %v4934
    %v4965 = vmul.f32 %v4963, %v4935
    %v4966 = vmul.f32 %v4963, %v4936
    %v4967 = vmul.f32 %v4963, %v4937
    %v4968 = vmul.f32 %v4963, %v4938
    %v4969 = vmul.f32 %v4963, %v4939
    %v4970 = vmul.f32 %v4963, %v4940
    %v4971 = vmul.f32 %v4963, %v4941
    %v4980 = vrot.slane %v4964, 1
    %v4981 = vrot.slane %v4965, 1
    %v4982 = vsel %vm170, %v4980, %v4981
    %v4983 = vrot.slane %v4966, 1
    %v4984 = vsel %vm170, %v4981, %v4983
    %v4985 = vrot.slane %v4967, 1
    %v4986 = vsel %vm170, %v4983, %v4985
    %v4987 = vrot.slane %v4968, 1
    %v4988 = vrot.slane %v4969, 1
    %v4989 = vsel %vm170, %v4987, %v4988
    %v4990 = vrot.slane %v4970, 1
    %v4991 = vsel %vm170, %v4988, %v4990
    %v4992 = vrot.slane %v4971, 1
    %v4993 = vsel %vm170, %v4990, %v4992
    %v5000 = vadd.f32 %v4953, %v4982
    %v5001 = vadd.f32 %v4954, %v4984
    %v5002 = vadd.f32 %v4955, %v4986
    %v5003 = vadd.f32 %v4956, %v4989
    %v5004 = vadd.f32 %v4957, %v4991
    %v5005 = vadd.f32 %v4958, %v4993
    %v5006 = vld [vmem:[%s7 + $0x8] sm:$0x1]
    %v5007 = vlaneseq
    %v5008 = vshrl.u32 %v5007, 7
    %v5009 = vsub.s32 0, %v5008
    %v5010 = vrot.slane %v5006, %v5009
    %v5011 = vmul.f32 %v5010, %v4934
    %v5012 = vmul.f32 %v5010, %v4935
    %v5013 = vmul.f32 %v5010, %v4936
    %v5014 = vmul.f32 %v5010, %v4937
    %v5015 = vmul.f32 %v5010, %v4938
    %v5016 = vmul.f32 %v5010, %v4939
    %v5017 = vmul.f32 %v5010, %v4940
    %v5018 = vmul.f32 %v5010, %v4941
    %v5027 = vrot.slane %v5011, 2
    %v5028 = vrot.slane %v5012, 2
    %v5029 = vsel %vm222, %v5027, %v5028
    %v5030 = vrot.slane %v5013, 2
    %v5031 = vsel %vm222, %v5028, %v5030
    %v5032 = vrot.slane %v5014, 2
    %v5033 = vsel %vm222, %v5030, %v5032
    %v5034 = vrot.slane %v5015, 2
    %v5035 = vrot.slane %v5016, 2
    %v5036 = vsel %vm222, %v5034, %v5035
    %v5037 = vrot.slane %v5017, 2
    %v5038 = vsel %vm222, %v5035, %v5037
    %v5039 = vrot.slane %v5018, 2
    %v5040 = vsel %vm222, %v5037, %v5039
    %v5047 = vadd.f32 %v5000, %v5029
    %v5048 = vadd.f32 %v5001, %v5031
    %v5049 = vadd.f32 %v5002, %v5033
    %v5050 = vadd.f32 %v5003, %v5036
    %v5051 = vadd.f32 %v5004, %v5038
    %v5052 = vadd.f32 %v5005, %v5040
    %5053 = vrot.lane.b32.xlu0 %v4455, 102
    %v5054 = vpop.permute.xlu0 %5053
    %5055 = vrot.lane.b32.xlu0 %v4456, 102
    %v5056 = vpop.permute.xlu0 %5055
    %5057 = vrot.lane.b32.xlu0 %v4457, 102
    %v5058 = vpop.permute.xlu0 %5057
    %5059 = vrot.lane.b32.xlu0 %v4458, 102
    %v5060 = vpop.permute.xlu0 %5059
    %5061 = vrot.lane.b32.xlu0 %v4459, 102
    %v5062 = vpop.permute.xlu0 %5061
    %5063 = vrot.lane.b32.xlu0 %v4460, 102
    %v5064 = vpop.permute.xlu0 %5063
    %5065 = vrot.lane.b32.xlu0 %v4461, 102
    %v5066 = vpop.permute.xlu0 %5065
    %5067 = vrot.lane.b32.xlu0 %v4462, 102
    %v5068 = vpop.permute.xlu0 %5067
    %v5077 = vsel %vm4526, %v5054, %v4855
    %v5078 = vsel %vm4526, %v5056, %v4857
    %v5079 = vsel %vm4526, %v5058, %v4859
    %v5080 = vsel %vm4526, %v5060, %v4861
    %v5081 = vsel %vm4526, %v5062, %v4863
    %v5082 = vsel %vm4526, %v5064, %v4865
    %v5083 = vsel %vm4526, %v5066, %v4867
    %v5084 = vsel %vm4526, %v5068, %v4869
    %v5085 = vsel %vm4535, %v5077, %v4879
    %v5086 = vsel %vm4535, %v5078, %v4881
    %v5087 = vsel %vm4535, %v5079, %v4883
    %v5088 = vsel %vm4535, %v5080, %v4885
    %v5089 = vsel %vm4535, %v5081, %v4887
    %v5090 = vsel %vm4535, %v5082, %v4889
    %v5091 = vsel %vm4535, %v5083, %v4891
    %v5092 = vsel %vm4535, %v5084, %v4893
    %v5093 = vld [vmem:[%s7 + $0x9] sm:$0x1]
    %v5094 = vlaneseq
    %v5095 = vshrl.u32 %v5094, 7
    %v5096 = vsub.s32 0, %v5095
    %v5097 = vrot.slane %v5093, %v5096
    %v5098 = vmul.f32 %v5097, %v5085
    %v5099 = vmul.f32 %v5097, %v5086
    %v5100 = vmul.f32 %v5097, %v5087
    %v5101 = vmul.f32 %v5097, %v5089
    %v5102 = vmul.f32 %v5097, %v5090
    %v5103 = vmul.f32 %v5097, %v5091
    %v5104 = vadd.f32 %v5047, %v5098
    %v5105 = vadd.f32 %v5048, %v5099
    %v5106 = vadd.f32 %v5049, %v5100
    %v5107 = vadd.f32 %v5050, %v5101
    %v5108 = vadd.f32 %v5051, %v5102
    %v5109 = vadd.f32 %v5052, %v5103
    %v5110 = vld [vmem:[%s7 + $0xc] sm:$0x1]
    %v5111 = vlaneseq
    %v5112 = vshrl.u32 %v5111, 7
    %v5113 = vsub.s32 0, %v5112
    %v5114 = vrot.slane %v5110, %v5113
    %v5115 = vmul.f32 %v5114, %v5085
    %v5116 = vmul.f32 %v5114, %v5086
    %v5117 = vmul.f32 %v5114, %v5087
    %v5118 = vmul.f32 %v5114, %v5088
    %v5119 = vmul.f32 %v5114, %v5089
    %v5120 = vmul.f32 %v5114, %v5090
    %v5121 = vmul.f32 %v5114, %v5091
    %v5122 = vmul.f32 %v5114, %v5092
    %v5131 = vrot.slane %v5115, 1
    %v5132 = vrot.slane %v5116, 1
    %v5133 = vsel %vm170, %v5131, %v5132
    %v5134 = vrot.slane %v5117, 1
    %v5135 = vsel %vm170, %v5132, %v5134
    %v5136 = vrot.slane %v5118, 1
    %v5137 = vsel %vm170, %v5134, %v5136
    %v5138 = vrot.slane %v5119, 1
    %v5139 = vrot.slane %v5120, 1
    %v5140 = vsel %vm170, %v5138, %v5139
    %v5141 = vrot.slane %v5121, 1
    %v5142 = vsel %vm170, %v5139, %v5141
    %v5143 = vrot.slane %v5122, 1
    %v5144 = vsel %vm170, %v5141, %v5143
    %v5151 = vadd.f32 %v5104, %v5133
    %v5152 = vadd.f32 %v5105, %v5135
    %v5153 = vadd.f32 %v5106, %v5137
    %v5154 = vadd.f32 %v5107, %v5140
    %v5155 = vadd.f32 %v5108, %v5142
    %v5156 = vadd.f32 %v5109, %v5144
    %v5157 = vld [vmem:[%s7 + $0xf] sm:$0x1]
    %v5158 = vlaneseq
    %v5159 = vshrl.u32 %v5158, 7
    %v5160 = vsub.s32 0, %v5159
    %v5161 = vrot.slane %v5157, %v5160
    %v5162 = vmul.f32 %v5161, %v5085
    %v5163 = vmul.f32 %v5161, %v5086
    %v5164 = vmul.f32 %v5161, %v5087
    %v5165 = vmul.f32 %v5161, %v5088
    %v5166 = vmul.f32 %v5161, %v5089
    %v5167 = vmul.f32 %v5161, %v5090
    %v5168 = vmul.f32 %v5161, %v5091
    %v5169 = vmul.f32 %v5161, %v5092
    %v5178 = vrot.slane %v5162, 2
    %v5179 = vrot.slane %v5163, 2
    %v5180 = vsel %vm222, %v5178, %v5179
    %v5181 = vrot.slane %v5164, 2
    %v5182 = vsel %vm222, %v5179, %v5181
    %v5183 = vrot.slane %v5165, 2
    %v5184 = vsel %vm222, %v5181, %v5183
    %v5185 = vrot.slane %v5166, 2
    %v5186 = vrot.slane %v5167, 2
    %v5187 = vsel %vm222, %v5185, %v5186
    %v5188 = vrot.slane %v5168, 2
    %v5189 = vsel %vm222, %v5186, %v5188
    %v5190 = vrot.slane %v5169, 2
    %v5191 = vsel %vm222, %v5188, %v5190
    %v5198 = vadd.f32 %v5151, %v5180
    %v5199 = vadd.f32 %v5152, %v5182
    %v5200 = vadd.f32 %v5153, %v5184
    %v5201 = vadd.f32 %v5154, %v5187
    %v5202 = vadd.f32 %v5155, %v5189
    %v5203 = vadd.f32 %v5156, %v5191
    %5204 = vrot.lane.b32.xlu0 %v4455, 101
    %v5205 = vpop.permute.xlu0 %5204
    %5206 = vrot.lane.b32.xlu0 %v4456, 101
    %v5207 = vpop.permute.xlu0 %5206
    %5208 = vrot.lane.b32.xlu0 %v4457, 101
    %v5209 = vpop.permute.xlu0 %5208
    %5210 = vrot.lane.b32.xlu0 %v4458, 101
    %v5211 = vpop.permute.xlu0 %5210
    %5212 = vrot.lane.b32.xlu0 %v4459, 101
    %v5213 = vpop.permute.xlu0 %5212
    %5214 = vrot.lane.b32.xlu0 %v4460, 101
    %v5215 = vpop.permute.xlu0 %5214
    %5216 = vrot.lane.b32.xlu0 %v4461, 101
    %v5217 = vpop.permute.xlu0 %5216
    %5218 = vrot.lane.b32.xlu0 %v4462, 101
    %v5219 = vpop.permute.xlu0 %5218
    %5228 = vrot.lane.b32.xlu0 %v4455, 125
    %v5229 = vpop.permute.xlu0 %5228
    %5230 = vrot.lane.b32.xlu0 %v4456, 125
    %v5231 = vpop.permute.xlu0 %5230
    %5232 = vrot.lane.b32.xlu0 %v4457, 125
    %v5233 = vpop.permute.xlu0 %5232
    %5234 = vrot.lane.b32.xlu0 %v4458, 125
    %v5235 = vpop.permute.xlu0 %5234
    %5236 = vrot.lane.b32.xlu0 %v4459, 125
    %v5237 = vpop.permute.xlu0 %5236
    %5238 = vrot.lane.b32.xlu0 %v4460, 125
    %v5239 = vpop.permute.xlu0 %5238
    %5240 = vrot.lane.b32.xlu0 %v4461, 125
    %v5241 = vpop.permute.xlu0 %5240
    %5242 = vrot.lane.b32.xlu0 %v4462, 125
    %v5243 = vpop.permute.xlu0 %5242
    %5252 = vrot.lane.b32.xlu0 %v4455, 21
    %v5253 = vpop.permute.xlu0 %5252
    %5254 = vrot.lane.b32.xlu0 %v4456, 21
    %v5255 = vpop.permute.xlu0 %5254
    %5256 = vrot.lane.b32.xlu0 %v4457, 21
    %v5257 = vpop.permute.xlu0 %5256
    %5258 = vrot.lane.b32.xlu0 %v4458, 21
    %v5259 = vpop.permute.xlu0 %5258
    %5260 = vrot.lane.b32.xlu0 %v4459, 21
    %v5261 = vpop.permute.xlu0 %5260
    %5262 = vrot.lane.b32.xlu0 %v4460, 21
    %v5263 = vpop.permute.xlu0 %5262
    %5264 = vrot.lane.b32.xlu0 %v4461, 21
    %v5265 = vpop.permute.xlu0 %5264
    %5266 = vrot.lane.b32.xlu0 %v4462, 21
    %v5267 = vpop.permute.xlu0 %5266
    %v5276 = vsel %vm4526, %v5205, %v5229
    %v5277 = vsel %vm4526, %v5207, %v5231
    %v5278 = vsel %vm4526, %v5209, %v5233
    %v5279 = vsel %vm4526, %v5211, %v5235
    %v5280 = vsel %vm4526, %v5213, %v5237
    %v5281 = vsel %vm4526, %v5215, %v5239
    %v5282 = vsel %vm4526, %v5217, %v5241
    %v5283 = vsel %vm4526, %v5219, %v5243
    %v5284 = vsel %vm4535, %v5276, %v5253
    %v5285 = vsel %vm4535, %v5277, %v5255
    %v5286 = vsel %vm4535, %v5278, %v5257
    %v5287 = vsel %vm4535, %v5279, %v5259
    %v5288 = vsel %vm4535, %v5280, %v5261
    %v5289 = vsel %vm4535, %v5281, %v5263
    %v5290 = vsel %vm4535, %v5282, %v5265
    %v5291 = vsel %vm4535, %v5283, %v5267
    %v5292 = vld [vmem:[%s7 + $0xa] sm:$0x1]
    %v5293 = vlaneseq
    %v5294 = vshrl.u32 %v5293, 7
    %v5295 = vsub.s32 0, %v5294
    %v5296 = vrot.slane %v5292, %v5295
    %v5297 = vmul.f32 %v5296, %v5284
    %v5298 = vmul.f32 %v5296, %v5285
    %v5299 = vmul.f32 %v5296, %v5286
    %v5300 = vmul.f32 %v5296, %v5288
    %v5301 = vmul.f32 %v5296, %v5289
    %v5302 = vmul.f32 %v5296, %v5290
    %v5303 = vadd.f32 %v5198, %v5297
    %v5304 = vadd.f32 %v5199, %v5298
    %v5305 = vadd.f32 %v5200, %v5299
    %v5306 = vadd.f32 %v5201, %v5300
    %v5307 = vadd.f32 %v5202, %v5301
    %v5308 = vadd.f32 %v5203, %v5302
    %v5309 = vld [vmem:[%s7 + $0xd] sm:$0x1]
    %v5310 = vlaneseq
    %v5311 = vshrl.u32 %v5310, 7
    %v5312 = vsub.s32 0, %v5311
    %v5313 = vrot.slane %v5309, %v5312
    %v5314 = vmul.f32 %v5313, %v5284
    %v5315 = vmul.f32 %v5313, %v5285
    %v5316 = vmul.f32 %v5313, %v5286
    %v5317 = vmul.f32 %v5313, %v5287
    %v5318 = vmul.f32 %v5313, %v5288
    %v5319 = vmul.f32 %v5313, %v5289
    %v5320 = vmul.f32 %v5313, %v5290
    %v5321 = vmul.f32 %v5313, %v5291
    %v5330 = vrot.slane %v5314, 1
    %v5331 = vrot.slane %v5315, 1
    %v5332 = vsel %vm170, %v5330, %v5331
    %v5333 = vrot.slane %v5316, 1
    %v5334 = vsel %vm170, %v5331, %v5333
    %v5335 = vrot.slane %v5317, 1
    %v5336 = vsel %vm170, %v5333, %v5335
    %v5337 = vrot.slane %v5318, 1
    %v5338 = vrot.slane %v5319, 1
    %v5339 = vsel %vm170, %v5337, %v5338
    %v5340 = vrot.slane %v5320, 1
    %v5341 = vsel %vm170, %v5338, %v5340
    %v5342 = vrot.slane %v5321, 1
    %v5343 = vsel %vm170, %v5340, %v5342
    %v5350 = vadd.f32 %v5303, %v5332
    %v5351 = vadd.f32 %v5304, %v5334
    %v5352 = vadd.f32 %v5305, %v5336
    %v5353 = vadd.f32 %v5306, %v5339
    %v5354 = vadd.f32 %v5307, %v5341
    %v5355 = vadd.f32 %v5308, %v5343
    %v5356 = vld [vmem:[%s7 + $0x10] sm:$0x1]
    %v5357 = vlaneseq
    %v5358 = vshrl.u32 %v5357, 7
    %v5359 = vsub.s32 0, %v5358
    %v5360 = vrot.slane %v5356, %v5359
    %v5361 = vmul.f32 %v5360, %v5284
    %v5362 = vmul.f32 %v5360, %v5285
    %v5363 = vmul.f32 %v5360, %v5286
    %v5364 = vmul.f32 %v5360, %v5287
    %v5365 = vmul.f32 %v5360, %v5288
    %v5366 = vmul.f32 %v5360, %v5289
    %v5367 = vmul.f32 %v5360, %v5290
    %v5368 = vmul.f32 %v5360, %v5291
    %v5377 = vrot.slane %v5361, 2
    %v5378 = vrot.slane %v5362, 2
    %v5379 = vsel %vm222, %v5377, %v5378
    %v5380 = vrot.slane %v5363, 2
    %v5381 = vsel %vm222, %v5378, %v5380
    %v5382 = vrot.slane %v5364, 2
    %v5383 = vsel %vm222, %v5380, %v5382
    %v5384 = vrot.slane %v5365, 2
    %v5385 = vrot.slane %v5366, 2
    %v5386 = vsel %vm222, %v5384, %v5385
    %v5387 = vrot.slane %v5367, 2
    %v5388 = vsel %vm222, %v5385, %v5387
    %v5389 = vrot.slane %v5368, 2
    %v5390 = vsel %vm222, %v5387, %v5389
    %v5397 = vadd.f32 %v5350, %v5379
    %v5398 = vadd.f32 %v5351, %v5381
    %v5399 = vadd.f32 %v5352, %v5383
    %v5400 = vadd.f32 %v5353, %v5386
    %v5401 = vadd.f32 %v5354, %v5388
    %v5402 = vadd.f32 %v5355, %v5390
    %5403 = vrot.lane.b32.xlu0 %v4455, 100
    %v5404 = vpop.permute.xlu0 %5403
    %5405 = vrot.lane.b32.xlu0 %v4456, 100
    %v5406 = vpop.permute.xlu0 %5405
    %5407 = vrot.lane.b32.xlu0 %v4457, 100
    %v5408 = vpop.permute.xlu0 %5407
    %5409 = vrot.lane.b32.xlu0 %v4458, 100
    %v5410 = vpop.permute.xlu0 %5409
    %5411 = vrot.lane.b32.xlu0 %v4459, 100
    %v5412 = vpop.permute.xlu0 %5411
    %5413 = vrot.lane.b32.xlu0 %v4460, 100
    %v5414 = vpop.permute.xlu0 %5413
    %5415 = vrot.lane.b32.xlu0 %v4461, 100
    %v5416 = vpop.permute.xlu0 %5415
    %5417 = vrot.lane.b32.xlu0 %v4462, 100
    %v5418 = vpop.permute.xlu0 %5417
    %5427 = vrot.lane.b32.xlu0 %v4455, 124
    %v5428 = vpop.permute.xlu0 %5427
    %5429 = vrot.lane.b32.xlu0 %v4456, 124
    %v5430 = vpop.permute.xlu0 %5429
    %5431 = vrot.lane.b32.xlu0 %v4457, 124
    %v5432 = vpop.permute.xlu0 %5431
    %5433 = vrot.lane.b32.xlu0 %v4458, 124
    %v5434 = vpop.permute.xlu0 %5433
    %5435 = vrot.lane.b32.xlu0 %v4459, 124
    %v5436 = vpop.permute.xlu0 %5435
    %5437 = vrot.lane.b32.xlu0 %v4460, 124
    %v5438 = vpop.permute.xlu0 %5437
    %5439 = vrot.lane.b32.xlu0 %v4461, 124
    %v5440 = vpop.permute.xlu0 %5439
    %5441 = vrot.lane.b32.xlu0 %v4462, 124
    %v5442 = vpop.permute.xlu0 %5441
    %5451 = vrot.lane.b32.xlu0 %v4455, 20
    %v5452 = vpop.permute.xlu0 %5451
    %5453 = vrot.lane.b32.xlu0 %v4456, 20
    %v5454 = vpop.permute.xlu0 %5453
    %5455 = vrot.lane.b32.xlu0 %v4457, 20
    %v5456 = vpop.permute.xlu0 %5455
    %5457 = vrot.lane.b32.xlu0 %v4458, 20
    %v5458 = vpop.permute.xlu0 %5457
    %5459 = vrot.lane.b32.xlu0 %v4459, 20
    %v5460 = vpop.permute.xlu0 %5459
    %5461 = vrot.lane.b32.xlu0 %v4460, 20
    %v5462 = vpop.permute.xlu0 %5461
    %5463 = vrot.lane.b32.xlu0 %v4461, 20
    %v5464 = vpop.permute.xlu0 %5463
    %5465 = vrot.lane.b32.xlu0 %v4462, 20
    %v5466 = vpop.permute.xlu0 %5465
    %v5475 = vsel %vm4526, %v5404, %v5428
    %v5476 = vsel %vm4526, %v5406, %v5430
    %v5477 = vsel %vm4526, %v5408, %v5432
    %v5478 = vsel %vm4526, %v5410, %v5434
    %v5479 = vsel %vm4526, %v5412, %v5436
    %v5480 = vsel %vm4526, %v5414, %v5438
    %v5481 = vsel %vm4526, %v5416, %v5440
    %v5482 = vsel %vm4526, %v5418, %v5442
    %v5483 = vsel %vm4535, %v5475, %v5452
    %v5484 = vsel %vm4535, %v5476, %v5454
    %v5485 = vsel %vm4535, %v5477, %v5456
    %v5486 = vsel %vm4535, %v5478, %v5458
    %v5487 = vsel %vm4535, %v5479, %v5460
    %v5488 = vsel %vm4535, %v5480, %v5462
    %v5489 = vsel %vm4535, %v5481, %v5464
    %v5490 = vsel %vm4535, %v5482, %v5466
    %v5491 = vld [vmem:[%s7 + $0xb] sm:$0x1]
    %v5492 = vlaneseq
    %v5493 = vshrl.u32 %v5492, 7
    %v5494 = vsub.s32 0, %v5493
    %v5495 = vrot.slane %v5491, %v5494
    %v5496 = vmul.f32 %v5495, %v5483
    %v5497 = vmul.f32 %v5495, %v5484
    %v5498 = vmul.f32 %v5495, %v5485
    %v5499 = vmul.f32 %v5495, %v5487
    %v5500 = vmul.f32 %v5495, %v5488
    %v5501 = vmul.f32 %v5495, %v5489
    %v5502 = vadd.f32 %v5397, %v5496
    %v5503 = vadd.f32 %v5398, %v5497
    %v5504 = vadd.f32 %v5399, %v5498
    %v5505 = vadd.f32 %v5400, %v5499
    %v5506 = vadd.f32 %v5401, %v5500
    %v5507 = vadd.f32 %v5402, %v5501
    %v5508 = vld [vmem:[%s7 + $0xe] sm:$0x1]
    %v5509 = vlaneseq
    %v5510 = vshrl.u32 %v5509, 7
    %v5511 = vsub.s32 0, %v5510
    %v5512 = vrot.slane %v5508, %v5511
    %v5513 = vmul.f32 %v5512, %v5483
    %v5514 = vmul.f32 %v5512, %v5484
    %v5515 = vmul.f32 %v5512, %v5485
    %v5516 = vmul.f32 %v5512, %v5486
    %v5517 = vmul.f32 %v5512, %v5487
    %v5518 = vmul.f32 %v5512, %v5488
    %v5519 = vmul.f32 %v5512, %v5489
    %v5520 = vmul.f32 %v5512, %v5490
    %v5529 = vrot.slane %v5513, 1
    %v5530 = vrot.slane %v5514, 1
    %v5531 = vsel %vm170, %v5529, %v5530
    %v5532 = vrot.slane %v5515, 1
    %v5533 = vsel %vm170, %v5530, %v5532
    %v5534 = vrot.slane %v5516, 1
    %v5535 = vsel %vm170, %v5532, %v5534
    %v5536 = vrot.slane %v5517, 1
    %v5537 = vrot.slane %v5518, 1
    %v5538 = vsel %vm170, %v5536, %v5537
    %v5539 = vrot.slane %v5519, 1
    %v5540 = vsel %vm170, %v5537, %v5539
    %v5541 = vrot.slane %v5520, 1
    %v5542 = vsel %vm170, %v5539, %v5541
    %v5549 = vadd.f32 %v5502, %v5531
    %v5550 = vadd.f32 %v5503, %v5533
    %v5551 = vadd.f32 %v5504, %v5535
    %v5552 = vadd.f32 %v5505, %v5538
    %v5553 = vadd.f32 %v5506, %v5540
    %v5554 = vadd.f32 %v5507, %v5542
    %v5555 = vld [vmem:[%s7 + $0x11] sm:$0x1]
    %v5556 = vlaneseq
    %v5557 = vshrl.u32 %v5556, 7
    %v5558 = vsub.s32 0, %v5557
    %v5559 = vrot.slane %v5555, %v5558
    %v5560 = vmul.f32 %v5559, %v5483
    %v5561 = vmul.f32 %v5559, %v5484
    %v5562 = vmul.f32 %v5559, %v5485
    %v5563 = vmul.f32 %v5559, %v5486
    %v5564 = vmul.f32 %v5559, %v5487
    %v5565 = vmul.f32 %v5559, %v5488
    %v5566 = vmul.f32 %v5559, %v5489
    %v5567 = vmul.f32 %v5559, %v5490
    %v5576 = vrot.slane %v5560, 2
    %v5577 = vrot.slane %v5561, 2
    %v5578 = vsel %vm222, %v5576, %v5577
    %v5579 = vrot.slane %v5562, 2
    %v5580 = vsel %vm222, %v5577, %v5579
    %v5581 = vrot.slane %v5563, 2
    %v5582 = vsel %vm222, %v5579, %v5581
    %v5583 = vrot.slane %v5564, 2
    %v5584 = vrot.slane %v5565, 2
    %v5585 = vsel %vm222, %v5583, %v5584
    %v5586 = vrot.slane %v5566, 2
    %v5587 = vsel %vm222, %v5584, %v5586
    %v5588 = vrot.slane %v5567, 2
    %v5589 = vsel %vm222, %v5586, %v5588
    %v5596 = vadd.f32 %v5549, %v5578
    %v5597 = vadd.f32 %v5550, %v5580
    %v5598 = vadd.f32 %v5551, %v5582
    %v5599 = vadd.f32 %v5552, %v5585
    %v5600 = vadd.f32 %v5553, %v5587
    %v5601 = vadd.f32 %v5554, %v5589
    %5602 = vrot.lane.b32.xlu0 %v4455, 76
    %v5603 = vpop.permute.xlu0 %5602
    %5604 = vrot.lane.b32.xlu0 %v4456, 76
    %v5605 = vpop.permute.xlu0 %5604
    %5606 = vrot.lane.b32.xlu0 %v4457, 76
    %v5607 = vpop.permute.xlu0 %5606
    %5608 = vrot.lane.b32.xlu0 %v4458, 76
    %v5609 = vpop.permute.xlu0 %5608
    %5610 = vrot.lane.b32.xlu0 %v4459, 76
    %v5611 = vpop.permute.xlu0 %5610
    %5612 = vrot.lane.b32.xlu0 %v4460, 76
    %v5613 = vpop.permute.xlu0 %5612
    %5614 = vrot.lane.b32.xlu0 %v4461, 76
    %v5615 = vpop.permute.xlu0 %5614
    %5616 = vrot.lane.b32.xlu0 %v4462, 76
    %v5617 = vpop.permute.xlu0 %5616
    %v5626 = vsel %vm4526, %v5603, %v5404
    %v5627 = vsel %vm4526, %v5605, %v5406
    %v5628 = vsel %vm4526, %v5607, %v5408
    %v5629 = vsel %vm4526, %v5609, %v5410
    %v5630 = vsel %vm4526, %v5611, %v5412
    %v5631 = vsel %vm4526, %v5613, %v5414
    %v5632 = vsel %vm4526, %v5615, %v5416
    %v5633 = vsel %vm4526, %v5617, %v5418
    %v5634 = vsel %vm4535, %v5626, %v5428
    %v5635 = vsel %vm4535, %v5627, %v5430
    %v5636 = vsel %vm4535, %v5628, %v5432
    %v5637 = vsel %vm4535, %v5629, %v5434
    %v5638 = vsel %vm4535, %v5630, %v5436
    %v5639 = vsel %vm4535, %v5631, %v5438
    %v5640 = vsel %vm4535, %v5632, %v5440
    %v5641 = vsel %vm4535, %v5633, %v5442
    %v5642 = vld [vmem:[%s7 + $0x12] sm:$0x1]
    %v5643 = vlaneseq
    %v5644 = vshrl.u32 %v5643, 7
    %v5645 = vsub.s32 0, %v5644
    %v5646 = vrot.slane %v5642, %v5645
    %v5647 = vmul.f32 %v5646, %v5634
    %v5648 = vmul.f32 %v5646, %v5635
    %v5649 = vmul.f32 %v5646, %v5636
    %v5650 = vmul.f32 %v5646, %v5638
    %v5651 = vmul.f32 %v5646, %v5639
    %v5652 = vmul.f32 %v5646, %v5640
    %v5653 = vadd.f32 %v5596, %v5647
    %v5654 = vadd.f32 %v5597, %v5648
    %v5655 = vadd.f32 %v5598, %v5649
    %v5656 = vadd.f32 %v5599, %v5650
    %v5657 = vadd.f32 %v5600, %v5651
    %v5658 = vadd.f32 %v5601, %v5652
    %v5659 = vld [vmem:[%s7 + $0x15] sm:$0x1]
    %v5660 = vlaneseq
    %v5661 = vshrl.u32 %v5660, 7
    %v5662 = vsub.s32 0, %v5661
    %v5663 = vrot.slane %v5659, %v5662
    %v5664 = vmul.f32 %v5663, %v5634
    %v5665 = vmul.f32 %v5663, %v5635
    %v5666 = vmul.f32 %v5663, %v5636
    %v5667 = vmul.f32 %v5663, %v5637
    %v5668 = vmul.f32 %v5663, %v5638
    %v5669 = vmul.f32 %v5663, %v5639
    %v5670 = vmul.f32 %v5663, %v5640
    %v5671 = vmul.f32 %v5663, %v5641
    %v5680 = vrot.slane %v5664, 1
    %v5681 = vrot.slane %v5665, 1
    %v5682 = vsel %vm170, %v5680, %v5681
    %v5683 = vrot.slane %v5666, 1
    %v5684 = vsel %vm170, %v5681, %v5683
    %v5685 = vrot.slane %v5667, 1
    %v5686 = vsel %vm170, %v5683, %v5685
    %v5687 = vrot.slane %v5668, 1
    %v5688 = vrot.slane %v5669, 1
    %v5689 = vsel %vm170, %v5687, %v5688
    %v5690 = vrot.slane %v5670, 1
    %v5691 = vsel %vm170, %v5688, %v5690
    %v5692 = vrot.slane %v5671, 1
    %v5693 = vsel %vm170, %v5690, %v5692
    %v5700 = vadd.f32 %v5653, %v5682
    %v5701 = vadd.f32 %v5654, %v5684
    %v5702 = vadd.f32 %v5655, %v5686
    %v5703 = vadd.f32 %v5656, %v5689
    %v5704 = vadd.f32 %v5657, %v5691
    %v5705 = vadd.f32 %v5658, %v5693
    %v5706 = vld [vmem:[%s7 + $0x18] sm:$0x1]
    %v5707 = vlaneseq
    %v5708 = vshrl.u32 %v5707, 7
    %v5709 = vsub.s32 0, %v5708
    %v5710 = vrot.slane %v5706, %v5709
    %v5711 = vmul.f32 %v5710, %v5634
    %v5712 = vmul.f32 %v5710, %v5635
    %v5713 = vmul.f32 %v5710, %v5636
    %v5714 = vmul.f32 %v5710, %v5637
    %v5715 = vmul.f32 %v5710, %v5638
    %v5716 = vmul.f32 %v5710, %v5639
    %v5717 = vmul.f32 %v5710, %v5640
    %v5718 = vmul.f32 %v5710, %v5641
    %v5727 = vrot.slane %v5711, 2
    %v5728 = vrot.slane %v5712, 2
    %v5729 = vsel %vm222, %v5727, %v5728
    %v5730 = vrot.slane %v5713, 2
    %v5731 = vsel %vm222, %v5728, %v5730
    %v5732 = vrot.slane %v5714, 2
    %v5733 = vsel %vm222, %v5730, %v5732
    %v5734 = vrot.slane %v5715, 2
    %v5735 = vrot.slane %v5716, 2
    %v5736 = vsel %vm222, %v5734, %v5735
    %v5737 = vrot.slane %v5717, 2
    %v5738 = vsel %vm222, %v5735, %v5737
    %v5739 = vrot.slane %v5718, 2
    %v5740 = vsel %vm222, %v5737, %v5739
    %v5747 = vadd.f32 %v5700, %v5729
    %v5748 = vadd.f32 %v5701, %v5731
    %v5749 = vadd.f32 %v5702, %v5733
    %v5750 = vadd.f32 %v5703, %v5736
    %v5751 = vadd.f32 %v5704, %v5738
    %v5752 = vadd.f32 %v5705, %v5740
    %5753 = vrot.lane.b32.xlu0 %v4455, 75
    %v5754 = vpop.permute.xlu0 %5753
    %5755 = vrot.lane.b32.xlu0 %v4456, 75
    %v5756 = vpop.permute.xlu0 %5755
    %5757 = vrot.lane.b32.xlu0 %v4457, 75
    %v5758 = vpop.permute.xlu0 %5757
    %5759 = vrot.lane.b32.xlu0 %v4458, 75
    %v5760 = vpop.permute.xlu0 %5759
    %5761 = vrot.lane.b32.xlu0 %v4459, 75
    %v5762 = vpop.permute.xlu0 %5761
    %5763 = vrot.lane.b32.xlu0 %v4460, 75
    %v5764 = vpop.permute.xlu0 %5763
    %5765 = vrot.lane.b32.xlu0 %v4461, 75
    %v5766 = vpop.permute.xlu0 %5765
    %5767 = vrot.lane.b32.xlu0 %v4462, 75
    %v5768 = vpop.permute.xlu0 %5767
    %5777 = vrot.lane.b32.xlu0 %v4455, 99
    %v5778 = vpop.permute.xlu0 %5777
    %5779 = vrot.lane.b32.xlu0 %v4456, 99
    %v5780 = vpop.permute.xlu0 %5779
    %5781 = vrot.lane.b32.xlu0 %v4457, 99
    %v5782 = vpop.permute.xlu0 %5781
    %5783 = vrot.lane.b32.xlu0 %v4458, 99
    %v5784 = vpop.permute.xlu0 %5783
    %5785 = vrot.lane.b32.xlu0 %v4459, 99
    %v5786 = vpop.permute.xlu0 %5785
    %5787 = vrot.lane.b32.xlu0 %v4460, 99
    %v5788 = vpop.permute.xlu0 %5787
    %5789 = vrot.lane.b32.xlu0 %v4461, 99
    %v5790 = vpop.permute.xlu0 %5789
    %5791 = vrot.lane.b32.xlu0 %v4462, 99
    %v5792 = vpop.permute.xlu0 %5791
    %5801 = vrot.lane.b32.xlu0 %v4455, 123
    %v5802 = vpop.permute.xlu0 %5801
    %5803 = vrot.lane.b32.xlu0 %v4456, 123
    %v5804 = vpop.permute.xlu0 %5803
    %5805 = vrot.lane.b32.xlu0 %v4457, 123
    %v5806 = vpop.permute.xlu0 %5805
    %5807 = vrot.lane.b32.xlu0 %v4458, 123
    %v5808 = vpop.permute.xlu0 %5807
    %5809 = vrot.lane.b32.xlu0 %v4459, 123
    %v5810 = vpop.permute.xlu0 %5809
    %5811 = vrot.lane.b32.xlu0 %v4460, 123
    %v5812 = vpop.permute.xlu0 %5811
    %5813 = vrot.lane.b32.xlu0 %v4461, 123
    %v5814 = vpop.permute.xlu0 %5813
    %5815 = vrot.lane.b32.xlu0 %v4462, 123
    %v5816 = vpop.permute.xlu0 %5815
    %v5825 = vsel %vm4526, %v5754, %v5778
    %v5826 = vsel %vm4526, %v5756, %v5780
    %v5827 = vsel %vm4526, %v5758, %v5782
    %v5828 = vsel %vm4526, %v5760, %v5784
    %v5829 = vsel %vm4526, %v5762, %v5786
    %v5830 = vsel %vm4526, %v5764, %v5788
    %v5831 = vsel %vm4526, %v5766, %v5790
    %v5832 = vsel %vm4526, %v5768, %v5792
    %v5833 = vsel %vm4535, %v5825, %v5802
    %v5834 = vsel %vm4535, %v5826, %v5804
    %v5835 = vsel %vm4535, %v5827, %v5806
    %v5836 = vsel %vm4535, %v5828, %v5808
    %v5837 = vsel %vm4535, %v5829, %v5810
    %v5838 = vsel %vm4535, %v5830, %v5812
    %v5839 = vsel %vm4535, %v5831, %v5814
    %v5840 = vsel %vm4535, %v5832, %v5816
    %v5841 = vld [vmem:[%s7 + $0x13] sm:$0x1]
    %v5842 = vlaneseq
    %v5843 = vshrl.u32 %v5842, 7
    %v5844 = vsub.s32 0, %v5843
    %v5845 = vrot.slane %v5841, %v5844
    %v5846 = vmul.f32 %v5845, %v5833
    %v5847 = vmul.f32 %v5845, %v5834
    %v5848 = vmul.f32 %v5845, %v5835
    %v5849 = vmul.f32 %v5845, %v5837
    %v5850 = vmul.f32 %v5845, %v5838
    %v5851 = vmul.f32 %v5845, %v5839
    %v5852 = vadd.f32 %v5747, %v5846
    %v5853 = vadd.f32 %v5748, %v5847
    %v5854 = vadd.f32 %v5749, %v5848
    %v5855 = vadd.f32 %v5750, %v5849
    %v5856 = vadd.f32 %v5751, %v5850
    %v5857 = vadd.f32 %v5752, %v5851
    %v5858 = vld [vmem:[%s7 + $0x16] sm:$0x1]
    %v5859 = vlaneseq
    %v5860 = vshrl.u32 %v5859, 7
    %v5861 = vsub.s32 0, %v5860
    %v5862 = vrot.slane %v5858, %v5861
    %v5863 = vmul.f32 %v5862, %v5833
    %v5864 = vmul.f32 %v5862, %v5834
    %v5865 = vmul.f32 %v5862, %v5835
    %v5866 = vmul.f32 %v5862, %v5836
    %v5867 = vmul.f32 %v5862, %v5837
    %v5868 = vmul.f32 %v5862, %v5838
    %v5869 = vmul.f32 %v5862, %v5839
    %v5870 = vmul.f32 %v5862, %v5840
    %v5879 = vrot.slane %v5863, 1
    %v5880 = vrot.slane %v5864, 1
    %v5881 = vsel %vm170, %v5879, %v5880
    %v5882 = vrot.slane %v5865, 1
    %v5883 = vsel %vm170, %v5880, %v5882
    %v5884 = vrot.slane %v5866, 1
    %v5885 = vsel %vm170, %v5882, %v5884
    %v5886 = vrot.slane %v5867, 1
    %v5887 = vrot.slane %v5868, 1
    %v5888 = vsel %vm170, %v5886, %v5887
    %v5889 = vrot.slane %v5869, 1
    %v5890 = vsel %vm170, %v5887, %v5889
    %v5891 = vrot.slane %v5870, 1
    %v5892 = vsel %vm170, %v5889, %v5891
    %v5899 = vadd.f32 %v5852, %v5881
    %v5900 = vadd.f32 %v5853, %v5883
    %v5901 = vadd.f32 %v5854, %v5885
    %v5902 = vadd.f32 %v5855, %v5888
    %v5903 = vadd.f32 %v5856, %v5890
    %v5904 = vadd.f32 %v5857, %v5892
    %v5905 = vld [vmem:[%s7 + $0x19] sm:$0x1]
    %v5906 = vlaneseq
    %v5907 = vshrl.u32 %v5906, 7
    %v5908 = vsub.s32 0, %v5907
    %v5909 = vrot.slane %v5905, %v5908
    %v5910 = vmul.f32 %v5909, %v5833
    %v5911 = vmul.f32 %v5909, %v5834
    %v5912 = vmul.f32 %v5909, %v5835
    %v5913 = vmul.f32 %v5909, %v5836
    %v5914 = vmul.f32 %v5909, %v5837
    %v5915 = vmul.f32 %v5909, %v5838
    %v5916 = vmul.f32 %v5909, %v5839
    %v5917 = vmul.f32 %v5909, %v5840
    %v5926 = vrot.slane %v5910, 2
    %v5927 = vrot.slane %v5911, 2
    %v5928 = vsel %vm222, %v5926, %v5927
    %v5929 = vrot.slane %v5912, 2
    %v5930 = vsel %vm222, %v5927, %v5929
    %v5931 = vrot.slane %v5913, 2
    %v5932 = vsel %vm222, %v5929, %v5931
    %v5933 = vrot.slane %v5914, 2
    %v5934 = vrot.slane %v5915, 2
    %v5935 = vsel %vm222, %v5933, %v5934
    %v5936 = vrot.slane %v5916, 2
    %v5937 = vsel %vm222, %v5934, %v5936
    %v5938 = vrot.slane %v5917, 2
    %v5939 = vsel %vm222, %v5936, %v5938
    %v5946 = vadd.f32 %v5899, %v5928
    %v5947 = vadd.f32 %v5900, %v5930
    %v5948 = vadd.f32 %v5901, %v5932
    %v5949 = vadd.f32 %v5902, %v5935
    %v5950 = vadd.f32 %v5903, %v5937
    %v5951 = vadd.f32 %v5904, %v5939
    %5952 = vrot.lane.b32.xlu0 %v4455, 74
    %v5953 = vpop.permute.xlu0 %5952
    %5954 = vrot.lane.b32.xlu0 %v4456, 74
    %v5955 = vpop.permute.xlu0 %5954
    %5956 = vrot.lane.b32.xlu0 %v4457, 74
    %v5957 = vpop.permute.xlu0 %5956
    %5958 = vrot.lane.b32.xlu0 %v4458, 74
    %v5959 = vpop.permute.xlu0 %5958
    %5960 = vrot.lane.b32.xlu0 %v4459, 74
    %v5961 = vpop.permute.xlu0 %5960
    %5962 = vrot.lane.b32.xlu0 %v4460, 74
    %v5963 = vpop.permute.xlu0 %5962
    %5964 = vrot.lane.b32.xlu0 %v4461, 74
    %v5965 = vpop.permute.xlu0 %5964
    %5966 = vrot.lane.b32.xlu0 %v4462, 74
    %v5967 = vpop.permute.xlu0 %5966
    %5976 = vrot.lane.b32.xlu0 %v4455, 98
    %v5977 = vpop.permute.xlu0 %5976
    %5978 = vrot.lane.b32.xlu0 %v4456, 98
    %v5979 = vpop.permute.xlu0 %5978
    %5980 = vrot.lane.b32.xlu0 %v4457, 98
    %v5981 = vpop.permute.xlu0 %5980
    %5982 = vrot.lane.b32.xlu0 %v4458, 98
    %v5983 = vpop.permute.xlu0 %5982
    %5984 = vrot.lane.b32.xlu0 %v4459, 98
    %v5985 = vpop.permute.xlu0 %5984
    %5986 = vrot.lane.b32.xlu0 %v4460, 98
    %v5987 = vpop.permute.xlu0 %5986
    %5988 = vrot.lane.b32.xlu0 %v4461, 98
    %v5989 = vpop.permute.xlu0 %5988
    %5990 = vrot.lane.b32.xlu0 %v4462, 98
    %v5991 = vpop.permute.xlu0 %5990
    %6000 = vrot.lane.b32.xlu0 %v4455, 122
    %v6001 = vpop.permute.xlu0 %6000
    %6002 = vrot.lane.b32.xlu0 %v4456, 122
    %v6003 = vpop.permute.xlu0 %6002
    %6004 = vrot.lane.b32.xlu0 %v4457, 122
    %v6005 = vpop.permute.xlu0 %6004
    %6006 = vrot.lane.b32.xlu0 %v4458, 122
    %v6007 = vpop.permute.xlu0 %6006
    %6008 = vrot.lane.b32.xlu0 %v4459, 122
    %v6009 = vpop.permute.xlu0 %6008
    %6010 = vrot.lane.b32.xlu0 %v4460, 122
    %v6011 = vpop.permute.xlu0 %6010
    %6012 = vrot.lane.b32.xlu0 %v4461, 122
    %v6013 = vpop.permute.xlu0 %6012
    %6014 = vrot.lane.b32.xlu0 %v4462, 122
    %v6015 = vpop.permute.xlu0 %6014
    %v6024 = vsel %vm4526, %v5953, %v5977
    %v6025 = vsel %vm4526, %v5955, %v5979
    %v6026 = vsel %vm4526, %v5957, %v5981
    %v6027 = vsel %vm4526, %v5959, %v5983
    %v6028 = vsel %vm4526, %v5961, %v5985
    %v6029 = vsel %vm4526, %v5963, %v5987
    %v6030 = vsel %vm4526, %v5965, %v5989
    %v6031 = vsel %vm4526, %v5967, %v5991
    %v6032 = vsel %vm4535, %v6024, %v6001
    %v6033 = vsel %vm4535, %v6025, %v6003
    %v6034 = vsel %vm4535, %v6026, %v6005
    %v6035 = vsel %vm4535, %v6027, %v6007
    %v6036 = vsel %vm4535, %v6028, %v6009
    %v6037 = vsel %vm4535, %v6029, %v6011
    %v6038 = vsel %vm4535, %v6030, %v6013
    %v6039 = vsel %vm4535, %v6031, %v6015
    %v6040 = vld [vmem:[%s7 + $0x14] sm:$0x1]
    %v6041 = vlaneseq
    %v6042 = vshrl.u32 %v6041, 7
    %v6043 = vsub.s32 0, %v6042
    %v6044 = vrot.slane %v6040, %v6043
    %v6045 = vmul.f32 %v6044, %v6032
    %v6046 = vmul.f32 %v6044, %v6033
    %v6047 = vmul.f32 %v6044, %v6034
    %v6048 = vmul.f32 %v6044, %v6036
    %v6049 = vmul.f32 %v6044, %v6037
    %v6050 = vmul.f32 %v6044, %v6038
    %v6051 = vadd.f32 %v5946, %v6045
    %v6052 = vadd.f32 %v5947, %v6046
    %v6053 = vadd.f32 %v5948, %v6047
    %v6054 = vadd.f32 %v5949, %v6048
    %v6055 = vadd.f32 %v5950, %v6049
    %v6056 = vadd.f32 %v5951, %v6050
    %v6057 = vld [vmem:[%s7 + $0x17] sm:$0x1]
    %v6058 = vlaneseq
    %v6059 = vshrl.u32 %v6058, 7
    %v6060 = vsub.s32 0, %v6059
    %v6061 = vrot.slane %v6057, %v6060
    %v6062 = vmul.f32 %v6061, %v6032
    %v6063 = vmul.f32 %v6061, %v6033
    %v6064 = vmul.f32 %v6061, %v6034
    %v6065 = vmul.f32 %v6061, %v6035
    %v6066 = vmul.f32 %v6061, %v6036
    %v6067 = vmul.f32 %v6061, %v6037
    %v6068 = vmul.f32 %v6061, %v6038
    %v6069 = vmul.f32 %v6061, %v6039
    %v6078 = vrot.slane %v6062, 1
    %v6079 = vrot.slane %v6063, 1
    %v6080 = vsel %vm170, %v6078, %v6079
    %v6081 = vrot.slane %v6064, 1
    %v6082 = vsel %vm170, %v6079, %v6081
    %v6083 = vrot.slane %v6065, 1
    %v6084 = vsel %vm170, %v6081, %v6083
    %v6085 = vrot.slane %v6066, 1
    %v6086 = vrot.slane %v6067, 1
    %v6087 = vsel %vm170, %v6085, %v6086
    %v6088 = vrot.slane %v6068, 1
    %v6089 = vsel %vm170, %v6086, %v6088
    %v6090 = vrot.slane %v6069, 1
    %v6091 = vsel %vm170, %v6088, %v6090
    %v6098 = vadd.f32 %v6051, %v6080
    %v6099 = vadd.f32 %v6052, %v6082
    %v6100 = vadd.f32 %v6053, %v6084
    %v6101 = vadd.f32 %v6054, %v6087
    %v6102 = vadd.f32 %v6055, %v6089
    %v6103 = vadd.f32 %v6056, %v6091
    %v6104 = vld [vmem:[%s7 + $0x1a] sm:$0x1]
    %v6105 = vlaneseq
    %v6106 = vshrl.u32 %v6105, 7
    %v6107 = vsub.s32 0, %v6106
    %v6108 = vrot.slane %v6104, %v6107
    %v6109 = vmul.f32 %v6108, %v6032
    %v6110 = vmul.f32 %v6108, %v6033
    %v6111 = vmul.f32 %v6108, %v6034
    %v6112 = vmul.f32 %v6108, %v6035
    %v6113 = vmul.f32 %v6108, %v6036
    %v6114 = vmul.f32 %v6108, %v6037
    %v6115 = vmul.f32 %v6108, %v6038
    %v6116 = vmul.f32 %v6108, %v6039
    %v6125 = vrot.slane %v6109, 2
    %v6126 = vrot.slane %v6110, 2
    %v6127 = vsel %vm222, %v6125, %v6126
    %v6128 = vrot.slane %v6111, 2
    %v6129 = vsel %vm222, %v6126, %v6128
    %v6130 = vrot.slane %v6112, 2
    %v6131 = vsel %vm222, %v6128, %v6130
    %v6132 = vrot.slane %v6113, 2
    %v6133 = vrot.slane %v6114, 2
    %v6134 = vsel %vm222, %v6132, %v6133
    %v6135 = vrot.slane %v6115, 2
    %v6136 = vsel %vm222, %v6133, %v6135
    %v6137 = vrot.slane %v6116, 2
    %v6138 = vsel %vm222, %v6135, %v6137
    %v6145 = vadd.f32 %v6098, %v6127
    %v6146 = vadd.f32 %v6099, %v6129
    %v6147 = vadd.f32 %v6100, %v6131
    %v6148 = vadd.f32 %v6101, %v6134
    %v6149 = vadd.f32 %v6102, %v6136
    %v6150 = vadd.f32 %v6103, %v6138
    %v6151 = vld [vmem:[%s10] sm:$0x1]
    %v6153 = vlaneseq
    %v6154 = vshrl.u32 %v6153, 7
    %v6155 = vsub.s32 0, %v6154
    %v6156 = vrot.slane %v6151, %v6155
    %v6158 = vld [vmem:[%s9] sm:$0xff]
    %v6159 = vld [vmem:[%s9 + $0x8] sm:$0xff]
    %v6160 = vld [vmem:[%s9 + $0x10] sm:$0xff]
    %v6161 = vld [vmem:[%s9 + $0x18] sm:$0xff]
    %v6162 = vld [vmem:[%s9 + $0x20] sm:$0xff]
    %v6163 = vld [vmem:[%s9 + $0x28] sm:$0xff]
    %v6164 = vld [vmem:[%s9 + $0x30] sm:$0xff]
    %v6165 = vld [vmem:[%s9 + $0x38] sm:$0xff]
    %v6166 = vld [vmem:[%s9 + $0x40] sm:$0xff]
    %v6169 = vrot.slane %v6148, 7
    %vm6170 = vcmask 1041409
    %v6171 = vsel %vm6170, %v6169, %v6145
    %vm6172 = vcmask 588800
    %v6173 = vsel %vm6172, %v6171, 0
    %6175 = vmatprep.subr.mxu0 0.0
    %6176 = vmatpush1.msra.mxu0 %v6158
    %6177 = vmatprep.subr.mxu0 0.0
    %6178 = vmatpush1.msra.mxu0 %v6159
    %6179 = vmatprep.subr.mxu0 0.0
    %6180 = vmatpush1.msra.mxu0 %v6160
    %6181 = vmatprep.subr.mxu0 0.0
    %6182 = vmatpush1.msra.mxu0 %v6161
    %6183 = vmatprep.subr.mxu0 0.0
    %6184 = vmatpush1.msra.mxu0 %v6162
    %6185 = vmatprep.subr.mxu0 0.0
    %6186 = vmatpush1.msra.mxu0 %v6163
    %6187 = vmatprep.subr.mxu0 0.0
    %6188 = vmatpush1.msra.mxu0 %v6164
    %6189 = vmatprep.subr.mxu0 0.0
    %6190 = vmatpush1.msra.mxu0 %v6165
    %6191 = vmatprep.subr.mxu0 0.0
    %6192 = vmatpush1.msra.mxu0 %v6166
    %6193 = vmatprep.subr.mxu0 0.0
    %6194 = vmatpush1.msra.mxu0 0.0
    %6195 = vmatprep.subr.mxu0 0.0
    %6196 = vmatpush1.msra.mxu0 0.0
    %6197 = vmatprep.subr.mxu0 0.0
    %6198 = vmatpush1.msra.mxu0 0.0
    %6199 = vmatprep.subr.mxu0 0.0
    %6200 = vmatpush1.msra.mxu0 0.0
    %6201 = vmatprep.subr.mxu0 0.0
    %6202 = vmatpush1.msra.mxu0 0.0
    %6203 = vmatprep.subr.mxu0 0.0
    %6204 = vmatpush1.msra.mxu0 0.0
    %6205 = vmatprep.subr.mxu0 0.0
    %6206 = vmatpush1.msra.mxu0 0.0
    %6207 = vmatprep.subr.mxu0 0.0
    %6208 = vmatpush1.msra.mxu0 0.0
    %6209 = vmatprep.subr.mxu0 0.0
    %6210 = vmatpush1.msra.mxu0 0.0
    %6211 = vmatprep.subr.mxu0 0.0
    %6212 = vmatpush1.msra.mxu0 0.0
    %6213 = vmatprep.subr.mxu0 0.0
    %6214 = vmatpush1.msra.mxu0 0.0
    %6215 = vmatprep.subr.mxu0 0.0
    %6216 = vmatpush1.msra.mxu0 0.0
    %6217 = vmatprep.subr.mxu0 0.0
    %6218 = vmatpush1.msra.mxu0 0.0
    %6219 = vmatprep.subr.mxu0 0.0
    %6220 = vmatpush1.msra.mxu0 0.0
    %6221 = vmatprep.subr.mxu0 0.0
    %6222 = vmatpush1.msra.mxu0 0.0
    %6223 = vmatprep.subr.mxu0 0.0
    %6224 = vmatpush1.msra.mxu0 0.0
    %6225 = vmatprep.subr.mxu0 0.0
    %6226 = vmatpush1.msra.mxu0 0.0
    %6227 = vmatprep.subr.mxu0 0.0
    %6228 = vmatpush1.msra.mxu0 0.0
    %6229 = vmatprep.subr.mxu0 0.0
    %6230 = vmatpush1.msra.mxu0 0.0
    %6231 = vmatprep.subr.mxu0 0.0
    %6232 = vmatpush1.msra.mxu0 0.0
    %6233 = vmatprep.subr.mxu0 0.0
    %6234 = vmatpush1.msra.mxu0 0.0
    %6235 = vmatprep.subr.mxu0 0.0
    %6236 = vmatpush1.msra.mxu0 0.0
    %6237 = vmatprep.subr.mxu0 0.0
    %6238 = vmatpush1.msra.mxu0 0.0
    %6239 = vmatprep.mubr.f32.mxu0 0.0
    %6240 = vmatmul.mubr.f32.gmra.mrb[0].mxu0 %v6173
    %v6241 = vpop.f32.mrb[0].mxu0
    %v6242 = vadd.f32 0.0, %v6241
    %v6243 = vpop.f32.mrb[0].mxu0
    %6244 = vdwg.mxu0
    %v6245 = vadd.f32 %v6156, %v6242
    %s6246 = scalar_lea.vmem %s9, 72
    %v6247 = vld [vmem:[%s6246] sm:$0xff]
    %v6248 = vld [vmem:[%s6246 + $0x8] sm:$0xff]
    %v6249 = vld [vmem:[%s6246 + $0x10] sm:$0xff]
    %v6250 = vld [vmem:[%s6246 + $0x18] sm:$0xff]
    %v6251 = vld [vmem:[%s6246 + $0x20] sm:$0xff]
    %v6252 = vld [vmem:[%s6246 + $0x28] sm:$0xff]
    %v6253 = vld [vmem:[%s6246 + $0x30] sm:$0xff]
    %v6254 = vld [vmem:[%s6246 + $0x38] sm:$0xff]
    %v6255 = vld [vmem:[%s6246 + $0x40] sm:$0xff]
    %v6256 = vrot.slane %v6145, 1
    %v6257 = vsel %vm6170, %v6148, %v6256
    %v6258 = vsel %vm6172, %v6257, 0
    %6260 = vmatprep.subr.mxu0 0.0
    %6261 = vmatpush1.msra.mxu0 %v6247
    %6262 = vmatprep.subr.mxu0 0.0
    %6263 = vmatpush1.msra.mxu0 %v6248
    %6264 = vmatprep.subr.mxu0 0.0
    %6265 = vmatpush1.msra.mxu0 %v6249
    %6266 = vmatprep.subr.mxu0 0.0
    %6267 = vmatpush1.msra.mxu0 %v6250
    %6268 = vmatprep.subr.mxu0 0.0
    %6269 = vmatpush1.msra.mxu0 %v6251
    %6270 = vmatprep.subr.mxu0 0.0
    %6271 = vmatpush1.msra.mxu0 %v6252
    %6272 = vmatprep.subr.mxu0 0.0
    %6273 = vmatpush1.msra.mxu0 %v6253
    %6274 = vmatprep.subr.mxu0 0.0
    %6275 = vmatpush1.msra.mxu0 %v6254
    %6276 = vmatprep.subr.mxu0 0.0
    %6277 = vmatpush1.msra.mxu0 %v6255
    %6278 = vmatprep.subr.mxu0 0.0
    %6279 = vmatpush1.msra.mxu0 0.0
    %6280 = vmatprep.subr.mxu0 0.0
    %6281 = vmatpush1.msra.mxu0 0.0
    %6282 = vmatprep.subr.mxu0 0.0
    %6283 = vmatpush1.msra.mxu0 0.0
    %6284 = vmatprep.subr.mxu0 0.0
    %6285 = vmatpush1.msra.mxu0 0.0
    %6286 = vmatprep.subr.mxu0 0.0
    %6287 = vmatpush1.msra.mxu0 0.0
    %6288 = vmatprep.subr.mxu0 0.0
    %6289 = vmatpush1.msra.mxu0 0.0
    %6290 = vmatprep.subr.mxu0 0.0
    %6291 = vmatpush1.msra.mxu0 0.0
    %6292 = vmatprep.subr.mxu0 0.0
    %6293 = vmatpush1.msra.mxu0 0.0
    %6294 = vmatprep.subr.mxu0 0.0
    %6295 = vmatpush1.msra.mxu0 0.0
    %6296 = vmatprep.subr.mxu0 0.0
    %6297 = vmatpush1.msra.mxu0 0.0
    %6298 = vmatprep.subr.mxu0 0.0
    %6299 = vmatpush1.msra.mxu0 0.0
    %6300 = vmatprep.subr.mxu0 0.0
    %6301 = vmatpush1.msra.mxu0 0.0
    %6302 = vmatprep.subr.mxu0 0.0
    %6303 = vmatpush1.msra.mxu0 0.0
    %6304 = vmatprep.subr.mxu0 0.0
    %6305 = vmatpush1.msra.mxu0 0.0
    %6306 = vmatprep.subr.mxu0 0.0
    %6307 = vmatpush1.msra.mxu0 0.0
    %6308 = vmatprep.subr.mxu0 0.0
    %6309 = vmatpush1.msra.mxu0 0.0
    %6310 = vmatprep.subr.mxu0 0.0
    %6311 = vmatpush1.msra.mxu0 0.0
    %6312 = vmatprep.subr.mxu0 0.0
    %6313 = vmatpush1.msra.mxu0 0.0
    %6314 = vmatprep.subr.mxu0 0.0
    %6315 = vmatpush1.msra.mxu0 0.0
    %6316 = vmatprep.subr.mxu0 0.0
    %6317 = vmatpush1.msra.mxu0 0.0
    %6318 = vmatprep.subr.mxu0 0.0
    %6319 = vmatpush1.msra.mxu0 0.0
    %6320 = vmatprep.subr.mxu0 0.0
    %6321 = vmatpush1.msra.mxu0 0.0
    %6322 = vmatprep.subr.mxu0 0.0
    %6323 = vmatpush1.msra.mxu0 0.0
    %6324 = vmatprep.mubr.f32.mxu0 0.0
    %6325 = vmatmul.mubr.f32.gmra.mrb[0].mxu0 %v6258
    %v6326 = vpop.f32.mrb[0].mxu0
    %v6327 = vadd.f32 0.0, %v6326
    %v6328 = vpop.f32.mrb[0].mxu0
    %6329 = vdwg.mxu0
    %v6330 = vadd.f32 %v6245, %v6327
    %s6331 = scalar_lea.vmem %s9, 144
    %v6332 = vld [vmem:[%s6331] sm:$0xff]
    %v6333 = vld [vmem:[%s6331 + $0x8] sm:$0xff]
    %v6334 = vld [vmem:[%s6331 + $0x10] sm:$0xff]
    %v6335 = vld [vmem:[%s6331 + $0x18] sm:$0xff]
    %v6336 = vld [vmem:[%s6331 + $0x20] sm:$0xff]
    %v6337 = vld [vmem:[%s6331 + $0x28] sm:$0xff]
    %v6338 = vld [vmem:[%s6331 + $0x30] sm:$0xff]
    %v6339 = vld [vmem:[%s6331 + $0x38] sm:$0xff]
    %v6340 = vld [vmem:[%s6331 + $0x40] sm:$0xff]
    %v6341 = vrot.slane %v6145, 2
    %v6342 = vrot.slane %v6148, 1
    %v6343 = vsel %vm6170, %v6342, %v6341
    %v6344 = vsel %vm6172, %v6343, 0
    %6346 = vmatprep.subr.mxu0 0.0
    %6347 = vmatpush1.msra.mxu0 %v6332
    %6348 = vmatprep.subr.mxu0 0.0
    %6349 = vmatpush1.msra.mxu0 %v6333
    %6350 = vmatprep.subr.mxu0 0.0
    %6351 = vmatpush1.msra.mxu0 %v6334
    %6352 = vmatprep.subr.mxu0 0.0
    %6353 = vmatpush1.msra.mxu0 %v6335
    %6354 = vmatprep.subr.mxu0 0.0
    %6355 = vmatpush1.msra.mxu0 %v6336
    %6356 = vmatprep.subr.mxu0 0.0
    %6357 = vmatpush1.msra.mxu0 %v6337
    %6358 = vmatprep.subr.mxu0 0.0
    %6359 = vmatpush1.msra.mxu0 %v6338
    %6360 = vmatprep.subr.mxu0 0.0
    %6361 = vmatpush1.msra.mxu0 %v6339
    %6362 = vmatprep.subr.mxu0 0.0
    %6363 = vmatpush1.msra.mxu0 %v6340
    %6364 = vmatprep.subr.mxu0 0.0
    %6365 = vmatpush1.msra.mxu0 0.0
    %6366 = vmatprep.subr.mxu0 0.0
    %6367 = vmatpush1.msra.mxu0 0.0
    %6368 = vmatprep.subr.mxu0 0.0
    %6369 = vmatpush1.msra.mxu0 0.0
    %6370 = vmatprep.subr.mxu0 0.0
    %6371 = vmatpush1.msra.mxu0 0.0
    %6372 = vmatprep.subr.mxu0 0.0
    %6373 = vmatpush1.msra.mxu0 0.0
    %6374 = vmatprep.subr.mxu0 0.0
    %6375 = vmatpush1.msra.mxu0 0.0
    %6376 = vmatprep.subr.mxu0 0.0
    %6377 = vmatpush1.msra.mxu0 0.0
    %6378 = vmatprep.subr.mxu0 0.0
    %6379 = vmatpush1.msra.mxu0 0.0
    %6380 = vmatprep.subr.mxu0 0.0
    %6381 = vmatpush1.msra.mxu0 0.0
    %6382 = vmatprep.subr.mxu0 0.0
    %6383 = vmatpush1.msra.mxu0 0.0
    %6384 = vmatprep.subr.mxu0 0.0
    %6385 = vmatpush1.msra.mxu0 0.0
    %6386 = vmatprep.subr.mxu0 0.0
    %6387 = vmatpush1.msra.mxu0 0.0
    %6388 = vmatprep.subr.mxu0 0.0
    %6389 = vmatpush1.msra.mxu0 0.0
    %6390 = vmatprep.subr.mxu0 0.0
    %6391 = vmatpush1.msra.mxu0 0.0
    %6392 = vmatprep.subr.mxu0 0.0
    %6393 = vmatpush1.msra.mxu0 0.0
    %6394 = vmatprep.subr.mxu0 0.0
    %6395 = vmatpush1.msra.mxu0 0.0
    %6396 = vmatprep.subr.mxu0 0.0
    %6397 = vmatpush1.msra.mxu0 0.0
    %6398 = vmatprep.subr.mxu0 0.0
    %6399 = vmatpush1.msra.mxu0 0.0
    %6400 = vmatprep.subr.mxu0 0.0
    %6401 = vmatpush1.msra.mxu0 0.0
    %6402 = vmatprep.subr.mxu0 0.0
    %6403 = vmatpush1.msra.mxu0 0.0
    %6404 = vmatprep.subr.mxu0 0.0
    %6405 = vmatpush1.msra.mxu0 0.0
    %6406 = vmatprep.subr.mxu0 0.0
    %6407 = vmatpush1.msra.mxu0 0.0
    %6408 = vmatprep.subr.mxu0 0.0
    %6409 = vmatpush1.msra.mxu0 0.0
    %6410 = vmatprep.mubr.f32.mxu0 0.0
    %6411 = vmatmul.mubr.f32.gmra.mrb[0].mxu0 %v6344
    %v6412 = vpop.f32.mrb[0].mxu0
    %v6413 = vadd.f32 0.0, %v6412
    %v6414 = vpop.f32.mrb[0].mxu0
    %6415 = vdwg.mxu0
    %v6416 = vadd.f32 %v6330, %v6413
    %s6417 = scalar_lea.vmem %s9, 216
    %v6418 = vld [vmem:[%s6417] sm:$0xff]
    %v6419 = vld [vmem:[%s6417 + $0x8] sm:$0xff]
    %v6420 = vld [vmem:[%s6417 + $0x10] sm:$0xff]
    %v6421 = vld [vmem:[%s6417 + $0x18] sm:$0xff]
    %v6422 = vld [vmem:[%s6417 + $0x20] sm:$0xff]
    %v6423 = vld [vmem:[%s6417 + $0x28] sm:$0xff]
    %v6424 = vld [vmem:[%s6417 + $0x30] sm:$0xff]
    %v6425 = vld [vmem:[%s6417 + $0x38] sm:$0xff]
    %v6426 = vld [vmem:[%s6417 + $0x40] sm:$0xff]
    %v6427 = vrot.slane %v6145, 3
    %v6428 = vrot.slane %v6148, 2
    %v6429 = vsel %vm6170, %v6428, %v6427
    %v6430 = vsel %vm6172, %v6429, 0
    %6432 = vmatprep.subr.mxu0 0.0
    %6433 = vmatpush1.msra.mxu0 %v6418
    %6434 = vmatprep.subr.mxu0 0.0
    %6435 = vmatpush1.msra.mxu0 %v6419
    %6436 = vmatprep.subr.mxu0 0.0
    %6437 = vmatpush1.msra.mxu0 %v6420
    %6438 = vmatprep.subr.mxu0 0.0
    %6439 = vmatpush1.msra.mxu0 %v6421
    %6440 = vmatprep.subr.mxu0 0.0
    %6441 = vmatpush1.msra.mxu0 %v6422
    %6442 = vmatprep.subr.mxu0 0.0
    %6443 = vmatpush1.msra.mxu0 %v6423
    %6444 = vmatprep.subr.mxu0 0.0
    %6445 = vmatpush1.msra.mxu0 %v6424
    %6446 = vmatprep.subr.mxu0 0.0
    %6447 = vmatpush1.msra.mxu0 %v6425
    %6448 = vmatprep.subr.mxu0 0.0
    %6449 = vmatpush1.msra.mxu0 %v6426
    %6450 = vmatprep.subr.mxu0 0.0
    %6451 = vmatpush1.msra.mxu0 0.0
    %6452 = vmatprep.subr.mxu0 0.0
    %6453 = vmatpush1.msra.mxu0 0.0
    %6454 = vmatprep.subr.mxu0 0.0
    %6455 = vmatpush1.msra.mxu0 0.0
    %6456 = vmatprep.subr.mxu0 0.0
    %6457 = vmatpush1.msra.mxu0 0.0
    %6458 = vmatprep.subr.mxu0 0.0
    %6459 = vmatpush1.msra.mxu0 0.0
    %6460 = vmatprep.subr.mxu0 0.0
    %6461 = vmatpush1.msra.mxu0 0.0
    %6462 = vmatprep.subr.mxu0 0.0
    %6463 = vmatpush1.msra.mxu0 0.0
    %6464 = vmatprep.subr.mxu0 0.0
    %6465 = vmatpush1.msra.mxu0 0.0
    %6466 = vmatprep.subr.mxu0 0.0
    %6467 = vmatpush1.msra.mxu0 0.0
    %6468 = vmatprep.subr.mxu0 0.0
    %6469 = vmatpush1.msra.mxu0 0.0
    %6470 = vmatprep.subr.mxu0 0.0
    %6471 = vmatpush1.msra.mxu0 0.0
    %6472 = vmatprep.subr.mxu0 0.0
    %6473 = vmatpush1.msra.mxu0 0.0
    %6474 = vmatprep.subr.mxu0 0.0
    %6475 = vmatpush1.msra.mxu0 0.0
    %6476 = vmatprep.subr.mxu0 0.0
    %6477 = vmatpush1.msra.mxu0 0.0
    %6478 = vmatprep.subr.mxu0 0.0
    %6479 = vmatpush1.msra.mxu0 0.0
    %6480 = vmatprep.subr.mxu0 0.0
    %6481 = vmatpush1.msra.mxu0 0.0
    %6482 = vmatprep.subr.mxu0 0.0
    %6483 = vmatpush1.msra.mxu0 0.0
    %6484 = vmatprep.subr.mxu0 0.0
    %6485 = vmatpush1.msra.mxu0 0.0
    %6486 = vmatprep.subr.mxu0 0.0
    %6487 = vmatpush1.msra.mxu0 0.0
    %6488 = vmatprep.subr.mxu0 0.0
    %6489 = vmatpush1.msra.mxu0 0.0
    %6490 = vmatprep.subr.mxu0 0.0
    %6491 = vmatpush1.msra.mxu0 0.0
    %6492 = vmatprep.subr.mxu0 0.0
    %6493 = vmatpush1.msra.mxu0 0.0
    %6494 = vmatprep.subr.mxu0 0.0
    %6495 = vmatpush1.msra.mxu0 0.0
    %6496 = vmatprep.mubr.f32.mxu0 0.0
    %6497 = vmatmul.mubr.f32.gmra.mrb[0].mxu0 %v6430
    %v6498 = vpop.f32.mrb[0].mxu0
    %v6499 = vadd.f32 0.0, %v6498
    %v6500 = vpop.f32.mrb[0].mxu0
    %6501 = vdwg.mxu0
    %v6502 = vadd.f32 %v6416, %v6499
    %s6503 = scalar_lea.vmem %s9, 288
    %v6504 = vld [vmem:[%s6503] sm:$0xff]
    %v6505 = vld [vmem:[%s6503 + $0x8] sm:$0xff]
    %v6506 = vld [vmem:[%s6503 + $0x10] sm:$0xff]
    %v6507 = vld [vmem:[%s6503 + $0x18] sm:$0xff]
    %v6508 = vld [vmem:[%s6503 + $0x20] sm:$0xff]
    %v6509 = vld [vmem:[%s6503 + $0x28] sm:$0xff]
    %v6510 = vld [vmem:[%s6503 + $0x30] sm:$0xff]
    %v6511 = vld [vmem:[%s6503 + $0x38] sm:$0xff]
    %v6512 = vld [vmem:[%s6503 + $0x40] sm:$0xff]
    %v6513 = vrot.slane %v6145, 4
    %v6514 = vrot.slane %v6148, 3
    %v6515 = vsel %vm6170, %v6514, %v6513
    %v6516 = vsel %vm6172, %v6515, 0
    %6518 = vmatprep.subr.mxu0 0.0
    %6519 = vmatpush1.msra.mxu0 %v6504
    %6520 = vmatprep.subr.mxu0 0.0
    %6521 = vmatpush1.msra.mxu0 %v6505
    %6522 = vmatprep.subr.mxu0 0.0
    %6523 = vmatpush1.msra.mxu0 %v6506
    %6524 = vmatprep.subr.mxu0 0.0
    %6525 = vmatpush1.msra.mxu0 %v6507
    %6526 = vmatprep.subr.mxu0 0.0
    %6527 = vmatpush1.msra.mxu0 %v6508
    %6528 = vmatprep.subr.mxu0 0.0
    %6529 = vmatpush1.msra.mxu0 %v6509
    %6530 = vmatprep.subr.mxu0 0.0
    %6531 = vmatpush1.msra.mxu0 %v6510
    %6532 = vmatprep.subr.mxu0 0.0
    %6533 = vmatpush1.msra.mxu0 %v6511
    %6534 = vmatprep.subr.mxu0 0.0
    %6535 = vmatpush1.msra.mxu0 %v6512
    %6536 = vmatprep.subr.mxu0 0.0
    %6537 = vmatpush1.msra.mxu0 0.0
    %6538 = vmatprep.subr.mxu0 0.0
    %6539 = vmatpush1.msra.mxu0 0.0
    %6540 = vmatprep.subr.mxu0 0.0
    %6541 = vmatpush1.msra.mxu0 0.0
    %6542 = vmatprep.subr.mxu0 0.0
    %6543 = vmatpush1.msra.mxu0 0.0
    %6544 = vmatprep.subr.mxu0 0.0
    %6545 = vmatpush1.msra.mxu0 0.0
    %6546 = vmatprep.subr.mxu0 0.0
    %6547 = vmatpush1.msra.mxu0 0.0
    %6548 = vmatprep.subr.mxu0 0.0
    %6549 = vmatpush1.msra.mxu0 0.0
    %6550 = vmatprep.subr.mxu0 0.0
    %6551 = vmatpush1.msra.mxu0 0.0
    %6552 = vmatprep.subr.mxu0 0.0
    %6553 = vmatpush1.msra.mxu0 0.0
    %6554 = vmatprep.subr.mxu0 0.0
    %6555 = vmatpush1.msra.mxu0 0.0
    %6556 = vmatprep.subr.mxu0 0.0
    %6557 = vmatpush1.msra.mxu0 0.0
    %6558 = vmatprep.subr.mxu0 0.0
    %6559 = vmatpush1.msra.mxu0 0.0
    %6560 = vmatprep.subr.mxu0 0.0
    %6561 = vmatpush1.msra.mxu0 0.0
    %6562 = vmatprep.subr.mxu0 0.0
    %6563 = vmatpush1.msra.mxu0 0.0
    %6564 = vmatprep.subr.mxu0 0.0
    %6565 = vmatpush1.msra.mxu0 0.0
    %6566 = vmatprep.subr.mxu0 0.0
    %6567 = vmatpush1.msra.mxu0 0.0
    %6568 = vmatprep.subr.mxu0 0.0
    %6569 = vmatpush1.msra.mxu0 0.0
    %6570 = vmatprep.subr.mxu0 0.0
    %6571 = vmatpush1.msra.mxu0 0.0
    %6572 = vmatprep.subr.mxu0 0.0
    %6573 = vmatpush1.msra.mxu0 0.0
    %6574 = vmatprep.subr.mxu0 0.0
    %6575 = vmatpush1.msra.mxu0 0.0
    %6576 = vmatprep.subr.mxu0 0.0
    %6577 = vmatpush1.msra.mxu0 0.0
    %6578 = vmatprep.subr.mxu0 0.0
    %6579 = vmatpush1.msra.mxu0 0.0
    %6580 = vmatprep.subr.mxu0 0.0
    %6581 = vmatpush1.msra.mxu0 0.0
    %6582 = vmatprep.mubr.f32.mxu0 0.0
    %6583 = vmatmul.mubr.f32.gmra.mrb[0].mxu0 %v6516
    %v6584 = vpop.f32.mrb[0].mxu0
    %v6585 = vadd.f32 0.0, %v6584
    %v6586 = vpop.f32.mrb[0].mxu0
    %6587 = vdwg.mxu0
    %v6588 = vadd.f32 %v6502, %v6585
    %s6589 = scalar_lea.vmem %s9, 360
    %v6590 = vld [vmem:[%s6589] sm:$0xff]
    %v6591 = vld [vmem:[%s6589 + $0x8] sm:$0xff]
    %v6592 = vld [vmem:[%s6589 + $0x10] sm:$0xff]
    %v6593 = vld [vmem:[%s6589 + $0x18] sm:$0xff]
    %v6594 = vld [vmem:[%s6589 + $0x20] sm:$0xff]
    %v6595 = vld [vmem:[%s6589 + $0x28] sm:$0xff]
    %v6596 = vld [vmem:[%s6589 + $0x30] sm:$0xff]
    %v6597 = vld [vmem:[%s6589 + $0x38] sm:$0xff]
    %v6598 = vld [vmem:[%s6589 + $0x40] sm:$0xff]
    %v6599 = vrot.slane %v6145, 5
    %v6600 = vrot.slane %v6148, 4
    %v6601 = vsel %vm6170, %v6600, %v6599
    %v6602 = vsel %vm6172, %v6601, 0
    %6604 = vmatprep.subr.mxu0 0.0
    %6605 = vmatpush1.msra.mxu0 %v6590
    %6606 = vmatprep.subr.mxu0 0.0
    %6607 = vmatpush1.msra.mxu0 %v6591
    %6608 = vmatprep.subr.mxu0 0.0
    %6609 = vmatpush1.msra.mxu0 %v6592
    %6610 = vmatprep.subr.mxu0 0.0
    %6611 = vmatpush1.msra.mxu0 %v6593
    %6612 = vmatprep.subr.mxu0 0.0
    %6613 = vmatpush1.msra.mxu0 %v6594
    %6614 = vmatprep.subr.mxu0 0.0
    %6615 = vmatpush1.msra.mxu0 %v6595
    %6616 = vmatprep.subr.mxu0 0.0
    %6617 = vmatpush1.msra.mxu0 %v6596
    %6618 = vmatprep.subr.mxu0 0.0
    %6619 = vmatpush1.msra.mxu0 %v6597
    %6620 = vmatprep.subr.mxu0 0.0
    %6621 = vmatpush1.msra.mxu0 %v6598
    %6622 = vmatprep.subr.mxu0 0.0
    %6623 = vmatpush1.msra.mxu0 0.0
    %6624 = vmatprep.subr.mxu0 0.0
    %6625 = vmatpush1.msra.mxu0 0.0
    %6626 = vmatprep.subr.mxu0 0.0
    %6627 = vmatpush1.msra.mxu0 0.0
    %6628 = vmatprep.subr.mxu0 0.0
    %6629 = vmatpush1.msra.mxu0 0.0
    %6630 = vmatprep.subr.mxu0 0.0
    %6631 = vmatpush1.msra.mxu0 0.0
    %6632 = vmatprep.subr.mxu0 0.0
    %6633 = vmatpush1.msra.mxu0 0.0
    %6634 = vmatprep.subr.mxu0 0.0
    %6635 = vmatpush1.msra.mxu0 0.0
    %6636 = vmatprep.subr.mxu0 0.0
    %6637 = vmatpush1.msra.mxu0 0.0
    %6638 = vmatprep.subr.mxu0 0.0
    %6639 = vmatpush1.msra.mxu0 0.0
    %6640 = vmatprep.subr.mxu0 0.0
    %6641 = vmatpush1.msra.mxu0 0.0
    %6642 = vmatprep.subr.mxu0 0.0
    %6643 = vmatpush1.msra.mxu0 0.0
    %6644 = vmatprep.subr.mxu0 0.0
    %6645 = vmatpush1.msra.mxu0 0.0
    %6646 = vmatprep.subr.mxu0 0.0
    %6647 = vmatpush1.msra.mxu0 0.0
    %6648 = vmatprep.subr.mxu0 0.0
    %6649 = vmatpush1.msra.mxu0 0.0
    %6650 = vmatprep.subr.mxu0 0.0
    %6651 = vmatpush1.msra.mxu0 0.0
    %6652 = vmatprep.subr.mxu0 0.0
    %6653 = vmatpush1.msra.mxu0 0.0
    %6654 = vmatprep.subr.mxu0 0.0
    %6655 = vmatpush1.msra.mxu0 0.0
    %6656 = vmatprep.subr.mxu0 0.0
    %6657 = vmatpush1.msra.mxu0 0.0
    %6658 = vmatprep.subr.mxu0 0.0
    %6659 = vmatpush1.msra.mxu0 0.0
    %6660 = vmatprep.subr.mxu0 0.0
    %6661 = vmatpush1.msra.mxu0 0.0
    %6662 = vmatprep.subr.mxu0 0.0
    %6663 = vmatpush1.msra.mxu0 0.0
    %6664 = vmatprep.subr.mxu0 0.0
    %6665 = vmatpush1.msra.mxu0 0.0
    %6666 = vmatprep.subr.mxu0 0.0
    %6667 = vmatpush1.msra.mxu0 0.0
    %6668 = vmatprep.mubr.f32.mxu0 0.0
    %6669 = vmatmul.mubr.f32.gmra.mrb[0].mxu0 %v6602
    %v6670 = vpop.f32.mrb[0].mxu0
    %v6671 = vadd.f32 0.0, %v6670
    %v6672 = vpop.f32.mrb[0].mxu0
    %6673 = vdwg.mxu0
    %v6674 = vadd.f32 %v6588, %v6671
    %s6675 = scalar_lea.vmem %s9, 432
    %v6676 = vld [vmem:[%s6675] sm:$0xff]
    %v6677 = vld [vmem:[%s6675 + $0x8] sm:$0xff]
    %v6678 = vld [vmem:[%s6675 + $0x10] sm:$0xff]
    %v6679 = vld [vmem:[%s6675 + $0x18] sm:$0xff]
    %v6680 = vld [vmem:[%s6675 + $0x20] sm:$0xff]
    %v6681 = vld [vmem:[%s6675 + $0x28] sm:$0xff]
    %v6682 = vld [vmem:[%s6675 + $0x30] sm:$0xff]
    %v6683 = vld [vmem:[%s6675 + $0x38] sm:$0xff]
    %v6684 = vld [vmem:[%s6675 + $0x40] sm:$0xff]
    %v6685 = vrot.slane %v6145, 6
    %v6686 = vrot.slane %v6148, 5
    %v6687 = vsel %vm6170, %v6686, %v6685
    %v6688 = vsel %vm6172, %v6687, 0
    %6690 = vmatprep.subr.mxu0 0.0
    %6691 = vmatpush1.msra.mxu0 %v6676
    %6692 = vmatprep.subr.mxu0 0.0
    %6693 = vmatpush1.msra.mxu0 %v6677
    %6694 = vmatprep.subr.mxu0 0.0
    %6695 = vmatpush1.msra.mxu0 %v6678
    %6696 = vmatprep.subr.mxu0 0.0
    %6697 = vmatpush1.msra.mxu0 %v6679
    %6698 = vmatprep.subr.mxu0 0.0
    %6699 = vmatpush1.msra.mxu0 %v6680
    %6700 = vmatprep.subr.mxu0 0.0
    %6701 = vmatpush1.msra.mxu0 %v6681
    %6702 = vmatprep.subr.mxu0 0.0
    %6703 = vmatpush1.msra.mxu0 %v6682
    %6704 = vmatprep.subr.mxu0 0.0
    %6705 = vmatpush1.msra.mxu0 %v6683
    %6706 = vmatprep.subr.mxu0 0.0
    %6707 = vmatpush1.msra.mxu0 %v6684
    %6708 = vmatprep.subr.mxu0 0.0
    %6709 = vmatpush1.msra.mxu0 0.0
    %6710 = vmatprep.subr.mxu0 0.0
    %6711 = vmatpush1.msra.mxu0 0.0
    %6712 = vmatprep.subr.mxu0 0.0
    %6713 = vmatpush1.msra.mxu0 0.0
    %6714 = vmatprep.subr.mxu0 0.0
    %6715 = vmatpush1.msra.mxu0 0.0
    %6716 = vmatprep.subr.mxu0 0.0
    %6717 = vmatpush1.msra.mxu0 0.0
    %6718 = vmatprep.subr.mxu0 0.0
    %6719 = vmatpush1.msra.mxu0 0.0
    %6720 = vmatprep.subr.mxu0 0.0
    %6721 = vmatpush1.msra.mxu0 0.0
    %6722 = vmatprep.subr.mxu0 0.0
    %6723 = vmatpush1.msra.mxu0 0.0
    %6724 = vmatprep.subr.mxu0 0.0
    %6725 = vmatpush1.msra.mxu0 0.0
    %6726 = vmatprep.subr.mxu0 0.0
    %6727 = vmatpush1.msra.mxu0 0.0
    %6728 = vmatprep.subr.mxu0 0.0
    %6729 = vmatpush1.msra.mxu0 0.0
    %6730 = vmatprep.subr.mxu0 0.0
    %6731 = vmatpush1.msra.mxu0 0.0
    %6732 = vmatprep.subr.mxu0 0.0
    %6733 = vmatpush1.msra.mxu0 0.0
    %6734 = vmatprep.subr.mxu0 0.0
    %6735 = vmatpush1.msra.mxu0 0.0
    %6736 = vmatprep.subr.mxu0 0.0
    %6737 = vmatpush1.msra.mxu0 0.0
    %6738 = vmatprep.subr.mxu0 0.0
    %6739 = vmatpush1.msra.mxu0 0.0
    %6740 = vmatprep.subr.mxu0 0.0
    %6741 = vmatpush1.msra.mxu0 0.0
    %6742 = vmatprep.subr.mxu0 0.0
    %6743 = vmatpush1.msra.mxu0 0.0
    %6744 = vmatprep.subr.mxu0 0.0
    %6745 = vmatpush1.msra.mxu0 0.0
    %6746 = vmatprep.subr.mxu0 0.0
    %6747 = vmatpush1.msra.mxu0 0.0
    %6748 = vmatprep.subr.mxu0 0.0
    %6749 = vmatpush1.msra.mxu0 0.0
    %6750 = vmatprep.subr.mxu0 0.0
    %6751 = vmatpush1.msra.mxu0 0.0
    %6752 = vmatprep.subr.mxu0 0.0
    %6753 = vmatpush1.msra.mxu0 0.0
    %6754 = vmatprep.mubr.f32.mxu0 0.0
    %6755 = vmatmul.mubr.f32.gmra.mrb[0].mxu0 %v6688
    %v6756 = vpop.f32.mrb[0].mxu0
    %v6757 = vadd.f32 0.0, %v6756
    %v6758 = vpop.f32.mrb[0].mxu0
    %6759 = vdwg.mxu0
    %v6760 = vadd.f32 %v6674, %v6757
    %s6761 = scalar_lea.vmem %s9, 504
    %v6762 = vld [vmem:[%s6761] sm:$0xff]
    %v6763 = vld [vmem:[%s6761 + $0x8] sm:$0xff]
    %v6764 = vld [vmem:[%s6761 + $0x10] sm:$0xff]
    %v6765 = vld [vmem:[%s6761 + $0x18] sm:$0xff]
    %v6766 = vld [vmem:[%s6761 + $0x20] sm:$0xff]
    %v6767 = vld [vmem:[%s6761 + $0x28] sm:$0xff]
    %v6768 = vld [vmem:[%s6761 + $0x30] sm:$0xff]
    %v6769 = vld [vmem:[%s6761 + $0x38] sm:$0xff]
    %v6770 = vld [vmem:[%s6761 + $0x40] sm:$0xff]
    %v6771 = vrot.slane %v6145, 7
    %v6772 = vrot.slane %v6148, 6
    %v6773 = vsel %vm6170, %v6772, %v6771
    %v6774 = vsel %vm6172, %v6773, 0
    %6776 = vmatprep.subr.mxu0 0.0
    %6777 = vmatpush1.msra.mxu0 %v6762
    %6778 = vmatprep.subr.mxu0 0.0
    %6779 = vmatpush1.msra.mxu0 %v6763
    %6780 = vmatprep.subr.mxu0 0.0
    %6781 = vmatpush1.msra.mxu0 %v6764
    %6782 = vmatprep.subr.mxu0 0.0
    %6783 = vmatpush1.msra.mxu0 %v6765
    %6784 = vmatprep.subr.mxu0 0.0
    %6785 = vmatpush1.msra.mxu0 %v6766
    %6786 = vmatprep.subr.mxu0 0.0
    %6787 = vmatpush1.msra.mxu0 %v6767
    %6788 = vmatprep.subr.mxu0 0.0
    %6789 = vmatpush1.msra.mxu0 %v6768
    %6790 = vmatprep.subr.mxu0 0.0
    %6791 = vmatpush1.msra.mxu0 %v6769
    %6792 = vmatprep.subr.mxu0 0.0
    %6793 = vmatpush1.msra.mxu0 %v6770
    %6794 = vmatprep.subr.mxu0 0.0
    %6795 = vmatpush1.msra.mxu0 0.0
    %6796 = vmatprep.subr.mxu0 0.0
    %6797 = vmatpush1.msra.mxu0 0.0
    %6798 = vmatprep.subr.mxu0 0.0
    %6799 = vmatpush1.msra.mxu0 0.0
    %6800 = vmatprep.subr.mxu0 0.0
    %6801 = vmatpush1.msra.mxu0 0.0
    %6802 = vmatprep.subr.mxu0 0.0
    %6803 = vmatpush1.msra.mxu0 0.0
    %6804 = vmatprep.subr.mxu0 0.0
    %6805 = vmatpush1.msra.mxu0 0.0
    %6806 = vmatprep.subr.mxu0 0.0
    %6807 = vmatpush1.msra.mxu0 0.0
    %6808 = vmatprep.subr.mxu0 0.0
    %6809 = vmatpush1.msra.mxu0 0.0
    %6810 = vmatprep.subr.mxu0 0.0
    %6811 = vmatpush1.msra.mxu0 0.0
    %6812 = vmatprep.subr.mxu0 0.0
    %6813 = vmatpush1.msra.mxu0 0.0
    %6814 = vmatprep.subr.mxu0 0.0
    %6815 = vmatpush1.msra.mxu0 0.0
    %6816 = vmatprep.subr.mxu0 0.0
    %6817 = vmatpush1.msra.mxu0 0.0
    %6818 = vmatprep.subr.mxu0 0.0
    %6819 = vmatpush1.msra.mxu0 0.0
    %6820 = vmatprep.subr.mxu0 0.0
    %6821 = vmatpush1.msra.mxu0 0.0
    %6822 = vmatprep.subr.mxu0 0.0
    %6823 = vmatpush1.msra.mxu0 0.0
    %6824 = vmatprep.subr.mxu0 0.0
    %6825 = vmatpush1.msra.mxu0 0.0
    %6826 = vmatprep.subr.mxu0 0.0
    %6827 = vmatpush1.msra.mxu0 0.0
    %6828 = vmatprep.subr.mxu0 0.0
    %6829 = vmatpush1.msra.mxu0 0.0
    %6830 = vmatprep.subr.mxu0 0.0
    %6831 = vmatpush1.msra.mxu0 0.0
    %6832 = vmatprep.subr.mxu0 0.0
    %6833 = vmatpush1.msra.mxu0 0.0
    %6834 = vmatprep.subr.mxu0 0.0
    %6835 = vmatpush1.msra.mxu0 0.0
    %6836 = vmatprep.subr.mxu0 0.0
    %6837 = vmatpush1.msra.mxu0 0.0
    %6838 = vmatprep.subr.mxu0 0.0
    %6839 = vmatpush1.msra.mxu0 0.0
    %6840 = vmatprep.mubr.f32.mxu0 0.0
    %6841 = vmatmul.mubr.f32.gmra.mrb[0].mxu0 %v6774
    %v6842 = vpop.f32.mrb[0].mxu0
    %v6843 = vadd.f32 0.0, %v6842
    %v6844 = vpop.f32.mrb[0].mxu0
    %6845 = vdwg.mxu0
    %v6846 = vadd.f32 %v6760, %v6843
    %s6847 = scalar_lea.vmem %s9, 576
    %v6848 = vld [vmem:[%s6847] sm:$0xff]
    %v6849 = vld [vmem:[%s6847 + $0x8] sm:$0xff]
    %v6850 = vld [vmem:[%s6847 + $0x10] sm:$0xff]
    %v6851 = vld [vmem:[%s6847 + $0x18] sm:$0xff]
    %v6852 = vld [vmem:[%s6847 + $0x20] sm:$0xff]
    %v6853 = vld [vmem:[%s6847 + $0x28] sm:$0xff]
    %v6854 = vld [vmem:[%s6847 + $0x30] sm:$0xff]
    %v6855 = vld [vmem:[%s6847 + $0x38] sm:$0xff]
    %v6856 = vld [vmem:[%s6847 + $0x40] sm:$0xff]
    %v6859 = vrot.slane %v6149, 7
    %v6860 = vsel %vm6170, %v6859, %v6146
    %v6861 = vsel %vm6172, %v6860, 0
    %6863 = vmatprep.subr.mxu0 0.0
    %6864 = vmatpush1.msra.mxu0 %v6848
    %6865 = vmatprep.subr.mxu0 0.0
    %6866 = vmatpush1.msra.mxu0 %v6849
    %6867 = vmatprep.subr.mxu0 0.0
    %6868 = vmatpush1.msra.mxu0 %v6850
    %6869 = vmatprep.subr.mxu0 0.0
    %6870 = vmatpush1.msra.mxu0 %v6851
    %6871 = vmatprep.subr.mxu0 0.0
    %6872 = vmatpush1.msra.mxu0 %v6852
    %6873 = vmatprep.subr.mxu0 0.0
    %6874 = vmatpush1.msra.mxu0 %v6853
    %6875 = vmatprep.subr.mxu0 0.0
    %6876 = vmatpush1.msra.mxu0 %v6854
    %6877 = vmatprep.subr.mxu0 0.0
    %6878 = vmatpush1.msra.mxu0 %v6855
    %6879 = vmatprep.subr.mxu0 0.0
    %6880 = vmatpush1.msra.mxu0 %v6856
    %6881 = vmatprep.subr.mxu0 0.0
    %6882 = vmatpush1.msra.mxu0 0.0
    %6883 = vmatprep.subr.mxu0 0.0
    %6884 = vmatpush1.msra.mxu0 0.0
    %6885 = vmatprep.subr.mxu0 0.0
    %6886 = vmatpush1.msra.mxu0 0.0
    %6887 = vmatprep.subr.mxu0 0.0
    %6888 = vmatpush1.msra.mxu0 0.0
    %6889 = vmatprep.subr.mxu0 0.0
    %6890 = vmatpush1.msra.mxu0 0.0
    %6891 = vmatprep.subr.mxu0 0.0
    %6892 = vmatpush1.msra.mxu0 0.0
    %6893 = vmatprep.subr.mxu0 0.0
    %6894 = vmatpush1.msra.mxu0 0.0
    %6895 = vmatprep.subr.mxu0 0.0
    %6896 = vmatpush1.msra.mxu0 0.0
    %6897 = vmatprep.subr.mxu0 0.0
    %6898 = vmatpush1.msra.mxu0 0.0
    %6899 = vmatprep.subr.mxu0 0.0
    %6900 = vmatpush1.msra.mxu0 0.0
    %6901 = vmatprep.subr.mxu0 0.0
    %6902 = vmatpush1.msra.mxu0 0.0
    %6903 = vmatprep.subr.mxu0 0.0
    %6904 = vmatpush1.msra.mxu0 0.0
    %6905 = vmatprep.subr.mxu0 0.0
    %6906 = vmatpush1.msra.mxu0 0.0
    %6907 = vmatprep.subr.mxu0 0.0
    %6908 = vmatpush1.msra.mxu0 0.0
    %6909 = vmatprep.subr.mxu0 0.0
    %6910 = vmatpush1.msra.mxu0 0.0
    %6911 = vmatprep.subr.mxu0 0.0
    %6912 = vmatpush1.msra.mxu0 0.0
    %6913 = vmatprep.subr.mxu0 0.0
    %6914 = vmatpush1.msra.mxu0 0.0
    %6915 = vmatprep.subr.mxu0 0.0
    %6916 = vmatpush1.msra.mxu0 0.0
    %6917 = vmatprep.subr.mxu0 0.0
    %6918 = vmatpush1.msra.mxu0 0.0
    %6919 = vmatprep.subr.mxu0 0.0
    %6920 = vmatpush1.msra.mxu0 0.0
    %6921 = vmatprep.subr.mxu0 0.0
    %6922 = vmatpush1.msra.mxu0 0.0
    %6923 = vmatprep.subr.mxu0 0.0
    %6924 = vmatpush1.msra.mxu0 0.0
    %6925 = vmatprep.subr.mxu0 0.0
    %6926 = vmatpush1.msra.mxu0 0.0
    %6927 = vmatprep.mubr.f32.mxu0 0.0
    %6928 = vmatmul.mubr.f32.gmra.mrb[0].mxu0 %v6861
    %v6929 = vpop.f32.mrb[0].mxu0
    %v6930 = vadd.f32 0.0, %v6929
    %v6931 = vpop.f32.mrb[0].mxu0
    %6932 = vdwg.mxu0
    %v6933 = vadd.f32 %v6846, %v6930
    %s6934 = scalar_lea.vmem %s9, 648
    %v6935 = vld [vmem:[%s6934] sm:$0xff]
    %v6936 = vld [vmem:[%s6934 + $0x8] sm:$0xff]
    %v6937 = vld [vmem:[%s6934 + $0x10] sm:$0xff]
    %v6938 = vld [vmem:[%s6934 + $0x18] sm:$0xff]
    %v6939 = vld [vmem:[%s6934 + $0x20] sm:$0xff]
    %v6940 = vld [vmem:[%s6934 + $0x28] sm:$0xff]
    %v6941 = vld [vmem:[%s6934 + $0x30] sm:$0xff]
    %v6942 = vld [vmem:[%s6934 + $0x38] sm:$0xff]
    %v6943 = vld [vmem:[%s6934 + $0x40] sm:$0xff]
    %v6944 = vrot.slane %v6146, 1
    %v6945 = vsel %vm6170, %v6149, %v6944
    %v6946 = vsel %vm6172, %v6945, 0
    %6948 = vmatprep.subr.mxu0 0.0
    %6949 = vmatpush1.msra.mxu0 %v6935
    %6950 = vmatprep.subr.mxu0 0.0
    %6951 = vmatpush1.msra.mxu0 %v6936
    %6952 = vmatprep.subr.mxu0 0.0
    %6953 = vmatpush1.msra.mxu0 %v6937
    %6954 = vmatprep.subr.mxu0 0.0
    %6955 = vmatpush1.msra.mxu0 %v6938
    %6956 = vmatprep.subr.mxu0 0.0
    %6957 = vmatpush1.msra.mxu0 %v6939
    %6958 = vmatprep.subr.mxu0 0.0
    %6959 = vmatpush1.msra.mxu0 %v6940
    %6960 = vmatprep.subr.mxu0 0.0
    %6961 = vmatpush1.msra.mxu0 %v6941
    %6962 = vmatprep.subr.mxu0 0.0
    %6963 = vmatpush1.msra.mxu0 %v6942
    %6964 = vmatprep.subr.mxu0 0.0
    %6965 = vmatpush1.msra.mxu0 %v6943
    %6966 = vmatprep.subr.mxu0 0.0
    %6967 = vmatpush1.msra.mxu0 0.0
    %6968 = vmatprep.subr.mxu0 0.0
    %6969 = vmatpush1.msra.mxu0 0.0
    %6970 = vmatprep.subr.mxu0 0.0
    %6971 = vmatpush1.msra.mxu0 0.0
    %6972 = vmatprep.subr.mxu0 0.0
    %6973 = vmatpush1.msra.mxu0 0.0
    %6974 = vmatprep.subr.mxu0 0.0
    %6975 = vmatpush1.msra.mxu0 0.0
    %6976 = vmatprep.subr.mxu0 0.0
    %6977 = vmatpush1.msra.mxu0 0.0
    %6978 = vmatprep.subr.mxu0 0.0
    %6979 = vmatpush1.msra.mxu0 0.0
    %6980 = vmatprep.subr.mxu0 0.0
    %6981 = vmatpush1.msra.mxu0 0.0
    %6982 = vmatprep.subr.mxu0 0.0
    %6983 = vmatpush1.msra.mxu0 0.0
    %6984 = vmatprep.subr.mxu0 0.0
    %6985 = vmatpush1.msra.mxu0 0.0
    %6986 = vmatprep.subr.mxu0 0.0
    %6987 = vmatpush1.msra.mxu0 0.0
    %6988 = vmatprep.subr.mxu0 0.0
    %6989 = vmatpush1.msra.mxu0 0.0
    %6990 = vmatprep.subr.mxu0 0.0
    %6991 = vmatpush1.msra.mxu0 0.0
    %6992 = vmatprep.subr.mxu0 0.0
    %6993 = vmatpush1.msra.mxu0 0.0
    %6994 = vmatprep.subr.mxu0 0.0
    %6995 = vmatpush1.msra.mxu0 0.0
    %6996 = vmatprep.subr.mxu0 0.0
    %6997 = vmatpush1.msra.mxu0 0.0
    %6998 = vmatprep.subr.mxu0 0.0
    %6999 = vmatpush1.msra.mxu0 0.0
    %7000 = vmatprep.subr.mxu0 0.0
    %7001 = vmatpush1.msra.mxu0 0.0
    %7002 = vmatprep.subr.mxu0 0.0
    %7003 = vmatpush1.msra.mxu0 0.0
    %7004 = vmatprep.subr.mxu0 0.0
    %7005 = vmatpush1.msra.mxu0 0.0
    %7006 = vmatprep.subr.mxu0 0.0
    %7007 = vmatpush1.msra.mxu0 0.0
    %7008 = vmatprep.subr.mxu0 0.0
    %7009 = vmatpush1.msra.mxu0 0.0
    %7010 = vmatprep.subr.mxu0 0.0
    %7011 = vmatpush1.msra.mxu0 0.0
    %7012 = vmatprep.mubr.f32.mxu0 0.0
    %7013 = vmatmul.mubr.f32.gmra.mrb[0].mxu0 %v6946
    %v7014 = vpop.f32.mrb[0].mxu0
    %v7015 = vadd.f32 0.0, %v7014
    %v7016 = vpop.f32.mrb[0].mxu0
    %7017 = vdwg.mxu0
    %v7018 = vadd.f32 %v6933, %v7015
    %s7019 = scalar_lea.vmem %s9, 720
    %v7020 = vld [vmem:[%s7019] sm:$0xff]
    %v7021 = vld [vmem:[%s7019 + $0x8] sm:$0xff]
    %v7022 = vld [vmem:[%s7019 + $0x10] sm:$0xff]
    %v7023 = vld [vmem:[%s7019 + $0x18] sm:$0xff]
    %v7024 = vld [vmem:[%s7019 + $0x20] sm:$0xff]
    %v7025 = vld [vmem:[%s7019 + $0x28] sm:$0xff]
    %v7026 = vld [vmem:[%s7019 + $0x30] sm:$0xff]
    %v7027 = vld [vmem:[%s7019 + $0x38] sm:$0xff]
    %v7028 = vld [vmem:[%s7019 + $0x40] sm:$0xff]
    %v7029 = vrot.slane %v6146, 2
    %v7030 = vrot.slane %v6149, 1
    %v7031 = vsel %vm6170, %v7030, %v7029
    %v7032 = vsel %vm6172, %v7031, 0
    %7034 = vmatprep.subr.mxu0 0.0
    %7035 = vmatpush1.msra.mxu0 %v7020
    %7036 = vmatprep.subr.mxu0 0.0
    %7037 = vmatpush1.msra.mxu0 %v7021
    %7038 = vmatprep.subr.mxu0 0.0
    %7039 = vmatpush1.msra.mxu0 %v7022
    %7040 = vmatprep.subr.mxu0 0.0
    %7041 = vmatpush1.msra.mxu0 %v7023
    %7042 = vmatprep.subr.mxu0 0.0
    %7043 = vmatpush1.msra.mxu0 %v7024
    %7044 = vmatprep.subr.mxu0 0.0
    %7045 = vmatpush1.msra.mxu0 %v7025
    %7046 = vmatprep.subr.mxu0 0.0
    %7047 = vmatpush1.msra.mxu0 %v7026
    %7048 = vmatprep.subr.mxu0 0.0
    %7049 = vmatpush1.msra.mxu0 %v7027
    %7050 = vmatprep.subr.mxu0 0.0
    %7051 = vmatpush1.msra.mxu0 %v7028
    %7052 = vmatprep.subr.mxu0 0.0
    %7053 = vmatpush1.msra.mxu0 0.0
    %7054 = vmatprep.subr.mxu0 0.0
    %7055 = vmatpush1.msra.mxu0 0.0
    %7056 = vmatprep.subr.mxu0 0.0
    %7057 = vmatpush1.msra.mxu0 0.0
    %7058 = vmatprep.subr.mxu0 0.0
    %7059 = vmatpush1.msra.mxu0 0.0
    %7060 = vmatprep.subr.mxu0 0.0
    %7061 = vmatpush1.msra.mxu0 0.0
    %7062 = vmatprep.subr.mxu0 0.0
    %7063 = vmatpush1.msra.mxu0 0.0
    %7064 = vmatprep.subr.mxu0 0.0
    %7065 = vmatpush1.msra.mxu0 0.0
    %7066 = vmatprep.subr.mxu0 0.0
    %7067 = vmatpush1.msra.mxu0 0.0
    %7068 = vmatprep.subr.mxu0 0.0
    %7069 = vmatpush1.msra.mxu0 0.0
    %7070 = vmatprep.subr.mxu0 0.0
    %7071 = vmatpush1.msra.mxu0 0.0
    %7072 = vmatprep.subr.mxu0 0.0
    %7073 = vmatpush1.msra.mxu0 0.0
    %7074 = vmatprep.subr.mxu0 0.0
    %7075 = vmatpush1.msra.mxu0 0.0
    %7076 = vmatprep.subr.mxu0 0.0
    %7077 = vmatpush1.msra.mxu0 0.0
    %7078 = vmatprep.subr.mxu0 0.0
    %7079 = vmatpush1.msra.mxu0 0.0
    %7080 = vmatprep.subr.mxu0 0.0
    %7081 = vmatpush1.msra.mxu0 0.0
    %7082 = vmatprep.subr.mxu0 0.0
    %7083 = vmatpush1.msra.mxu0 0.0
    %7084 = vmatprep.subr.mxu0 0.0
    %7085 = vmatpush1.msra.mxu0 0.0
    %7086 = vmatprep.subr.mxu0 0.0
    %7087 = vmatpush1.msra.mxu0 0.0
    %7088 = vmatprep.subr.mxu0 0.0
    %7089 = vmatpush1.msra.mxu0 0.0
    %7090 = vmatprep.subr.mxu0 0.0
    %7091 = vmatpush1.msra.mxu0 0.0
    %7092 = vmatprep.subr.mxu0 0.0
    %7093 = vmatpush1.msra.mxu0 0.0
    %7094 = vmatprep.subr.mxu0 0.0
    %7095 = vmatpush1.msra.mxu0 0.0
    %7096 = vmatprep.subr.mxu0 0.0
    %7097 = vmatpush1.msra.mxu0 0.0
    %7098 = vmatprep.mubr.f32.mxu0 0.0
    %7099 = vmatmul.mubr.f32.gmra.mrb[0].mxu0 %v7032
    %v7100 = vpop.f32.mrb[0].mxu0
    %v7101 = vadd.f32 0.0, %v7100
    %v7102 = vpop.f32.mrb[0].mxu0
    %7103 = vdwg.mxu0
    %v7104 = vadd.f32 %v7018, %v7101
    %s7105 = scalar_lea.vmem %s9, 792
    %v7106 = vld [vmem:[%s7105] sm:$0xff]
    %v7107 = vld [vmem:[%s7105 + $0x8] sm:$0xff]
    %v7108 = vld [vmem:[%s7105 + $0x10] sm:$0xff]
    %v7109 = vld [vmem:[%s7105 + $0x18] sm:$0xff]
    %v7110 = vld [vmem:[%s7105 + $0x20] sm:$0xff]
    %v7111 = vld [vmem:[%s7105 + $0x28] sm:$0xff]
    %v7112 = vld [vmem:[%s7105 + $0x30] sm:$0xff]
    %v7113 = vld [vmem:[%s7105 + $0x38] sm:$0xff]
    %v7114 = vld [vmem:[%s7105 + $0x40] sm:$0xff]
    %v7115 = vrot.slane %v6146, 3
    %v7116 = vrot.slane %v6149, 2
    %v7117 = vsel %vm6170, %v7116, %v7115
    %v7118 = vsel %vm6172, %v7117, 0
    %7120 = vmatprep.subr.mxu0 0.0
    %7121 = vmatpush1.msra.mxu0 %v7106
    %7122 = vmatprep.subr.mxu0 0.0
    %7123 = vmatpush1.msra.mxu0 %v7107
    %7124 = vmatprep.subr.mxu0 0.0
    %7125 = vmatpush1.msra.mxu0 %v7108
    %7126 = vmatprep.subr.mxu0 0.0
    %7127 = vmatpush1.msra.mxu0 %v7109
    %7128 = vmatprep.subr.mxu0 0.0
    %7129 = vmatpush1.msra.mxu0 %v7110
    %7130 = vmatprep.subr.mxu0 0.0
    %7131 = vmatpush1.msra.mxu0 %v7111
    %7132 = vmatprep.subr.mxu0 0.0
    %7133 = vmatpush1.msra.mxu0 %v7112
    %7134 = vmatprep.subr.mxu0 0.0
    %7135 = vmatpush1.msra.mxu0 %v7113
    %7136 = vmatprep.subr.mxu0 0.0
    %7137 = vmatpush1.msra.mxu0 %v7114
    %7138 = vmatprep.subr.mxu0 0.0
    %7139 = vmatpush1.msra.mxu0 0.0
    %7140 = vmatprep.subr.mxu0 0.0
    %7141 = vmatpush1.msra.mxu0 0.0
    %7142 = vmatprep.subr.mxu0 0.0
    %7143 = vmatpush1.msra.mxu0 0.0
    %7144 = vmatprep.subr.mxu0 0.0
    %7145 = vmatpush1.msra.mxu0 0.0
    %7146 = vmatprep.subr.mxu0 0.0
    %7147 = vmatpush1.msra.mxu0 0.0
    %7148 = vmatprep.subr.mxu0 0.0
    %7149 = vmatpush1.msra.mxu0 0.0
    %7150 = vmatprep.subr.mxu0 0.0
    %7151 = vmatpush1.msra.mxu0 0.0
    %7152 = vmatprep.subr.mxu0 0.0
    %7153 = vmatpush1.msra.mxu0 0.0
    %7154 = vmatprep.subr.mxu0 0.0
    %7155 = vmatpush1.msra.mxu0 0.0
    %7156 = vmatprep.subr.mxu0 0.0
    %7157 = vmatpush1.msra.mxu0 0.0
    %7158 = vmatprep.subr.mxu0 0.0
    %7159 = vmatpush1.msra.mxu0 0.0
    %7160 = vmatprep.subr.mxu0 0.0
    %7161 = vmatpush1.msra.mxu0 0.0
    %7162 = vmatprep.subr.mxu0 0.0
    %7163 = vmatpush1.msra.mxu0 0.0
    %7164 = vmatprep.subr.mxu0 0.0
    %7165 = vmatpush1.msra.mxu0 0.0
    %7166 = vmatprep.subr.mxu0 0.0
    %7167 = vmatpush1.msra.mxu0 0.0
    %7168 = vmatprep.subr.mxu0 0.0
    %7169 = vmatpush1.msra.mxu0 0.0
    %7170 = vmatprep.subr.mxu0 0.0
    %7171 = vmatpush1.msra.mxu0 0.0
    %7172 = vmatprep.subr.mxu0 0.0
    %7173 = vmatpush1.msra.mxu0 0.0
    %7174 = vmatprep.subr.mxu0 0.0
    %7175 = vmatpush1.msra.mxu0 0.0
    %7176 = vmatprep.subr.mxu0 0.0
    %7177 = vmatpush1.msra.mxu0 0.0
    %7178 = vmatprep.subr.mxu0 0.0
    %7179 = vmatpush1.msra.mxu0 0.0
    %7180 = vmatprep.subr.mxu0 0.0
    %7181 = vmatpush1.msra.mxu0 0.0
    %7182 = vmatprep.subr.mxu0 0.0
    %7183 = vmatpush1.msra.mxu0 0.0
    %7184 = vmatprep.mubr.f32.mxu0 0.0
    %7185 = vmatmul.mubr.f32.gmra.mrb[0].mxu0 %v7118
    %v7186 = vpop.f32.mrb[0].mxu0
    %v7187 = vadd.f32 0.0, %v7186
    %v7188 = vpop.f32.mrb[0].mxu0
    %7189 = vdwg.mxu0
    %v7190 = vadd.f32 %v7104, %v7187
    %s7191 = scalar_lea.vmem %s9, 864
    %v7192 = vld [vmem:[%s7191] sm:$0xff]
    %v7193 = vld [vmem:[%s7191 + $0x8] sm:$0xff]
    %v7194 = vld [vmem:[%s7191 + $0x10] sm:$0xff]
    %v7195 = vld [vmem:[%s7191 + $0x18] sm:$0xff]
    %v7196 = vld [vmem:[%s7191 + $0x20] sm:$0xff]
    %v7197 = vld [vmem:[%s7191 + $0x28] sm:$0xff]
    %v7198 = vld [vmem:[%s7191 + $0x30] sm:$0xff]
    %v7199 = vld [vmem:[%s7191 + $0x38] sm:$0xff]
    %v7200 = vld [vmem:[%s7191 + $0x40] sm:$0xff]
    %v7201 = vrot.slane %v6146, 4
    %v7202 = vrot.slane %v6149, 3
    %v7203 = vsel %vm6170, %v7202, %v7201
    %v7204 = vsel %vm6172, %v7203, 0
    %7206 = vmatprep.subr.mxu0 0.0
    %7207 = vmatpush1.msra.mxu0 %v7192
    %7208 = vmatprep.subr.mxu0 0.0
    %7209 = vmatpush1.msra.mxu0 %v7193
    %7210 = vmatprep.subr.mxu0 0.0
    %7211 = vmatpush1.msra.mxu0 %v7194
    %7212 = vmatprep.subr.mxu0 0.0
    %7213 = vmatpush1.msra.mxu0 %v7195
    %7214 = vmatprep.subr.mxu0 0.0
    %7215 = vmatpush1.msra.mxu0 %v7196
    %7216 = vmatprep.subr.mxu0 0.0
    %7217 = vmatpush1.msra.mxu0 %v7197
    %7218 = vmatprep.subr.mxu0 0.0
    %7219 = vmatpush1.msra.mxu0 %v7198
    %7220 = vmatprep.subr.mxu0 0.0
    %7221 = vmatpush1.msra.mxu0 %v7199
    %7222 = vmatprep.subr.mxu0 0.0
    %7223 = vmatpush1.msra.mxu0 %v7200
    %7224 = vmatprep.subr.mxu0 0.0
    %7225 = vmatpush1.msra.mxu0 0.0
    %7226 = vmatprep.subr.mxu0 0.0
    %7227 = vmatpush1.msra.mxu0 0.0
    %7228 = vmatprep.subr.mxu0 0.0
    %7229 = vmatpush1.msra.mxu0 0.0
    %7230 = vmatprep.subr.mxu0 0.0
    %7231 = vmatpush1.msra.mxu0 0.0
    %7232 = vmatprep.subr.mxu0 0.0
    %7233 = vmatpush1.msra.mxu0 0.0
    %7234 = vmatprep.subr.mxu0 0.0
    %7235 = vmatpush1.msra.mxu0 0.0
    %7236 = vmatprep.subr.mxu0 0.0
    %7237 = vmatpush1.msra.mxu0 0.0
    %7238 = vmatprep.subr.mxu0 0.0
    %7239 = vmatpush1.msra.mxu0 0.0
    %7240 = vmatprep.subr.mxu0 0.0
    %7241 = vmatpush1.msra.mxu0 0.0
    %7242 = vmatprep.subr.mxu0 0.0
    %7243 = vmatpush1.msra.mxu0 0.0
    %7244 = vmatprep.subr.mxu0 0.0
    %7245 = vmatpush1.msra.mxu0 0.0
    %7246 = vmatprep.subr.mxu0 0.0
    %7247 = vmatpush1.msra.mxu0 0.0
    %7248 = vmatprep.subr.mxu0 0.0
    %7249 = vmatpush1.msra.mxu0 0.0
    %7250 = vmatprep.subr.mxu0 0.0
    %7251 = vmatpush1.msra.mxu0 0.0
    %7252 = vmatprep.subr.mxu0 0.0
    %7253 = vmatpush1.msra.mxu0 0.0
    %7254 = vmatprep.subr.mxu0 0.0
    %7255 = vmatpush1.msra.mxu0 0.0
    %7256 = vmatprep.subr.mxu0 0.0
    %7257 = vmatpush1.msra.mxu0 0.0
    %7258 = vmatprep.subr.mxu0 0.0
    %7259 = vmatpush1.msra.mxu0 0.0
    %7260 = vmatprep.subr.mxu0 0.0
    %7261 = vmatpush1.msra.mxu0 0.0
    %7262 = vmatprep.subr.mxu0 0.0
    %7263 = vmatpush1.msra.mxu0 0.0
    %7264 = vmatprep.subr.mxu0 0.0
    %7265 = vmatpush1.msra.mxu0 0.0
    %7266 = vmatprep.subr.mxu0 0.0
    %7267 = vmatpush1.msra.mxu0 0.0
    %7268 = vmatprep.subr.mxu0 0.0
    %7269 = vmatpush1.msra.mxu0 0.0
    %7270 = vmatprep.mubr.f32.mxu0 0.0
    %7271 = vmatmul.mubr.f32.gmra.mrb[0].mxu0 %v7204
    %v7272 = vpop.f32.mrb[0].mxu0
    %v7273 = vadd.f32 0.0, %v7272
    %v7274 = vpop.f32.mrb[0].mxu0
    %7275 = vdwg.mxu0
    %v7276 = vadd.f32 %v7190, %v7273
    %s7277 = scalar_lea.vmem %s9, 936
    %v7278 = vld [vmem:[%s7277] sm:$0xff]
    %v7279 = vld [vmem:[%s7277 + $0x8] sm:$0xff]
    %v7280 = vld [vmem:[%s7277 + $0x10] sm:$0xff]
    %v7281 = vld [vmem:[%s7277 + $0x18] sm:$0xff]
    %v7282 = vld [vmem:[%s7277 + $0x20] sm:$0xff]
    %v7283 = vld [vmem:[%s7277 + $0x28] sm:$0xff]
    %v7284 = vld [vmem:[%s7277 + $0x30] sm:$0xff]
    %v7285 = vld [vmem:[%s7277 + $0x38] sm:$0xff]
    %v7286 = vld [vmem:[%s7277 + $0x40] sm:$0xff]
    %v7287 = vrot.slane %v6146, 5
    %v7288 = vrot.slane %v6149, 4
    %v7289 = vsel %vm6170, %v7288, %v7287
    %v7290 = vsel %vm6172, %v7289, 0
    %7292 = vmatprep.subr.mxu0 0.0
    %7293 = vmatpush1.msra.mxu0 %v7278
    %7294 = vmatprep.subr.mxu0 0.0
    %7295 = vmatpush1.msra.mxu0 %v7279
    %7296 = vmatprep.subr.mxu0 0.0
    %7297 = vmatpush1.msra.mxu0 %v7280
    %7298 = vmatprep.subr.mxu0 0.0
    %7299 = vmatpush1.msra.mxu0 %v7281
    %7300 = vmatprep.subr.mxu0 0.0
    %7301 = vmatpush1.msra.mxu0 %v7282
    %7302 = vmatprep.subr.mxu0 0.0
    %7303 = vmatpush1.msra.mxu0 %v7283
    %7304 = vmatprep.subr.mxu0 0.0
    %7305 = vmatpush1.msra.mxu0 %v7284
    %7306 = vmatprep.subr.mxu0 0.0
    %7307 = vmatpush1.msra.mxu0 %v7285
    %7308 = vmatprep.subr.mxu0 0.0
    %7309 = vmatpush1.msra.mxu0 %v7286
    %7310 = vmatprep.subr.mxu0 0.0
    %7311 = vmatpush1.msra.mxu0 0.0
    %7312 = vmatprep.subr.mxu0 0.0
    %7313 = vmatpush1.msra.mxu0 0.0
    %7314 = vmatprep.subr.mxu0 0.0
    %7315 = vmatpush1.msra.mxu0 0.0
    %7316 = vmatprep.subr.mxu0 0.0
    %7317 = vmatpush1.msra.mxu0 0.0
    %7318 = vmatprep.subr.mxu0 0.0
    %7319 = vmatpush1.msra.mxu0 0.0
    %7320 = vmatprep.subr.mxu0 0.0
    %7321 = vmatpush1.msra.mxu0 0.0
    %7322 = vmatprep.subr.mxu0 0.0
    %7323 = vmatpush1.msra.mxu0 0.0
    %7324 = vmatprep.subr.mxu0 0.0
    %7325 = vmatpush1.msra.mxu0 0.0
    %7326 = vmatprep.subr.mxu0 0.0
    %7327 = vmatpush1.msra.mxu0 0.0
    %7328 = vmatprep.subr.mxu0 0.0
    %7329 = vmatpush1.msra.mxu0 0.0
    %7330 = vmatprep.subr.mxu0 0.0
    %7331 = vmatpush1.msra.mxu0 0.0
    %7332 = vmatprep.subr.mxu0 0.0
    %7333 = vmatpush1.msra.mxu0 0.0
    %7334 = vmatprep.subr.mxu0 0.0
    %7335 = vmatpush1.msra.mxu0 0.0
    %7336 = vmatprep.subr.mxu0 0.0
    %7337 = vmatpush1.msra.mxu0 0.0
    %7338 = vmatprep.subr.mxu0 0.0
    %7339 = vmatpush1.msra.mxu0 0.0
    %7340 = vmatprep.subr.mxu0 0.0
    %7341 = vmatpush1.msra.mxu0 0.0
    %7342 = vmatprep.subr.mxu0 0.0
    %7343 = vmatpush1.msra.mxu0 0.0
    %7344 = vmatprep.subr.mxu0 0.0
    %7345 = vmatpush1.msra.mxu0 0.0
    %7346 = vmatprep.subr.mxu0 0.0
    %7347 = vmatpush1.msra.mxu0 0.0
    %7348 = vmatprep.subr.mxu0 0.0
    %7349 = vmatpush1.msra.mxu0 0.0
    %7350 = vmatprep.subr.mxu0 0.0
    %7351 = vmatpush1.msra.mxu0 0.0
    %7352 = vmatprep.subr.mxu0 0.0
    %7353 = vmatpush1.msra.mxu0 0.0
    %7354 = vmatprep.subr.mxu0 0.0
    %7355 = vmatpush1.msra.mxu0 0.0
    %7356 = vmatprep.mubr.f32.mxu0 0.0
    %7357 = vmatmul.mubr.f32.gmra.mrb[0].mxu0 %v7290
    %v7358 = vpop.f32.mrb[0].mxu0
    %v7359 = vadd.f32 0.0, %v7358
    %v7360 = vpop.f32.mrb[0].mxu0
    %7361 = vdwg.mxu0
    %v7362 = vadd.f32 %v7276, %v7359
    %s7363 = scalar_lea.vmem %s9, 1008
    %v7364 = vld [vmem:[%s7363] sm:$0xff]
    %v7365 = vld [vmem:[%s7363 + $0x8] sm:$0xff]
    %v7366 = vld [vmem:[%s7363 + $0x10] sm:$0xff]
    %v7367 = vld [vmem:[%s7363 + $0x18] sm:$0xff]
    %v7368 = vld [vmem:[%s7363 + $0x20] sm:$0xff]
    %v7369 = vld [vmem:[%s7363 + $0x28] sm:$0xff]
    %v7370 = vld [vmem:[%s7363 + $0x30] sm:$0xff]
    %v7371 = vld [vmem:[%s7363 + $0x38] sm:$0xff]
    %v7372 = vld [vmem:[%s7363 + $0x40] sm:$0xff]
    %v7373 = vrot.slane %v6146, 6
    %v7374 = vrot.slane %v6149, 5
    %v7375 = vsel %vm6170, %v7374, %v7373
    %v7376 = vsel %vm6172, %v7375, 0
    %7378 = vmatprep.subr.mxu0 0.0
    %7379 = vmatpush1.msra.mxu0 %v7364
    %7380 = vmatprep.subr.mxu0 0.0
    %7381 = vmatpush1.msra.mxu0 %v7365
    %7382 = vmatprep.subr.mxu0 0.0
    %7383 = vmatpush1.msra.mxu0 %v7366
    %7384 = vmatprep.subr.mxu0 0.0
    %7385 = vmatpush1.msra.mxu0 %v7367
    %7386 = vmatprep.subr.mxu0 0.0
    %7387 = vmatpush1.msra.mxu0 %v7368
    %7388 = vmatprep.subr.mxu0 0.0
    %7389 = vmatpush1.msra.mxu0 %v7369
    %7390 = vmatprep.subr.mxu0 0.0
    %7391 = vmatpush1.msra.mxu0 %v7370
    %7392 = vmatprep.subr.mxu0 0.0
    %7393 = vmatpush1.msra.mxu0 %v7371
    %7394 = vmatprep.subr.mxu0 0.0
    %7395 = vmatpush1.msra.mxu0 %v7372
    %7396 = vmatprep.subr.mxu0 0.0
    %7397 = vmatpush1.msra.mxu0 0.0
    %7398 = vmatprep.subr.mxu0 0.0
    %7399 = vmatpush1.msra.mxu0 0.0
    %7400 = vmatprep.subr.mxu0 0.0
    %7401 = vmatpush1.msra.mxu0 0.0
    %7402 = vmatprep.subr.mxu0 0.0
    %7403 = vmatpush1.msra.mxu0 0.0
    %7404 = vmatprep.subr.mxu0 0.0
    %7405 = vmatpush1.msra.mxu0 0.0
    %7406 = vmatprep.subr.mxu0 0.0
    %7407 = vmatpush1.msra.mxu0 0.0
    %7408 = vmatprep.subr.mxu0 0.0
    %7409 = vmatpush1.msra.mxu0 0.0
    %7410 = vmatprep.subr.mxu0 0.0
    %7411 = vmatpush1.msra.mxu0 0.0
    %7412 = vmatprep.subr.mxu0 0.0
    %7413 = vmatpush1.msra.mxu0 0.0
    %7414 = vmatprep.subr.mxu0 0.0
    %7415 = vmatpush1.msra.mxu0 0.0
    %7416 = vmatprep.subr.mxu0 0.0
    %7417 = vmatpush1.msra.mxu0 0.0
    %7418 = vmatprep.subr.mxu0 0.0
    %7419 = vmatpush1.msra.mxu0 0.0
    %7420 = vmatprep.subr.mxu0 0.0
    %7421 = vmatpush1.msra.mxu0 0.0
    %7422 = vmatprep.subr.mxu0 0.0
    %7423 = vmatpush1.msra.mxu0 0.0
    %7424 = vmatprep.subr.mxu0 0.0
    %7425 = vmatpush1.msra.mxu0 0.0
    %7426 = vmatprep.subr.mxu0 0.0
    %7427 = vmatpush1.msra.mxu0 0.0
    %7428 = vmatprep.subr.mxu0 0.0
    %7429 = vmatpush1.msra.mxu0 0.0
    %7430 = vmatprep.subr.mxu0 0.0
    %7431 = vmatpush1.msra.mxu0 0.0
    %7432 = vmatprep.subr.mxu0 0.0
    %7433 = vmatpush1.msra.mxu0 0.0
    %7434 = vmatprep.subr.mxu0 0.0
    %7435 = vmatpush1.msra.mxu0 0.0
    %7436 = vmatprep.subr.mxu0 0.0
    %7437 = vmatpush1.msra.mxu0 0.0
    %7438 = vmatprep.subr.mxu0 0.0
    %7439 = vmatpush1.msra.mxu0 0.0
    %7440 = vmatprep.subr.mxu0 0.0
    %7441 = vmatpush1.msra.mxu0 0.0
    %7442 = vmatprep.mubr.f32.mxu0 0.0
    %7443 = vmatmul.mubr.f32.gmra.mrb[0].mxu0 %v7376
    %v7444 = vpop.f32.mrb[0].mxu0
    %v7445 = vadd.f32 0.0, %v7444
    %v7446 = vpop.f32.mrb[0].mxu0
    %7447 = vdwg.mxu0
    %v7448 = vadd.f32 %v7362, %v7445
    %s7449 = scalar_lea.vmem %s9, 1080
    %v7450 = vld [vmem:[%s7449] sm:$0xff]
    %v7451 = vld [vmem:[%s7449 + $0x8] sm:$0xff]
    %v7452 = vld [vmem:[%s7449 + $0x10] sm:$0xff]
    %v7453 = vld [vmem:[%s7449 + $0x18] sm:$0xff]
    %v7454 = vld [vmem:[%s7449 + $0x20] sm:$0xff]
    %v7455 = vld [vmem:[%s7449 + $0x28] sm:$0xff]
    %v7456 = vld [vmem:[%s7449 + $0x30] sm:$0xff]
    %v7457 = vld [vmem:[%s7449 + $0x38] sm:$0xff]
    %v7458 = vld [vmem:[%s7449 + $0x40] sm:$0xff]
    %v7459 = vrot.slane %v6146, 7
    %v7460 = vrot.slane %v6149, 6
    %v7461 = vsel %vm6170, %v7460, %v7459
    %v7462 = vsel %vm6172, %v7461, 0
    %7464 = vmatprep.subr.mxu0 0.0
    %7465 = vmatpush1.msra.mxu0 %v7450
    %7466 = vmatprep.subr.mxu0 0.0
    %7467 = vmatpush1.msra.mxu0 %v7451
    %7468 = vmatprep.subr.mxu0 0.0
    %7469 = vmatpush1.msra.mxu0 %v7452
    %7470 = vmatprep.subr.mxu0 0.0
    %7471 = vmatpush1.msra.mxu0 %v7453
    %7472 = vmatprep.subr.mxu0 0.0
    %7473 = vmatpush1.msra.mxu0 %v7454
    %7474 = vmatprep.subr.mxu0 0.0
    %7475 = vmatpush1.msra.mxu0 %v7455
    %7476 = vmatprep.subr.mxu0 0.0
    %7477 = vmatpush1.msra.mxu0 %v7456
    %7478 = vmatprep.subr.mxu0 0.0
    %7479 = vmatpush1.msra.mxu0 %v7457
    %7480 = vmatprep.subr.mxu0 0.0
    %7481 = vmatpush1.msra.mxu0 %v7458
    %7482 = vmatprep.subr.mxu0 0.0
    %7483 = vmatpush1.msra.mxu0 0.0
    %7484 = vmatprep.subr.mxu0 0.0
    %7485 = vmatpush1.msra.mxu0 0.0
    %7486 = vmatprep.subr.mxu0 0.0
    %7487 = vmatpush1.msra.mxu0 0.0
    %7488 = vmatprep.subr.mxu0 0.0
    %7489 = vmatpush1.msra.mxu0 0.0
    %7490 = vmatprep.subr.mxu0 0.0
    %7491 = vmatpush1.msra.mxu0 0.0
    %7492 = vmatprep.subr.mxu0 0.0
    %7493 = vmatpush1.msra.mxu0 0.0
    %7494 = vmatprep.subr.mxu0 0.0
    %7495 = vmatpush1.msra.mxu0 0.0
    %7496 = vmatprep.subr.mxu0 0.0
    %7497 = vmatpush1.msra.mxu0 0.0
    %7498 = vmatprep.subr.mxu0 0.0
    %7499 = vmatpush1.msra.mxu0 0.0
    %7500 = vmatprep.subr.mxu0 0.0
    %7501 = vmatpush1.msra.mxu0 0.0
    %7502 = vmatprep.subr.mxu0 0.0
    %7503 = vmatpush1.msra.mxu0 0.0
    %7504 = vmatprep.subr.mxu0 0.0
    %7505 = vmatpush1.msra.mxu0 0.0
    %7506 = vmatprep.subr.mxu0 0.0
    %7507 = vmatpush1.msra.mxu0 0.0
    %7508 = vmatprep.subr.mxu0 0.0
    %7509 = vmatpush1.msra.mxu0 0.0
    %7510 = vmatprep.subr.mxu0 0.0
    %7511 = vmatpush1.msra.mxu0 0.0
    %7512 = vmatprep.subr.mxu0 0.0
    %7513 = vmatpush1.msra.mxu0 0.0
    %7514 = vmatprep.subr.mxu0 0.0
    %7515 = vmatpush1.msra.mxu0 0.0
    %7516 = vmatprep.subr.mxu0 0.0
    %7517 = vmatpush1.msra.mxu0 0.0
    %7518 = vmatprep.subr.mxu0 0.0
    %7519 = vmatpush1.msra.mxu0 0.0
    %7520 = vmatprep.subr.mxu0 0.0
    %7521 = vmatpush1.msra.mxu0 0.0
    %7522 = vmatprep.subr.mxu0 0.0
    %7523 = vmatpush1.msra.mxu0 0.0
    %7524 = vmatprep.subr.mxu0 0.0
    %7525 = vmatpush1.msra.mxu0 0.0
    %7526 = vmatprep.subr.mxu0 0.0
    %7527 = vmatpush1.msra.mxu0 0.0
    %7528 = vmatprep.mubr.f32.mxu0 0.0
    %7529 = vmatmul.mubr.f32.gmra.mrb[0].mxu0 %v7462
    %v7530 = vpop.f32.mrb[0].mxu0
    %v7531 = vadd.f32 0.0, %v7530
    %v7532 = vpop.f32.mrb[0].mxu0
    %7533 = vdwg.mxu0
    %v7534 = vadd.f32 %v7448, %v7531
    %s7535 = scalar_lea.vmem %s9, 1152
    %v7536 = vld [vmem:[%s7535] sm:$0xff]
    %v7537 = vld [vmem:[%s7535 + $0x8] sm:$0xff]
    %v7538 = vld [vmem:[%s7535 + $0x10] sm:$0xff]
    %v7539 = vld [vmem:[%s7535 + $0x18] sm:$0xff]
    %v7540 = vld [vmem:[%s7535 + $0x20] sm:$0xff]
    %v7541 = vld [vmem:[%s7535 + $0x28] sm:$0xff]
    %v7542 = vld [vmem:[%s7535 + $0x30] sm:$0xff]
    %v7543 = vld [vmem:[%s7535 + $0x38] sm:$0xff]
    %v7544 = vld [vmem:[%s7535 + $0x40] sm:$0xff]
    %v7547 = vrot.slane %v6150, 7
    %v7548 = vsel %vm6170, %v7547, %v6147
    %v7549 = vsel %vm6172, %v7548, 0
    %7551 = vmatprep.subr.mxu0 0.0
    %7552 = vmatpush1.msra.mxu0 %v7536
    %7553 = vmatprep.subr.mxu0 0.0
    %7554 = vmatpush1.msra.mxu0 %v7537
    %7555 = vmatprep.subr.mxu0 0.0
    %7556 = vmatpush1.msra.mxu0 %v7538
    %7557 = vmatprep.subr.mxu0 0.0
    %7558 = vmatpush1.msra.mxu0 %v7539
    %7559 = vmatprep.subr.mxu0 0.0
    %7560 = vmatpush1.msra.mxu0 %v7540
    %7561 = vmatprep.subr.mxu0 0.0
    %7562 = vmatpush1.msra.mxu0 %v7541
    %7563 = vmatprep.subr.mxu0 0.0
    %7564 = vmatpush1.msra.mxu0 %v7542
    %7565 = vmatprep.subr.mxu0 0.0
    %7566 = vmatpush1.msra.mxu0 %v7543
    %7567 = vmatprep.subr.mxu0 0.0
    %7568 = vmatpush1.msra.mxu0 %v7544
    %7569 = vmatprep.subr.mxu0 0.0
    %7570 = vmatpush1.msra.mxu0 0.0
    %7571 = vmatprep.subr.mxu0 0.0
    %7572 = vmatpush1.msra.mxu0 0.0
    %7573 = vmatprep.subr.mxu0 0.0
    %7574 = vmatpush1.msra.mxu0 0.0
    %7575 = vmatprep.subr.mxu0 0.0
    %7576 = vmatpush1.msra.mxu0 0.0
    %7577 = vmatprep.subr.mxu0 0.0
    %7578 = vmatpush1.msra.mxu0 0.0
    %7579 = vmatprep.subr.mxu0 0.0
    %7580 = vmatpush1.msra.mxu0 0.0
    %7581 = vmatprep.subr.mxu0 0.0
    %7582 = vmatpush1.msra.mxu0 0.0
    %7583 = vmatprep.subr.mxu0 0.0
    %7584 = vmatpush1.msra.mxu0 0.0
    %7585 = vmatprep.subr.mxu0 0.0
    %7586 = vmatpush1.msra.mxu0 0.0
    %7587 = vmatprep.subr.mxu0 0.0
    %7588 = vmatpush1.msra.mxu0 0.0
    %7589 = vmatprep.subr.mxu0 0.0
    %7590 = vmatpush1.msra.mxu0 0.0
    %7591 = vmatprep.subr.mxu0 0.0
    %7592 = vmatpush1.msra.mxu0 0.0
    %7593 = vmatprep.subr.mxu0 0.0
    %7594 = vmatpush1.msra.mxu0 0.0
    %7595 = vmatprep.subr.mxu0 0.0
    %7596 = vmatpush1.msra.mxu0 0.0
    %7597 = vmatprep.subr.mxu0 0.0
    %7598 = vmatpush1.msra.mxu0 0.0
    %7599 = vmatprep.subr.mxu0 0.0
    %7600 = vmatpush1.msra.mxu0 0.0
    %7601 = vmatprep.subr.mxu0 0.0
    %7602 = vmatpush1.msra.mxu0 0.0
    %7603 = vmatprep.subr.mxu0 0.0
    %7604 = vmatpush1.msra.mxu0 0.0
    %7605 = vmatprep.subr.mxu0 0.0
    %7606 = vmatpush1.msra.mxu0 0.0
    %7607 = vmatprep.subr.mxu0 0.0
    %7608 = vmatpush1.msra.mxu0 0.0
    %7609 = vmatprep.subr.mxu0 0.0
    %7610 = vmatpush1.msra.mxu0 0.0
    %7611 = vmatprep.subr.mxu0 0.0
    %7612 = vmatpush1.msra.mxu0 0.0
    %7613 = vmatprep.subr.mxu0 0.0
    %7614 = vmatpush1.msra.mxu0 0.0
    %7615 = vmatprep.mubr.f32.mxu0 0.0
    %7616 = vmatmul.mubr.f32.gmra.mrb[0].mxu0 %v7549
    %v7617 = vpop.f32.mrb[0].mxu0
    %v7618 = vadd.f32 0.0, %v7617
    %v7619 = vpop.f32.mrb[0].mxu0
    %7620 = vdwg.mxu0
    %v7621 = vadd.f32 %v7534, %v7618
    %s7622 = scalar_lea.vmem %s9, 1224
    %v7623 = vld [vmem:[%s7622] sm:$0xff]
    %v7624 = vld [vmem:[%s7622 + $0x8] sm:$0xff]
    %v7625 = vld [vmem:[%s7622 + $0x10] sm:$0xff]
    %v7626 = vld [vmem:[%s7622 + $0x18] sm:$0xff]
    %v7627 = vld [vmem:[%s7622 + $0x20] sm:$0xff]
    %v7628 = vld [vmem:[%s7622 + $0x28] sm:$0xff]
    %v7629 = vld [vmem:[%s7622 + $0x30] sm:$0xff]
    %v7630 = vld [vmem:[%s7622 + $0x38] sm:$0xff]
    %v7631 = vld [vmem:[%s7622 + $0x40] sm:$0xff]
    %v7632 = vrot.slane %v6147, 1
    %v7633 = vsel %vm6170, %v6150, %v7632
    %v7634 = vsel %vm6172, %v7633, 0
    %7636 = vmatprep.subr.mxu0 0.0
    %7637 = vmatpush1.msra.mxu0 %v7623
    %7638 = vmatprep.subr.mxu0 0.0
    %7639 = vmatpush1.msra.mxu0 %v7624
    %7640 = vmatprep.subr.mxu0 0.0
    %7641 = vmatpush1.msra.mxu0 %v7625
    %7642 = vmatprep.subr.mxu0 0.0
    %7643 = vmatpush1.msra.mxu0 %v7626
    %7644 = vmatprep.subr.mxu0 0.0
    %7645 = vmatpush1.msra.mxu0 %v7627
    %7646 = vmatprep.subr.mxu0 0.0
    %7647 = vmatpush1.msra.mxu0 %v7628
    %7648 = vmatprep.subr.mxu0 0.0
    %7649 = vmatpush1.msra.mxu0 %v7629
    %7650 = vmatprep.subr.mxu0 0.0
    %7651 = vmatpush1.msra.mxu0 %v7630
    %7652 = vmatprep.subr.mxu0 0.0
    %7653 = vmatpush1.msra.mxu0 %v7631
    %7654 = vmatprep.subr.mxu0 0.0
    %7655 = vmatpush1.msra.mxu0 0.0
    %7656 = vmatprep.subr.mxu0 0.0
    %7657 = vmatpush1.msra.mxu0 0.0
    %7658 = vmatprep.subr.mxu0 0.0
    %7659 = vmatpush1.msra.mxu0 0.0
    %7660 = vmatprep.subr.mxu0 0.0
    %7661 = vmatpush1.msra.mxu0 0.0
    %7662 = vmatprep.subr.mxu0 0.0
    %7663 = vmatpush1.msra.mxu0 0.0
    %7664 = vmatprep.subr.mxu0 0.0
    %7665 = vmatpush1.msra.mxu0 0.0
    %7666 = vmatprep.subr.mxu0 0.0
    %7667 = vmatpush1.msra.mxu0 0.0
    %7668 = vmatprep.subr.mxu0 0.0
    %7669 = vmatpush1.msra.mxu0 0.0
    %7670 = vmatprep.subr.mxu0 0.0
    %7671 = vmatpush1.msra.mxu0 0.0
    %7672 = vmatprep.subr.mxu0 0.0
    %7673 = vmatpush1.msra.mxu0 0.0
    %7674 = vmatprep.subr.mxu0 0.0
    %7675 = vmatpush1.msra.mxu0 0.0
    %7676 = vmatprep.subr.mxu0 0.0
    %7677 = vmatpush1.msra.mxu0 0.0
    %7678 = vmatprep.subr.mxu0 0.0
    %7679 = vmatpush1.msra.mxu0 0.0
    %7680 = vmatprep.subr.mxu0 0.0
    %7681 = vmatpush1.msra.mxu0 0.0
    %7682 = vmatprep.subr.mxu0 0.0
    %7683 = vmatpush1.msra.mxu0 0.0
    %7684 = vmatprep.subr.mxu0 0.0
    %7685 = vmatpush1.msra.mxu0 0.0
    %7686 = vmatprep.subr.mxu0 0.0
    %7687 = vmatpush1.msra.mxu0 0.0
    %7688 = vmatprep.subr.mxu0 0.0
    %7689 = vmatpush1.msra.mxu0 0.0
    %7690 = vmatprep.subr.mxu0 0.0
    %7691 = vmatpush1.msra.mxu0 0.0
    %7692 = vmatprep.subr.mxu0 0.0
    %7693 = vmatpush1.msra.mxu0 0.0
    %7694 = vmatprep.subr.mxu0 0.0
    %7695 = vmatpush1.msra.mxu0 0.0
    %7696 = vmatprep.subr.mxu0 0.0
    %7697 = vmatpush1.msra.mxu0 0.0
    %7698 = vmatprep.subr.mxu0 0.0
    %7699 = vmatpush1.msra.mxu0 0.0
    %7700 = vmatprep.mubr.f32.mxu0 0.0
    %7701 = vmatmul.mubr.f32.gmra.mrb[0].mxu0 %v7634
    %v7702 = vpop.f32.mrb[0].mxu0
    %v7703 = vadd.f32 0.0, %v7702
    %v7704 = vpop.f32.mrb[0].mxu0
    %7705 = vdwg.mxu0
    %v7706 = vadd.f32 %v7621, %v7703
    %s7707 = scalar_lea.vmem %s9, 1296
    %v7708 = vld [vmem:[%s7707] sm:$0xff]
    %v7709 = vld [vmem:[%s7707 + $0x8] sm:$0xff]
    %v7710 = vld [vmem:[%s7707 + $0x10] sm:$0xff]
    %v7711 = vld [vmem:[%s7707 + $0x18] sm:$0xff]
    %v7712 = vld [vmem:[%s7707 + $0x20] sm:$0xff]
    %v7713 = vld [vmem:[%s7707 + $0x28] sm:$0xff]
    %v7714 = vld [vmem:[%s7707 + $0x30] sm:$0xff]
    %v7715 = vld [vmem:[%s7707 + $0x38] sm:$0xff]
    %v7716 = vld [vmem:[%s7707 + $0x40] sm:$0xff]
    %v7717 = vrot.slane %v6147, 2
    %v7718 = vrot.slane %v6150, 1
    %v7719 = vsel %vm6170, %v7718, %v7717
    %v7720 = vsel %vm6172, %v7719, 0
    %7722 = vmatprep.subr.mxu0 0.0
    %7723 = vmatpush1.msra.mxu0 %v7708
    %7724 = vmatprep.subr.mxu0 0.0
    %7725 = vmatpush1.msra.mxu0 %v7709
    %7726 = vmatprep.subr.mxu0 0.0
    %7727 = vmatpush1.msra.mxu0 %v7710
    %7728 = vmatprep.subr.mxu0 0.0
    %7729 = vmatpush1.msra.mxu0 %v7711
    %7730 = vmatprep.subr.mxu0 0.0
    %7731 = vmatpush1.msra.mxu0 %v7712
    %7732 = vmatprep.subr.mxu0 0.0
    %7733 = vmatpush1.msra.mxu0 %v7713
    %7734 = vmatprep.subr.mxu0 0.0
    %7735 = vmatpush1.msra.mxu0 %v7714
    %7736 = vmatprep.subr.mxu0 0.0
    %7737 = vmatpush1.msra.mxu0 %v7715
    %7738 = vmatprep.subr.mxu0 0.0
    %7739 = vmatpush1.msra.mxu0 %v7716
    %7740 = vmatprep.subr.mxu0 0.0
    %7741 = vmatpush1.msra.mxu0 0.0
    %7742 = vmatprep.subr.mxu0 0.0
    %7743 = vmatpush1.msra.mxu0 0.0
    %7744 = vmatprep.subr.mxu0 0.0
    %7745 = vmatpush1.msra.mxu0 0.0
    %7746 = vmatprep.subr.mxu0 0.0
    %7747 = vmatpush1.msra.mxu0 0.0
    %7748 = vmatprep.subr.mxu0 0.0
    %7749 = vmatpush1.msra.mxu0 0.0
    %7750 = vmatprep.subr.mxu0 0.0
    %7751 = vmatpush1.msra.mxu0 0.0
    %7752 = vmatprep.subr.mxu0 0.0
    %7753 = vmatpush1.msra.mxu0 0.0
    %7754 = vmatprep.subr.mxu0 0.0
    %7755 = vmatpush1.msra.mxu0 0.0
    %7756 = vmatprep.subr.mxu0 0.0
    %7757 = vmatpush1.msra.mxu0 0.0
    %7758 = vmatprep.subr.mxu0 0.0
    %7759 = vmatpush1.msra.mxu0 0.0
    %7760 = vmatprep.subr.mxu0 0.0
    %7761 = vmatpush1.msra.mxu0 0.0
    %7762 = vmatprep.subr.mxu0 0.0
    %7763 = vmatpush1.msra.mxu0 0.0
    %7764 = vmatprep.subr.mxu0 0.0
    %7765 = vmatpush1.msra.mxu0 0.0
    %7766 = vmatprep.subr.mxu0 0.0
    %7767 = vmatpush1.msra.mxu0 0.0
    %7768 = vmatprep.subr.mxu0 0.0
    %7769 = vmatpush1.msra.mxu0 0.0
    %7770 = vmatprep.subr.mxu0 0.0
    %7771 = vmatpush1.msra.mxu0 0.0
    %7772 = vmatprep.subr.mxu0 0.0
    %7773 = vmatpush1.msra.mxu0 0.0
    %7774 = vmatprep.subr.mxu0 0.0
    %7775 = vmatpush1.msra.mxu0 0.0
    %7776 = vmatprep.subr.mxu0 0.0
    %7777 = vmatpush1.msra.mxu0 0.0
    %7778 = vmatprep.subr.mxu0 0.0
    %7779 = vmatpush1.msra.mxu0 0.0
    %7780 = vmatprep.subr.mxu0 0.0
    %7781 = vmatpush1.msra.mxu0 0.0
    %7782 = vmatprep.subr.mxu0 0.0
    %7783 = vmatpush1.msra.mxu0 0.0
    %7784 = vmatprep.subr.mxu0 0.0
    %7785 = vmatpush1.msra.mxu0 0.0
    %7786 = vmatprep.mubr.f32.mxu0 0.0
    %7787 = vmatmul.mubr.f32.gmra.mrb[0].mxu0 %v7720
    %v7788 = vpop.f32.mrb[0].mxu0
    %v7789 = vadd.f32 0.0, %v7788
    %v7790 = vpop.f32.mrb[0].mxu0
    %7791 = vdwg.mxu0
    %v7792 = vadd.f32 %v7706, %v7789
    %s7793 = scalar_lea.vmem %s9, 1368
    %v7794 = vld [vmem:[%s7793] sm:$0xff]
    %v7795 = vld [vmem:[%s7793 + $0x8] sm:$0xff]
    %v7796 = vld [vmem:[%s7793 + $0x10] sm:$0xff]
    %v7797 = vld [vmem:[%s7793 + $0x18] sm:$0xff]
    %v7798 = vld [vmem:[%s7793 + $0x20] sm:$0xff]
    %v7799 = vld [vmem:[%s7793 + $0x28] sm:$0xff]
    %v7800 = vld [vmem:[%s7793 + $0x30] sm:$0xff]
    %v7801 = vld [vmem:[%s7793 + $0x38] sm:$0xff]
    %v7802 = vld [vmem:[%s7793 + $0x40] sm:$0xff]
    %v7803 = vrot.slane %v6147, 3
    %v7804 = vrot.slane %v6150, 2
    %v7805 = vsel %vm6170, %v7804, %v7803
    %v7806 = vsel %vm6172, %v7805, 0
    %7808 = vmatprep.subr.mxu0 0.0
    %7809 = vmatpush1.msra.mxu0 %v7794
    %7810 = vmatprep.subr.mxu0 0.0
    %7811 = vmatpush1.msra.mxu0 %v7795
    %7812 = vmatprep.subr.mxu0 0.0
    %7813 = vmatpush1.msra.mxu0 %v7796
    %7814 = vmatprep.subr.mxu0 0.0
    %7815 = vmatpush1.msra.mxu0 %v7797
    %7816 = vmatprep.subr.mxu0 0.0
    %7817 = vmatpush1.msra.mxu0 %v7798
    %7818 = vmatprep.subr.mxu0 0.0
    %7819 = vmatpush1.msra.mxu0 %v7799
    %7820 = vmatprep.subr.mxu0 0.0
    %7821 = vmatpush1.msra.mxu0 %v7800
    %7822 = vmatprep.subr.mxu0 0.0
    %7823 = vmatpush1.msra.mxu0 %v7801
    %7824 = vmatprep.subr.mxu0 0.0
    %7825 = vmatpush1.msra.mxu0 %v7802
    %7826 = vmatprep.subr.mxu0 0.0
    %7827 = vmatpush1.msra.mxu0 0.0
    %7828 = vmatprep.subr.mxu0 0.0
    %7829 = vmatpush1.msra.mxu0 0.0
    %7830 = vmatprep.subr.mxu0 0.0
    %7831 = vmatpush1.msra.mxu0 0.0
    %7832 = vmatprep.subr.mxu0 0.0
    %7833 = vmatpush1.msra.mxu0 0.0
    %7834 = vmatprep.subr.mxu0 0.0
    %7835 = vmatpush1.msra.mxu0 0.0
    %7836 = vmatprep.subr.mxu0 0.0
    %7837 = vmatpush1.msra.mxu0 0.0
    %7838 = vmatprep.subr.mxu0 0.0
    %7839 = vmatpush1.msra.mxu0 0.0
    %7840 = vmatprep.subr.mxu0 0.0
    %7841 = vmatpush1.msra.mxu0 0.0
    %7842 = vmatprep.subr.mxu0 0.0
    %7843 = vmatpush1.msra.mxu0 0.0
    %7844 = vmatprep.subr.mxu0 0.0
    %7845 = vmatpush1.msra.mxu0 0.0
    %7846 = vmatprep.subr.mxu0 0.0
    %7847 = vmatpush1.msra.mxu0 0.0
    %7848 = vmatprep.subr.mxu0 0.0
    %7849 = vmatpush1.msra.mxu0 0.0
    %7850 = vmatprep.subr.mxu0 0.0
    %7851 = vmatpush1.msra.mxu0 0.0
    %7852 = vmatprep.subr.mxu0 0.0
    %7853 = vmatpush1.msra.mxu0 0.0
    %7854 = vmatprep.subr.mxu0 0.0
    %7855 = vmatpush1.msra.mxu0 0.0
    %7856 = vmatprep.subr.mxu0 0.0
    %7857 = vmatpush1.msra.mxu0 0.0
    %7858 = vmatprep.subr.mxu0 0.0
    %7859 = vmatpush1.msra.mxu0 0.0
    %7860 = vmatprep.subr.mxu0 0.0
    %7861 = vmatpush1.msra.mxu0 0.0
    %7862 = vmatprep.subr.mxu0 0.0
    %7863 = vmatpush1.msra.mxu0 0.0
    %7864 = vmatprep.subr.mxu0 0.0
    %7865 = vmatpush1.msra.mxu0 0.0
    %7866 = vmatprep.subr.mxu0 0.0
    %7867 = vmatpush1.msra.mxu0 0.0
    %7868 = vmatprep.subr.mxu0 0.0
    %7869 = vmatpush1.msra.mxu0 0.0
    %7870 = vmatprep.subr.mxu0 0.0
    %7871 = vmatpush1.msra.mxu0 0.0
    %7872 = vmatprep.mubr.f32.mxu0 0.0
    %7873 = vmatmul.mubr.f32.gmra.mrb[0].mxu0 %v7806
    %v7874 = vpop.f32.mrb[0].mxu0
    %v7875 = vadd.f32 0.0, %v7874
    %v7876 = vpop.f32.mrb[0].mxu0
    %7877 = vdwg.mxu0
    %v7878 = vadd.f32 %v7792, %v7875
    %s7879 = scalar_lea.vmem %s9, 1440
    %v7880 = vld [vmem:[%s7879] sm:$0xff]
    %v7881 = vld [vmem:[%s7879 + $0x8] sm:$0xff]
    %v7882 = vld [vmem:[%s7879 + $0x10] sm:$0xff]
    %v7883 = vld [vmem:[%s7879 + $0x18] sm:$0xff]
    %v7884 = vld [vmem:[%s7879 + $0x20] sm:$0xff]
    %v7885 = vld [vmem:[%s7879 + $0x28] sm:$0xff]
    %v7886 = vld [vmem:[%s7879 + $0x30] sm:$0xff]
    %v7887 = vld [vmem:[%s7879 + $0x38] sm:$0xff]
    %v7888 = vld [vmem:[%s7879 + $0x40] sm:$0xff]
    %v7889 = vrot.slane %v6147, 4
    %v7890 = vrot.slane %v6150, 3
    %v7891 = vsel %vm6170, %v7890, %v7889
    %v7892 = vsel %vm6172, %v7891, 0
    %7894 = vmatprep.subr.mxu0 0.0
    %7895 = vmatpush1.msra.mxu0 %v7880
    %7896 = vmatprep.subr.mxu0 0.0
    %7897 = vmatpush1.msra.mxu0 %v7881
    %7898 = vmatprep.subr.mxu0 0.0
    %7899 = vmatpush1.msra.mxu0 %v7882
    %7900 = vmatprep.subr.mxu0 0.0
    %7901 = vmatpush1.msra.mxu0 %v7883
    %7902 = vmatprep.subr.mxu0 0.0
    %7903 = vmatpush1.msra.mxu0 %v7884
    %7904 = vmatprep.subr.mxu0 0.0
    %7905 = vmatpush1.msra.mxu0 %v7885
    %7906 = vmatprep.subr.mxu0 0.0
    %7907 = vmatpush1.msra.mxu0 %v7886
    %7908 = vmatprep.subr.mxu0 0.0
    %7909 = vmatpush1.msra.mxu0 %v7887
    %7910 = vmatprep.subr.mxu0 0.0
    %7911 = vmatpush1.msra.mxu0 %v7888
    %7912 = vmatprep.subr.mxu0 0.0
    %7913 = vmatpush1.msra.mxu0 0.0
    %7914 = vmatprep.subr.mxu0 0.0
    %7915 = vmatpush1.msra.mxu0 0.0
    %7916 = vmatprep.subr.mxu0 0.0
    %7917 = vmatpush1.msra.mxu0 0.0
    %7918 = vmatprep.subr.mxu0 0.0
    %7919 = vmatpush1.msra.mxu0 0.0
    %7920 = vmatprep.subr.mxu0 0.0
    %7921 = vmatpush1.msra.mxu0 0.0
    %7922 = vmatprep.subr.mxu0 0.0
    %7923 = vmatpush1.msra.mxu0 0.0
    %7924 = vmatprep.subr.mxu0 0.0
    %7925 = vmatpush1.msra.mxu0 0.0
    %7926 = vmatprep.subr.mxu0 0.0
    %7927 = vmatpush1.msra.mxu0 0.0
    %7928 = vmatprep.subr.mxu0 0.0
    %7929 = vmatpush1.msra.mxu0 0.0
    %7930 = vmatprep.subr.mxu0 0.0
    %7931 = vmatpush1.msra.mxu0 0.0
    %7932 = vmatprep.subr.mxu0 0.0
    %7933 = vmatpush1.msra.mxu0 0.0
    %7934 = vmatprep.subr.mxu0 0.0
    %7935 = vmatpush1.msra.mxu0 0.0
    %7936 = vmatprep.subr.mxu0 0.0
    %7937 = vmatpush1.msra.mxu0 0.0
    %7938 = vmatprep.subr.mxu0 0.0
    %7939 = vmatpush1.msra.mxu0 0.0
    %7940 = vmatprep.subr.mxu0 0.0
    %7941 = vmatpush1.msra.mxu0 0.0
    %7942 = vmatprep.subr.mxu0 0.0
    %7943 = vmatpush1.msra.mxu0 0.0
    %7944 = vmatprep.subr.mxu0 0.0
    %7945 = vmatpush1.msra.mxu0 0.0
    %7946 = vmatprep.subr.mxu0 0.0
    %7947 = vmatpush1.msra.mxu0 0.0
    %7948 = vmatprep.subr.mxu0 0.0
    %7949 = vmatpush1.msra.mxu0 0.0
    %7950 = vmatprep.subr.mxu0 0.0
    %7951 = vmatpush1.msra.mxu0 0.0
    %7952 = vmatprep.subr.mxu0 0.0
    %7953 = vmatpush1.msra.mxu0 0.0
    %7954 = vmatprep.subr.mxu0 0.0
    %7955 = vmatpush1.msra.mxu0 0.0
    %7956 = vmatprep.subr.mxu0 0.0
    %7957 = vmatpush1.msra.mxu0 0.0
    %7958 = vmatprep.mubr.f32.mxu0 0.0
    %7959 = vmatmul.mubr.f32.gmra.mrb[0].mxu0 %v7892
    %v7960 = vpop.f32.mrb[0].mxu0
    %v7961 = vadd.f32 0.0, %v7960
    %v7962 = vpop.f32.mrb[0].mxu0
    %7963 = vdwg.mxu0
    %v7964 = vadd.f32 %v7878, %v7961
    %s7965 = scalar_lea.vmem %s9, 1512
    %v7966 = vld [vmem:[%s7965] sm:$0xff]
    %v7967 = vld [vmem:[%s7965 + $0x8] sm:$0xff]
    %v7968 = vld [vmem:[%s7965 + $0x10] sm:$0xff]
    %v7969 = vld [vmem:[%s7965 + $0x18] sm:$0xff]
    %v7970 = vld [vmem:[%s7965 + $0x20] sm:$0xff]
    %v7971 = vld [vmem:[%s7965 + $0x28] sm:$0xff]
    %v7972 = vld [vmem:[%s7965 + $0x30] sm:$0xff]
    %v7973 = vld [vmem:[%s7965 + $0x38] sm:$0xff]
    %v7974 = vld [vmem:[%s7965 + $0x40] sm:$0xff]
    %v7975 = vrot.slane %v6147, 5
    %v7976 = vrot.slane %v6150, 4
    %v7977 = vsel %vm6170, %v7976, %v7975
    %v7978 = vsel %vm6172, %v7977, 0
    %7980 = vmatprep.subr.mxu0 0.0
    %7981 = vmatpush1.msra.mxu0 %v7966
    %7982 = vmatprep.subr.mxu0 0.0
    %7983 = vmatpush1.msra.mxu0 %v7967
    %7984 = vmatprep.subr.mxu0 0.0
    %7985 = vmatpush1.msra.mxu0 %v7968
    %7986 = vmatprep.subr.mxu0 0.0
    %7987 = vmatpush1.msra.mxu0 %v7969
    %7988 = vmatprep.subr.mxu0 0.0
    %7989 = vmatpush1.msra.mxu0 %v7970
    %7990 = vmatprep.subr.mxu0 0.0
    %7991 = vmatpush1.msra.mxu0 %v7971
    %7992 = vmatprep.subr.mxu0 0.0
    %7993 = vmatpush1.msra.mxu0 %v7972
    %7994 = vmatprep.subr.mxu0 0.0
    %7995 = vmatpush1.msra.mxu0 %v7973
    %7996 = vmatprep.subr.mxu0 0.0
    %7997 = vmatpush1.msra.mxu0 %v7974
    %7998 = vmatprep.subr.mxu0 0.0
    %7999 = vmatpush1.msra.mxu0 0.0
    %8000 = vmatprep.subr.mxu0 0.0
    %8001 = vmatpush1.msra.mxu0 0.0
    %8002 = vmatprep.subr.mxu0 0.0
    %8003 = vmatpush1.msra.mxu0 0.0
    %8004 = vmatprep.subr.mxu0 0.0
    %8005 = vmatpush1.msra.mxu0 0.0
    %8006 = vmatprep.subr.mxu0 0.0
    %8007 = vmatpush1.msra.mxu0 0.0
    %8008 = vmatprep.subr.mxu0 0.0
    %8009 = vmatpush1.msra.mxu0 0.0
    %8010 = vmatprep.subr.mxu0 0.0
    %8011 = vmatpush1.msra.mxu0 0.0
    %8012 = vmatprep.subr.mxu0 0.0
    %8013 = vmatpush1.msra.mxu0 0.0
    %8014 = vmatprep.subr.mxu0 0.0
    %8015 = vmatpush1.msra.mxu0 0.0
    %8016 = vmatprep.subr.mxu0 0.0
    %8017 = vmatpush1.msra.mxu0 0.0
    %8018 = vmatprep.subr.mxu0 0.0
    %8019 = vmatpush1.msra.mxu0 0.0
    %8020 = vmatprep.subr.mxu0 0.0
    %8021 = vmatpush1.msra.mxu0 0.0
    %8022 = vmatprep.subr.mxu0 0.0
    %8023 = vmatpush1.msra.mxu0 0.0
    %8024 = vmatprep.subr.mxu0 0.0
    %8025 = vmatpush1.msra.mxu0 0.0
    %8026 = vmatprep.subr.mxu0 0.0
    %8027 = vmatpush1.msra.mxu0 0.0
    %8028 = vmatprep.subr.mxu0 0.0
    %8029 = vmatpush1.msra.mxu0 0.0
    %8030 = vmatprep.subr.mxu0 0.0
    %8031 = vmatpush1.msra.mxu0 0.0
    %8032 = vmatprep.subr.mxu0 0.0
    %8033 = vmatpush1.msra.mxu0 0.0
    %8034 = vmatprep.subr.mxu0 0.0
    %8035 = vmatpush1.msra.mxu0 0.0
    %8036 = vmatprep.subr.mxu0 0.0
    %8037 = vmatpush1.msra.mxu0 0.0
    %8038 = vmatprep.subr.mxu0 0.0
    %8039 = vmatpush1.msra.mxu0 0.0
    %8040 = vmatprep.subr.mxu0 0.0
    %8041 = vmatpush1.msra.mxu0 0.0
    %8042 = vmatprep.subr.mxu0 0.0
    %8043 = vmatpush1.msra.mxu0 0.0
    %8044 = vmatprep.mubr.f32.mxu0 0.0
    %8045 = vmatmul.mubr.f32.gmra.mrb[0].mxu0 %v7978
    %v8046 = vpop.f32.mrb[0].mxu0
    %v8047 = vadd.f32 0.0, %v8046
    %v8048 = vpop.f32.mrb[0].mxu0
    %8049 = vdwg.mxu0
    %v8050 = vadd.f32 %v7964, %v8047
    %s8051 = scalar_lea.vmem %s9, 1584
    %v8052 = vld [vmem:[%s8051] sm:$0xff]
    %v8053 = vld [vmem:[%s8051 + $0x8] sm:$0xff]
    %v8054 = vld [vmem:[%s8051 + $0x10] sm:$0xff]
    %v8055 = vld [vmem:[%s8051 + $0x18] sm:$0xff]
    %v8056 = vld [vmem:[%s8051 + $0x20] sm:$0xff]
    %v8057 = vld [vmem:[%s8051 + $0x28] sm:$0xff]
    %v8058 = vld [vmem:[%s8051 + $0x30] sm:$0xff]
    %v8059 = vld [vmem:[%s8051 + $0x38] sm:$0xff]
    %v8060 = vld [vmem:[%s8051 + $0x40] sm:$0xff]
    %v8061 = vrot.slane %v6147, 6
    %v8062 = vrot.slane %v6150, 5
    %v8063 = vsel %vm6170, %v8062, %v8061
    %v8064 = vsel %vm6172, %v8063, 0
    %8066 = vmatprep.subr.mxu0 0.0
    %8067 = vmatpush1.msra.mxu0 %v8052
    %8068 = vmatprep.subr.mxu0 0.0
    %8069 = vmatpush1.msra.mxu0 %v8053
    %8070 = vmatprep.subr.mxu0 0.0
    %8071 = vmatpush1.msra.mxu0 %v8054
    %8072 = vmatprep.subr.mxu0 0.0
    %8073 = vmatpush1.msra.mxu0 %v8055
    %8074 = vmatprep.subr.mxu0 0.0
    %8075 = vmatpush1.msra.mxu0 %v8056
    %8076 = vmatprep.subr.mxu0 0.0
    %8077 = vmatpush1.msra.mxu0 %v8057
    %8078 = vmatprep.subr.mxu0 0.0
    %8079 = vmatpush1.msra.mxu0 %v8058
    %8080 = vmatprep.subr.mxu0 0.0
    %8081 = vmatpush1.msra.mxu0 %v8059
    %8082 = vmatprep.subr.mxu0 0.0
    %8083 = vmatpush1.msra.mxu0 %v8060
    %8084 = vmatprep.subr.mxu0 0.0
    %8085 = vmatpush1.msra.mxu0 0.0
    %8086 = vmatprep.subr.mxu0 0.0
    %8087 = vmatpush1.msra.mxu0 0.0
    %8088 = vmatprep.subr.mxu0 0.0
    %8089 = vmatpush1.msra.mxu0 0.0
    %8090 = vmatprep.subr.mxu0 0.0
    %8091 = vmatpush1.msra.mxu0 0.0
    %8092 = vmatprep.subr.mxu0 0.0
    %8093 = vmatpush1.msra.mxu0 0.0
    %8094 = vmatprep.subr.mxu0 0.0
    %8095 = vmatpush1.msra.mxu0 0.0
    %8096 = vmatprep.subr.mxu0 0.0
    %8097 = vmatpush1.msra.mxu0 0.0
    %8098 = vmatprep.subr.mxu0 0.0
    %8099 = vmatpush1.msra.mxu0 0.0
    %8100 = vmatprep.subr.mxu0 0.0
    %8101 = vmatpush1.msra.mxu0 0.0
    %8102 = vmatprep.subr.mxu0 0.0
    %8103 = vmatpush1.msra.mxu0 0.0
    %8104 = vmatprep.subr.mxu0 0.0
    %8105 = vmatpush1.msra.mxu0 0.0
    %8106 = vmatprep.subr.mxu0 0.0
    %8107 = vmatpush1.msra.mxu0 0.0
    %8108 = vmatprep.subr.mxu0 0.0
    %8109 = vmatpush1.msra.mxu0 0.0
    %8110 = vmatprep.subr.mxu0 0.0
    %8111 = vmatpush1.msra.mxu0 0.0
    %8112 = vmatprep.subr.mxu0 0.0
    %8113 = vmatpush1.msra.mxu0 0.0
    %8114 = vmatprep.subr.mxu0 0.0
    %8115 = vmatpush1.msra.mxu0 0.0
    %8116 = vmatprep.subr.mxu0 0.0
    %8117 = vmatpush1.msra.mxu0 0.0
    %8118 = vmatprep.subr.mxu0 0.0
    %8119 = vmatpush1.msra.mxu0 0.0
    %8120 = vmatprep.subr.mxu0 0.0
    %8121 = vmatpush1.msra.mxu0 0.0
    %8122 = vmatprep.subr.mxu0 0.0
    %8123 = vmatpush1.msra.mxu0 0.0
    %8124 = vmatprep.subr.mxu0 0.0
    %8125 = vmatpush1.msra.mxu0 0.0
    %8126 = vmatprep.subr.mxu0 0.0
    %8127 = vmatpush1.msra.mxu0 0.0
    %8128 = vmatprep.subr.mxu0 0.0
    %8129 = vmatpush1.msra.mxu0 0.0
    %8130 = vmatprep.mubr.f32.mxu0 0.0
    %8131 = vmatmul.mubr.f32.gmra.mrb[0].mxu0 %v8064
    %v8132 = vpop.f32.mrb[0].mxu0
    %v8133 = vadd.f32 0.0, %v8132
    %v8134 = vpop.f32.mrb[0].mxu0
    %8135 = vdwg.mxu0
    %v8136 = vadd.f32 %v8050, %v8133
    %s8137 = scalar_lea.vmem %s9, 1656
    %v8138 = vld [vmem:[%s8137] sm:$0xff]
    %v8139 = vld [vmem:[%s8137 + $0x8] sm:$0xff]
    %v8140 = vld [vmem:[%s8137 + $0x10] sm:$0xff]
    %v8141 = vld [vmem:[%s8137 + $0x18] sm:$0xff]
    %v8142 = vld [vmem:[%s8137 + $0x20] sm:$0xff]
    %v8143 = vld [vmem:[%s8137 + $0x28] sm:$0xff]
    %v8144 = vld [vmem:[%s8137 + $0x30] sm:$0xff]
    %v8145 = vld [vmem:[%s8137 + $0x38] sm:$0xff]
    %v8146 = vld [vmem:[%s8137 + $0x40] sm:$0xff]
    %v8147 = vrot.slane %v6147, 7
    %v8148 = vrot.slane %v6150, 6
    %v8149 = vsel %vm6170, %v8148, %v8147
    %v8150 = vsel %vm6172, %v8149, 0
    %8152 = vmatprep.subr.mxu0 0.0
    %8153 = vmatpush1.msra.mxu0 %v8138
    %8154 = vmatprep.subr.mxu0 0.0
    %8155 = vmatpush1.msra.mxu0 %v8139
    %8156 = vmatprep.subr.mxu0 0.0
    %8157 = vmatpush1.msra.mxu0 %v8140
    %8158 = vmatprep.subr.mxu0 0.0
    %8159 = vmatpush1.msra.mxu0 %v8141
    %8160 = vmatprep.subr.mxu0 0.0
    %8161 = vmatpush1.msra.mxu0 %v8142
    %8162 = vmatprep.subr.mxu0 0.0
    %8163 = vmatpush1.msra.mxu0 %v8143
    %8164 = vmatprep.subr.mxu0 0.0
    %8165 = vmatpush1.msra.mxu0 %v8144
    %8166 = vmatprep.subr.mxu0 0.0
    %8167 = vmatpush1.msra.mxu0 %v8145
    %8168 = vmatprep.subr.mxu0 0.0
    %8169 = vmatpush1.msra.mxu0 %v8146
    %8170 = vmatprep.subr.mxu0 0.0
    %8171 = vmatpush1.msra.mxu0 0.0
    %8172 = vmatprep.subr.mxu0 0.0
    %8173 = vmatpush1.msra.mxu0 0.0
    %8174 = vmatprep.subr.mxu0 0.0
    %8175 = vmatpush1.msra.mxu0 0.0
    %8176 = vmatprep.subr.mxu0 0.0
    %8177 = vmatpush1.msra.mxu0 0.0
    %8178 = vmatprep.subr.mxu0 0.0
    %8179 = vmatpush1.msra.mxu0 0.0
    %8180 = vmatprep.subr.mxu0 0.0
    %8181 = vmatpush1.msra.mxu0 0.0
    %8182 = vmatprep.subr.mxu0 0.0
    %8183 = vmatpush1.msra.mxu0 0.0
    %8184 = vmatprep.subr.mxu0 0.0
    %8185 = vmatpush1.msra.mxu0 0.0
    %8186 = vmatprep.subr.mxu0 0.0
    %8187 = vmatpush1.msra.mxu0 0.0
    %8188 = vmatprep.subr.mxu0 0.0
    %8189 = vmatpush1.msra.mxu0 0.0
    %8190 = vmatprep.subr.mxu0 0.0
    %8191 = vmatpush1.msra.mxu0 0.0
    %8192 = vmatprep.subr.mxu0 0.0
    %8193 = vmatpush1.msra.mxu0 0.0
    %8194 = vmatprep.subr.mxu0 0.0
    %8195 = vmatpush1.msra.mxu0 0.0
    %8196 = vmatprep.subr.mxu0 0.0
    %8197 = vmatpush1.msra.mxu0 0.0
    %8198 = vmatprep.subr.mxu0 0.0
    %8199 = vmatpush1.msra.mxu0 0.0
    %8200 = vmatprep.subr.mxu0 0.0
    %8201 = vmatpush1.msra.mxu0 0.0
    %8202 = vmatprep.subr.mxu0 0.0
    %8203 = vmatpush1.msra.mxu0 0.0
    %8204 = vmatprep.subr.mxu0 0.0
    %8205 = vmatpush1.msra.mxu0 0.0
    %8206 = vmatprep.subr.mxu0 0.0
    %8207 = vmatpush1.msra.mxu0 0.0
    %8208 = vmatprep.subr.mxu0 0.0
    %8209 = vmatpush1.msra.mxu0 0.0
    %8210 = vmatprep.subr.mxu0 0.0
    %8211 = vmatpush1.msra.mxu0 0.0
    %8212 = vmatprep.subr.mxu0 0.0
    %8213 = vmatpush1.msra.mxu0 0.0
    %8214 = vmatprep.subr.mxu0 0.0
    %8215 = vmatpush1.msra.mxu0 0.0
    %8216 = vmatprep.mubr.f32.mxu0 0.0
    %8217 = vmatmul.mubr.f32.gmra.mrb[0].mxu0 %v8150
    %v8218 = vpop.f32.mrb[0].mxu0
    %v8219 = vadd.f32 0.0, %v8218
    %v8220 = vpop.f32.mrb[0].mxu0
    %8221 = vdwg.mxu0
    %v8222 = vadd.f32 %v8136, %v8219
    %v8223 = vmax.f32 %v8222, 0.0
    %vm8224 = vcmask 74752
    %8225 = vst.msk [vmem:[#allocation2] sm:$0x3] %vm8224, %v8223
    // Predicated region
    $region46: #{tpu_custom_call.1} parent=1 // pred_check
      _
    $region47: #{tpu_custom_call.1} parent=1 // pred_check_branch
      %8227 = sbr.rel (0) target = $region49
    $region48: #{tpu_custom_call.1} parent=1 // pred_region
      %s8229 = ssub.s32 32, 32
      %8230 = vsyncadd [#allocation3], %s8229
      %s8232 = sshll.u32 [#allocation2], 4
      %s8233 = int_to_ptr.vmem [resolvable:$true] %s8232
      %8235 = dma.vmem_to_hbm [thread:$0]  %s8233, 32, %s11, [#allocation3]
    $region49: #{tpu_custom_call.1} parent=1 // pred_fallthru
      _
    // Predicated region
    $region50: #{tpu_custom_call.1} parent=1 // pred_check
      _
    $region51: #{tpu_custom_call.1} parent=1 // pred_check_branch
      %8237 = sbr.rel (0) target = $region53
    $region52: #{tpu_custom_call.1} parent=1 // pred_region
      %8238 = dma.done [#allocation3], 32
    $region53: #{tpu_custom_call.1} parent=1 // pred_fallthru
      _
    %8239 = vsyncpa [#allocation3], 1

</llo_original>
